<compile_context>
chip_gen: v6e
topology: v6e:2x2x1
jax: 0.10.0
libtpu: 0.0.40
codegen_flags: <defaults>
</compile_context>

<pallas_src>
import jax
import jax.numpy as jnp
from jax import lax
from jax.experimental import pallas as pl
from jax.experimental.pallas import tpu as pltpu


EPS = 1e-5  # PyTorch InstanceNorm2d default eps


def _instance_norm(y):
    """y: (H*W, C) f32. Per-channel norm over spatial dim, two-pass (mean-shifted)
    biased variance — same VPU cost as single-pass, better conditioned."""
    inv_n = 1.0 / y.shape[0]
    mean = jnp.sum(y, axis=0, keepdims=True) * inv_n
    d = y - mean
    var = jnp.sum(d * d, axis=0, keepdims=True) * inv_n
    return d * lax.rsqrt(var + EPS)


def resblock_kernel(x_ref, w1_ref, w2_ref, o_ref, pad_ref):
    # x_ref  : (1, H, W, C) bf16   unpadded input block
    # w*_ref : (3, 3*C, C)  bf16   conv weights grouped by kh (rows ordered (kw, ci))
    # o_ref  : (1, H, W, C) f32    output block
    # pad_ref: (H+2, W+2, C) bf16  VMEM scratch reused for both reflection pads
    _, H, W, C = x_ref.shape

    def write_reflect_pad(img):
        """ReflectionPad2d(1) of img (H, W, C) bf16 into pad_ref.

        Every element of pad_ref is rewritten each call (interior, left/right
        columns, full-width top/bottom rows incl. corners); border strips are
        built from img values — no read-back from the scratch."""
        pad_ref[1:H + 1, 1:W + 1, :] = img
        pad_ref[1:H + 1, 0:1, :] = img[:, 1:2, :]                    # left  <- col 1
        pad_ref[1:H + 1, W + 1:W + 2, :] = img[:, W - 2:W - 1, :]    # right <- col W-2
        row_t = img[1:2, :, :]                                       # padded row 0   <- row 1
        row_b = img[H - 2:H - 1, :, :]                               # padded row H+1 <- row H-2
        pad_ref[0:1, :, :] = jnp.concatenate(
            [row_t[:, 1:2, :], row_t, row_t[:, W - 2:W - 1, :]], axis=1)
        pad_ref[H + 1:H + 2, :, :] = jnp.concatenate(
            [row_b[:, 1:2, :], row_b, row_b[:, W - 2:W - 1, :]], axis=1)

    def conv3x3(w_ref):
        """3x3 'VALID' conv of pad_ref: 3 MXU matmuls (K = 3C, taps grouped by kh)
        accumulated in f32 — no (H*W, 9C) im2col materialization."""
        acc = None
        for dy in range(3):
            panel = jnp.concatenate(
                [pad_ref[dy:dy + H, dx:dx + W, :].reshape(H * W, C)
                 for dx in range(3)],
                axis=-1)                                             # (H*W, 3C) bf16
            part = jnp.dot(panel, w_ref[dy],
                           preferred_element_type=jnp.float32)       # (H*W, C) f32
            acc = part if acc is None else acc + part
        return acc

    x3 = x_ref[0]                                                    # (H, W, C) bf16

    # conv1 -> instance norm -> ReLU   (conv bias cancels under InstanceNorm)
    write_reflect_pad(x3)
    y = jnp.maximum(_instance_norm(conv3x3(w1_ref)), 0.0)            # (H*W, C) f32

    # second reflection pad (scratch reused) -> conv2 -> instance norm
    write_reflect_pad(y.reshape(H, W, C).astype(jnp.bfloat16))
    z = _instance_norm(conv3x3(w2_ref))                              # (H*W, C) f32

    # residual add in f32 (x comes from the streamed bf16 block)
    out = x3.reshape(H * W, C).astype(jnp.float32) + z
    o_ref[0:1, :, :, :] = out.reshape(1, H, W, C).astype(o_ref.dtype)


def _pick_vmem_limit_bytes():
    # ~75% of physical VMEM: ~96 MiB on v5e/v6e (128 MiB), ~48 MiB on v7x (64 MiB).
    try:
        cap = int(pltpu.get_tpu_info().vmem_capacity_bytes)
    except Exception:
        cap = 64 * 1024 * 1024
    return min(96 * 1024 * 1024, (3 * cap) // 4)


_VMEM_LIMIT_BYTES = _pick_vmem_limit_bytes()


@jax.jit
def resblock_pallas(x_nchw, w1_oihw, b1, w2_oihw, b2):
    """x: (N,C,H,W) f32; w*: (C,C,3,3) f32 (OIHW); b*: (C,) f32. Returns (N,C,H,W) f32.

    b1/b2 are accepted (the module owns them) but are exact no-ops: a per-channel
    constant added before InstanceNorm2d(affine=False) is cancelled by the mean
    subtraction, so they are not streamed into the kernel."""
    del b1, b2
    N, C, H, W = x_nchw.shape
    # Layout glue stays outside the kernel (NCHW<->NHWC + f32->bf16). Keep the
    # network NHWC / bf16 across blocks in production to avoid this HBM tax
    # (biggest on v5e).
    x_nhwc = jnp.transpose(x_nchw, (0, 2, 3, 1)).astype(jnp.bfloat16)
    # OIHW -> (kh, kw*ci, co): rows of each kh-group ordered (kw, ci), matching
    # the kernel's per-kh panel layout.
    w1 = jnp.transpose(w1_oihw, (2, 3, 1, 0)).reshape(3, 3 * C, C).astype(jnp.bfloat16)
    w2 = jnp.transpose(w2_oihw, (2, 3, 1, 0)).reshape(3, 3 * C, C).astype(jnp.bfloat16)

    grid_spec = pltpu.PrefetchScalarGridSpec(
        num_scalar_prefetch=0,
        grid=(N,),
        in_specs=[
            pl.BlockSpec((1, H, W, C), lambda n: (n, 0, 0, 0)),
            pl.BlockSpec((3, 3 * C, C), lambda n: (0, 0, 0)),
            pl.BlockSpec((3, 3 * C, C), lambda n: (0, 0, 0)),
        ],
        out_specs=pl.BlockSpec((1, H, W, C), lambda n: (n, 0, 0, 0)),
        scratch_shapes=[pltpu.VMEM((H + 2, W + 2, C), jnp.bfloat16)],
    )
    out_nhwc = pl.pallas_call(
        resblock_kernel,
        out_shape=jax.ShapeDtypeStruct((N, H, W, C), jnp.float32),
        grid_spec=grid_spec,
        compiler_params=pltpu.CompilerParams(
            dimension_semantics=("parallel",),
            vmem_limit_bytes=_VMEM_LIMIT_BYTES),
    )(x_nhwc, w1, w2)
    return jnp.transpose(out_nhwc, (0, 3, 1, 2))   # back to NCHW


def resblock_reference(x_nchw, w1_oihw, b1, w2_oihw, b2):
    """Pure-JAX f32 reference (NCHW / OIHW, biases INCLUDED) for validation."""
    def conv(x, w, b):
        xp = jnp.pad(x, ((0, 0), (0, 0), (1, 1), (1, 1)), mode="reflect")
        y = lax.conv_general_dilated(
            xp, w, window_strides=(1, 1), padding="VALID",
            dimension_numbers=("NCHW", "OIHW", "NCHW"))
        return y + b.reshape(1, -1, 1, 1)

    def inorm(y):
        mean = jnp.mean(y, axis=(2, 3), keepdims=True)
        var = jnp.mean((y - mean) ** 2, axis=(2, 3), keepdims=True)
        return (y - mean) * lax.rsqrt(var + EPS)

    y = jax.nn.relu(inorm(conv(x_nchw, w1_oihw, b1)))
    y = inorm(conv(y, w2_oihw, b2))
    return x_nchw + y


if __name__ == "__main__":
    # Small smoke-test shapes consistent with the module: batch=2, channels=4, 16x16.
    # NOTE: tune / benchmark at production C (>=128, ideally multiple of 128) —
    # decisions made at C=4 do not transfer (lane occupancy 4/128).
    N, C, H, W = 2, 4, 16, 16
    key = jax.random.PRNGKey(0)
    k_x, k_w1, k_b1, k_w2, k_b2 = jax.random.split(key, 5)

    x_nchw = jax.random.normal(k_x, (N, C, H, W), jnp.float32)
    w1_oihw = jax.random.normal(k_w1, (C, C, 3, 3), jnp.float32) * 0.1
    b1 = jax.random.normal(k_b1, (C,), jnp.float32) * 0.1
    w2_oihw = jax.random.normal(k_w2, (C, C, 3, 3), jnp.float32) * 0.1
    b2 = jax.random.normal(k_b2, (C,), jnp.float32) * 0.1

    out = resblock_pallas(x_nchw, w1_oihw, b1, w2_oihw, b2)
    out = jax.block_until_ready(out)

    ref = resblock_reference(x_nchw, w1_oihw, b1, w2_oihw, b2)
    err = jnp.max(jnp.abs(out - ref))
    # bf16 MXU operands (activations + weights) vs. a pure-f32 reference (which
    # also carries the — mathematically cancelled — biases): ~1e-3-level
    # deviations; stats / residual add are f32, so 5e-2 is comfortable.
    assert jnp.allclose(out, ref, atol=5e-2, rtol=5e-2), f"max abs err {err}"

    print("KERNEL_OK")
</pallas_src>

<mosaic_0001>
module attributes {stable_mosaic.version = 11 : i64} {
  func.func @resblock_kernel(%arg0: i32, %arg1: memref<1x16x16x4xbf16, #tpu.memory_space<vmem>>, %arg2: memref<3x12x4xbf16, #tpu.memory_space<vmem>>, %arg3: memref<3x12x4xbf16, #tpu.memory_space<vmem>>, %arg4: memref<1x16x16x4xf32, #tpu.memory_space<vmem>>, %arg5: memref<18x18x4xbf16, #tpu.memory_space<vmem>>) attributes {dimension_semantics = [#tpu.dimension_semantics<parallel>], iteration_bounds = array<i64: 2>, scalar_prefetch = 0 : i64, scratch_operands = 1 : i64, tpu.core_type = #tpu.core_type<tc>, window_params = [{transform_indices = @transform_0, window_bounds = array<i64: 1, 16, 16, 4>}, {pipeline_mode = #tpu.pipeline_mode<synchronous>, transform_indices = @transform_1, window_bounds = array<i64: 3, 12, 4>}, {pipeline_mode = #tpu.pipeline_mode<synchronous>, transform_indices = @transform_2, window_bounds = array<i64: 3, 12, 4>}, {transform_indices = @transform_3, window_bounds = array<i64: 1, 16, 16, 4>}]} {
    %c0 = arith.constant 0 : index
    %c0_0 = arith.constant 0 : index
    %c0_1 = arith.constant 0 : index
    %c0_2 = arith.constant 0 : index
    %0 = vector.load %arg1[%c0, %c0_0, %c0_1, %c0_2] : memref<1x16x16x4xbf16, #tpu.memory_space<vmem>>, vector<1x16x16x4xbf16>
    %1 = vector.shape_cast %0 : vector<1x16x16x4xbf16> to vector<16x16x4xbf16>
    %c1 = arith.constant 1 : index
    %c1_3 = arith.constant 1 : index
    %c0_4 = arith.constant 0 : index
    %2 = vector.load %arg5[%c1, %c1_3, %c0_4] : memref<18x18x4xbf16, #tpu.memory_space<vmem>>, vector<16x16x4xbf16>
    tpu.vector_store %arg5[%c1, %c1_3, %c0_4], %1 {strides = array<i32>} : memref<18x18x4xbf16, #tpu.memory_space<vmem>>, vector<16x16x4xbf16>,
    %3 = vector.extract_strided_slice %1 {offsets = [0, 1, 0], sizes = [16, 1, 4], strides = [1, 1, 1]} : vector<16x16x4xbf16> to vector<16x1x4xbf16>
    %c1_5 = arith.constant 1 : index
    %c0_6 = arith.constant 0 : index
    %c0_7 = arith.constant 0 : index
    %4 = vector.load %arg5[%c1_5, %c0_6, %c0_7] : memref<18x18x4xbf16, #tpu.memory_space<vmem>>, vector<16x1x4xbf16>
    tpu.vector_store %arg5[%c1_5, %c0_6, %c0_7], %3 {strides = array<i32>} : memref<18x18x4xbf16, #tpu.memory_space<vmem>>, vector<16x1x4xbf16>,
    %5 = vector.extract_strided_slice %1 {offsets = [0, 14, 0], sizes = [16, 1, 4], strides = [1, 1, 1]} : vector<16x16x4xbf16> to vector<16x1x4xbf16>
    %c1_8 = arith.constant 1 : index
    %c17 = arith.constant 17 : index
    %c0_9 = arith.constant 0 : index
    %6 = vector.load %arg5[%c1_8, %c17, %c0_9] : memref<18x18x4xbf16, #tpu.memory_space<vmem>>, vector<16x1x4xbf16>
    tpu.vector_store %arg5[%c1_8, %c17, %c0_9], %5 {strides = array<i32>} : memref<18x18x4xbf16, #tpu.memory_space<vmem>>, vector<16x1x4xbf16>,
    %7 = vector.extract_strided_slice %1 {offsets = [1, 0, 0], sizes = [1, 16, 4], strides = [1, 1, 1]} : vector<16x16x4xbf16> to vector<1x16x4xbf16>
    %8 = vector.extract_strided_slice %1 {offsets = [14, 0, 0], sizes = [1, 16, 4], strides = [1, 1, 1]} : vector<16x16x4xbf16> to vector<1x16x4xbf16>
    %9 = vector.extract_strided_slice %7 {offsets = [0, 1, 0], sizes = [1, 1, 4], strides = [1, 1, 1]} : vector<1x16x4xbf16> to vector<1x1x4xbf16>
    %10 = vector.extract_strided_slice %7 {offsets = [0, 14, 0], sizes = [1, 1, 4], strides = [1, 1, 1]} : vector<1x16x4xbf16> to vector<1x1x4xbf16>
    %11 = tpu.concatenate %9, %7, %10 in 1 : vector<1x1x4xbf16>, vector<1x16x4xbf16>, vector<1x1x4xbf16> -> vector<1x18x4xbf16>
    %c0_10 = arith.constant 0 : index
    %c0_11 = arith.constant 0 : index
    %c0_12 = arith.constant 0 : index
    %12 = vector.load %arg5[%c0_10, %c0_11, %c0_12] : memref<18x18x4xbf16, #tpu.memory_space<vmem>>, vector<1x18x4xbf16>
    tpu.vector_store %arg5[%c0_10, %c0_11, %c0_12], %11 {strides = array<i32>} : memref<18x18x4xbf16, #tpu.memory_space<vmem>>, vector<1x18x4xbf16>,
    %13 = vector.extract_strided_slice %8 {offsets = [0, 1, 0], sizes = [1, 1, 4], strides = [1, 1, 1]} : vector<1x16x4xbf16> to vector<1x1x4xbf16>
    %14 = vector.extract_strided_slice %8 {offsets = [0, 14, 0], sizes = [1, 1, 4], strides = [1, 1, 1]} : vector<1x16x4xbf16> to vector<1x1x4xbf16>
    %15 = tpu.concatenate %13, %8, %14 in 1 : vector<1x1x4xbf16>, vector<1x16x4xbf16>, vector<1x1x4xbf16> -> vector<1x18x4xbf16>
    %c17_13 = arith.constant 17 : index
    %c0_14 = arith.constant 0 : index
    %c0_15 = arith.constant 0 : index
    %16 = vector.load %arg5[%c17_13, %c0_14, %c0_15] : memref<18x18x4xbf16, #tpu.memory_space<vmem>>, vector<1x18x4xbf16>
    tpu.vector_store %arg5[%c17_13, %c0_14, %c0_15], %15 {strides = array<i32>} : memref<18x18x4xbf16, #tpu.memory_space<vmem>>, vector<1x18x4xbf16>,
    %c0_16 = arith.constant 0 : index
    %c0_17 = arith.constant 0 : index
    %c0_18 = arith.constant 0 : index
    %17 = vector.load %arg5[%c0_16, %c0_17, %c0_18] : memref<18x18x4xbf16, #tpu.memory_space<vmem>>, vector<16x16x4xbf16>
    %18 = vector.shape_cast %17 : vector<16x16x4xbf16> to vector<256x4xbf16>
    %c0_19 = arith.constant 0 : index
    %c1_20 = arith.constant 1 : index
    %c0_21 = arith.constant 0 : index
    %19 = vector.load %arg5[%c0_19, %c1_20, %c0_21] : memref<18x18x4xbf16, #tpu.memory_space<vmem>>, vector<16x16x4xbf16>
    %20 = vector.shape_cast %19 : vector<16x16x4xbf16> to vector<256x4xbf16>
    %c0_22 = arith.constant 0 : index
    %c2 = arith.constant 2 : index
    %c0_23 = arith.constant 0 : index
    %21 = vector.load %arg5[%c0_22, %c2, %c0_23] : memref<18x18x4xbf16, #tpu.memory_space<vmem>>, vector<16x16x4xbf16>
    %22 = vector.shape_cast %21 : vector<16x16x4xbf16> to vector<256x4xbf16>
    %23 = tpu.concatenate %18, %20, %22 in 1 : vector<256x4xbf16>, vector<256x4xbf16>, vector<256x4xbf16> -> vector<256x12xbf16>
    %c0_24 = arith.constant 0 : index
    %c0_25 = arith.constant 0 : index
    %c0_26 = arith.constant 0 : index
    %24 = vector.load %arg2[%c0_24, %c0_25, %c0_26] : memref<3x12x4xbf16, #tpu.memory_space<vmem>>, vector<1x12x4xbf16>
    %25 = vector.shape_cast %24 : vector<1x12x4xbf16> to vector<12x4xbf16>
    %cst = arith.constant dense<0.000000e+00> : vector<256x4xf32>
    %26 = tpu.matmul %23, %25, %cst {dimension_numbers = #tpu.dot_dimension_numbers<[1], [0], [0], [1], [0, 0, 1, 1], [], []>} : vector<256x12xbf16>, vector<12x4xbf16>, vector<256x4xf32> -> vector<256x4xf32>
    %c1_27 = arith.constant 1 : index
    %c0_28 = arith.constant 0 : index
    %c0_29 = arith.constant 0 : index
    %27 = vector.load %arg5[%c1_27, %c0_28, %c0_29] : memref<18x18x4xbf16, #tpu.memory_space<vmem>>, vector<16x16x4xbf16>
    %28 = vector.shape_cast %27 : vector<16x16x4xbf16> to vector<256x4xbf16>
    %c1_30 = arith.constant 1 : index
    %c1_31 = arith.constant 1 : index
    %c0_32 = arith.constant 0 : index
    %29 = vector.load %arg5[%c1_30, %c1_31, %c0_32] : memref<18x18x4xbf16, #tpu.memory_space<vmem>>, vector<16x16x4xbf16>
    %30 = vector.shape_cast %29 : vector<16x16x4xbf16> to vector<256x4xbf16>
    %c1_33 = arith.constant 1 : index
    %c2_34 = arith.constant 2 : index
    %c0_35 = arith.constant 0 : index
    %31 = vector.load %arg5[%c1_33, %c2_34, %c0_35] : memref<18x18x4xbf16, #tpu.memory_space<vmem>>, vector<16x16x4xbf16>
    %32 = vector.shape_cast %31 : vector<16x16x4xbf16> to vector<256x4xbf16>
    %33 = tpu.concatenate %28, %30, %32 in 1 : vector<256x4xbf16>, vector<256x4xbf16>, vector<256x4xbf16> -> vector<256x12xbf16>
    %c1_36 = arith.constant 1 : index
    %c0_37 = arith.constant 0 : index
    %c0_38 = arith.constant 0 : index
    %34 = vector.load %arg2[%c1_36, %c0_37, %c0_38] : memref<3x12x4xbf16, #tpu.memory_space<vmem>>, vector<1x12x4xbf16>
    %35 = vector.shape_cast %34 : vector<1x12x4xbf16> to vector<12x4xbf16>
    %cst_39 = arith.constant dense<0.000000e+00> : vector<256x4xf32>
    %36 = tpu.matmul %33, %35, %cst_39 {dimension_numbers = #tpu.dot_dimension_numbers<[1], [0], [0], [1], [0, 0, 1, 1], [], []>} : vector<256x12xbf16>, vector<12x4xbf16>, vector<256x4xf32> -> vector<256x4xf32>
    %37 = arith.addf %26, %36 : vector<256x4xf32>
    %c2_40 = arith.constant 2 : index
    %c0_41 = arith.constant 0 : index
    %c0_42 = arith.constant 0 : index
    %38 = vector.load %arg5[%c2_40, %c0_41, %c0_42] : memref<18x18x4xbf16, #tpu.memory_space<vmem>>, vector<16x16x4xbf16>
    %39 = vector.shape_cast %38 : vector<16x16x4xbf16> to vector<256x4xbf16>
    %c2_43 = arith.constant 2 : index
    %c1_44 = arith.constant 1 : index
    %c0_45 = arith.constant 0 : index
    %40 = vector.load %arg5[%c2_43, %c1_44, %c0_45] : memref<18x18x4xbf16, #tpu.memory_space<vmem>>, vector<16x16x4xbf16>
    %41 = vector.shape_cast %40 : vector<16x16x4xbf16> to vector<256x4xbf16>
    %c2_46 = arith.constant 2 : index
    %c2_47 = arith.constant 2 : index
    %c0_48 = arith.constant 0 : index
    %42 = vector.load %arg5[%c2_46, %c2_47, %c0_48] : memref<18x18x4xbf16, #tpu.memory_space<vmem>>, vector<16x16x4xbf16>
    %43 = vector.shape_cast %42 : vector<16x16x4xbf16> to vector<256x4xbf16>
    %44 = tpu.concatenate %39, %41, %43 in 1 : vector<256x4xbf16>, vector<256x4xbf16>, vector<256x4xbf16> -> vector<256x12xbf16>
    %c2_49 = arith.constant 2 : index
    %c0_50 = arith.constant 0 : index
    %c0_51 = arith.constant 0 : index
    %45 = vector.load %arg2[%c2_49, %c0_50, %c0_51] : memref<3x12x4xbf16, #tpu.memory_space<vmem>>, vector<1x12x4xbf16>
    %46 = vector.shape_cast %45 : vector<1x12x4xbf16> to vector<12x4xbf16>
    %cst_52 = arith.constant dense<0.000000e+00> : vector<256x4xf32>
    %47 = tpu.matmul %44, %46, %cst_52 {dimension_numbers = #tpu.dot_dimension_numbers<[1], [0], [0], [1], [0, 0, 1, 1], [], []>} : vector<256x12xbf16>, vector<12x4xbf16>, vector<256x4xf32> -> vector<256x4xf32>
    %48 = arith.addf %37, %47 : vector<256x4xf32>
    %cst_53 = arith.constant dense<0.000000e+00> : vector<4xf32>
    %49 = vector.multi_reduction <add>, %48, %cst_53 [0] : vector<256x4xf32> to vector<4xf32>
    %50 = vector.shape_cast %49 : vector<4xf32> to vector<1x4xf32>
    %cst_54 = arith.constant 3.906250e-03 : f32
    %51 = vector.broadcast %cst_54 : f32 to vector<1x4xf32>
    %52 = arith.mulf %50, %51 : vector<1x4xf32>
    %53 = vector.broadcast %52 : vector<1x4xf32> to vector<256x4xf32>
    %54 = arith.subf %48, %53 : vector<256x4xf32>
    %55 = arith.mulf %54, %54 : vector<256x4xf32>
    %cst_55 = arith.constant dense<0.000000e+00> : vector<4xf32>
    %56 = vector.multi_reduction <add>, %55, %cst_55 [0] : vector<256x4xf32> to vector<4xf32>
    %57 = vector.shape_cast %56 : vector<4xf32> to vector<1x4xf32>
    %cst_56 = arith.constant 3.906250e-03 : f32
    %58 = vector.broadcast %cst_56 : f32 to vector<1x4xf32>
    %59 = arith.mulf %57, %58 : vector<1x4xf32>
    %cst_57 = arith.constant 9.99999974E-6 : f32
    %60 = vector.broadcast %cst_57 : f32 to vector<1x4xf32>
    %61 = arith.addf %59, %60 : vector<1x4xf32>
    %62 = math.rsqrt %61 : vector<1x4xf32>
    %63 = vector.broadcast %62 : vector<1x4xf32> to vector<256x4xf32>
    %64 = arith.mulf %54, %63 : vector<256x4xf32>
    %cst_58 = arith.constant 0.000000e+00 : f32
    %65 = vector.broadcast %cst_58 : f32 to vector<256x4xf32>
    %66 = arith.maximumf %64, %65 : vector<256x4xf32>
    %67 = vector.shape_cast %66 : vector<256x4xf32> to vector<16x16x4xf32>
    %68 = arith.truncf %67 : vector<16x16x4xf32> to vector<16x16x4xbf16>
    %c1_59 = arith.constant 1 : index
    %c1_60 = arith.constant 1 : index
    %c0_61 = arith.constant 0 : index
    %69 = vector.load %arg5[%c1_59, %c1_60, %c0_61] : memref<18x18x4xbf16, #tpu.memory_space<vmem>>, vector<16x16x4xbf16>
    tpu.vector_store %arg5[%c1_59, %c1_60, %c0_61], %68 {strides = array<i32>} : memref<18x18x4xbf16, #tpu.memory_space<vmem>>, vector<16x16x4xbf16>,
    %70 = vector.extract_strided_slice %68 {offsets = [0, 1, 0], sizes = [16, 1, 4], strides = [1, 1, 1]} : vector<16x16x4xbf16> to vector<16x1x4xbf16>
    %c1_62 = arith.constant 1 : index
    %c0_63 = arith.constant 0 : index
    %c0_64 = arith.constant 0 : index
    %71 = vector.load %arg5[%c1_62, %c0_63, %c0_64] : memref<18x18x4xbf16, #tpu.memory_space<vmem>>, vector<16x1x4xbf16>
    tpu.vector_store %arg5[%c1_62, %c0_63, %c0_64], %70 {strides = array<i32>} : memref<18x18x4xbf16, #tpu.memory_space<vmem>>, vector<16x1x4xbf16>,
    %72 = vector.extract_strided_slice %68 {offsets = [0, 14, 0], sizes = [16, 1, 4], strides = [1, 1, 1]} : vector<16x16x4xbf16> to vector<16x1x4xbf16>
    %c1_65 = arith.constant 1 : index
    %c17_66 = arith.constant 17 : index
    %c0_67 = arith.constant 0 : index
    %73 = vector.load %arg5[%c1_65, %c17_66, %c0_67] : memref<18x18x4xbf16, #tpu.memory_space<vmem>>, vector<16x1x4xbf16>
    tpu.vector_store %arg5[%c1_65, %c17_66, %c0_67], %72 {strides = array<i32>} : memref<18x18x4xbf16, #tpu.memory_space<vmem>>, vector<16x1x4xbf16>,
    %74 = vector.extract_strided_slice %68 {offsets = [1, 0, 0], sizes = [1, 16, 4], strides = [1, 1, 1]} : vector<16x16x4xbf16> to vector<1x16x4xbf16>
    %75 = vector.extract_strided_slice %68 {offsets = [14, 0, 0], sizes = [1, 16, 4], strides = [1, 1, 1]} : vector<16x16x4xbf16> to vector<1x16x4xbf16>
    %76 = vector.extract_strided_slice %74 {offsets = [0, 1, 0], sizes = [1, 1, 4], strides = [1, 1, 1]} : vector<1x16x4xbf16> to vector<1x1x4xbf16>
    %77 = vector.extract_strided_slice %74 {offsets = [0, 14, 0], sizes = [1, 1, 4], strides = [1, 1, 1]} : vector<1x16x4xbf16> to vector<1x1x4xbf16>
    %78 = tpu.concatenate %76, %74, %77 in 1 : vector<1x1x4xbf16>, vector<1x16x4xbf16>, vector<1x1x4xbf16> -> vector<1x18x4xbf16>
    %c0_68 = arith.constant 0 : index
    %c0_69 = arith.constant 0 : index
    %c0_70 = arith.constant 0 : index
    %79 = vector.load %arg5[%c0_68, %c0_69, %c0_70] : memref<18x18x4xbf16, #tpu.memory_space<vmem>>, vector<1x18x4xbf16>
    tpu.vector_store %arg5[%c0_68, %c0_69, %c0_70], %78 {strides = array<i32>} : memref<18x18x4xbf16, #tpu.memory_space<vmem>>, vector<1x18x4xbf16>,
    %80 = vector.extract_strided_slice %75 {offsets = [0, 1, 0], sizes = [1, 1, 4], strides = [1, 1, 1]} : vector<1x16x4xbf16> to vector<1x1x4xbf16>
    %81 = vector.extract_strided_slice %75 {offsets = [0, 14, 0], sizes = [1, 1, 4], strides = [1, 1, 1]} : vector<1x16x4xbf16> to vector<1x1x4xbf16>
    %82 = tpu.concatenate %80, %75, %81 in 1 : vector<1x1x4xbf16>, vector<1x16x4xbf16>, vector<1x1x4xbf16> -> vector<1x18x4xbf16>
    %c17_71 = arith.constant 17 : index
    %c0_72 = arith.constant 0 : index
    %c0_73 = arith.constant 0 : index
    %83 = vector.load %arg5[%c17_71, %c0_72, %c0_73] : memref<18x18x4xbf16, #tpu.memory_space<vmem>>, vector<1x18x4xbf16>
    tpu.vector_store %arg5[%c17_71, %c0_72, %c0_73], %82 {strides = array<i32>} : memref<18x18x4xbf16, #tpu.memory_space<vmem>>, vector<1x18x4xbf16>,
    %c0_74 = arith.constant 0 : index
    %c0_75 = arith.constant 0 : index
    %c0_76 = arith.constant 0 : index
    %84 = vector.load %arg5[%c0_74, %c0_75, %c0_76] : memref<18x18x4xbf16, #tpu.memory_space<vmem>>, vector<16x16x4xbf16>
    %85 = vector.shape_cast %84 : vector<16x16x4xbf16> to vector<256x4xbf16>
    %c0_77 = arith.constant 0 : index
    %c1_78 = arith.constant 1 : index
    %c0_79 = arith.constant 0 : index
    %86 = vector.load %arg5[%c0_77, %c1_78, %c0_79] : memref<18x18x4xbf16, #tpu.memory_space<vmem>>, vector<16x16x4xbf16>
    %87 = vector.shape_cast %86 : vector<16x16x4xbf16> to vector<256x4xbf16>
    %c0_80 = arith.constant 0 : index
    %c2_81 = arith.constant 2 : index
    %c0_82 = arith.constant 0 : index
    %88 = vector.load %arg5[%c0_80, %c2_81, %c0_82] : memref<18x18x4xbf16, #tpu.memory_space<vmem>>, vector<16x16x4xbf16>
    %89 = vector.shape_cast %88 : vector<16x16x4xbf16> to vector<256x4xbf16>
    %90 = tpu.concatenate %85, %87, %89 in 1 : vector<256x4xbf16>, vector<256x4xbf16>, vector<256x4xbf16> -> vector<256x12xbf16>
    %c0_83 = arith.constant 0 : index
    %c0_84 = arith.constant 0 : index
    %c0_85 = arith.constant 0 : index
    %91 = vector.load %arg3[%c0_83, %c0_84, %c0_85] : memref<3x12x4xbf16, #tpu.memory_space<vmem>>, vector<1x12x4xbf16>
    %92 = vector.shape_cast %91 : vector<1x12x4xbf16> to vector<12x4xbf16>
    %cst_86 = arith.constant dense<0.000000e+00> : vector<256x4xf32>
    %93 = tpu.matmul %90, %92, %cst_86 {dimension_numbers = #tpu.dot_dimension_numbers<[1], [0], [0], [1], [0, 0, 1, 1], [], []>} : vector<256x12xbf16>, vector<12x4xbf16>, vector<256x4xf32> -> vector<256x4xf32>
    %c1_87 = arith.constant 1 : index
    %c0_88 = arith.constant 0 : index
    %c0_89 = arith.constant 0 : index
    %94 = vector.load %arg5[%c1_87, %c0_88, %c0_89] : memref<18x18x4xbf16, #tpu.memory_space<vmem>>, vector<16x16x4xbf16>
    %95 = vector.shape_cast %94 : vector<16x16x4xbf16> to vector<256x4xbf16>
    %c1_90 = arith.constant 1 : index
    %c1_91 = arith.constant 1 : index
    %c0_92 = arith.constant 0 : index
    %96 = vector.load %arg5[%c1_90, %c1_91, %c0_92] : memref<18x18x4xbf16, #tpu.memory_space<vmem>>, vector<16x16x4xbf16>
    %97 = vector.shape_cast %96 : vector<16x16x4xbf16> to vector<256x4xbf16>
    %c1_93 = arith.constant 1 : index
    %c2_94 = arith.constant 2 : index
    %c0_95 = arith.constant 0 : index
    %98 = vector.load %arg5[%c1_93, %c2_94, %c0_95] : memref<18x18x4xbf16, #tpu.memory_space<vmem>>, vector<16x16x4xbf16>
    %99 = vector.shape_cast %98 : vector<16x16x4xbf16> to vector<256x4xbf16>
    %100 = tpu.concatenate %95, %97, %99 in 1 : vector<256x4xbf16>, vector<256x4xbf16>, vector<256x4xbf16> -> vector<256x12xbf16>
    %c1_96 = arith.constant 1 : index
    %c0_97 = arith.constant 0 : index
    %c0_98 = arith.constant 0 : index
    %101 = vector.load %arg3[%c1_96, %c0_97, %c0_98] : memref<3x12x4xbf16, #tpu.memory_space<vmem>>, vector<1x12x4xbf16>
    %102 = vector.shape_cast %101 : vector<1x12x4xbf16> to vector<12x4xbf16>
    %cst_99 = arith.constant dense<0.000000e+00> : vector<256x4xf32>
    %103 = tpu.matmul %100, %102, %cst_99 {dimension_numbers = #tpu.dot_dimension_numbers<[1], [0], [0], [1], [0, 0, 1, 1], [], []>} : vector<256x12xbf16>, vector<12x4xbf16>, vector<256x4xf32> -> vector<256x4xf32>
    %104 = arith.addf %93, %103 : vector<256x4xf32>
    %c2_100 = arith.constant 2 : index
    %c0_101 = arith.constant 0 : index
    %c0_102 = arith.constant 0 : index
    %105 = vector.load %arg5[%c2_100, %c0_101, %c0_102] : memref<18x18x4xbf16, #tpu.memory_space<vmem>>, vector<16x16x4xbf16>
    %106 = vector.shape_cast %105 : vector<16x16x4xbf16> to vector<256x4xbf16>
    %c2_103 = arith.constant 2 : index
    %c1_104 = arith.constant 1 : index
    %c0_105 = arith.constant 0 : index
    %107 = vector.load %arg5[%c2_103, %c1_104, %c0_105] : memref<18x18x4xbf16, #tpu.memory_space<vmem>>, vector<16x16x4xbf16>
    %108 = vector.shape_cast %107 : vector<16x16x4xbf16> to vector<256x4xbf16>
    %c2_106 = arith.constant 2 : index
    %c2_107 = arith.constant 2 : index
    %c0_108 = arith.constant 0 : index
    %109 = vector.load %arg5[%c2_106, %c2_107, %c0_108] : memref<18x18x4xbf16, #tpu.memory_space<vmem>>, vector<16x16x4xbf16>
    %110 = vector.shape_cast %109 : vector<16x16x4xbf16> to vector<256x4xbf16>
    %111 = tpu.concatenate %106, %108, %110 in 1 : vector<256x4xbf16>, vector<256x4xbf16>, vector<256x4xbf16> -> vector<256x12xbf16>
    %c2_109 = arith.constant 2 : index
    %c0_110 = arith.constant 0 : index
    %c0_111 = arith.constant 0 : index
    %112 = vector.load %arg3[%c2_109, %c0_110, %c0_111] : memref<3x12x4xbf16, #tpu.memory_space<vmem>>, vector<1x12x4xbf16>
    %113 = vector.shape_cast %112 : vector<1x12x4xbf16> to vector<12x4xbf16>
    %cst_112 = arith.constant dense<0.000000e+00> : vector<256x4xf32>
    %114 = tpu.matmul %111, %113, %cst_112 {dimension_numbers = #tpu.dot_dimension_numbers<[1], [0], [0], [1], [0, 0, 1, 1], [], []>} : vector<256x12xbf16>, vector<12x4xbf16>, vector<256x4xf32> -> vector<256x4xf32>
    %115 = arith.addf %104, %114 : vector<256x4xf32>
    %cst_113 = arith.constant dense<0.000000e+00> : vector<4xf32>
    %116 = vector.multi_reduction <add>, %115, %cst_113 [0] : vector<256x4xf32> to vector<4xf32>
    %117 = vector.shape_cast %116 : vector<4xf32> to vector<1x4xf32>
    %cst_114 = arith.constant 3.906250e-03 : f32
    %118 = vector.broadcast %cst_114 : f32 to vector<1x4xf32>
    %119 = arith.mulf %117, %118 : vector<1x4xf32>
    %120 = vector.broadcast %119 : vector<1x4xf32> to vector<256x4xf32>
    %121 = arith.subf %115, %120 : vector<256x4xf32>
    %122 = arith.mulf %121, %121 : vector<256x4xf32>
    %cst_115 = arith.constant dense<0.000000e+00> : vector<4xf32>
    %123 = vector.multi_reduction <add>, %122, %cst_115 [0] : vector<256x4xf32> to vector<4xf32>
    %124 = vector.shape_cast %123 : vector<4xf32> to vector<1x4xf32>
    %cst_116 = arith.constant 3.906250e-03 : f32
    %125 = vector.broadcast %cst_116 : f32 to vector<1x4xf32>
    %126 = arith.mulf %124, %125 : vector<1x4xf32>
    %cst_117 = arith.constant 9.99999974E-6 : f32
    %127 = vector.broadcast %cst_117 : f32 to vector<1x4xf32>
    %128 = arith.addf %126, %127 : vector<1x4xf32>
    %129 = math.rsqrt %128 : vector<1x4xf32>
    %130 = vector.broadcast %129 : vector<1x4xf32> to vector<256x4xf32>
    %131 = arith.mulf %121, %130 : vector<256x4xf32>
    %132 = vector.shape_cast %1 : vector<16x16x4xbf16> to vector<256x4xbf16>
    %133 = arith.extf %132 : vector<256x4xbf16> to vector<256x4xf32>
    %134 = arith.addf %133, %131 : vector<256x4xf32>
    %135 = vector.shape_cast %134 : vector<256x4xf32> to vector<1x16x16x4xf32>
    %c0_118 = arith.constant 0 : index
    %c0_119 = arith.constant 0 : index
    %c0_120 = arith.constant 0 : index
    %c0_121 = arith.constant 0 : index
    %136 = vector.load %arg4[%c0_118, %c0_119, %c0_120, %c0_121] : memref<1x16x16x4xf32, #tpu.memory_space<vmem>>, vector<1x16x16x4xf32>
    tpu.vector_store %arg4[%c0_118, %c0_119, %c0_120, %c0_121], %135 {strides = array<i32>} : memref<1x16x16x4xf32, #tpu.memory_space<vmem>>, vector<1x16x16x4xf32>,
    return
  }
  func.func @transform_0(%arg0: i32) -> (i32, i32, i32, i32) {
    %c0_i32 = arith.constant 0 : i32
    %c0_i32_0 = arith.constant 0 : i32
    %c0_i32_1 = arith.constant 0 : i32
    %c0_i32_2 = arith.constant 0 : i32
    return %arg0, %c0_i32, %c0_i32_0, %c0_i32_1 : i32, i32, i32, i32
  }
  func.func @transform_1(%arg0: i32) -> (i32, i32, i32) {
    %c0_i32 = arith.constant 0 : i32
    %c0_i32_0 = arith.constant 0 : i32
    %c0_i32_1 = arith.constant 0 : i32
    %c0_i32_2 = arith.constant 0 : i32
    return %c0_i32, %c0_i32_0, %c0_i32_1 : i32, i32, i32
  }
  func.func @transform_2(%arg0: i32) -> (i32, i32, i32) {
    %c0_i32 = arith.constant 0 : i32
    %c0_i32_0 = arith.constant 0 : i32
    %c0_i32_1 = arith.constant 0 : i32
    %c0_i32_2 = arith.constant 0 : i32
    return %c0_i32, %c0_i32_0, %c0_i32_1 : i32, i32, i32
  }
  func.func @transform_3(%arg0: i32) -> (i32, i32, i32, i32) {
    %c0_i32 = arith.constant 0 : i32
    %c0_i32_0 = arith.constant 0 : i32
    %c0_i32_1 = arith.constant 0 : i32
    %c0_i32_2 = arith.constant 0 : i32
    return %arg0, %c0_i32, %c0_i32_0, %c0_i32_1 : i32, i32, i32, i32
  }
}

</mosaic_0001>

<llo_original>
// kernel: resblock_pallas.1
$region0: #{resblock_pallas.1}
  #allocation0 [shape = 'u32[]', space=smem, size = 0x4, offset = 0x4, fixed_abs, tag = 'smem constant byte address 0x4 - core index']
  #allocation1 [shape = 'u32[144,128]{1,0:T(1,128)}', space=vmem, size = 0x12000, scoped, tag = 'internal scratch']
  #allocation2 [shape = 'bf16[18,18,4]{2,1,0:T(8,128)(2,1)}', space=vmem, size = 0x1b000, scoped, tag = 'scratch operand']
  %s0 = inlined_call_operand.vmem [shape: bf16[2,16,16,4], index: 0, kind: input, shape index: {}]
  %s1 = inlined_call_operand.vmem [shape: bf16[3,12,4], index: 1, kind: input, shape index: {}]
  %s2 = inlined_call_operand.vmem [shape: bf16[3,12,4], index: 2, kind: input, shape index: {}]
  %s3 = inlined_call_operand.vmem [shape: f32[2,16,16,4], index: 3, kind: output, shape index: {}]
  %s4 = sld [smem:[#allocation0]]
  $region45: #{resblock_pallas.1} parent=0
    _
  %s6 = ssub.s32 1, %s4
  %s7 = scalar_select 0, %s6, %s4
  loop: start=0, step=1, limit=4
  $region2: #{resblock_pallas.1} parent=0 // loop_pre_header
    _
  $region3: #{resblock_pallas.1} parent=0 // loop_header
    %s9 = sphi 0, %s13
    %p10 = scmp.ge.s32.totalorder %s9, 4
    %s19 = sphi 0, %s21
    %s22 = sphi 0, %s19
    %s23 = sphi 0, %s22
    %s39 = sphi 0, %s23
    %s43 = sphi 0, %s43
    %s45 = sphi 0, %s43
    %s46 = sphi 0, %s45
    %s60 = sphi 0, %s46
    %s64 = sphi 0, %s64
    %s66 = sphi 0, %s64
    %s67 = sphi 0, %s66
    %s81 = sphi 0, %s67
    %s87 = sphi 0, %s89
    %s90 = sphi 0, %s87
    %s91 = sphi 0, %s90
    %s107 = sphi 0, %s91
  $region4: #{resblock_pallas.1} parent=0 // loop_header_branch
    %12 = sbr.rel (%p10) target = $region8
  $region5: #{resblock_pallas.1} parent=0 // loop_body
    %s14 = ssub.s32 %s9, 1
    %s15 = ssub.s32 %s9, 2
    %s16 = sadd.s32 %s9, 1
    %s17 = ssub.s32 %s9, %s16
    %p18 = scmp.eq.s32.totalorder %s17, 0
    %s20 = sadd.s32 %s19, 1
    %s21 = scalar_select %p18, %s19, %s20
    %p24 = pneg %p18
    %p25 = scmp.eq.s32.totalorder %s9, 1
    %p26 = por %p24, %p25
    %p27 = scmp.ne.s32.totalorder %s19, %s22
    %p28 = scmp.eq.s32.totalorder %s9, 0
    %p29 = por %p27, %p28
    %p30 = scmp.ne.s32.totalorder %s19, %s22
    %p31 = scmp.eq.s32.totalorder %s14, 1
    %p32 = por %p30, %p31
    %p33 = scmp.ne.s32.totalorder %s22, %s23
    %p34 = scmp.eq.s32.totalorder %s14, 0
    %p35 = por %p33, %p34
    %p36 = scmp.ne.s32.totalorder %s22, %s23
    %p37 = scmp.eq.s32.totalorder %s15, 1
    %p38 = por %p36, %p37
    %p40 = scmp.ne.s32.totalorder %s23, %s39
    %p41 = scmp.eq.s32.totalorder %s15, 0
    %p42 = por %p40, %p41
    %s44 = sadd.s32 %s43, 1
    %p47 = scmp.eq.s32.totalorder %s9, 1
    %p48 = scmp.ne.s32.totalorder %s43, %s45
    %p49 = scmp.eq.s32.totalorder %s9, 0
    %p50 = por %p48, %p49
    %p51 = scmp.ne.s32.totalorder %s43, %s45
    %p52 = scmp.eq.s32.totalorder %s14, 1
    %p53 = por %p51, %p52
    %p54 = scmp.ne.s32.totalorder %s45, %s46
    %p55 = scmp.eq.s32.totalorder %s14, 0
    %p56 = por %p54, %p55
    %p57 = scmp.ne.s32.totalorder %s45, %s46
    %p58 = scmp.eq.s32.totalorder %s15, 1
    %p59 = por %p57, %p58
    %p61 = scmp.ne.s32.totalorder %s46, %s60
    %p62 = scmp.eq.s32.totalorder %s15, 0
    %p63 = por %p61, %p62
    %s65 = sadd.s32 %s64, 1
    %p68 = scmp.eq.s32.totalorder %s9, 1
    %p69 = scmp.ne.s32.totalorder %s64, %s66
    %p70 = scmp.eq.s32.totalorder %s9, 0
    %p71 = por %p69, %p70
    %p72 = scmp.ne.s32.totalorder %s64, %s66
    %p73 = scmp.eq.s32.totalorder %s14, 1
    %p74 = por %p72, %p73
    %p75 = scmp.ne.s32.totalorder %s66, %s67
    %p76 = scmp.eq.s32.totalorder %s14, 0
    %p77 = por %p75, %p76
    %p78 = scmp.ne.s32.totalorder %s66, %s67
    %p79 = scmp.eq.s32.totalorder %s15, 1
    %p80 = por %p78, %p79
    %p82 = scmp.ne.s32.totalorder %s67, %s81
    %p83 = scmp.eq.s32.totalorder %s15, 0
    %p84 = por %p82, %p83
    %s85 = ssub.s32 %s9, %s16
    %p86 = scmp.eq.s32.totalorder %s85, 0
    %s88 = sadd.s32 %s87, 1
    %s89 = scalar_select %p86, %s87, %s88
    %p92 = pneg %p86
    %p93 = scmp.eq.s32.totalorder %s9, 1
    %p94 = por %p92, %p93
    %p95 = scmp.ne.s32.totalorder %s87, %s90
    %p96 = scmp.eq.s32.totalorder %s9, 0
    %p97 = por %p95, %p96
    %p98 = scmp.ne.s32.totalorder %s87, %s90
    %p99 = scmp.eq.s32.totalorder %s14, 1
    %p100 = por %p98, %p99
    %p101 = scmp.ne.s32.totalorder %s90, %s91
    %p102 = scmp.eq.s32.totalorder %s14, 0
    %p103 = por %p101, %p102
    %p104 = scmp.ne.s32.totalorder %s90, %s91
    %p105 = scmp.eq.s32.totalorder %s15, 1
    %p106 = por %p104, %p105
    %p108 = scmp.ne.s32.totalorder %s91, %s107
    %p109 = scmp.eq.s32.totalorder %s15, 0
    %p110 = por %p108, %p109
    %p111 = scmp.le.s32.totalorder 1, %s9
    %p112 = scmp.lt.s32.totalorder %s9, 3
    %p113 = pnand %p111, %p112
    %p114 = pneg %p113
    // Predicated region
    $region9: #{resblock_pallas.1} parent=5 // pred_check
      _
    $region10: #{resblock_pallas.1} parent=5 // pred_check_branch
      %116 = sbr.rel (%p113) target = $region12
    $region11: #{resblock_pallas.1} parent=5 // pred_region
      %s117 = ssub.s32 %s9, 1
      // Predicated region
      $region13: #{resblock_pallas.1} parent=11 // pred_check
        %p118 = pneg %p56
      $region14: #{resblock_pallas.1} parent=11 // pred_check_branch
        %120 = sbr.rel (%p118) target = $region16
      $region15: #{resblock_pallas.1} parent=11 // pred_region
        _
      $region16: #{resblock_pallas.1} parent=11 // pred_fallthru
        _
      // Predicated region
      $region17: #{resblock_pallas.1} parent=11 // pred_check
        %p121 = pneg %p77
      $region18: #{resblock_pallas.1} parent=11 // pred_check_branch
        %123 = sbr.rel (%p121) target = $region20
      $region19: #{resblock_pallas.1} parent=11 // pred_region
        _
      $region20: #{resblock_pallas.1} parent=11 // pred_fallthru
        _
    $region12: #{resblock_pallas.1} parent=5 // pred_fallthru
      _
    %p124 = scmp.lt.s32.totalorder %s9, 2
    // Predicated region
    $region21: #{resblock_pallas.1} parent=5 // pred_check
      %p125 = pneg %p124
    $region22: #{resblock_pallas.1} parent=5 // pred_check_branch
      %127 = sbr.rel (%p125) target = $region24
    $region23: #{resblock_pallas.1} parent=5 // pred_region
      // Predicated region
      $region25: #{resblock_pallas.1} parent=23 // pred_check
        %p128 = pneg %p29
      $region26: #{resblock_pallas.1} parent=23 // pred_check_branch
        %130 = sbr.rel (%p128) target = $region28
      $region27: #{resblock_pallas.1} parent=23 // pred_region
        %p131 = scmp.lt.s32.totalorder %s9, 1
        %s132 = scalar_select %p131, %s9, 1
        %s133 = smul.addr %s132, 32
        %s134 = smul.addr %s133, 4
        %s135 = scalar_lea.vmem %s0, %s134
      $region28: #{resblock_pallas.1} parent=23 // pred_fallthru
        _
    $region24: #{resblock_pallas.1} parent=5 // pred_fallthru
      _
    %p136 = scmp.le.s32.totalorder 1, %s9
    %p137 = scmp.lt.s32.totalorder %s9, 3
    %p138 = pnand %p136, %p137
    %p139 = pneg %p138
    // Predicated region
    $region29: #{resblock_pallas.1} parent=5 // pred_check
      _
    $region30: #{resblock_pallas.1} parent=5 // pred_check_branch
      %141 = sbr.rel (%p138) target = $region32
    $region31: #{resblock_pallas.1} parent=5 // pred_region
      %s142 = ssub.s32 %s9, 1
      %p143 = scmp.lt.s32.totalorder %s14, 1
      %s144 = scalar_select %p143, %s14, 1
      %s145 = smul.addr %s144, 32
      %s146 = smul.addr %s145, 4
      %s147 = scalar_lea.vmem %s0, %s146
      %p148 = pneg %p35
      %p149 = pneg %p32
      %p150 = pneg %p56
      %p151 = pneg %p53
      %p152 = pneg %p77
      %p153 = pneg %p74
      %p154 = pneg %p103
      %p155 = pneg %p100
      %p156 = scmp.lt.s32.totalorder %s14, 1
      %s157 = scalar_select %p156, %s14, 1
      %s158 = smul.addr %s157, 32
      %s159 = smul.addr %s158, 8
      %s160 = scalar_lea.vmem %s3, %s159
      %p161 = scmp.lt.s32.totalorder %s14, 1
      %s162 = scalar_select %p161, %s14, 1
      %s163 = smul.addr %s162, 32
      %s164 = smul.addr %s163, 4
      %s165 = scalar_lea.vmem %s0, %s164
      %p166 = scmp.lt.s32.totalorder %s14, 1
      %s167 = scalar_select %p166, %s14, 1
      %s168 = smul.addr %s167, 32
      %s169 = smul.addr %s168, 8
      %s170 = scalar_lea.vmem %s3, %s169
      %v172 = vld [vmem:[%s165] sm:$0xf]
      %v173 = vld [vmem:[%s165 + $0x4] sm:$0xf]
      %v174 = vld [vmem:[%s165 + $0x8] sm:$0xf]
      %v175 = vld [vmem:[%s165 + $0xc] sm:$0xf]
      %v176 = vld [vmem:[%s165 + $0x10] sm:$0xf]
      %v177 = vld [vmem:[%s165 + $0x14] sm:$0xf]
      %v178 = vld [vmem:[%s165 + $0x18] sm:$0xf]
      %v179 = vld [vmem:[%s165 + $0x1c] sm:$0xf]
      %v180 = vld [vmem:[%s165 + $0x20] sm:$0xf]
      %v181 = vld [vmem:[%s165 + $0x24] sm:$0xf]
      %v182 = vld [vmem:[%s165 + $0x28] sm:$0xf]
      %v183 = vld [vmem:[%s165 + $0x2c] sm:$0xf]
      %v184 = vld [vmem:[%s165 + $0x30] sm:$0xf]
      %v185 = vld [vmem:[%s165 + $0x34] sm:$0xf]
      %v186 = vld [vmem:[%s165 + $0x38] sm:$0xf]
      %v187 = vld [vmem:[%s165 + $0x3c] sm:$0xf]
      %v188 = vld [vmem:[%s165 + $0x40] sm:$0xf]
      %v189 = vld [vmem:[%s165 + $0x44] sm:$0xf]
      %v190 = vld [vmem:[%s165 + $0x48] sm:$0xf]
      %v191 = vld [vmem:[%s165 + $0x4c] sm:$0xf]
      %v192 = vld [vmem:[%s165 + $0x50] sm:$0xf]
      %v193 = vld [vmem:[%s165 + $0x54] sm:$0xf]
      %v194 = vld [vmem:[%s165 + $0x58] sm:$0xf]
      %v195 = vld [vmem:[%s165 + $0x5c] sm:$0xf]
      %v196 = vld [vmem:[%s165 + $0x60] sm:$0xf]
      %v197 = vld [vmem:[%s165 + $0x64] sm:$0xf]
      %v198 = vld [vmem:[%s165 + $0x68] sm:$0xf]
      %v199 = vld [vmem:[%s165 + $0x6c] sm:$0xf]
      %v200 = vld [vmem:[%s165 + $0x70] sm:$0xf]
      %v201 = vld [vmem:[%s165 + $0x74] sm:$0xf]
      %v202 = vld [vmem:[%s165 + $0x78] sm:$0xf]
      %v203 = vld [vmem:[%s165 + $0x7c] sm:$0xf]
      %vm204 = vsmask.f32 256
      %vm205 = vsmask.f32 4368
      %vm206 = vmor %vm204, %vm205
      %v208 = vshrl.u32 %v172, 16
      %v210 = vrot.slane %v208, 7
      %v211 = vshll.u32 %v172, 16
      %v213 = vor.u32 %v210, %v211
      %v214 = vrot.slane %v210, 4
      %v216 = vshrl.u32 %v173, 16
      %v218 = vrot.slane %v216, 7
      %v219 = vshll.u32 %v173, 16
      %v221 = vor.u32 %v218, %v219
      %v222 = vsel %vm206, %v214, %v221
      %v223 = vrot.slane %v218, 4
      %v225 = vshrl.u32 %v174, 16
      %v227 = vrot.slane %v225, 7
      %v228 = vshll.u32 %v174, 16
      %v230 = vor.u32 %v227, %v228
      %v231 = vrot.slane %v227, 4
      %v233 = vshrl.u32 %v175, 16
      %v235 = vrot.slane %v233, 7
      %v236 = vshll.u32 %v175, 16
      %v238 = vor.u32 %v235, %v236
      %v239 = vsel %vm206, %v231, %v238
      %v240 = vrot.slane %v235, 4
      %v242 = vshrl.u32 %v176, 16
      %v244 = vrot.slane %v242, 7
      %v245 = vshll.u32 %v176, 16
      %v247 = vor.u32 %v244, %v245
      %v248 = vrot.slane %v244, 4
      %v250 = vshrl.u32 %v177, 16
      %v252 = vrot.slane %v250, 7
      %v253 = vshll.u32 %v177, 16
      %v255 = vor.u32 %v252, %v253
      %v256 = vsel %vm206, %v248, %v255
      %v257 = vrot.slane %v252, 4
      %v259 = vshrl.u32 %v178, 16
      %v261 = vrot.slane %v259, 7
      %v262 = vshll.u32 %v178, 16
      %v264 = vor.u32 %v261, %v262
      %v265 = vrot.slane %v261, 4
      %v267 = vshrl.u32 %v179, 16
      %v269 = vrot.slane %v267, 7
      %v270 = vshll.u32 %v179, 16
      %v272 = vor.u32 %v269, %v270
      %v273 = vsel %vm206, %v265, %v272
      %v274 = vrot.slane %v269, 4
      %v276 = vshrl.u32 %v180, 16
      %v278 = vrot.slane %v276, 7
      %v279 = vshll.u32 %v180, 16
      %v281 = vor.u32 %v278, %v279
      %v282 = vrot.slane %v278, 4
      %v284 = vshrl.u32 %v181, 16
      %v286 = vrot.slane %v284, 7
      %v287 = vshll.u32 %v181, 16
      %v289 = vor.u32 %v286, %v287
      %v290 = vsel %vm206, %v282, %v289
      %v291 = vrot.slane %v286, 4
      %v293 = vshrl.u32 %v182, 16
      %v295 = vrot.slane %v293, 7
      %v296 = vshll.u32 %v182, 16
      %v298 = vor.u32 %v295, %v296
      %v299 = vrot.slane %v295, 4
      %v301 = vshrl.u32 %v183, 16
      %v303 = vrot.slane %v301, 7
      %v304 = vshll.u32 %v183, 16
      %v306 = vor.u32 %v303, %v304
      %v307 = vsel %vm206, %v299, %v306
      %v308 = vrot.slane %v303, 4
      %v310 = vshrl.u32 %v184, 16
      %v312 = vrot.slane %v310, 7
      %v313 = vshll.u32 %v184, 16
      %v315 = vor.u32 %v312, %v313
      %v316 = vrot.slane %v312, 4
      %v318 = vshrl.u32 %v185, 16
      %v320 = vrot.slane %v318, 7
      %v321 = vshll.u32 %v185, 16
      %v323 = vor.u32 %v320, %v321
      %v324 = vsel %vm206, %v316, %v323
      %v325 = vrot.slane %v320, 4
      %v327 = vshrl.u32 %v186, 16
      %v329 = vrot.slane %v327, 7
      %v330 = vshll.u32 %v186, 16
      %v332 = vor.u32 %v329, %v330
      %v333 = vrot.slane %v329, 4
      %v335 = vshrl.u32 %v187, 16
      %v337 = vrot.slane %v335, 7
      %v338 = vshll.u32 %v187, 16
      %v340 = vor.u32 %v337, %v338
      %v341 = vsel %vm206, %v333, %v340
      %v342 = vrot.slane %v337, 4
      %v344 = vshrl.u32 %v188, 16
      %v346 = vrot.slane %v344, 7
      %v347 = vshll.u32 %v188, 16
      %v349 = vor.u32 %v346, %v347
      %v350 = vrot.slane %v346, 4
      %v352 = vshrl.u32 %v189, 16
      %v354 = vrot.slane %v352, 7
      %v355 = vshll.u32 %v189, 16
      %v357 = vor.u32 %v354, %v355
      %v358 = vsel %vm206, %v350, %v357
      %v359 = vrot.slane %v354, 4
      %v361 = vshrl.u32 %v190, 16
      %v363 = vrot.slane %v361, 7
      %v364 = vshll.u32 %v190, 16
      %v366 = vor.u32 %v363, %v364
      %v367 = vrot.slane %v363, 4
      %v369 = vshrl.u32 %v191, 16
      %v371 = vrot.slane %v369, 7
      %v372 = vshll.u32 %v191, 16
      %v374 = vor.u32 %v371, %v372
      %v375 = vsel %vm206, %v367, %v374
      %v376 = vrot.slane %v371, 4
      %v378 = vshrl.u32 %v192, 16
      %v380 = vrot.slane %v378, 7
      %v381 = vshll.u32 %v192, 16
      %v383 = vor.u32 %v380, %v381
      %v384 = vrot.slane %v380, 4
      %v386 = vshrl.u32 %v193, 16
      %v388 = vrot.slane %v386, 7
      %v389 = vshll.u32 %v193, 16
      %v391 = vor.u32 %v388, %v389
      %v392 = vsel %vm206, %v384, %v391
      %v393 = vrot.slane %v388, 4
      %v395 = vshrl.u32 %v194, 16
      %v397 = vrot.slane %v395, 7
      %v398 = vshll.u32 %v194, 16
      %v400 = vor.u32 %v397, %v398
      %v401 = vrot.slane %v397, 4
      %v403 = vshrl.u32 %v195, 16
      %v405 = vrot.slane %v403, 7
      %v406 = vshll.u32 %v195, 16
      %v408 = vor.u32 %v405, %v406
      %v409 = vsel %vm206, %v401, %v408
      %v410 = vrot.slane %v405, 4
      %v412 = vshrl.u32 %v196, 16
      %v414 = vrot.slane %v412, 7
      %v415 = vshll.u32 %v196, 16
      %v417 = vor.u32 %v414, %v415
      %v418 = vrot.slane %v414, 4
      %v420 = vshrl.u32 %v197, 16
      %v422 = vrot.slane %v420, 7
      %v423 = vshll.u32 %v197, 16
      %v425 = vor.u32 %v422, %v423
      %v426 = vsel %vm206, %v418, %v425
      %v427 = vrot.slane %v422, 4
      %v429 = vshrl.u32 %v198, 16
      %v431 = vrot.slane %v429, 7
      %v432 = vshll.u32 %v198, 16
      %v434 = vor.u32 %v431, %v432
      %v435 = vrot.slane %v431, 4
      %v437 = vshrl.u32 %v199, 16
      %v439 = vrot.slane %v437, 7
      %v440 = vshll.u32 %v199, 16
      %v442 = vor.u32 %v439, %v440
      %v443 = vsel %vm206, %v435, %v442
      %v444 = vrot.slane %v439, 4
      %v446 = vshrl.u32 %v200, 16
      %v448 = vrot.slane %v446, 7
      %v449 = vshll.u32 %v200, 16
      %v451 = vor.u32 %v448, %v449
      %v452 = vrot.slane %v448, 4
      %v454 = vshrl.u32 %v201, 16
      %v456 = vrot.slane %v454, 7
      %v457 = vshll.u32 %v201, 16
      %v459 = vor.u32 %v456, %v457
      %v460 = vsel %vm206, %v452, %v459
      %v461 = vrot.slane %v456, 4
      %v463 = vshrl.u32 %v202, 16
      %v465 = vrot.slane %v463, 7
      %v466 = vshll.u32 %v202, 16
      %v468 = vor.u32 %v465, %v466
      %v469 = vrot.slane %v465, 4
      %v471 = vshrl.u32 %v203, 16
      %v473 = vrot.slane %v471, 7
      %v474 = vshll.u32 %v203, 16
      %v476 = vor.u32 %v473, %v474
      %v477 = vsel %vm206, %v469, %v476
      %v478 = vrot.slane %v473, 4
      %s527 = scalar_lea.vmem [#allocation2], 12
      %vm528 = vcmask 27648
      %vm529 = vsmask.f32 7938
      %vm530 = vmand %vm528, %vm529
      %v531 = vld [vmem:[%s527] sm:$0xf]
      %v532 = vsel %vm530, %v213, %v531
      %533 = vst [vmem:[%s527] sm:$0xf] %v532
      %vm534 = vcmask 27648
      %535 = vst.msk [vmem:[%s527 + $0x4] sm:$0xf] %vm534, %v222
      %vm536 = vcmask 24576
      %vm537 = vmand %vm536, %vm204
      %v538 = vld [vmem:[%s527 + $0x8] sm:$0x1]
      %v539 = vsel %vm537, %v223, %v538
      %540 = vst [vmem:[%s527 + $0x8] sm:$0x1] %v539
      %v541 = vld [vmem:[%s527 + $0xc] sm:$0xf]
      %v542 = vsel %vm530, %v230, %v541
      %543 = vst [vmem:[%s527 + $0xc] sm:$0xf] %v542
      %544 = vst.msk [vmem:[%s527 + $0x10] sm:$0xf] %vm534, %v239
      %v545 = vld [vmem:[%s527 + $0x14] sm:$0x1]
      %v546 = vsel %vm537, %v240, %v545
      %547 = vst [vmem:[%s527 + $0x14] sm:$0x1] %v546
      %v548 = vld [vmem:[%s527 + $0x18] sm:$0xf]
      %v549 = vsel %vm530, %v247, %v548
      %550 = vst [vmem:[%s527 + $0x18] sm:$0xf] %v549
      %551 = vst.msk [vmem:[%s527 + $0x1c] sm:$0xf] %vm534, %v256
      %v552 = vld [vmem:[%s527 + $0x20] sm:$0x1]
      %v553 = vsel %vm537, %v257, %v552
      %554 = vst [vmem:[%s527 + $0x20] sm:$0x1] %v553
      %v555 = vld [vmem:[%s527 + $0x24] sm:$0xf]
      %v556 = vsel %vm530, %v264, %v555
      %557 = vst [vmem:[%s527 + $0x24] sm:$0xf] %v556
      %558 = vst.msk [vmem:[%s527 + $0x28] sm:$0xf] %vm534, %v273
      %v559 = vld [vmem:[%s527 + $0x2c] sm:$0x1]
      %v560 = vsel %vm537, %v274, %v559
      %561 = vst [vmem:[%s527 + $0x2c] sm:$0x1] %v560
      %v562 = vld [vmem:[%s527 + $0x30] sm:$0xf]
      %v563 = vsel %vm530, %v281, %v562
      %564 = vst [vmem:[%s527 + $0x30] sm:$0xf] %v563
      %565 = vst.msk [vmem:[%s527 + $0x34] sm:$0xf] %vm534, %v290
      %v566 = vld [vmem:[%s527 + $0x38] sm:$0x1]
      %v567 = vsel %vm537, %v291, %v566
      %568 = vst [vmem:[%s527 + $0x38] sm:$0x1] %v567
      %v569 = vld [vmem:[%s527 + $0x3c] sm:$0xf]
      %v570 = vsel %vm530, %v298, %v569
      %571 = vst [vmem:[%s527 + $0x3c] sm:$0xf] %v570
      %572 = vst.msk [vmem:[%s527 + $0x40] sm:$0xf] %vm534, %v307
      %v573 = vld [vmem:[%s527 + $0x44] sm:$0x1]
      %v574 = vsel %vm537, %v308, %v573
      %575 = vst [vmem:[%s527 + $0x44] sm:$0x1] %v574
      %v576 = vld [vmem:[%s527 + $0x48] sm:$0xf]
      %v577 = vsel %vm530, %v315, %v576
      %578 = vst [vmem:[%s527 + $0x48] sm:$0xf] %v577
      %579 = vst.msk [vmem:[%s527 + $0x4c] sm:$0xf] %vm534, %v324
      %v580 = vld [vmem:[%s527 + $0x50] sm:$0x1]
      %v581 = vsel %vm537, %v325, %v580
      %582 = vst [vmem:[%s527 + $0x50] sm:$0x1] %v581
      %v583 = vld [vmem:[%s527 + $0x54] sm:$0xf]
      %v584 = vsel %vm530, %v332, %v583
      %585 = vst [vmem:[%s527 + $0x54] sm:$0xf] %v584
      %586 = vst.msk [vmem:[%s527 + $0x58] sm:$0xf] %vm534, %v341
      %v587 = vld [vmem:[%s527 + $0x5c] sm:$0x1]
      %v588 = vsel %vm537, %v342, %v587
      %589 = vst [vmem:[%s527 + $0x5c] sm:$0x1] %v588
      %v590 = vld [vmem:[%s527 + $0x60] sm:$0xf]
      %v591 = vsel %vm530, %v349, %v590
      %592 = vst [vmem:[%s527 + $0x60] sm:$0xf] %v591
      %593 = vst.msk [vmem:[%s527 + $0x64] sm:$0xf] %vm534, %v358
      %v594 = vld [vmem:[%s527 + $0x68] sm:$0x1]
      %v595 = vsel %vm537, %v359, %v594
      %596 = vst [vmem:[%s527 + $0x68] sm:$0x1] %v595
      %v597 = vld [vmem:[%s527 + $0x6c] sm:$0xf]
      %v598 = vsel %vm530, %v366, %v597
      %599 = vst [vmem:[%s527 + $0x6c] sm:$0xf] %v598
      %600 = vst.msk [vmem:[%s527 + $0x70] sm:$0xf] %vm534, %v375
      %v601 = vld [vmem:[%s527 + $0x74] sm:$0x1]
      %v602 = vsel %vm537, %v376, %v601
      %603 = vst [vmem:[%s527 + $0x74] sm:$0x1] %v602
      %v604 = vld [vmem:[%s527 + $0x78] sm:$0xf]
      %v605 = vsel %vm530, %v383, %v604
      %606 = vst [vmem:[%s527 + $0x78] sm:$0xf] %v605
      %607 = vst.msk [vmem:[%s527 + $0x7c] sm:$0xf] %vm534, %v392
      %v608 = vld [vmem:[%s527 + $0x80] sm:$0x1]
      %v609 = vsel %vm537, %v393, %v608
      %610 = vst [vmem:[%s527 + $0x80] sm:$0x1] %v609
      %v611 = vld [vmem:[%s527 + $0x84] sm:$0xf]
      %v612 = vsel %vm530, %v400, %v611
      %613 = vst [vmem:[%s527 + $0x84] sm:$0xf] %v612
      %614 = vst.msk [vmem:[%s527 + $0x88] sm:$0xf] %vm534, %v409
      %v615 = vld [vmem:[%s527 + $0x8c] sm:$0x1]
      %v616 = vsel %vm537, %v410, %v615
      %617 = vst [vmem:[%s527 + $0x8c] sm:$0x1] %v616
      %v618 = vld [vmem:[%s527 + $0x90] sm:$0xf]
      %v619 = vsel %vm530, %v417, %v618
      %620 = vst [vmem:[%s527 + $0x90] sm:$0xf] %v619
      %621 = vst.msk [vmem:[%s527 + $0x94] sm:$0xf] %vm534, %v426
      %v622 = vld [vmem:[%s527 + $0x98] sm:$0x1]
      %v623 = vsel %vm537, %v427, %v622
      %624 = vst [vmem:[%s527 + $0x98] sm:$0x1] %v623
      %v625 = vld [vmem:[%s527 + $0x9c] sm:$0xf]
      %v626 = vsel %vm530, %v434, %v625
      %627 = vst [vmem:[%s527 + $0x9c] sm:$0xf] %v626
      %628 = vst.msk [vmem:[%s527 + $0xa0] sm:$0xf] %vm534, %v443
      %v629 = vld [vmem:[%s527 + $0xa4] sm:$0x1]
      %v630 = vsel %vm537, %v444, %v629
      %631 = vst [vmem:[%s527 + $0xa4] sm:$0x1] %v630
      %v632 = vld [vmem:[%s527 + $0xa8] sm:$0xf]
      %v633 = vsel %vm530, %v451, %v632
      %634 = vst [vmem:[%s527 + $0xa8] sm:$0xf] %v633
      %635 = vst.msk [vmem:[%s527 + $0xac] sm:$0xf] %vm534, %v460
      %v636 = vld [vmem:[%s527 + $0xb0] sm:$0x1]
      %v637 = vsel %vm537, %v461, %v636
      %638 = vst [vmem:[%s527 + $0xb0] sm:$0x1] %v637
      %v639 = vld [vmem:[%s527 + $0xb4] sm:$0xf]
      %v640 = vsel %vm530, %v468, %v639
      %641 = vst [vmem:[%s527 + $0xb4] sm:$0xf] %v640
      %642 = vst.msk [vmem:[%s527 + $0xb8] sm:$0xf] %vm534, %v477
      %v643 = vld [vmem:[%s527 + $0xbc] sm:$0x1]
      %v644 = vsel %vm537, %v478, %v643
      %645 = vst [vmem:[%s527 + $0xbc] sm:$0x1] %v644
      %v646 = vrot.slane %v208, 4
      %v647 = vrot.slane %v646, 4
      %v648 = vrot.slane %v225, 4
      %v649 = vrot.slane %v648, 4
      %v650 = vrot.slane %v242, 4
      %v651 = vrot.slane %v650, 4
      %v652 = vrot.slane %v259, 4
      %v653 = vrot.slane %v652, 4
      %v654 = vrot.slane %v276, 4
      %v655 = vrot.slane %v654, 4
      %v656 = vrot.slane %v293, 4
      %v657 = vrot.slane %v656, 4
      %v658 = vrot.slane %v310, 4
      %v659 = vrot.slane %v658, 4
      %v660 = vrot.slane %v327, 4
      %v661 = vrot.slane %v660, 4
      %v662 = vrot.slane %v344, 4
      %v663 = vrot.slane %v662, 4
      %v664 = vrot.slane %v361, 4
      %v665 = vrot.slane %v664, 4
      %v666 = vrot.slane %v378, 4
      %v667 = vrot.slane %v666, 4
      %v668 = vrot.slane %v395, 4
      %v669 = vrot.slane %v668, 4
      %v670 = vrot.slane %v412, 4
      %v671 = vrot.slane %v670, 4
      %v672 = vrot.slane %v429, 4
      %v673 = vrot.slane %v672, 4
      %v674 = vrot.slane %v446, 4
      %v675 = vrot.slane %v674, 4
      %v676 = vrot.slane %v463, 4
      %v677 = vrot.slane %v676, 4
      %v694 = vld [vmem:[%s527] sm:$0x1]
      %v695 = vsel %vm537, %v647, %v694
      %696 = vst [vmem:[%s527] sm:$0x1] %v695
      %v697 = vld [vmem:[%s527 + $0xc] sm:$0x1]
      %v698 = vsel %vm537, %v649, %v697
      %699 = vst [vmem:[%s527 + $0xc] sm:$0x1] %v698
      %v700 = vld [vmem:[%s527 + $0x18] sm:$0x1]
      %v701 = vsel %vm537, %v651, %v700
      %702 = vst [vmem:[%s527 + $0x18] sm:$0x1] %v701
      %v703 = vld [vmem:[%s527 + $0x24] sm:$0x1]
      %v704 = vsel %vm537, %v653, %v703
      %705 = vst [vmem:[%s527 + $0x24] sm:$0x1] %v704
      %v706 = vld [vmem:[%s527 + $0x30] sm:$0x1]
      %v707 = vsel %vm537, %v655, %v706
      %708 = vst [vmem:[%s527 + $0x30] sm:$0x1] %v707
      %v709 = vld [vmem:[%s527 + $0x3c] sm:$0x1]
      %v710 = vsel %vm537, %v657, %v709
      %711 = vst [vmem:[%s527 + $0x3c] sm:$0x1] %v710
      %v712 = vld [vmem:[%s527 + $0x48] sm:$0x1]
      %v713 = vsel %vm537, %v659, %v712
      %714 = vst [vmem:[%s527 + $0x48] sm:$0x1] %v713
      %v715 = vld [vmem:[%s527 + $0x54] sm:$0x1]
      %v716 = vsel %vm537, %v661, %v715
      %717 = vst [vmem:[%s527 + $0x54] sm:$0x1] %v716
      %v718 = vld [vmem:[%s527 + $0x60] sm:$0x1]
      %v719 = vsel %vm537, %v663, %v718
      %720 = vst [vmem:[%s527 + $0x60] sm:$0x1] %v719
      %v721 = vld [vmem:[%s527 + $0x6c] sm:$0x1]
      %v722 = vsel %vm537, %v665, %v721
      %723 = vst [vmem:[%s527 + $0x6c] sm:$0x1] %v722
      %v724 = vld [vmem:[%s527 + $0x78] sm:$0x1]
      %v725 = vsel %vm537, %v667, %v724
      %726 = vst [vmem:[%s527 + $0x78] sm:$0x1] %v725
      %v727 = vld [vmem:[%s527 + $0x84] sm:$0x1]
      %v728 = vsel %vm537, %v669, %v727
      %729 = vst [vmem:[%s527 + $0x84] sm:$0x1] %v728
      %v730 = vld [vmem:[%s527 + $0x90] sm:$0x1]
      %v731 = vsel %vm537, %v671, %v730
      %732 = vst [vmem:[%s527 + $0x90] sm:$0x1] %v731
      %v733 = vld [vmem:[%s527 + $0x9c] sm:$0x1]
      %v734 = vsel %vm537, %v673, %v733
      %735 = vst [vmem:[%s527 + $0x9c] sm:$0x1] %v734
      %v736 = vld [vmem:[%s527 + $0xa8] sm:$0x1]
      %v737 = vsel %vm537, %v675, %v736
      %738 = vst [vmem:[%s527 + $0xa8] sm:$0x1] %v737
      %v739 = vld [vmem:[%s527 + $0xb4] sm:$0x1]
      %v740 = vsel %vm537, %v677, %v739
      %741 = vst [vmem:[%s527 + $0xb4] sm:$0x1] %v740
      %v742 = vrot.slane %v219, 7
      %v743 = vrot.slane %v742, 4
      %v744 = vrot.slane %v236, 7
      %v745 = vrot.slane %v744, 4
      %v746 = vrot.slane %v253, 7
      %v747 = vrot.slane %v746, 4
      %v748 = vrot.slane %v270, 7
      %v749 = vrot.slane %v748, 4
      %v750 = vrot.slane %v287, 7
      %v751 = vrot.slane %v750, 4
      %v752 = vrot.slane %v304, 7
      %v753 = vrot.slane %v752, 4
      %v754 = vrot.slane %v321, 7
      %v755 = vrot.slane %v754, 4
      %v756 = vrot.slane %v338, 7
      %v757 = vrot.slane %v756, 4
      %v758 = vrot.slane %v355, 7
      %v759 = vrot.slane %v758, 4
      %v760 = vrot.slane %v372, 7
      %v761 = vrot.slane %v760, 4
      %v762 = vrot.slane %v389, 7
      %v763 = vrot.slane %v762, 4
      %v764 = vrot.slane %v406, 7
      %v765 = vrot.slane %v764, 4
      %v766 = vrot.slane %v423, 7
      %v767 = vrot.slane %v766, 4
      %v768 = vrot.slane %v440, 7
      %v769 = vrot.slane %v768, 4
      %v770 = vrot.slane %v457, 7
      %v771 = vrot.slane %v770, 4
      %v772 = vrot.slane %v474, 7
      %v773 = vrot.slane %v772, 4
      %vm790 = vmand %vm536, %vm529
      %v791 = vld [vmem:[%s527 + $0x8] sm:$0x1]
      %v792 = vsel %vm790, %v743, %v791
      %793 = vst [vmem:[%s527 + $0x8] sm:$0x1] %v792
      %v794 = vld [vmem:[%s527 + $0x14] sm:$0x1]
      %v795 = vsel %vm790, %v745, %v794
      %796 = vst [vmem:[%s527 + $0x14] sm:$0x1] %v795
      %v797 = vld [vmem:[%s527 + $0x20] sm:$0x1]
      %v798 = vsel %vm790, %v747, %v797
      %799 = vst [vmem:[%s527 + $0x20] sm:$0x1] %v798
      %v800 = vld [vmem:[%s527 + $0x2c] sm:$0x1]
      %v801 = vsel %vm790, %v749, %v800
      %802 = vst [vmem:[%s527 + $0x2c] sm:$0x1] %v801
      %v803 = vld [vmem:[%s527 + $0x38] sm:$0x1]
      %v804 = vsel %vm790, %v751, %v803
      %805 = vst [vmem:[%s527 + $0x38] sm:$0x1] %v804
      %v806 = vld [vmem:[%s527 + $0x44] sm:$0x1]
      %v807 = vsel %vm790, %v753, %v806
      %808 = vst [vmem:[%s527 + $0x44] sm:$0x1] %v807
      %v809 = vld [vmem:[%s527 + $0x50] sm:$0x1]
      %v810 = vsel %vm790, %v755, %v809
      %811 = vst [vmem:[%s527 + $0x50] sm:$0x1] %v810
      %v812 = vld [vmem:[%s527 + $0x5c] sm:$0x1]
      %v813 = vsel %vm790, %v757, %v812
      %814 = vst [vmem:[%s527 + $0x5c] sm:$0x1] %v813
      %v815 = vld [vmem:[%s527 + $0x68] sm:$0x1]
      %v816 = vsel %vm790, %v759, %v815
      %817 = vst [vmem:[%s527 + $0x68] sm:$0x1] %v816
      %v818 = vld [vmem:[%s527 + $0x74] sm:$0x1]
      %v819 = vsel %vm790, %v761, %v818
      %820 = vst [vmem:[%s527 + $0x74] sm:$0x1] %v819
      %v821 = vld [vmem:[%s527 + $0x80] sm:$0x1]
      %v822 = vsel %vm790, %v763, %v821
      %823 = vst [vmem:[%s527 + $0x80] sm:$0x1] %v822
      %v824 = vld [vmem:[%s527 + $0x8c] sm:$0x1]
      %v825 = vsel %vm790, %v765, %v824
      %826 = vst [vmem:[%s527 + $0x8c] sm:$0x1] %v825
      %v827 = vld [vmem:[%s527 + $0x98] sm:$0x1]
      %v828 = vsel %vm790, %v767, %v827
      %829 = vst [vmem:[%s527 + $0x98] sm:$0x1] %v828
      %v830 = vld [vmem:[%s527 + $0xa4] sm:$0x1]
      %v831 = vsel %vm790, %v769, %v830
      %832 = vst [vmem:[%s527 + $0xa4] sm:$0x1] %v831
      %v833 = vld [vmem:[%s527 + $0xb0] sm:$0x1]
      %v834 = vsel %vm790, %v771, %v833
      %835 = vst [vmem:[%s527 + $0xb0] sm:$0x1] %v834
      %v836 = vld [vmem:[%s527 + $0xbc] sm:$0x1]
      %v837 = vsel %vm790, %v773, %v836
      %838 = vst [vmem:[%s527 + $0xbc] sm:$0x1] %v837
      %v840 = vunpack.c.l.b16 %v174
      %v841 = vpack.c.b16 %v840, %v840
      %v843 = vshrl.u32 %v841, 16
      %v847 = vunpack.c.l.b16 %v175
      %v848 = vpack.c.b16 %v847, %v840
      %v850 = vshrl.u32 %v848, 16
      %v852 = vrot.slane %v850, 7
      %v853 = vshll.u32 %v848, 16
      %v855 = vor.u32 %v852, %v853
      %v858 = vpack.c.b16 %v847, %v847
      %v860 = vshll.u32 %v858, 16
      %v862 = vrot.slane %v860, 3
      %vm864 = vcmask 1040384
      %vm865 = vmand %vm864, %vm204
      %v866 = vsel %vm865, %v843, %v855
      %v867 = vsel %vm865, %v852, %v862
      %v870 = vunpack.c.l.b16 %v866
      %v871 = vunpack.c.h.b16 %v866
      %v872 = vunpack.c.l.b16 %v867
      %v873 = vpack.c.b16 %v870, %v870
      %v874 = vpack.c.b16 %v871, %v871
      %v875 = vpack.c.b16 %v872, %v872
      %879 = vst.msk [vmem:[#allocation2] sm:$0xf] %vm534, %v873
      %880 = vst.msk [vmem:[#allocation2 + $0x4] sm:$0xf] %vm534, %v874
      %vm881 = vcmask 24576
      %882 = vst.msk [vmem:[#allocation2 + $0x8] sm:$0x1] %vm881, %v875
      %v884 = vunpack.c.l.b16 %v200
      %v885 = vpack.c.b16 %v884, %v884
      %v887 = vshrl.u32 %v885, 16
      %v891 = vunpack.c.l.b16 %v201
      %v892 = vpack.c.b16 %v891, %v884
      %v894 = vshrl.u32 %v892, 16
      %v896 = vrot.slane %v894, 7
      %v897 = vshll.u32 %v892, 16
      %v899 = vor.u32 %v896, %v897
      %v902 = vpack.c.b16 %v891, %v891
      %v904 = vshll.u32 %v902, 16
      %v906 = vrot.slane %v904, 3
      %v908 = vsel %vm865, %v887, %v899
      %v909 = vsel %vm865, %v896, %v906
      %v912 = vunpack.c.l.b16 %v908
      %v913 = vunpack.c.h.b16 %v908
      %v914 = vunpack.c.l.b16 %v909
      %v915 = vpack.c.b16 %v912, %v912
      %v916 = vpack.c.b16 %v913, %v913
      %v917 = vpack.c.b16 %v914, %v914
      %s921 = scalar_lea.vmem [#allocation2], 204
      %922 = vst.msk [vmem:[%s921] sm:$0xf] %vm534, %v915
      %923 = vst.msk [vmem:[%s921 + $0x4] sm:$0xf] %vm534, %v916
      %924 = vst.msk [vmem:[%s921 + $0x8] sm:$0x1] %vm881, %v917
      %v925 = vld [vmem:[#allocation2] sm:$0xf]
      %v926 = vld [vmem:[#allocation2 + $0x4] sm:$0xf]
      %v927 = vld [vmem:[#allocation2 + $0xc] sm:$0xf]
      %v928 = vld [vmem:[#allocation2 + $0x10] sm:$0xf]
      %v929 = vld [vmem:[#allocation2 + $0x18] sm:$0xf]
      %v930 = vld [vmem:[#allocation2 + $0x1c] sm:$0xf]
      %v931 = vld [vmem:[#allocation2 + $0x24] sm:$0xf]
      %v932 = vld [vmem:[#allocation2 + $0x28] sm:$0xf]
      %v933 = vld [vmem:[#allocation2 + $0x30] sm:$0xf]
      %v934 = vld [vmem:[#allocation2 + $0x34] sm:$0xf]
      %v935 = vld [vmem:[#allocation2 + $0x3c] sm:$0xf]
      %v936 = vld [vmem:[#allocation2 + $0x40] sm:$0xf]
      %v937 = vld [vmem:[#allocation2 + $0x48] sm:$0xf]
      %v938 = vld [vmem:[#allocation2 + $0x4c] sm:$0xf]
      %v939 = vld [vmem:[#allocation2 + $0x54] sm:$0xf]
      %v940 = vld [vmem:[#allocation2 + $0x58] sm:$0xf]
      %v941 = vld [vmem:[#allocation2 + $0x60] sm:$0xf]
      %v942 = vld [vmem:[#allocation2 + $0x64] sm:$0xf]
      %v943 = vld [vmem:[#allocation2 + $0x6c] sm:$0xf]
      %v944 = vld [vmem:[#allocation2 + $0x70] sm:$0xf]
      %v945 = vld [vmem:[#allocation2 + $0x78] sm:$0xf]
      %v946 = vld [vmem:[#allocation2 + $0x7c] sm:$0xf]
      %v947 = vld [vmem:[#allocation2 + $0x84] sm:$0xf]
      %v948 = vld [vmem:[#allocation2 + $0x88] sm:$0xf]
      %v949 = vld [vmem:[#allocation2 + $0x90] sm:$0xf]
      %v950 = vld [vmem:[#allocation2 + $0x94] sm:$0xf]
      %v951 = vld [vmem:[#allocation2 + $0x9c] sm:$0xf]
      %v952 = vld [vmem:[#allocation2 + $0xa0] sm:$0xf]
      %v953 = vld [vmem:[#allocation2 + $0xa8] sm:$0xf]
      %v954 = vld [vmem:[#allocation2 + $0xac] sm:$0xf]
      %v955 = vld [vmem:[#allocation2 + $0xb4] sm:$0xf]
      %v956 = vld [vmem:[#allocation2 + $0xb8] sm:$0xf]
      %v957 = vld [vmem:[#allocation2 + $0x8] sm:$0x1]
      %v958 = vld [vmem:[#allocation2 + $0x14] sm:$0x1]
      %v959 = vld [vmem:[#allocation2 + $0x20] sm:$0x1]
      %v960 = vld [vmem:[#allocation2 + $0x2c] sm:$0x1]
      %v961 = vld [vmem:[#allocation2 + $0x38] sm:$0x1]
      %v962 = vld [vmem:[#allocation2 + $0x44] sm:$0x1]
      %v963 = vld [vmem:[#allocation2 + $0x50] sm:$0x1]
      %v964 = vld [vmem:[#allocation2 + $0x5c] sm:$0x1]
      %v965 = vld [vmem:[#allocation2 + $0x68] sm:$0x1]
      %v966 = vld [vmem:[#allocation2 + $0x74] sm:$0x1]
      %v967 = vld [vmem:[#allocation2 + $0x80] sm:$0x1]
      %v968 = vld [vmem:[#allocation2 + $0x8c] sm:$0x1]
      %v969 = vld [vmem:[#allocation2 + $0x98] sm:$0x1]
      %v970 = vld [vmem:[#allocation2 + $0xa4] sm:$0x1]
      %v971 = vld [vmem:[#allocation2 + $0xb0] sm:$0x1]
      %v972 = vld [vmem:[#allocation2 + $0xbc] sm:$0x1]
      %vm973 = vsmask.f32 3328
      %vm974 = vsmask.f32 7440
      %vm975 = vmor %vm973, %vm974
      %v977 = vshrl.u32 %v925, 16
      %v979 = vrot.slane %v977, 4
      %v980 = vshll.u32 %v925, 16
      %v982 = vrot.slane %v980, 5
      %v983 = vor.u32 %v979, %v982
      %v984 = vrot.slane %v983, 4
      %v986 = vshll.u32 %v926, 16
      %v988 = vrot.slane %v986, 5
      %v989 = vsel %vm975, %v984, %v988
      %v990 = vshrl.u32 %v926, 16
      %v992 = vrot.slane %v990, 4
      %v993 = vor.u32 %v992, %v988
      %v994 = vrot.slane %v993, 4
      %v996 = vshll.u32 %v957, 16
      %v998 = vrot.slane %v996, 5
      %v999 = vsel %vm975, %v994, %v998
      %v1001 = vshrl.u32 %v927, 16
      %v1003 = vrot.slane %v1001, 4
      %v1004 = vshll.u32 %v927, 16
      %v1006 = vrot.slane %v1004, 5
      %v1007 = vor.u32 %v1003, %v1006
      %v1008 = vrot.slane %v1007, 4
      %v1010 = vshll.u32 %v928, 16
      %v1012 = vrot.slane %v1010, 5
      %v1013 = vsel %vm975, %v1008, %v1012
      %v1014 = vshrl.u32 %v928, 16
      %v1016 = vrot.slane %v1014, 4
      %v1017 = vor.u32 %v1016, %v1012
      %v1018 = vrot.slane %v1017, 4
      %v1020 = vshll.u32 %v958, 16
      %v1022 = vrot.slane %v1020, 5
      %v1023 = vsel %vm975, %v1018, %v1022
      %v1025 = vshrl.u32 %v929, 16
      %v1027 = vrot.slane %v1025, 4
      %v1028 = vshll.u32 %v929, 16
      %v1030 = vrot.slane %v1028, 5
      %v1031 = vor.u32 %v1027, %v1030
      %v1032 = vrot.slane %v1031, 4
      %v1034 = vshll.u32 %v930, 16
      %v1036 = vrot.slane %v1034, 5
      %v1037 = vsel %vm975, %v1032, %v1036
      %v1038 = vshrl.u32 %v930, 16
      %v1040 = vrot.slane %v1038, 4
      %v1041 = vor.u32 %v1040, %v1036
      %v1042 = vrot.slane %v1041, 4
      %v1044 = vshll.u32 %v959, 16
      %v1046 = vrot.slane %v1044, 5
      %v1047 = vsel %vm975, %v1042, %v1046
      %v1049 = vshrl.u32 %v931, 16
      %v1051 = vrot.slane %v1049, 4
      %v1052 = vshll.u32 %v931, 16
      %v1054 = vrot.slane %v1052, 5
      %v1055 = vor.u32 %v1051, %v1054
      %v1056 = vrot.slane %v1055, 4
      %v1058 = vshll.u32 %v932, 16
      %v1060 = vrot.slane %v1058, 5
      %v1061 = vsel %vm975, %v1056, %v1060
      %v1062 = vshrl.u32 %v932, 16
      %v1064 = vrot.slane %v1062, 4
      %v1065 = vor.u32 %v1064, %v1060
      %v1066 = vrot.slane %v1065, 4
      %v1068 = vshll.u32 %v960, 16
      %v1070 = vrot.slane %v1068, 5
      %v1071 = vsel %vm975, %v1066, %v1070
      %v1073 = vshrl.u32 %v933, 16
      %v1075 = vrot.slane %v1073, 4
      %v1076 = vshll.u32 %v933, 16
      %v1078 = vrot.slane %v1076, 5
      %v1079 = vor.u32 %v1075, %v1078
      %v1080 = vrot.slane %v1079, 4
      %v1082 = vshll.u32 %v934, 16
      %v1084 = vrot.slane %v1082, 5
      %v1085 = vsel %vm975, %v1080, %v1084
      %v1086 = vshrl.u32 %v934, 16
      %v1088 = vrot.slane %v1086, 4
      %v1089 = vor.u32 %v1088, %v1084
      %v1090 = vrot.slane %v1089, 4
      %v1092 = vshll.u32 %v961, 16
      %v1094 = vrot.slane %v1092, 5
      %v1095 = vsel %vm975, %v1090, %v1094
      %v1097 = vshrl.u32 %v935, 16
      %v1099 = vrot.slane %v1097, 4
      %v1100 = vshll.u32 %v935, 16
      %v1102 = vrot.slane %v1100, 5
      %v1103 = vor.u32 %v1099, %v1102
      %v1104 = vrot.slane %v1103, 4
      %v1106 = vshll.u32 %v936, 16
      %v1108 = vrot.slane %v1106, 5
      %v1109 = vsel %vm975, %v1104, %v1108
      %v1110 = vshrl.u32 %v936, 16
      %v1112 = vrot.slane %v1110, 4
      %v1113 = vor.u32 %v1112, %v1108
      %v1114 = vrot.slane %v1113, 4
      %v1116 = vshll.u32 %v962, 16
      %v1118 = vrot.slane %v1116, 5
      %v1119 = vsel %vm975, %v1114, %v1118
      %v1121 = vshrl.u32 %v937, 16
      %v1123 = vrot.slane %v1121, 4
      %v1124 = vshll.u32 %v937, 16
      %v1126 = vrot.slane %v1124, 5
      %v1127 = vor.u32 %v1123, %v1126
      %v1128 = vrot.slane %v1127, 4
      %v1130 = vshll.u32 %v938, 16
      %v1132 = vrot.slane %v1130, 5
      %v1133 = vsel %vm975, %v1128, %v1132
      %v1134 = vshrl.u32 %v938, 16
      %v1136 = vrot.slane %v1134, 4
      %v1137 = vor.u32 %v1136, %v1132
      %v1138 = vrot.slane %v1137, 4
      %v1140 = vshll.u32 %v963, 16
      %v1142 = vrot.slane %v1140, 5
      %v1143 = vsel %vm975, %v1138, %v1142
      %v1145 = vshrl.u32 %v939, 16
      %v1147 = vrot.slane %v1145, 4
      %v1148 = vshll.u32 %v939, 16
      %v1150 = vrot.slane %v1148, 5
      %v1151 = vor.u32 %v1147, %v1150
      %v1152 = vrot.slane %v1151, 4
      %v1154 = vshll.u32 %v940, 16
      %v1156 = vrot.slane %v1154, 5
      %v1157 = vsel %vm975, %v1152, %v1156
      %v1158 = vshrl.u32 %v940, 16
      %v1160 = vrot.slane %v1158, 4
      %v1161 = vor.u32 %v1160, %v1156
      %v1162 = vrot.slane %v1161, 4
      %v1164 = vshll.u32 %v964, 16
      %v1166 = vrot.slane %v1164, 5
      %v1167 = vsel %vm975, %v1162, %v1166
      %v1169 = vshrl.u32 %v941, 16
      %v1171 = vrot.slane %v1169, 4
      %v1172 = vshll.u32 %v941, 16
      %v1174 = vrot.slane %v1172, 5
      %v1175 = vor.u32 %v1171, %v1174
      %v1176 = vrot.slane %v1175, 4
      %v1178 = vshll.u32 %v942, 16
      %v1180 = vrot.slane %v1178, 5
      %v1181 = vsel %vm975, %v1176, %v1180
      %v1182 = vshrl.u32 %v942, 16
      %v1184 = vrot.slane %v1182, 4
      %v1185 = vor.u32 %v1184, %v1180
      %v1186 = vrot.slane %v1185, 4
      %v1188 = vshll.u32 %v965, 16
      %v1190 = vrot.slane %v1188, 5
      %v1191 = vsel %vm975, %v1186, %v1190
      %v1193 = vshrl.u32 %v943, 16
      %v1195 = vrot.slane %v1193, 4
      %v1196 = vshll.u32 %v943, 16
      %v1198 = vrot.slane %v1196, 5
      %v1199 = vor.u32 %v1195, %v1198
      %v1200 = vrot.slane %v1199, 4
      %v1202 = vshll.u32 %v944, 16
      %v1204 = vrot.slane %v1202, 5
      %v1205 = vsel %vm975, %v1200, %v1204
      %v1206 = vshrl.u32 %v944, 16
      %v1208 = vrot.slane %v1206, 4
      %v1209 = vor.u32 %v1208, %v1204
      %v1210 = vrot.slane %v1209, 4
      %v1212 = vshll.u32 %v966, 16
      %v1214 = vrot.slane %v1212, 5
      %v1215 = vsel %vm975, %v1210, %v1214
      %v1217 = vshrl.u32 %v945, 16
      %v1219 = vrot.slane %v1217, 4
      %v1220 = vshll.u32 %v945, 16
      %v1222 = vrot.slane %v1220, 5
      %v1223 = vor.u32 %v1219, %v1222
      %v1224 = vrot.slane %v1223, 4
      %v1226 = vshll.u32 %v946, 16
      %v1228 = vrot.slane %v1226, 5
      %v1229 = vsel %vm975, %v1224, %v1228
      %v1230 = vshrl.u32 %v946, 16
      %v1232 = vrot.slane %v1230, 4
      %v1233 = vor.u32 %v1232, %v1228
      %v1234 = vrot.slane %v1233, 4
      %v1236 = vshll.u32 %v967, 16
      %v1238 = vrot.slane %v1236, 5
      %v1239 = vsel %vm975, %v1234, %v1238
      %v1241 = vshrl.u32 %v947, 16
      %v1243 = vrot.slane %v1241, 4
      %v1244 = vshll.u32 %v947, 16
      %v1246 = vrot.slane %v1244, 5
      %v1247 = vor.u32 %v1243, %v1246
      %v1248 = vrot.slane %v1247, 4
      %v1250 = vshll.u32 %v948, 16
      %v1252 = vrot.slane %v1250, 5
      %v1253 = vsel %vm975, %v1248, %v1252
      %v1254 = vshrl.u32 %v948, 16
      %v1256 = vrot.slane %v1254, 4
      %v1257 = vor.u32 %v1256, %v1252
      %v1258 = vrot.slane %v1257, 4
      %v1260 = vshll.u32 %v968, 16
      %v1262 = vrot.slane %v1260, 5
      %v1263 = vsel %vm975, %v1258, %v1262
      %v1265 = vshrl.u32 %v949, 16
      %v1267 = vrot.slane %v1265, 4
      %v1268 = vshll.u32 %v949, 16
      %v1270 = vrot.slane %v1268, 5
      %v1271 = vor.u32 %v1267, %v1270
      %v1272 = vrot.slane %v1271, 4
      %v1274 = vshll.u32 %v950, 16
      %v1276 = vrot.slane %v1274, 5
      %v1277 = vsel %vm975, %v1272, %v1276
      %v1278 = vshrl.u32 %v950, 16
      %v1280 = vrot.slane %v1278, 4
      %v1281 = vor.u32 %v1280, %v1276
      %v1282 = vrot.slane %v1281, 4
      %v1284 = vshll.u32 %v969, 16
      %v1286 = vrot.slane %v1284, 5
      %v1287 = vsel %vm975, %v1282, %v1286
      %v1289 = vshrl.u32 %v951, 16
      %v1291 = vrot.slane %v1289, 4
      %v1292 = vshll.u32 %v951, 16
      %v1294 = vrot.slane %v1292, 5
      %v1295 = vor.u32 %v1291, %v1294
      %v1296 = vrot.slane %v1295, 4
      %v1298 = vshll.u32 %v952, 16
      %v1300 = vrot.slane %v1298, 5
      %v1301 = vsel %vm975, %v1296, %v1300
      %v1302 = vshrl.u32 %v952, 16
      %v1304 = vrot.slane %v1302, 4
      %v1305 = vor.u32 %v1304, %v1300
      %v1306 = vrot.slane %v1305, 4
      %v1308 = vshll.u32 %v970, 16
      %v1310 = vrot.slane %v1308, 5
      %v1311 = vsel %vm975, %v1306, %v1310
      %v1313 = vshrl.u32 %v953, 16
      %v1315 = vrot.slane %v1313, 4
      %v1316 = vshll.u32 %v953, 16
      %v1318 = vrot.slane %v1316, 5
      %v1319 = vor.u32 %v1315, %v1318
      %v1320 = vrot.slane %v1319, 4
      %v1322 = vshll.u32 %v954, 16
      %v1324 = vrot.slane %v1322, 5
      %v1325 = vsel %vm975, %v1320, %v1324
      %v1326 = vshrl.u32 %v954, 16
      %v1328 = vrot.slane %v1326, 4
      %v1329 = vor.u32 %v1328, %v1324
      %v1330 = vrot.slane %v1329, 4
      %v1332 = vshll.u32 %v971, 16
      %v1334 = vrot.slane %v1332, 5
      %v1335 = vsel %vm975, %v1330, %v1334
      %v1337 = vshrl.u32 %v955, 16
      %v1339 = vrot.slane %v1337, 4
      %v1340 = vshll.u32 %v955, 16
      %v1342 = vrot.slane %v1340, 5
      %v1343 = vor.u32 %v1339, %v1342
      %v1344 = vrot.slane %v1343, 4
      %v1346 = vshll.u32 %v956, 16
      %v1348 = vrot.slane %v1346, 5
      %v1349 = vsel %vm975, %v1344, %v1348
      %v1350 = vshrl.u32 %v956, 16
      %v1352 = vrot.slane %v1350, 4
      %v1353 = vor.u32 %v1352, %v1348
      %v1354 = vrot.slane %v1353, 4
      %v1356 = vshll.u32 %v972, 16
      %v1358 = vrot.slane %v1356, 5
      %v1359 = vsel %vm975, %v1354, %v1358
      %v1360 = vld [vmem:[#allocation2] sm:$0xe]
      %v1361 = vld [vmem:[#allocation2 + $0xc] sm:$0xe]
      %v1362 = vld [vmem:[#allocation2 + $0x18] sm:$0xe]
      %v1363 = vld [vmem:[#allocation2 + $0x24] sm:$0xe]
      %v1364 = vld [vmem:[#allocation2 + $0x30] sm:$0xe]
      %v1365 = vld [vmem:[#allocation2 + $0x3c] sm:$0xe]
      %v1366 = vld [vmem:[#allocation2 + $0x48] sm:$0xe]
      %v1367 = vld [vmem:[#allocation2 + $0x54] sm:$0xe]
      %v1368 = vld [vmem:[#allocation2 + $0x60] sm:$0xe]
      %v1369 = vld [vmem:[#allocation2 + $0x6c] sm:$0xe]
      %v1370 = vld [vmem:[#allocation2 + $0x78] sm:$0xe]
      %v1371 = vld [vmem:[#allocation2 + $0x84] sm:$0xe]
      %v1372 = vld [vmem:[#allocation2 + $0x90] sm:$0xe]
      %v1373 = vld [vmem:[#allocation2 + $0x9c] sm:$0xe]
      %v1374 = vld [vmem:[#allocation2 + $0xa8] sm:$0xe]
      %v1375 = vld [vmem:[#allocation2 + $0xb4] sm:$0xe]
      %vm1424 = vcmask 1042432
      %vm1425 = vcmask 1046532
      %vm1426 = vmor %vm1424, %vm1425
      %v1427 = vrot.slane %v1360, 5
      %v1428 = vrot.slane %v1427, 4
      %v1429 = vrot.slane %v926, 5
      %v1430 = vsel %vm1426, %v1428, %v1429
      %v1431 = vrot.slane %v1429, 4
      %v1432 = vrot.slane %v957, 5
      %v1433 = vsel %vm1426, %v1431, %v1432
      %v1434 = vrot.slane %v1361, 5
      %v1435 = vrot.slane %v1434, 4
      %v1436 = vrot.slane %v928, 5
      %v1437 = vsel %vm1426, %v1435, %v1436
      %v1438 = vrot.slane %v1436, 4
      %v1439 = vrot.slane %v958, 5
      %v1440 = vsel %vm1426, %v1438, %v1439
      %v1441 = vrot.slane %v1362, 5
      %v1442 = vrot.slane %v1441, 4
      %v1443 = vrot.slane %v930, 5
      %v1444 = vsel %vm1426, %v1442, %v1443
      %v1445 = vrot.slane %v1443, 4
      %v1446 = vrot.slane %v959, 5
      %v1447 = vsel %vm1426, %v1445, %v1446
      %v1448 = vrot.slane %v1363, 5
      %v1449 = vrot.slane %v1448, 4
      %v1450 = vrot.slane %v932, 5
      %v1451 = vsel %vm1426, %v1449, %v1450
      %v1452 = vrot.slane %v1450, 4
      %v1453 = vrot.slane %v960, 5
      %v1454 = vsel %vm1426, %v1452, %v1453
      %v1455 = vrot.slane %v1364, 5
      %v1456 = vrot.slane %v1455, 4
      %v1457 = vrot.slane %v934, 5
      %v1458 = vsel %vm1426, %v1456, %v1457
      %v1459 = vrot.slane %v1457, 4
      %v1460 = vrot.slane %v961, 5
      %v1461 = vsel %vm1426, %v1459, %v1460
      %v1462 = vrot.slane %v1365, 5
      %v1463 = vrot.slane %v1462, 4
      %v1464 = vrot.slane %v936, 5
      %v1465 = vsel %vm1426, %v1463, %v1464
      %v1466 = vrot.slane %v1464, 4
      %v1467 = vrot.slane %v962, 5
      %v1468 = vsel %vm1426, %v1466, %v1467
      %v1469 = vrot.slane %v1366, 5
      %v1470 = vrot.slane %v1469, 4
      %v1471 = vrot.slane %v938, 5
      %v1472 = vsel %vm1426, %v1470, %v1471
      %v1473 = vrot.slane %v1471, 4
      %v1474 = vrot.slane %v963, 5
      %v1475 = vsel %vm1426, %v1473, %v1474
      %v1476 = vrot.slane %v1367, 5
      %v1477 = vrot.slane %v1476, 4
      %v1478 = vrot.slane %v940, 5
      %v1479 = vsel %vm1426, %v1477, %v1478
      %v1480 = vrot.slane %v1478, 4
      %v1481 = vrot.slane %v964, 5
      %v1482 = vsel %vm1426, %v1480, %v1481
      %v1483 = vrot.slane %v1368, 5
      %v1484 = vrot.slane %v1483, 4
      %v1485 = vrot.slane %v942, 5
      %v1486 = vsel %vm1426, %v1484, %v1485
      %v1487 = vrot.slane %v1485, 4
      %v1488 = vrot.slane %v965, 5
      %v1489 = vsel %vm1426, %v1487, %v1488
      %v1490 = vrot.slane %v1369, 5
      %v1491 = vrot.slane %v1490, 4
      %v1492 = vrot.slane %v944, 5
      %v1493 = vsel %vm1426, %v1491, %v1492
      %v1494 = vrot.slane %v1492, 4
      %v1495 = vrot.slane %v966, 5
      %v1496 = vsel %vm1426, %v1494, %v1495
      %v1497 = vrot.slane %v1370, 5
      %v1498 = vrot.slane %v1497, 4
      %v1499 = vrot.slane %v946, 5
      %v1500 = vsel %vm1426, %v1498, %v1499
      %v1501 = vrot.slane %v1499, 4
      %v1502 = vrot.slane %v967, 5
      %v1503 = vsel %vm1426, %v1501, %v1502
      %v1504 = vrot.slane %v1371, 5
      %v1505 = vrot.slane %v1504, 4
      %v1506 = vrot.slane %v948, 5
      %v1507 = vsel %vm1426, %v1505, %v1506
      %v1508 = vrot.slane %v1506, 4
      %v1509 = vrot.slane %v968, 5
      %v1510 = vsel %vm1426, %v1508, %v1509
      %v1511 = vrot.slane %v1372, 5
      %v1512 = vrot.slane %v1511, 4
      %v1513 = vrot.slane %v950, 5
      %v1514 = vsel %vm1426, %v1512, %v1513
      %v1515 = vrot.slane %v1513, 4
      %v1516 = vrot.slane %v969, 5
      %v1517 = vsel %vm1426, %v1515, %v1516
      %v1518 = vrot.slane %v1373, 5
      %v1519 = vrot.slane %v1518, 4
      %v1520 = vrot.slane %v952, 5
      %v1521 = vsel %vm1426, %v1519, %v1520
      %v1522 = vrot.slane %v1520, 4
      %v1523 = vrot.slane %v970, 5
      %v1524 = vsel %vm1426, %v1522, %v1523
      %v1525 = vrot.slane %v1374, 5
      %v1526 = vrot.slane %v1525, 4
      %v1527 = vrot.slane %v954, 5
      %v1528 = vsel %vm1426, %v1526, %v1527
      %v1529 = vrot.slane %v1527, 4
      %v1530 = vrot.slane %v971, 5
      %v1531 = vsel %vm1426, %v1529, %v1530
      %v1532 = vrot.slane %v1375, 5
      %v1533 = vrot.slane %v1532, 4
      %v1534 = vrot.slane %v956, 5
      %v1535 = vsel %vm1426, %v1533, %v1534
      %v1536 = vrot.slane %v1534, 4
      %v1537 = vrot.slane %v972, 5
      %v1538 = vsel %vm1426, %v1536, %v1537
      %v1555 = vunpack.c.l.b16 %v925
      %v1556 = vunpack.c.l.b16 %v926
      %v1557 = vunpack.c.l.b16 %v927
      %v1558 = vunpack.c.l.b16 %v928
      %v1559 = vunpack.c.l.b16 %v929
      %v1560 = vunpack.c.l.b16 %v930
      %v1561 = vunpack.c.l.b16 %v931
      %v1562 = vunpack.c.l.b16 %v932
      %v1563 = vunpack.c.l.b16 %v933
      %v1564 = vunpack.c.l.b16 %v934
      %v1565 = vunpack.c.l.b16 %v935
      %v1566 = vunpack.c.l.b16 %v936
      %v1567 = vunpack.c.l.b16 %v937
      %v1568 = vunpack.c.l.b16 %v938
      %v1569 = vunpack.c.l.b16 %v939
      %v1570 = vunpack.c.l.b16 %v940
      %v1571 = vunpack.c.l.b16 %v941
      %v1572 = vunpack.c.l.b16 %v942
      %v1573 = vunpack.c.l.b16 %v943
      %v1574 = vunpack.c.l.b16 %v944
      %v1575 = vunpack.c.l.b16 %v945
      %v1576 = vunpack.c.l.b16 %v946
      %v1577 = vunpack.c.l.b16 %v947
      %v1578 = vunpack.c.l.b16 %v948
      %v1579 = vunpack.c.l.b16 %v949
      %v1580 = vunpack.c.l.b16 %v950
      %v1581 = vunpack.c.l.b16 %v951
      %v1582 = vunpack.c.l.b16 %v952
      %v1583 = vunpack.c.l.b16 %v953
      %v1584 = vunpack.c.l.b16 %v954
      %v1585 = vunpack.c.l.b16 %v955
      %v1586 = vunpack.c.l.b16 %v956
      %v1587 = vpack.c.b16 %v1556, %v1555
      %v1588 = vpack.c.b16 %v1558, %v1557
      %v1589 = vpack.c.b16 %v1560, %v1559
      %v1590 = vpack.c.b16 %v1562, %v1561
      %v1591 = vpack.c.b16 %v1564, %v1563
      %v1592 = vpack.c.b16 %v1566, %v1565
      %v1593 = vpack.c.b16 %v1568, %v1567
      %v1594 = vpack.c.b16 %v1570, %v1569
      %v1595 = vpack.c.b16 %v1572, %v1571
      %v1596 = vpack.c.b16 %v1574, %v1573
      %v1597 = vpack.c.b16 %v1576, %v1575
      %v1598 = vpack.c.b16 %v1578, %v1577
      %v1599 = vpack.c.b16 %v1580, %v1579
      %v1600 = vpack.c.b16 %v1582, %v1581
      %v1601 = vpack.c.b16 %v1584, %v1583
      %v1602 = vpack.c.b16 %v1586, %v1585
      %v1603 = vunpack.c.l.b16 %v989
      %v1604 = vunpack.c.l.b16 %v999
      %v1605 = vunpack.c.l.b16 %v1013
      %v1606 = vunpack.c.l.b16 %v1023
      %v1607 = vunpack.c.l.b16 %v1037
      %v1608 = vunpack.c.l.b16 %v1047
      %v1609 = vunpack.c.l.b16 %v1061
      %v1610 = vunpack.c.l.b16 %v1071
      %v1611 = vunpack.c.l.b16 %v1085
      %v1612 = vunpack.c.l.b16 %v1095
      %v1613 = vunpack.c.l.b16 %v1109
      %v1614 = vunpack.c.l.b16 %v1119
      %v1615 = vunpack.c.l.b16 %v1133
      %v1616 = vunpack.c.l.b16 %v1143
      %v1617 = vunpack.c.l.b16 %v1157
      %v1618 = vunpack.c.l.b16 %v1167
      %v1619 = vunpack.c.l.b16 %v1181
      %v1620 = vunpack.c.l.b16 %v1191
      %v1621 = vunpack.c.l.b16 %v1205
      %v1622 = vunpack.c.l.b16 %v1215
      %v1623 = vunpack.c.l.b16 %v1229
      %v1624 = vunpack.c.l.b16 %v1239
      %v1625 = vunpack.c.l.b16 %v1253
      %v1626 = vunpack.c.l.b16 %v1263
      %v1627 = vunpack.c.l.b16 %v1277
      %v1628 = vunpack.c.l.b16 %v1287
      %v1629 = vunpack.c.l.b16 %v1301
      %v1630 = vunpack.c.l.b16 %v1311
      %v1631 = vunpack.c.l.b16 %v1325
      %v1632 = vunpack.c.l.b16 %v1335
      %v1633 = vunpack.c.l.b16 %v1349
      %v1634 = vunpack.c.l.b16 %v1359
      %v1635 = vpack.c.b16 %v1604, %v1603
      %v1636 = vpack.c.b16 %v1606, %v1605
      %v1637 = vpack.c.b16 %v1608, %v1607
      %v1638 = vpack.c.b16 %v1610, %v1609
      %v1639 = vpack.c.b16 %v1612, %v1611
      %v1640 = vpack.c.b16 %v1614, %v1613
      %v1641 = vpack.c.b16 %v1616, %v1615
      %v1642 = vpack.c.b16 %v1618, %v1617
      %v1643 = vpack.c.b16 %v1620, %v1619
      %v1644 = vpack.c.b16 %v1622, %v1621
      %v1645 = vpack.c.b16 %v1624, %v1623
      %v1646 = vpack.c.b16 %v1626, %v1625
      %v1647 = vpack.c.b16 %v1628, %v1627
      %v1648 = vpack.c.b16 %v1630, %v1629
      %v1649 = vpack.c.b16 %v1632, %v1631
      %v1650 = vpack.c.b16 %v1634, %v1633
      %1651 = vrot.lane.b32.xlu0 %v1635, 4
      %v1652 = vpop.permute.xlu0 %1651
      %1653 = vrot.lane.b32.xlu0 %v1636, 4
      %v1654 = vpop.permute.xlu0 %1653
      %1655 = vrot.lane.b32.xlu0 %v1637, 4
      %v1656 = vpop.permute.xlu0 %1655
      %1657 = vrot.lane.b32.xlu0 %v1638, 4
      %v1658 = vpop.permute.xlu0 %1657
      %1659 = vrot.lane.b32.xlu0 %v1639, 4
      %v1660 = vpop.permute.xlu0 %1659
      %1661 = vrot.lane.b32.xlu0 %v1640, 4
      %v1662 = vpop.permute.xlu0 %1661
      %1663 = vrot.lane.b32.xlu0 %v1641, 4
      %v1664 = vpop.permute.xlu0 %1663
      %1665 = vrot.lane.b32.xlu0 %v1642, 4
      %v1666 = vpop.permute.xlu0 %1665
      %1667 = vrot.lane.b32.xlu0 %v1643, 4
      %v1668 = vpop.permute.xlu0 %1667
      %1669 = vrot.lane.b32.xlu0 %v1644, 4
      %v1670 = vpop.permute.xlu0 %1669
      %1671 = vrot.lane.b32.xlu0 %v1645, 4
      %v1672 = vpop.permute.xlu0 %1671
      %1673 = vrot.lane.b32.xlu0 %v1646, 4
      %v1674 = vpop.permute.xlu0 %1673
      %1675 = vrot.lane.b32.xlu0 %v1647, 4
      %v1676 = vpop.permute.xlu0 %1675
      %1677 = vrot.lane.b32.xlu0 %v1648, 4
      %v1678 = vpop.permute.xlu0 %1677
      %1679 = vrot.lane.b32.xlu0 %v1649, 4
      %v1680 = vpop.permute.xlu0 %1679
      %1681 = vrot.lane.b32.xlu0 %v1650, 4
      %v1682 = vpop.permute.xlu0 %1681
      %v1683 = vunpack.c.l.b16 %v1430
      %v1684 = vunpack.c.l.b16 %v1433
      %v1685 = vunpack.c.l.b16 %v1437
      %v1686 = vunpack.c.l.b16 %v1440
      %v1687 = vunpack.c.l.b16 %v1444
      %v1688 = vunpack.c.l.b16 %v1447
      %v1689 = vunpack.c.l.b16 %v1451
      %v1690 = vunpack.c.l.b16 %v1454
      %v1691 = vunpack.c.l.b16 %v1458
      %v1692 = vunpack.c.l.b16 %v1461
      %v1693 = vunpack.c.l.b16 %v1465
      %v1694 = vunpack.c.l.b16 %v1468
      %v1695 = vunpack.c.l.b16 %v1472
      %v1696 = vunpack.c.l.b16 %v1475
      %v1697 = vunpack.c.l.b16 %v1479
      %v1698 = vunpack.c.l.b16 %v1482
      %v1699 = vunpack.c.l.b16 %v1486
      %v1700 = vunpack.c.l.b16 %v1489
      %v1701 = vunpack.c.l.b16 %v1493
      %v1702 = vunpack.c.l.b16 %v1496
      %v1703 = vunpack.c.l.b16 %v1500
      %v1704 = vunpack.c.l.b16 %v1503
      %v1705 = vunpack.c.l.b16 %v1507
      %v1706 = vunpack.c.l.b16 %v1510
      %v1707 = vunpack.c.l.b16 %v1514
      %v1708 = vunpack.c.l.b16 %v1517
      %v1709 = vunpack.c.l.b16 %v1521
      %v1710 = vunpack.c.l.b16 %v1524
      %v1711 = vunpack.c.l.b16 %v1528
      %v1712 = vunpack.c.l.b16 %v1531
      %v1713 = vunpack.c.l.b16 %v1535
      %v1714 = vunpack.c.l.b16 %v1538
      %v1715 = vpack.c.b16 %v1684, %v1683
      %v1716 = vpack.c.b16 %v1686, %v1685
      %v1717 = vpack.c.b16 %v1688, %v1687
      %v1718 = vpack.c.b16 %v1690, %v1689
      %v1719 = vpack.c.b16 %v1692, %v1691
      %v1720 = vpack.c.b16 %v1694, %v1693
      %v1721 = vpack.c.b16 %v1696, %v1695
      %v1722 = vpack.c.b16 %v1698, %v1697
      %v1723 = vpack.c.b16 %v1700, %v1699
      %v1724 = vpack.c.b16 %v1702, %v1701
      %v1725 = vpack.c.b16 %v1704, %v1703
      %v1726 = vpack.c.b16 %v1706, %v1705
      %v1727 = vpack.c.b16 %v1708, %v1707
      %v1728 = vpack.c.b16 %v1710, %v1709
      %v1729 = vpack.c.b16 %v1712, %v1711
      %v1730 = vpack.c.b16 %v1714, %v1713
      %1731 = vrot.lane.b32.xlu0 %v1715, 8
      %v1732 = vpop.permute.xlu0 %1731
      %1733 = vrot.lane.b32.xlu0 %v1716, 8
      %v1734 = vpop.permute.xlu0 %1733
      %1735 = vrot.lane.b32.xlu0 %v1717, 8
      %v1736 = vpop.permute.xlu0 %1735
      %1737 = vrot.lane.b32.xlu0 %v1718, 8
      %v1738 = vpop.permute.xlu0 %1737
      %1739 = vrot.lane.b32.xlu0 %v1719, 8
      %v1740 = vpop.permute.xlu0 %1739
      %1741 = vrot.lane.b32.xlu0 %v1720, 8
      %v1742 = vpop.permute.xlu0 %1741
      %1743 = vrot.lane.b32.xlu0 %v1721, 8
      %v1744 = vpop.permute.xlu0 %1743
      %1745 = vrot.lane.b32.xlu0 %v1722, 8
      %v1746 = vpop.permute.xlu0 %1745
      %1747 = vrot.lane.b32.xlu0 %v1723, 8
      %v1748 = vpop.permute.xlu0 %1747
      %1749 = vrot.lane.b32.xlu0 %v1724, 8
      %v1750 = vpop.permute.xlu0 %1749
      %1751 = vrot.lane.b32.xlu0 %v1725, 8
      %v1752 = vpop.permute.xlu0 %1751
      %1753 = vrot.lane.b32.xlu0 %v1726, 8
      %v1754 = vpop.permute.xlu0 %1753
      %1755 = vrot.lane.b32.xlu0 %v1727, 8
      %v1756 = vpop.permute.xlu0 %1755
      %1757 = vrot.lane.b32.xlu0 %v1728, 8
      %v1758 = vpop.permute.xlu0 %1757
      %1759 = vrot.lane.b32.xlu0 %v1729, 8
      %v1760 = vpop.permute.xlu0 %1759
      %1761 = vrot.lane.b32.xlu0 %v1730, 8
      %v1762 = vpop.permute.xlu0 %1761
      %vm1763 = vcmask 31744
      %v1766 = vsel %vm1763, %v1587, %v1652
      %v1769 = vsel %vm1763, %v1588, %v1654
      %v1772 = vsel %vm1763, %v1589, %v1656
      %v1775 = vsel %vm1763, %v1590, %v1658
      %v1778 = vsel %vm1763, %v1591, %v1660
      %v1781 = vsel %vm1763, %v1592, %v1662
      %v1784 = vsel %vm1763, %v1593, %v1664
      %v1787 = vsel %vm1763, %v1594, %v1666
      %v1790 = vsel %vm1763, %v1595, %v1668
      %v1793 = vsel %vm1763, %v1596, %v1670
      %v1796 = vsel %vm1763, %v1597, %v1672
      %v1799 = vsel %vm1763, %v1598, %v1674
      %v1802 = vsel %vm1763, %v1599, %v1676
      %v1805 = vsel %vm1763, %v1600, %v1678
      %v1808 = vsel %vm1763, %v1601, %v1680
      %v1811 = vsel %vm1763, %v1602, %v1682
      %vm1812 = vcmask 64512
      %v1814 = vsel %vm1812, %v1766, %v1732
      %v1816 = vsel %vm1812, %v1769, %v1734
      %v1818 = vsel %vm1812, %v1772, %v1736
      %v1820 = vsel %vm1812, %v1775, %v1738
      %v1822 = vsel %vm1812, %v1778, %v1740
      %v1824 = vsel %vm1812, %v1781, %v1742
      %v1826 = vsel %vm1812, %v1784, %v1744
      %v1828 = vsel %vm1812, %v1787, %v1746
      %v1830 = vsel %vm1812, %v1790, %v1748
      %v1832 = vsel %vm1812, %v1793, %v1750
      %v1834 = vsel %vm1812, %v1796, %v1752
      %v1836 = vsel %vm1812, %v1799, %v1754
      %v1838 = vsel %vm1812, %v1802, %v1756
      %v1840 = vsel %vm1812, %v1805, %v1758
      %v1842 = vsel %vm1812, %v1808, %v1760
      %v1844 = vsel %vm1812, %v1811, %v1762
      %v1845 = vld [vmem:[%s1] sm:$0xf]
      %v1846 = vld [vmem:[%s1 + $0x4] sm:$0x3]
      %v1847 = vld [vmem:[%s527] sm:$0xf]
      %v1848 = vld [vmem:[%s527 + $0x4] sm:$0xf]
      %v1849 = vld [vmem:[%s527 + $0xc] sm:$0xf]
      %v1850 = vld [vmem:[%s527 + $0x10] sm:$0xf]
      %v1851 = vld [vmem:[%s527 + $0x18] sm:$0xf]
      %v1852 = vld [vmem:[%s527 + $0x1c] sm:$0xf]
      %v1853 = vld [vmem:[%s527 + $0x24] sm:$0xf]
      %v1854 = vld [vmem:[%s527 + $0x28] sm:$0xf]
      %v1855 = vld [vmem:[%s527 + $0x30] sm:$0xf]
      %v1856 = vld [vmem:[%s527 + $0x34] sm:$0xf]
      %v1857 = vld [vmem:[%s527 + $0x3c] sm:$0xf]
      %v1858 = vld [vmem:[%s527 + $0x40] sm:$0xf]
      %v1859 = vld [vmem:[%s527 + $0x48] sm:$0xf]
      %v1860 = vld [vmem:[%s527 + $0x4c] sm:$0xf]
      %v1861 = vld [vmem:[%s527 + $0x54] sm:$0xf]
      %v1862 = vld [vmem:[%s527 + $0x58] sm:$0xf]
      %v1863 = vld [vmem:[%s527 + $0x60] sm:$0xf]
      %v1864 = vld [vmem:[%s527 + $0x64] sm:$0xf]
      %v1865 = vld [vmem:[%s527 + $0x6c] sm:$0xf]
      %v1866 = vld [vmem:[%s527 + $0x70] sm:$0xf]
      %v1867 = vld [vmem:[%s527 + $0x78] sm:$0xf]
      %v1868 = vld [vmem:[%s527 + $0x7c] sm:$0xf]
      %v1869 = vld [vmem:[%s527 + $0x84] sm:$0xf]
      %v1870 = vld [vmem:[%s527 + $0x88] sm:$0xf]
      %v1871 = vld [vmem:[%s527 + $0x90] sm:$0xf]
      %v1872 = vld [vmem:[%s527 + $0x94] sm:$0xf]
      %v1873 = vld [vmem:[%s527 + $0x9c] sm:$0xf]
      %v1874 = vld [vmem:[%s527 + $0xa0] sm:$0xf]
      %v1875 = vld [vmem:[%s527 + $0xa8] sm:$0xf]
      %v1876 = vld [vmem:[%s527 + $0xac] sm:$0xf]
      %v1877 = vld [vmem:[%s527 + $0xb4] sm:$0xf]
      %v1878 = vld [vmem:[%s527 + $0xb8] sm:$0xf]
      %v1879 = vld [vmem:[%s527 + $0x8] sm:$0x1]
      %v1880 = vld [vmem:[%s527 + $0x14] sm:$0x1]
      %v1881 = vld [vmem:[%s527 + $0x20] sm:$0x1]
      %v1882 = vld [vmem:[%s527 + $0x2c] sm:$0x1]
      %v1883 = vld [vmem:[%s527 + $0x38] sm:$0x1]
      %v1884 = vld [vmem:[%s527 + $0x44] sm:$0x1]
      %v1885 = vld [vmem:[%s527 + $0x50] sm:$0x1]
      %v1886 = vld [vmem:[%s527 + $0x5c] sm:$0x1]
      %v1887 = vld [vmem:[%s527 + $0x68] sm:$0x1]
      %v1888 = vld [vmem:[%s527 + $0x74] sm:$0x1]
      %v1889 = vld [vmem:[%s527 + $0x80] sm:$0x1]
      %v1890 = vld [vmem:[%s527 + $0x8c] sm:$0x1]
      %v1891 = vld [vmem:[%s527 + $0x98] sm:$0x1]
      %v1892 = vld [vmem:[%s527 + $0xa4] sm:$0x1]
      %v1893 = vld [vmem:[%s527 + $0xb0] sm:$0x1]
      %v1894 = vld [vmem:[%s527 + $0xbc] sm:$0x1]
      %v1896 = vshrl.u32 %v1847, 16
      %v1898 = vrot.slane %v1896, 4
      %v1899 = vshll.u32 %v1847, 16
      %v1901 = vrot.slane %v1899, 5
      %v1902 = vor.u32 %v1898, %v1901
      %v1903 = vrot.slane %v1902, 4
      %v1905 = vshll.u32 %v1848, 16
      %v1907 = vrot.slane %v1905, 5
      %v1908 = vsel %vm975, %v1903, %v1907
      %v1909 = vshrl.u32 %v1848, 16
      %v1911 = vrot.slane %v1909, 4
      %v1912 = vor.u32 %v1911, %v1907
      %v1913 = vrot.slane %v1912, 4
      %v1915 = vshll.u32 %v1879, 16
      %v1917 = vrot.slane %v1915, 5
      %v1918 = vsel %vm975, %v1913, %v1917
      %v1920 = vshrl.u32 %v1849, 16
      %v1922 = vrot.slane %v1920, 4
      %v1923 = vshll.u32 %v1849, 16
      %v1925 = vrot.slane %v1923, 5
      %v1926 = vor.u32 %v1922, %v1925
      %v1927 = vrot.slane %v1926, 4
      %v1929 = vshll.u32 %v1850, 16
      %v1931 = vrot.slane %v1929, 5
      %v1932 = vsel %vm975, %v1927, %v1931
      %v1933 = vshrl.u32 %v1850, 16
      %v1935 = vrot.slane %v1933, 4
      %v1936 = vor.u32 %v1935, %v1931
      %v1937 = vrot.slane %v1936, 4
      %v1939 = vshll.u32 %v1880, 16
      %v1941 = vrot.slane %v1939, 5
      %v1942 = vsel %vm975, %v1937, %v1941
      %v1944 = vshrl.u32 %v1851, 16
      %v1946 = vrot.slane %v1944, 4
      %v1947 = vshll.u32 %v1851, 16
      %v1949 = vrot.slane %v1947, 5
      %v1950 = vor.u32 %v1946, %v1949
      %v1951 = vrot.slane %v1950, 4
      %v1953 = vshll.u32 %v1852, 16
      %v1955 = vrot.slane %v1953, 5
      %v1956 = vsel %vm975, %v1951, %v1955
      %v1957 = vshrl.u32 %v1852, 16
      %v1959 = vrot.slane %v1957, 4
      %v1960 = vor.u32 %v1959, %v1955
      %v1961 = vrot.slane %v1960, 4
      %v1963 = vshll.u32 %v1881, 16
      %v1965 = vrot.slane %v1963, 5
      %v1966 = vsel %vm975, %v1961, %v1965
      %v1968 = vshrl.u32 %v1853, 16
      %v1970 = vrot.slane %v1968, 4
      %v1971 = vshll.u32 %v1853, 16
      %v1973 = vrot.slane %v1971, 5
      %v1974 = vor.u32 %v1970, %v1973
      %v1975 = vrot.slane %v1974, 4
      %v1977 = vshll.u32 %v1854, 16
      %v1979 = vrot.slane %v1977, 5
      %v1980 = vsel %vm975, %v1975, %v1979
      %v1981 = vshrl.u32 %v1854, 16
      %v1983 = vrot.slane %v1981, 4
      %v1984 = vor.u32 %v1983, %v1979
      %v1985 = vrot.slane %v1984, 4
      %v1987 = vshll.u32 %v1882, 16
      %v1989 = vrot.slane %v1987, 5
      %v1990 = vsel %vm975, %v1985, %v1989
      %v1992 = vshrl.u32 %v1855, 16
      %v1994 = vrot.slane %v1992, 4
      %v1995 = vshll.u32 %v1855, 16
      %v1997 = vrot.slane %v1995, 5
      %v1998 = vor.u32 %v1994, %v1997
      %v1999 = vrot.slane %v1998, 4
      %v2001 = vshll.u32 %v1856, 16
      %v2003 = vrot.slane %v2001, 5
      %v2004 = vsel %vm975, %v1999, %v2003
      %v2005 = vshrl.u32 %v1856, 16
      %v2007 = vrot.slane %v2005, 4
      %v2008 = vor.u32 %v2007, %v2003
      %v2009 = vrot.slane %v2008, 4
      %v2011 = vshll.u32 %v1883, 16
      %v2013 = vrot.slane %v2011, 5
      %v2014 = vsel %vm975, %v2009, %v2013
      %v2016 = vshrl.u32 %v1857, 16
      %v2018 = vrot.slane %v2016, 4
      %v2019 = vshll.u32 %v1857, 16
      %v2021 = vrot.slane %v2019, 5
      %v2022 = vor.u32 %v2018, %v2021
      %v2023 = vrot.slane %v2022, 4
      %v2025 = vshll.u32 %v1858, 16
      %v2027 = vrot.slane %v2025, 5
      %v2028 = vsel %vm975, %v2023, %v2027
      %v2029 = vshrl.u32 %v1858, 16
      %v2031 = vrot.slane %v2029, 4
      %v2032 = vor.u32 %v2031, %v2027
      %v2033 = vrot.slane %v2032, 4
      %v2035 = vshll.u32 %v1884, 16
      %v2037 = vrot.slane %v2035, 5
      %v2038 = vsel %vm975, %v2033, %v2037
      %v2040 = vshrl.u32 %v1859, 16
      %v2042 = vrot.slane %v2040, 4
      %v2043 = vshll.u32 %v1859, 16
      %v2045 = vrot.slane %v2043, 5
      %v2046 = vor.u32 %v2042, %v2045
      %v2047 = vrot.slane %v2046, 4
      %v2049 = vshll.u32 %v1860, 16
      %v2051 = vrot.slane %v2049, 5
      %v2052 = vsel %vm975, %v2047, %v2051
      %v2053 = vshrl.u32 %v1860, 16
      %v2055 = vrot.slane %v2053, 4
      %v2056 = vor.u32 %v2055, %v2051
      %v2057 = vrot.slane %v2056, 4
      %v2059 = vshll.u32 %v1885, 16
      %v2061 = vrot.slane %v2059, 5
      %v2062 = vsel %vm975, %v2057, %v2061
      %v2064 = vshrl.u32 %v1861, 16
      %v2066 = vrot.slane %v2064, 4
      %v2067 = vshll.u32 %v1861, 16
      %v2069 = vrot.slane %v2067, 5
      %v2070 = vor.u32 %v2066, %v2069
      %v2071 = vrot.slane %v2070, 4
      %v2073 = vshll.u32 %v1862, 16
      %v2075 = vrot.slane %v2073, 5
      %v2076 = vsel %vm975, %v2071, %v2075
      %v2077 = vshrl.u32 %v1862, 16
      %v2079 = vrot.slane %v2077, 4
      %v2080 = vor.u32 %v2079, %v2075
      %v2081 = vrot.slane %v2080, 4
      %v2083 = vshll.u32 %v1886, 16
      %v2085 = vrot.slane %v2083, 5
      %v2086 = vsel %vm975, %v2081, %v2085
      %v2088 = vshrl.u32 %v1863, 16
      %v2090 = vrot.slane %v2088, 4
      %v2091 = vshll.u32 %v1863, 16
      %v2093 = vrot.slane %v2091, 5
      %v2094 = vor.u32 %v2090, %v2093
      %v2095 = vrot.slane %v2094, 4
      %v2097 = vshll.u32 %v1864, 16
      %v2099 = vrot.slane %v2097, 5
      %v2100 = vsel %vm975, %v2095, %v2099
      %v2101 = vshrl.u32 %v1864, 16
      %v2103 = vrot.slane %v2101, 4
      %v2104 = vor.u32 %v2103, %v2099
      %v2105 = vrot.slane %v2104, 4
      %v2107 = vshll.u32 %v1887, 16
      %v2109 = vrot.slane %v2107, 5
      %v2110 = vsel %vm975, %v2105, %v2109
      %v2112 = vshrl.u32 %v1865, 16
      %v2114 = vrot.slane %v2112, 4
      %v2115 = vshll.u32 %v1865, 16
      %v2117 = vrot.slane %v2115, 5
      %v2118 = vor.u32 %v2114, %v2117
      %v2119 = vrot.slane %v2118, 4
      %v2121 = vshll.u32 %v1866, 16
      %v2123 = vrot.slane %v2121, 5
      %v2124 = vsel %vm975, %v2119, %v2123
      %v2125 = vshrl.u32 %v1866, 16
      %v2127 = vrot.slane %v2125, 4
      %v2128 = vor.u32 %v2127, %v2123
      %v2129 = vrot.slane %v2128, 4
      %v2131 = vshll.u32 %v1888, 16
      %v2133 = vrot.slane %v2131, 5
      %v2134 = vsel %vm975, %v2129, %v2133
      %v2136 = vshrl.u32 %v1867, 16
      %v2138 = vrot.slane %v2136, 4
      %v2139 = vshll.u32 %v1867, 16
      %v2141 = vrot.slane %v2139, 5
      %v2142 = vor.u32 %v2138, %v2141
      %v2143 = vrot.slane %v2142, 4
      %v2145 = vshll.u32 %v1868, 16
      %v2147 = vrot.slane %v2145, 5
      %v2148 = vsel %vm975, %v2143, %v2147
      %v2149 = vshrl.u32 %v1868, 16
      %v2151 = vrot.slane %v2149, 4
      %v2152 = vor.u32 %v2151, %v2147
      %v2153 = vrot.slane %v2152, 4
      %v2155 = vshll.u32 %v1889, 16
      %v2157 = vrot.slane %v2155, 5
      %v2158 = vsel %vm975, %v2153, %v2157
      %v2160 = vshrl.u32 %v1869, 16
      %v2162 = vrot.slane %v2160, 4
      %v2163 = vshll.u32 %v1869, 16
      %v2165 = vrot.slane %v2163, 5
      %v2166 = vor.u32 %v2162, %v2165
      %v2167 = vrot.slane %v2166, 4
      %v2169 = vshll.u32 %v1870, 16
      %v2171 = vrot.slane %v2169, 5
      %v2172 = vsel %vm975, %v2167, %v2171
      %v2173 = vshrl.u32 %v1870, 16
      %v2175 = vrot.slane %v2173, 4
      %v2176 = vor.u32 %v2175, %v2171
      %v2177 = vrot.slane %v2176, 4
      %v2179 = vshll.u32 %v1890, 16
      %v2181 = vrot.slane %v2179, 5
      %v2182 = vsel %vm975, %v2177, %v2181
      %v2184 = vshrl.u32 %v1871, 16
      %v2186 = vrot.slane %v2184, 4
      %v2187 = vshll.u32 %v1871, 16
      %v2189 = vrot.slane %v2187, 5
      %v2190 = vor.u32 %v2186, %v2189
      %v2191 = vrot.slane %v2190, 4
      %v2193 = vshll.u32 %v1872, 16
      %v2195 = vrot.slane %v2193, 5
      %v2196 = vsel %vm975, %v2191, %v2195
      %v2197 = vshrl.u32 %v1872, 16
      %v2199 = vrot.slane %v2197, 4
      %v2200 = vor.u32 %v2199, %v2195
      %v2201 = vrot.slane %v2200, 4
      %v2203 = vshll.u32 %v1891, 16
      %v2205 = vrot.slane %v2203, 5
      %v2206 = vsel %vm975, %v2201, %v2205
      %v2208 = vshrl.u32 %v1873, 16
      %v2210 = vrot.slane %v2208, 4
      %v2211 = vshll.u32 %v1873, 16
      %v2213 = vrot.slane %v2211, 5
      %v2214 = vor.u32 %v2210, %v2213
      %v2215 = vrot.slane %v2214, 4
      %v2217 = vshll.u32 %v1874, 16
      %v2219 = vrot.slane %v2217, 5
      %v2220 = vsel %vm975, %v2215, %v2219
      %v2221 = vshrl.u32 %v1874, 16
      %v2223 = vrot.slane %v2221, 4
      %v2224 = vor.u32 %v2223, %v2219
      %v2225 = vrot.slane %v2224, 4
      %v2227 = vshll.u32 %v1892, 16
      %v2229 = vrot.slane %v2227, 5
      %v2230 = vsel %vm975, %v2225, %v2229
      %v2232 = vshrl.u32 %v1875, 16
      %v2234 = vrot.slane %v2232, 4
      %v2235 = vshll.u32 %v1875, 16
      %v2237 = vrot.slane %v2235, 5
      %v2238 = vor.u32 %v2234, %v2237
      %v2239 = vrot.slane %v2238, 4
      %v2241 = vshll.u32 %v1876, 16
      %v2243 = vrot.slane %v2241, 5
      %v2244 = vsel %vm975, %v2239, %v2243
      %v2245 = vshrl.u32 %v1876, 16
      %v2247 = vrot.slane %v2245, 4
      %v2248 = vor.u32 %v2247, %v2243
      %v2249 = vrot.slane %v2248, 4
      %v2251 = vshll.u32 %v1893, 16
      %v2253 = vrot.slane %v2251, 5
      %v2254 = vsel %vm975, %v2249, %v2253
      %v2256 = vshrl.u32 %v1877, 16
      %v2258 = vrot.slane %v2256, 4
      %v2259 = vshll.u32 %v1877, 16
      %v2261 = vrot.slane %v2259, 5
      %v2262 = vor.u32 %v2258, %v2261
      %v2263 = vrot.slane %v2262, 4
      %v2265 = vshll.u32 %v1878, 16
      %v2267 = vrot.slane %v2265, 5
      %v2268 = vsel %vm975, %v2263, %v2267
      %v2269 = vshrl.u32 %v1878, 16
      %v2271 = vrot.slane %v2269, 4
      %v2272 = vor.u32 %v2271, %v2267
      %v2273 = vrot.slane %v2272, 4
      %v2275 = vshll.u32 %v1894, 16
      %v2277 = vrot.slane %v2275, 5
      %v2278 = vsel %vm975, %v2273, %v2277
      %v2279 = vld [vmem:[%s527] sm:$0xe]
      %v2280 = vld [vmem:[%s527 + $0xc] sm:$0xe]
      %v2281 = vld [vmem:[%s527 + $0x18] sm:$0xe]
      %v2282 = vld [vmem:[%s527 + $0x24] sm:$0xe]
      %v2283 = vld [vmem:[%s527 + $0x30] sm:$0xe]
      %v2284 = vld [vmem:[%s527 + $0x3c] sm:$0xe]
      %v2285 = vld [vmem:[%s527 + $0x48] sm:$0xe]
      %v2286 = vld [vmem:[%s527 + $0x54] sm:$0xe]
      %v2287 = vld [vmem:[%s527 + $0x60] sm:$0xe]
      %v2288 = vld [vmem:[%s527 + $0x6c] sm:$0xe]
      %v2289 = vld [vmem:[%s527 + $0x78] sm:$0xe]
      %v2290 = vld [vmem:[%s527 + $0x84] sm:$0xe]
      %v2291 = vld [vmem:[%s527 + $0x90] sm:$0xe]
      %v2292 = vld [vmem:[%s527 + $0x9c] sm:$0xe]
      %v2293 = vld [vmem:[%s527 + $0xa8] sm:$0xe]
      %v2294 = vld [vmem:[%s527 + $0xb4] sm:$0xe]
      %v2343 = vrot.slane %v2279, 5
      %v2344 = vrot.slane %v2343, 4
      %v2345 = vrot.slane %v1848, 5
      %v2346 = vsel %vm1426, %v2344, %v2345
      %v2347 = vrot.slane %v2345, 4
      %v2348 = vrot.slane %v1879, 5
      %v2349 = vsel %vm1426, %v2347, %v2348
      %v2350 = vrot.slane %v2280, 5
      %v2351 = vrot.slane %v2350, 4
      %v2352 = vrot.slane %v1850, 5
      %v2353 = vsel %vm1426, %v2351, %v2352
      %v2354 = vrot.slane %v2352, 4
      %v2355 = vrot.slane %v1880, 5
      %v2356 = vsel %vm1426, %v2354, %v2355
      %v2357 = vrot.slane %v2281, 5
      %v2358 = vrot.slane %v2357, 4
      %v2359 = vrot.slane %v1852, 5
      %v2360 = vsel %vm1426, %v2358, %v2359
      %v2361 = vrot.slane %v2359, 4
      %v2362 = vrot.slane %v1881, 5
      %v2363 = vsel %vm1426, %v2361, %v2362
      %v2364 = vrot.slane %v2282, 5
      %v2365 = vrot.slane %v2364, 4
      %v2366 = vrot.slane %v1854, 5
      %v2367 = vsel %vm1426, %v2365, %v2366
      %v2368 = vrot.slane %v2366, 4
      %v2369 = vrot.slane %v1882, 5
      %v2370 = vsel %vm1426, %v2368, %v2369
      %v2371 = vrot.slane %v2283, 5
      %v2372 = vrot.slane %v2371, 4
      %v2373 = vrot.slane %v1856, 5
      %v2374 = vsel %vm1426, %v2372, %v2373
      %v2375 = vrot.slane %v2373, 4
      %v2376 = vrot.slane %v1883, 5
      %v2377 = vsel %vm1426, %v2375, %v2376
      %v2378 = vrot.slane %v2284, 5
      %v2379 = vrot.slane %v2378, 4
      %v2380 = vrot.slane %v1858, 5
      %v2381 = vsel %vm1426, %v2379, %v2380
      %v2382 = vrot.slane %v2380, 4
      %v2383 = vrot.slane %v1884, 5
      %v2384 = vsel %vm1426, %v2382, %v2383
      %v2385 = vrot.slane %v2285, 5
      %v2386 = vrot.slane %v2385, 4
      %v2387 = vrot.slane %v1860, 5
      %v2388 = vsel %vm1426, %v2386, %v2387
      %v2389 = vrot.slane %v2387, 4
      %v2390 = vrot.slane %v1885, 5
      %v2391 = vsel %vm1426, %v2389, %v2390
      %v2392 = vrot.slane %v2286, 5
      %v2393 = vrot.slane %v2392, 4
      %v2394 = vrot.slane %v1862, 5
      %v2395 = vsel %vm1426, %v2393, %v2394
      %v2396 = vrot.slane %v2394, 4
      %v2397 = vrot.slane %v1886, 5
      %v2398 = vsel %vm1426, %v2396, %v2397
      %v2399 = vrot.slane %v2287, 5
      %v2400 = vrot.slane %v2399, 4
      %v2401 = vrot.slane %v1864, 5
      %v2402 = vsel %vm1426, %v2400, %v2401
      %v2403 = vrot.slane %v2401, 4
      %v2404 = vrot.slane %v1887, 5
      %v2405 = vsel %vm1426, %v2403, %v2404
      %v2406 = vrot.slane %v2288, 5
      %v2407 = vrot.slane %v2406, 4
      %v2408 = vrot.slane %v1866, 5
      %v2409 = vsel %vm1426, %v2407, %v2408
      %v2410 = vrot.slane %v2408, 4
      %v2411 = vrot.slane %v1888, 5
      %v2412 = vsel %vm1426, %v2410, %v2411
      %v2413 = vrot.slane %v2289, 5
      %v2414 = vrot.slane %v2413, 4
      %v2415 = vrot.slane %v1868, 5
      %v2416 = vsel %vm1426, %v2414, %v2415
      %v2417 = vrot.slane %v2415, 4
      %v2418 = vrot.slane %v1889, 5
      %v2419 = vsel %vm1426, %v2417, %v2418
      %v2420 = vrot.slane %v2290, 5
      %v2421 = vrot.slane %v2420, 4
      %v2422 = vrot.slane %v1870, 5
      %v2423 = vsel %vm1426, %v2421, %v2422
      %v2424 = vrot.slane %v2422, 4
      %v2425 = vrot.slane %v1890, 5
      %v2426 = vsel %vm1426, %v2424, %v2425
      %v2427 = vrot.slane %v2291, 5
      %v2428 = vrot.slane %v2427, 4
      %v2429 = vrot.slane %v1872, 5
      %v2430 = vsel %vm1426, %v2428, %v2429
      %v2431 = vrot.slane %v2429, 4
      %v2432 = vrot.slane %v1891, 5
      %v2433 = vsel %vm1426, %v2431, %v2432
      %v2434 = vrot.slane %v2292, 5
      %v2435 = vrot.slane %v2434, 4
      %v2436 = vrot.slane %v1874, 5
      %v2437 = vsel %vm1426, %v2435, %v2436
      %v2438 = vrot.slane %v2436, 4
      %v2439 = vrot.slane %v1892, 5
      %v2440 = vsel %vm1426, %v2438, %v2439
      %v2441 = vrot.slane %v2293, 5
      %v2442 = vrot.slane %v2441, 4
      %v2443 = vrot.slane %v1876, 5
      %v2444 = vsel %vm1426, %v2442, %v2443
      %v2445 = vrot.slane %v2443, 4
      %v2446 = vrot.slane %v1893, 5
      %v2447 = vsel %vm1426, %v2445, %v2446
      %v2448 = vrot.slane %v2294, 5
      %v2449 = vrot.slane %v2448, 4
      %v2450 = vrot.slane %v1878, 5
      %v2451 = vsel %vm1426, %v2449, %v2450
      %v2452 = vrot.slane %v2450, 4
      %v2453 = vrot.slane %v1894, 5
      %v2454 = vsel %vm1426, %v2452, %v2453
      %v2471 = vunpack.c.l.b16 %v1847
      %v2472 = vunpack.c.l.b16 %v1848
      %v2473 = vunpack.c.l.b16 %v1849
      %v2474 = vunpack.c.l.b16 %v1850
      %v2475 = vunpack.c.l.b16 %v1851
      %v2476 = vunpack.c.l.b16 %v1852
      %v2477 = vunpack.c.l.b16 %v1853
      %v2478 = vunpack.c.l.b16 %v1854
      %v2479 = vunpack.c.l.b16 %v1855
      %v2480 = vunpack.c.l.b16 %v1856
      %v2481 = vunpack.c.l.b16 %v1857
      %v2482 = vunpack.c.l.b16 %v1858
      %v2483 = vunpack.c.l.b16 %v1859
      %v2484 = vunpack.c.l.b16 %v1860
      %v2485 = vunpack.c.l.b16 %v1861
      %v2486 = vunpack.c.l.b16 %v1862
      %v2487 = vunpack.c.l.b16 %v1863
      %v2488 = vunpack.c.l.b16 %v1864
      %v2489 = vunpack.c.l.b16 %v1865
      %v2490 = vunpack.c.l.b16 %v1866
      %v2491 = vunpack.c.l.b16 %v1867
      %v2492 = vunpack.c.l.b16 %v1868
      %v2493 = vunpack.c.l.b16 %v1869
      %v2494 = vunpack.c.l.b16 %v1870
      %v2495 = vunpack.c.l.b16 %v1871
      %v2496 = vunpack.c.l.b16 %v1872
      %v2497 = vunpack.c.l.b16 %v1873
      %v2498 = vunpack.c.l.b16 %v1874
      %v2499 = vunpack.c.l.b16 %v1875
      %v2500 = vunpack.c.l.b16 %v1876
      %v2501 = vunpack.c.l.b16 %v1877
      %v2502 = vunpack.c.l.b16 %v1878
      %v2503 = vpack.c.b16 %v2472, %v2471
      %v2504 = vpack.c.b16 %v2474, %v2473
      %v2505 = vpack.c.b16 %v2476, %v2475
      %v2506 = vpack.c.b16 %v2478, %v2477
      %v2507 = vpack.c.b16 %v2480, %v2479
      %v2508 = vpack.c.b16 %v2482, %v2481
      %v2509 = vpack.c.b16 %v2484, %v2483
      %v2510 = vpack.c.b16 %v2486, %v2485
      %v2511 = vpack.c.b16 %v2488, %v2487
      %v2512 = vpack.c.b16 %v2490, %v2489
      %v2513 = vpack.c.b16 %v2492, %v2491
      %v2514 = vpack.c.b16 %v2494, %v2493
      %v2515 = vpack.c.b16 %v2496, %v2495
      %v2516 = vpack.c.b16 %v2498, %v2497
      %v2517 = vpack.c.b16 %v2500, %v2499
      %v2518 = vpack.c.b16 %v2502, %v2501
      %v2519 = vunpack.c.l.b16 %v1908
      %v2520 = vunpack.c.l.b16 %v1918
      %v2521 = vunpack.c.l.b16 %v1932
      %v2522 = vunpack.c.l.b16 %v1942
      %v2523 = vunpack.c.l.b16 %v1956
      %v2524 = vunpack.c.l.b16 %v1966
      %v2525 = vunpack.c.l.b16 %v1980
      %v2526 = vunpack.c.l.b16 %v1990
      %v2527 = vunpack.c.l.b16 %v2004
      %v2528 = vunpack.c.l.b16 %v2014
      %v2529 = vunpack.c.l.b16 %v2028
      %v2530 = vunpack.c.l.b16 %v2038
      %v2531 = vunpack.c.l.b16 %v2052
      %v2532 = vunpack.c.l.b16 %v2062
      %v2533 = vunpack.c.l.b16 %v2076
      %v2534 = vunpack.c.l.b16 %v2086
      %v2535 = vunpack.c.l.b16 %v2100
      %v2536 = vunpack.c.l.b16 %v2110
      %v2537 = vunpack.c.l.b16 %v2124
      %v2538 = vunpack.c.l.b16 %v2134
      %v2539 = vunpack.c.l.b16 %v2148
      %v2540 = vunpack.c.l.b16 %v2158
      %v2541 = vunpack.c.l.b16 %v2172
      %v2542 = vunpack.c.l.b16 %v2182
      %v2543 = vunpack.c.l.b16 %v2196
      %v2544 = vunpack.c.l.b16 %v2206
      %v2545 = vunpack.c.l.b16 %v2220
      %v2546 = vunpack.c.l.b16 %v2230
      %v2547 = vunpack.c.l.b16 %v2244
      %v2548 = vunpack.c.l.b16 %v2254
      %v2549 = vunpack.c.l.b16 %v2268
      %v2550 = vunpack.c.l.b16 %v2278
      %v2551 = vpack.c.b16 %v2520, %v2519
      %v2552 = vpack.c.b16 %v2522, %v2521
      %v2553 = vpack.c.b16 %v2524, %v2523
      %v2554 = vpack.c.b16 %v2526, %v2525
      %v2555 = vpack.c.b16 %v2528, %v2527
      %v2556 = vpack.c.b16 %v2530, %v2529
      %v2557 = vpack.c.b16 %v2532, %v2531
      %v2558 = vpack.c.b16 %v2534, %v2533
      %v2559 = vpack.c.b16 %v2536, %v2535
      %v2560 = vpack.c.b16 %v2538, %v2537
      %v2561 = vpack.c.b16 %v2540, %v2539
      %v2562 = vpack.c.b16 %v2542, %v2541
      %v2563 = vpack.c.b16 %v2544, %v2543
      %v2564 = vpack.c.b16 %v2546, %v2545
      %v2565 = vpack.c.b16 %v2548, %v2547
      %v2566 = vpack.c.b16 %v2550, %v2549
      %2567 = vrot.lane.b32.xlu0 %v2551, 4
      %v2568 = vpop.permute.xlu0 %2567
      %2569 = vrot.lane.b32.xlu0 %v2552, 4
      %v2570 = vpop.permute.xlu0 %2569
      %2571 = vrot.lane.b32.xlu0 %v2553, 4
      %v2572 = vpop.permute.xlu0 %2571
      %2573 = vrot.lane.b32.xlu0 %v2554, 4
      %v2574 = vpop.permute.xlu0 %2573
      %2575 = vrot.lane.b32.xlu0 %v2555, 4
      %v2576 = vpop.permute.xlu0 %2575
      %2577 = vrot.lane.b32.xlu0 %v2556, 4
      %v2578 = vpop.permute.xlu0 %2577
      %2579 = vrot.lane.b32.xlu0 %v2557, 4
      %v2580 = vpop.permute.xlu0 %2579
      %2581 = vrot.lane.b32.xlu0 %v2558, 4
      %v2582 = vpop.permute.xlu0 %2581
      %2583 = vrot.lane.b32.xlu0 %v2559, 4
      %v2584 = vpop.permute.xlu0 %2583
      %2585 = vrot.lane.b32.xlu0 %v2560, 4
      %v2586 = vpop.permute.xlu0 %2585
      %2587 = vrot.lane.b32.xlu0 %v2561, 4
      %v2588 = vpop.permute.xlu0 %2587
      %2589 = vrot.lane.b32.xlu0 %v2562, 4
      %v2590 = vpop.permute.xlu0 %2589
      %2591 = vrot.lane.b32.xlu0 %v2563, 4
      %v2592 = vpop.permute.xlu0 %2591
      %2593 = vrot.lane.b32.xlu0 %v2564, 4
      %v2594 = vpop.permute.xlu0 %2593
      %2595 = vrot.lane.b32.xlu0 %v2565, 4
      %v2596 = vpop.permute.xlu0 %2595
      %2597 = vrot.lane.b32.xlu0 %v2566, 4
      %v2598 = vpop.permute.xlu0 %2597
      %v2599 = vunpack.c.l.b16 %v2346
      %v2600 = vunpack.c.l.b16 %v2349
      %v2601 = vunpack.c.l.b16 %v2353
      %v2602 = vunpack.c.l.b16 %v2356
      %v2603 = vunpack.c.l.b16 %v2360
      %v2604 = vunpack.c.l.b16 %v2363
      %v2605 = vunpack.c.l.b16 %v2367
      %v2606 = vunpack.c.l.b16 %v2370
      %v2607 = vunpack.c.l.b16 %v2374
      %v2608 = vunpack.c.l.b16 %v2377
      %v2609 = vunpack.c.l.b16 %v2381
      %v2610 = vunpack.c.l.b16 %v2384
      %v2611 = vunpack.c.l.b16 %v2388
      %v2612 = vunpack.c.l.b16 %v2391
      %v2613 = vunpack.c.l.b16 %v2395
      %v2614 = vunpack.c.l.b16 %v2398
      %v2615 = vunpack.c.l.b16 %v2402
      %v2616 = vunpack.c.l.b16 %v2405
      %v2617 = vunpack.c.l.b16 %v2409
      %v2618 = vunpack.c.l.b16 %v2412
      %v2619 = vunpack.c.l.b16 %v2416
      %v2620 = vunpack.c.l.b16 %v2419
      %v2621 = vunpack.c.l.b16 %v2423
      %v2622 = vunpack.c.l.b16 %v2426
      %v2623 = vunpack.c.l.b16 %v2430
      %v2624 = vunpack.c.l.b16 %v2433
      %v2625 = vunpack.c.l.b16 %v2437
      %v2626 = vunpack.c.l.b16 %v2440
      %v2627 = vunpack.c.l.b16 %v2444
      %v2628 = vunpack.c.l.b16 %v2447
      %v2629 = vunpack.c.l.b16 %v2451
      %v2630 = vunpack.c.l.b16 %v2454
      %v2631 = vpack.c.b16 %v2600, %v2599
      %v2632 = vpack.c.b16 %v2602, %v2601
      %v2633 = vpack.c.b16 %v2604, %v2603
      %v2634 = vpack.c.b16 %v2606, %v2605
      %v2635 = vpack.c.b16 %v2608, %v2607
      %v2636 = vpack.c.b16 %v2610, %v2609
      %v2637 = vpack.c.b16 %v2612, %v2611
      %v2638 = vpack.c.b16 %v2614, %v2613
      %v2639 = vpack.c.b16 %v2616, %v2615
      %v2640 = vpack.c.b16 %v2618, %v2617
      %v2641 = vpack.c.b16 %v2620, %v2619
      %v2642 = vpack.c.b16 %v2622, %v2621
      %v2643 = vpack.c.b16 %v2624, %v2623
      %v2644 = vpack.c.b16 %v2626, %v2625
      %v2645 = vpack.c.b16 %v2628, %v2627
      %v2646 = vpack.c.b16 %v2630, %v2629
      %2647 = vrot.lane.b32.xlu0 %v2631, 8
      %v2648 = vpop.permute.xlu0 %2647
      %2649 = vrot.lane.b32.xlu0 %v2632, 8
      %v2650 = vpop.permute.xlu0 %2649
      %2651 = vrot.lane.b32.xlu0 %v2633, 8
      %v2652 = vpop.permute.xlu0 %2651
      %2653 = vrot.lane.b32.xlu0 %v2634, 8
      %v2654 = vpop.permute.xlu0 %2653
      %2655 = vrot.lane.b32.xlu0 %v2635, 8
      %v2656 = vpop.permute.xlu0 %2655
      %2657 = vrot.lane.b32.xlu0 %v2636, 8
      %v2658 = vpop.permute.xlu0 %2657
      %2659 = vrot.lane.b32.xlu0 %v2637, 8
      %v2660 = vpop.permute.xlu0 %2659
      %2661 = vrot.lane.b32.xlu0 %v2638, 8
      %v2662 = vpop.permute.xlu0 %2661
      %2663 = vrot.lane.b32.xlu0 %v2639, 8
      %v2664 = vpop.permute.xlu0 %2663
      %2665 = vrot.lane.b32.xlu0 %v2640, 8
      %v2666 = vpop.permute.xlu0 %2665
      %2667 = vrot.lane.b32.xlu0 %v2641, 8
      %v2668 = vpop.permute.xlu0 %2667
      %2669 = vrot.lane.b32.xlu0 %v2642, 8
      %v2670 = vpop.permute.xlu0 %2669
      %2671 = vrot.lane.b32.xlu0 %v2643, 8
      %v2672 = vpop.permute.xlu0 %2671
      %2673 = vrot.lane.b32.xlu0 %v2644, 8
      %v2674 = vpop.permute.xlu0 %2673
      %2675 = vrot.lane.b32.xlu0 %v2645, 8
      %v2676 = vpop.permute.xlu0 %2675
      %2677 = vrot.lane.b32.xlu0 %v2646, 8
      %v2678 = vpop.permute.xlu0 %2677
      %v2681 = vsel %vm1763, %v2503, %v2568
      %v2684 = vsel %vm1763, %v2504, %v2570
      %v2687 = vsel %vm1763, %v2505, %v2572
      %v2690 = vsel %vm1763, %v2506, %v2574
      %v2693 = vsel %vm1763, %v2507, %v2576
      %v2696 = vsel %vm1763, %v2508, %v2578
      %v2699 = vsel %vm1763, %v2509, %v2580
      %v2702 = vsel %vm1763, %v2510, %v2582
      %v2705 = vsel %vm1763, %v2511, %v2584
      %v2708 = vsel %vm1763, %v2512, %v2586
      %v2711 = vsel %vm1763, %v2513, %v2588
      %v2714 = vsel %vm1763, %v2514, %v2590
      %v2717 = vsel %vm1763, %v2515, %v2592
      %v2720 = vsel %vm1763, %v2516, %v2594
      %v2723 = vsel %vm1763, %v2517, %v2596
      %v2726 = vsel %vm1763, %v2518, %v2598
      %v2728 = vsel %vm1812, %v2681, %v2648
      %v2730 = vsel %vm1812, %v2684, %v2650
      %v2732 = vsel %vm1812, %v2687, %v2652
      %v2734 = vsel %vm1812, %v2690, %v2654
      %v2736 = vsel %vm1812, %v2693, %v2656
      %v2738 = vsel %vm1812, %v2696, %v2658
      %v2740 = vsel %vm1812, %v2699, %v2660
      %v2742 = vsel %vm1812, %v2702, %v2662
      %v2744 = vsel %vm1812, %v2705, %v2664
      %v2746 = vsel %vm1812, %v2708, %v2666
      %v2748 = vsel %vm1812, %v2711, %v2668
      %v2750 = vsel %vm1812, %v2714, %v2670
      %v2752 = vsel %vm1812, %v2717, %v2672
      %v2754 = vsel %vm1812, %v2720, %v2674
      %v2756 = vsel %vm1812, %v2723, %v2676
      %v2758 = vsel %vm1812, %v2726, %v2678
      %s2759 = scalar_lea.vmem %s1, 8
      %v2760 = vld [vmem:[%s2759] sm:$0xf]
      %v2761 = vld [vmem:[%s2759 + $0x4] sm:$0x3]
      %v2764 = vunpack.c.l.b16 %v2760
      %v2765 = vunpack.c.l.b16 %v2761
      %v2766 = vpack.c.b16 %v2765, %v2764
      %vm2767 = vcmask 97280
      %v2768 = vsel %vm2767, %v2728, 0
      %v2770 = vsel %vm2767, %v2730, 0
      %v2772 = vsel %vm2767, %v2732, 0
      %v2774 = vsel %vm2767, %v2734, 0
      %v2776 = vsel %vm2767, %v2736, 0
      %v2778 = vsel %vm2767, %v2738, 0
      %v2780 = vsel %vm2767, %v2740, 0
      %v2782 = vsel %vm2767, %v2742, 0
      %v2784 = vsel %vm2767, %v2744, 0
      %v2786 = vsel %vm2767, %v2746, 0
      %v2788 = vsel %vm2767, %v2748, 0
      %v2790 = vsel %vm2767, %v2750, 0
      %v2792 = vsel %vm2767, %v2752, 0
      %v2794 = vsel %vm2767, %v2754, 0
      %v2796 = vsel %vm2767, %v2756, 0
      %v2798 = vsel %vm2767, %v2758, 0
      %vm2800 = vcmask 1045504
      %v2802 = vsel %vm2800, %v2766, 0
      %2804 = vmatprep.subr.bf16.mxu0 0
      %2805 = vmatpush1.bf16.msra.mxu0 0
      %2806 = vmatprep.subr.bf16.mxu0 0
      %2807 = vmatpush1.bf16.msra.mxu0 0
      %2808 = vmatprep.subr.bf16.mxu0 0
      %2809 = vmatpush1.bf16.msra.mxu0 0
      %2810 = vmatprep.subr.bf16.mxu0 0
      %2811 = vmatpush1.bf16.msra.mxu0 0
      %2812 = vmatprep.subr.bf16.mxu0 0
      %2813 = vmatpush1.bf16.msra.mxu0 0
      %2814 = vmatprep.subr.bf16.mxu0 0
      %2815 = vmatpush1.bf16.msra.mxu0 0
      %2816 = vmatprep.subr.bf16.mxu0 0
      %2817 = vmatpush1.bf16.msra.mxu0 0
      %2818 = vmatprep.subr.bf16.mxu0 0
      %2819 = vmatpush1.bf16.msra.mxu0 %v2802
      %2820 = vmatprep.subr.bf16.mxu0 0
      %2821 = vmatpush2.bf16.msra.mxu0 0
      %2822 = vmatprep.subr.bf16.mxu0 0
      %2823 = vmatpush2.bf16.msra.mxu0 0
      %2824 = vmatprep.subr.bf16.mxu0 0
      %2825 = vmatpush2.bf16.msra.mxu0 0
      %2826 = vmatprep.subr.bf16.mxu0 0
      %2827 = vmatpush2.bf16.msra.mxu0 0
      %2828 = vmatprep.subr.bf16.mxu0 0
      %2829 = vmatpush2.bf16.msra.mxu0 0
      %2830 = vmatprep.subr.bf16.mxu0 0
      %2831 = vmatpush2.bf16.msra.mxu0 0
      %2832 = vmatprep.subr.bf16.mxu0 0
      %2833 = vmatpush2.bf16.msra.mxu0 0
      %2834 = vmatprep.subr.bf16.mxu0 0
      %2835 = vmatpush2.bf16.msra.mxu0 0
      %2836 = vmatprep.mubr.bf16.mxu0 0
      %2837 = vmatmul.mubr.bf16.gmra.mxu0 %v2768
      %v2838 = vpop.f32.mrf.mxu0
      %v2839 = vadd.f32 0.0, %v2838
      %v2840 = vpop.f32.mrf.mxu0
      %v2841 = vpop.f32.mrf.mxu0
      %v2842 = vadd.f32 0.0, %v2841
      %v2843 = vpop.f32.mrf.mxu0
      %2844 = vmatprep.mubr.bf16.mxu0 0
      %2845 = vmatmul.mubr.bf16.gmra.mxu0 %v2770
      %v2846 = vpop.f32.mrf.mxu0
      %v2847 = vadd.f32 0.0, %v2846
      %v2848 = vpop.f32.mrf.mxu0
      %v2849 = vpop.f32.mrf.mxu0
      %v2850 = vadd.f32 0.0, %v2849
      %v2851 = vpop.f32.mrf.mxu0
      %2852 = vmatprep.mubr.bf16.mxu0 0
      %2853 = vmatmul.mubr.bf16.gmra.mxu0 %v2772
      %v2854 = vpop.f32.mrf.mxu0
      %v2855 = vadd.f32 0.0, %v2854
      %v2856 = vpop.f32.mrf.mxu0
      %v2857 = vpop.f32.mrf.mxu0
      %v2858 = vadd.f32 0.0, %v2857
      %v2859 = vpop.f32.mrf.mxu0
      %2860 = vmatprep.mubr.bf16.mxu0 0
      %2861 = vmatmul.mubr.bf16.gmra.mxu0 %v2774
      %v2862 = vpop.f32.mrf.mxu0
      %v2863 = vadd.f32 0.0, %v2862
      %v2864 = vpop.f32.mrf.mxu0
      %v2865 = vpop.f32.mrf.mxu0
      %v2866 = vadd.f32 0.0, %v2865
      %v2867 = vpop.f32.mrf.mxu0
      %2868 = vmatprep.mubr.bf16.mxu0 0
      %2869 = vmatmul.mubr.bf16.gmra.mxu0 %v2776
      %v2870 = vpop.f32.mrf.mxu0
      %v2871 = vadd.f32 0.0, %v2870
      %v2872 = vpop.f32.mrf.mxu0
      %v2873 = vpop.f32.mrf.mxu0
      %v2874 = vadd.f32 0.0, %v2873
      %v2875 = vpop.f32.mrf.mxu0
      %2876 = vmatprep.mubr.bf16.mxu0 0
      %2877 = vmatmul.mubr.bf16.gmra.mxu0 %v2778
      %v2878 = vpop.f32.mrf.mxu0
      %v2879 = vadd.f32 0.0, %v2878
      %v2880 = vpop.f32.mrf.mxu0
      %v2881 = vpop.f32.mrf.mxu0
      %v2882 = vadd.f32 0.0, %v2881
      %v2883 = vpop.f32.mrf.mxu0
      %2884 = vmatprep.mubr.bf16.mxu0 0
      %2885 = vmatmul.mubr.bf16.gmra.mxu0 %v2780
      %v2886 = vpop.f32.mrf.mxu0
      %v2887 = vadd.f32 0.0, %v2886
      %v2888 = vpop.f32.mrf.mxu0
      %v2889 = vpop.f32.mrf.mxu0
      %v2890 = vadd.f32 0.0, %v2889
      %v2891 = vpop.f32.mrf.mxu0
      %2892 = vmatprep.mubr.bf16.mxu0 0
      %2893 = vmatmul.mubr.bf16.gmra.mxu0 %v2782
      %v2894 = vpop.f32.mrf.mxu0
      %v2895 = vadd.f32 0.0, %v2894
      %v2896 = vpop.f32.mrf.mxu0
      %v2897 = vpop.f32.mrf.mxu0
      %v2898 = vadd.f32 0.0, %v2897
      %v2899 = vpop.f32.mrf.mxu0
      %2900 = vmatprep.mubr.bf16.mxu0 0
      %2901 = vmatmul.mubr.bf16.gmra.mxu0 %v2784
      %v2902 = vpop.f32.mrf.mxu0
      %v2903 = vadd.f32 0.0, %v2902
      %v2904 = vpop.f32.mrf.mxu0
      %v2905 = vpop.f32.mrf.mxu0
      %v2906 = vadd.f32 0.0, %v2905
      %v2907 = vpop.f32.mrf.mxu0
      %2908 = vmatprep.mubr.bf16.mxu0 0
      %2909 = vmatmul.mubr.bf16.gmra.mxu0 %v2786
      %v2910 = vpop.f32.mrf.mxu0
      %v2911 = vadd.f32 0.0, %v2910
      %v2912 = vpop.f32.mrf.mxu0
      %v2913 = vpop.f32.mrf.mxu0
      %v2914 = vadd.f32 0.0, %v2913
      %v2915 = vpop.f32.mrf.mxu0
      %2916 = vmatprep.mubr.bf16.mxu0 0
      %2917 = vmatmul.mubr.bf16.gmra.mxu0 %v2788
      %v2918 = vpop.f32.mrf.mxu0
      %v2919 = vadd.f32 0.0, %v2918
      %v2920 = vpop.f32.mrf.mxu0
      %v2921 = vpop.f32.mrf.mxu0
      %v2922 = vadd.f32 0.0, %v2921
      %v2923 = vpop.f32.mrf.mxu0
      %2924 = vmatprep.mubr.bf16.mxu0 0
      %2925 = vmatmul.mubr.bf16.gmra.mxu0 %v2790
      %v2926 = vpop.f32.mrf.mxu0
      %v2927 = vadd.f32 0.0, %v2926
      %v2928 = vpop.f32.mrf.mxu0
      %v2929 = vpop.f32.mrf.mxu0
      %v2930 = vadd.f32 0.0, %v2929
      %v2931 = vpop.f32.mrf.mxu0
      %2932 = vmatprep.mubr.bf16.mxu0 0
      %2933 = vmatmul.mubr.bf16.gmra.mxu0 %v2792
      %v2934 = vpop.f32.mrf.mxu0
      %v2935 = vadd.f32 0.0, %v2934
      %v2936 = vpop.f32.mrf.mxu0
      %v2937 = vpop.f32.mrf.mxu0
      %v2938 = vadd.f32 0.0, %v2937
      %v2939 = vpop.f32.mrf.mxu0
      %2940 = vmatprep.mubr.bf16.mxu0 0
      %2941 = vmatmul.mubr.bf16.gmra.mxu0 %v2794
      %v2942 = vpop.f32.mrf.mxu0
      %v2943 = vadd.f32 0.0, %v2942
      %v2944 = vpop.f32.mrf.mxu0
      %v2945 = vpop.f32.mrf.mxu0
      %v2946 = vadd.f32 0.0, %v2945
      %v2947 = vpop.f32.mrf.mxu0
      %2948 = vmatprep.mubr.bf16.mxu0 0
      %2949 = vmatmul.mubr.bf16.gmra.mxu0 %v2796
      %v2950 = vpop.f32.mrf.mxu0
      %v2951 = vadd.f32 0.0, %v2950
      %v2952 = vpop.f32.mrf.mxu0
      %v2953 = vpop.f32.mrf.mxu0
      %v2954 = vadd.f32 0.0, %v2953
      %v2955 = vpop.f32.mrf.mxu0
      %2956 = vmatprep.mubr.bf16.mxu0 0
      %2957 = vmatmul.mubr.bf16.gmra.mxu0 %v2798
      %v2958 = vpop.f32.mrf.mxu0
      %v2959 = vadd.f32 0.0, %v2958
      %v2960 = vpop.f32.mrf.mxu0
      %v2961 = vpop.f32.mrf.mxu0
      %v2962 = vadd.f32 0.0, %v2961
      %v2963 = vpop.f32.mrf.mxu0
      %2964 = vdwg.mxu0
      %v2967 = vunpack.c.l.b16 %v1845
      %v2968 = vunpack.c.l.b16 %v1846
      %v2969 = vpack.c.b16 %v2968, %v2967
      %v2970 = vsel %vm2767, %v1814, 0
      %v2972 = vsel %vm2767, %v1816, 0
      %v2974 = vsel %vm2767, %v1818, 0
      %v2976 = vsel %vm2767, %v1820, 0
      %v2978 = vsel %vm2767, %v1822, 0
      %v2980 = vsel %vm2767, %v1824, 0
      %v2982 = vsel %vm2767, %v1826, 0
      %v2984 = vsel %vm2767, %v1828, 0
      %v2986 = vsel %vm2767, %v1830, 0
      %v2988 = vsel %vm2767, %v1832, 0
      %v2990 = vsel %vm2767, %v1834, 0
      %v2992 = vsel %vm2767, %v1836, 0
      %v2994 = vsel %vm2767, %v1838, 0
      %v2996 = vsel %vm2767, %v1840, 0
      %v2998 = vsel %vm2767, %v1842, 0
      %v3000 = vsel %vm2767, %v1844, 0
      %v3003 = vsel %vm2800, %v2969, 0
      %3005 = vmatprep.subr.bf16.mxu0 0
      %3006 = vmatpush1.bf16.msra.mxu0 0
      %3007 = vmatprep.subr.bf16.mxu0 0
      %3008 = vmatpush1.bf16.msra.mxu0 0
      %3009 = vmatprep.subr.bf16.mxu0 0
      %3010 = vmatpush1.bf16.msra.mxu0 0
      %3011 = vmatprep.subr.bf16.mxu0 0
      %3012 = vmatpush1.bf16.msra.mxu0 0
      %3013 = vmatprep.subr.bf16.mxu0 0
      %3014 = vmatpush1.bf16.msra.mxu0 0
      %3015 = vmatprep.subr.bf16.mxu0 0
      %3016 = vmatpush1.bf16.msra.mxu0 0
      %3017 = vmatprep.subr.bf16.mxu0 0
      %3018 = vmatpush1.bf16.msra.mxu0 0
      %3019 = vmatprep.subr.bf16.mxu0 0
      %3020 = vmatpush1.bf16.msra.mxu0 %v3003
      %3021 = vmatprep.subr.bf16.mxu0 0
      %3022 = vmatpush2.bf16.msra.mxu0 0
      %3023 = vmatprep.subr.bf16.mxu0 0
      %3024 = vmatpush2.bf16.msra.mxu0 0
      %3025 = vmatprep.subr.bf16.mxu0 0
      %3026 = vmatpush2.bf16.msra.mxu0 0
      %3027 = vmatprep.subr.bf16.mxu0 0
      %3028 = vmatpush2.bf16.msra.mxu0 0
      %3029 = vmatprep.subr.bf16.mxu0 0
      %3030 = vmatpush2.bf16.msra.mxu0 0
      %3031 = vmatprep.subr.bf16.mxu0 0
      %3032 = vmatpush2.bf16.msra.mxu0 0
      %3033 = vmatprep.subr.bf16.mxu0 0
      %3034 = vmatpush2.bf16.msra.mxu0 0
      %3035 = vmatprep.subr.bf16.mxu0 0
      %3036 = vmatpush2.bf16.msra.mxu0 0
      %3037 = vmatprep.mubr.bf16.mxu0 0
      %3038 = vmatmul.mubr.bf16.gmra.mxu0 %v2970
      %v3039 = vpop.f32.mrf.mxu0
      %v3040 = vadd.f32 %v2839, %v3039
      %v3041 = vpop.f32.mrf.mxu0
      %v3042 = vpop.f32.mrf.mxu0
      %v3043 = vadd.f32 %v2842, %v3042
      %v3044 = vpop.f32.mrf.mxu0
      %3045 = vmatprep.mubr.bf16.mxu0 0
      %3046 = vmatmul.mubr.bf16.gmra.mxu0 %v2972
      %v3047 = vpop.f32.mrf.mxu0
      %v3048 = vadd.f32 %v2847, %v3047
      %v3049 = vpop.f32.mrf.mxu0
      %v3050 = vpop.f32.mrf.mxu0
      %v3051 = vadd.f32 %v2850, %v3050
      %v3052 = vpop.f32.mrf.mxu0
      %3053 = vmatprep.mubr.bf16.mxu0 0
      %3054 = vmatmul.mubr.bf16.gmra.mxu0 %v2974
      %v3055 = vpop.f32.mrf.mxu0
      %v3056 = vadd.f32 %v2855, %v3055
      %v3057 = vpop.f32.mrf.mxu0
      %v3058 = vpop.f32.mrf.mxu0
      %v3059 = vadd.f32 %v2858, %v3058
      %v3060 = vpop.f32.mrf.mxu0
      %3061 = vmatprep.mubr.bf16.mxu0 0
      %3062 = vmatmul.mubr.bf16.gmra.mxu0 %v2976
      %v3063 = vpop.f32.mrf.mxu0
      %v3064 = vadd.f32 %v2863, %v3063
      %v3065 = vpop.f32.mrf.mxu0
      %v3066 = vpop.f32.mrf.mxu0
      %v3067 = vadd.f32 %v2866, %v3066
      %v3068 = vpop.f32.mrf.mxu0
      %3069 = vmatprep.mubr.bf16.mxu0 0
      %3070 = vmatmul.mubr.bf16.gmra.mxu0 %v2978
      %v3071 = vpop.f32.mrf.mxu0
      %v3072 = vadd.f32 %v2871, %v3071
      %v3073 = vpop.f32.mrf.mxu0
      %v3074 = vpop.f32.mrf.mxu0
      %v3075 = vadd.f32 %v2874, %v3074
      %v3076 = vpop.f32.mrf.mxu0
      %3077 = vmatprep.mubr.bf16.mxu0 0
      %3078 = vmatmul.mubr.bf16.gmra.mxu0 %v2980
      %v3079 = vpop.f32.mrf.mxu0
      %v3080 = vadd.f32 %v2879, %v3079
      %v3081 = vpop.f32.mrf.mxu0
      %v3082 = vpop.f32.mrf.mxu0
      %v3083 = vadd.f32 %v2882, %v3082
      %v3084 = vpop.f32.mrf.mxu0
      %3085 = vmatprep.mubr.bf16.mxu0 0
      %3086 = vmatmul.mubr.bf16.gmra.mxu0 %v2982
      %v3087 = vpop.f32.mrf.mxu0
      %v3088 = vadd.f32 %v2887, %v3087
      %v3089 = vpop.f32.mrf.mxu0
      %v3090 = vpop.f32.mrf.mxu0
      %v3091 = vadd.f32 %v2890, %v3090
      %v3092 = vpop.f32.mrf.mxu0
      %3093 = vmatprep.mubr.bf16.mxu0 0
      %3094 = vmatmul.mubr.bf16.gmra.mxu0 %v2984
      %v3095 = vpop.f32.mrf.mxu0
      %v3096 = vadd.f32 %v2895, %v3095
      %v3097 = vpop.f32.mrf.mxu0
      %v3098 = vpop.f32.mrf.mxu0
      %v3099 = vadd.f32 %v2898, %v3098
      %v3100 = vpop.f32.mrf.mxu0
      %3101 = vmatprep.mubr.bf16.mxu0 0
      %3102 = vmatmul.mubr.bf16.gmra.mxu0 %v2986
      %v3103 = vpop.f32.mrf.mxu0
      %v3104 = vadd.f32 %v2903, %v3103
      %v3105 = vpop.f32.mrf.mxu0
      %v3106 = vpop.f32.mrf.mxu0
      %v3107 = vadd.f32 %v2906, %v3106
      %v3108 = vpop.f32.mrf.mxu0
      %3109 = vmatprep.mubr.bf16.mxu0 0
      %3110 = vmatmul.mubr.bf16.gmra.mxu0 %v2988
      %v3111 = vpop.f32.mrf.mxu0
      %v3112 = vadd.f32 %v2911, %v3111
      %v3113 = vpop.f32.mrf.mxu0
      %v3114 = vpop.f32.mrf.mxu0
      %v3115 = vadd.f32 %v2914, %v3114
      %v3116 = vpop.f32.mrf.mxu0
      %3117 = vmatprep.mubr.bf16.mxu0 0
      %3118 = vmatmul.mubr.bf16.gmra.mxu0 %v2990
      %v3119 = vpop.f32.mrf.mxu0
      %v3120 = vadd.f32 %v2919, %v3119
      %v3121 = vpop.f32.mrf.mxu0
      %v3122 = vpop.f32.mrf.mxu0
      %v3123 = vadd.f32 %v2922, %v3122
      %v3124 = vpop.f32.mrf.mxu0
      %3125 = vmatprep.mubr.bf16.mxu0 0
      %3126 = vmatmul.mubr.bf16.gmra.mxu0 %v2992
      %v3127 = vpop.f32.mrf.mxu0
      %v3128 = vadd.f32 %v2927, %v3127
      %v3129 = vpop.f32.mrf.mxu0
      %v3130 = vpop.f32.mrf.mxu0
      %v3131 = vadd.f32 %v2930, %v3130
      %v3132 = vpop.f32.mrf.mxu0
      %3133 = vmatprep.mubr.bf16.mxu0 0
      %3134 = vmatmul.mubr.bf16.gmra.mxu0 %v2994
      %v3135 = vpop.f32.mrf.mxu0
      %v3136 = vadd.f32 %v2935, %v3135
      %v3137 = vpop.f32.mrf.mxu0
      %v3138 = vpop.f32.mrf.mxu0
      %v3139 = vadd.f32 %v2938, %v3138
      %v3140 = vpop.f32.mrf.mxu0
      %3141 = vmatprep.mubr.bf16.mxu0 0
      %3142 = vmatmul.mubr.bf16.gmra.mxu0 %v2996
      %v3143 = vpop.f32.mrf.mxu0
      %v3144 = vadd.f32 %v2943, %v3143
      %v3145 = vpop.f32.mrf.mxu0
      %v3146 = vpop.f32.mrf.mxu0
      %v3147 = vadd.f32 %v2946, %v3146
      %v3148 = vpop.f32.mrf.mxu0
      %3149 = vmatprep.mubr.bf16.mxu0 0
      %3150 = vmatmul.mubr.bf16.gmra.mxu0 %v2998
      %v3151 = vpop.f32.mrf.mxu0
      %v3152 = vadd.f32 %v2951, %v3151
      %v3153 = vpop.f32.mrf.mxu0
      %v3154 = vpop.f32.mrf.mxu0
      %v3155 = vadd.f32 %v2954, %v3154
      %v3156 = vpop.f32.mrf.mxu0
      %3157 = vmatprep.mubr.bf16.mxu0 0
      %3158 = vmatmul.mubr.bf16.gmra.mxu0 %v3000
      %v3159 = vpop.f32.mrf.mxu0
      %v3160 = vadd.f32 %v2959, %v3159
      %v3161 = vpop.f32.mrf.mxu0
      %v3162 = vpop.f32.mrf.mxu0
      %v3163 = vadd.f32 %v2962, %v3162
      %v3164 = vpop.f32.mrf.mxu0
      %3165 = vdwg.mxu0
      %s3166 = scalar_lea.vmem [#allocation2], 24
      %v3167 = vld [vmem:[%s3166] sm:$0xf]
      %v3168 = vld [vmem:[%s3166 + $0x4] sm:$0xf]
      %v3169 = vld [vmem:[%s3166 + $0xc] sm:$0xf]
      %v3170 = vld [vmem:[%s3166 + $0x10] sm:$0xf]
      %v3171 = vld [vmem:[%s3166 + $0x18] sm:$0xf]
      %v3172 = vld [vmem:[%s3166 + $0x1c] sm:$0xf]
      %v3173 = vld [vmem:[%s3166 + $0x24] sm:$0xf]
      %v3174 = vld [vmem:[%s3166 + $0x28] sm:$0xf]
      %v3175 = vld [vmem:[%s3166 + $0x30] sm:$0xf]
      %v3176 = vld [vmem:[%s3166 + $0x34] sm:$0xf]
      %v3177 = vld [vmem:[%s3166 + $0x3c] sm:$0xf]
      %v3178 = vld [vmem:[%s3166 + $0x40] sm:$0xf]
      %v3179 = vld [vmem:[%s3166 + $0x48] sm:$0xf]
      %v3180 = vld [vmem:[%s3166 + $0x4c] sm:$0xf]
      %v3181 = vld [vmem:[%s3166 + $0x54] sm:$0xf]
      %v3182 = vld [vmem:[%s3166 + $0x58] sm:$0xf]
      %v3183 = vld [vmem:[%s3166 + $0x60] sm:$0xf]
      %v3184 = vld [vmem:[%s3166 + $0x64] sm:$0xf]
      %v3185 = vld [vmem:[%s3166 + $0x6c] sm:$0xf]
      %v3186 = vld [vmem:[%s3166 + $0x70] sm:$0xf]
      %v3187 = vld [vmem:[%s3166 + $0x78] sm:$0xf]
      %v3188 = vld [vmem:[%s3166 + $0x7c] sm:$0xf]
      %v3189 = vld [vmem:[%s3166 + $0x84] sm:$0xf]
      %v3190 = vld [vmem:[%s3166 + $0x88] sm:$0xf]
      %v3191 = vld [vmem:[%s3166 + $0x90] sm:$0xf]
      %v3192 = vld [vmem:[%s3166 + $0x94] sm:$0xf]
      %v3193 = vld [vmem:[%s3166 + $0x9c] sm:$0xf]
      %v3194 = vld [vmem:[%s3166 + $0xa0] sm:$0xf]
      %v3195 = vld [vmem:[%s3166 + $0xa8] sm:$0xf]
      %v3196 = vld [vmem:[%s3166 + $0xac] sm:$0xf]
      %v3197 = vld [vmem:[%s3166 + $0xb4] sm:$0xf]
      %v3198 = vld [vmem:[%s3166 + $0xb8] sm:$0xf]
      %v3199 = vld [vmem:[%s3166 + $0x8] sm:$0x1]
      %v3200 = vld [vmem:[%s3166 + $0x14] sm:$0x1]
      %v3201 = vld [vmem:[%s3166 + $0x20] sm:$0x1]
      %v3202 = vld [vmem:[%s3166 + $0x2c] sm:$0x1]
      %v3203 = vld [vmem:[%s3166 + $0x38] sm:$0x1]
      %v3204 = vld [vmem:[%s3166 + $0x44] sm:$0x1]
      %v3205 = vld [vmem:[%s3166 + $0x50] sm:$0x1]
      %v3206 = vld [vmem:[%s3166 + $0x5c] sm:$0x1]
      %v3207 = vld [vmem:[%s3166 + $0x68] sm:$0x1]
      %v3208 = vld [vmem:[%s3166 + $0x74] sm:$0x1]
      %v3209 = vld [vmem:[%s3166 + $0x80] sm:$0x1]
      %v3210 = vld [vmem:[%s3166 + $0x8c] sm:$0x1]
      %v3211 = vld [vmem:[%s3166 + $0x98] sm:$0x1]
      %v3212 = vld [vmem:[%s3166 + $0xa4] sm:$0x1]
      %v3213 = vld [vmem:[%s3166 + $0xb0] sm:$0x1]
      %v3214 = vld [vmem:[%s3166 + $0xbc] sm:$0x1]
      %v3216 = vshrl.u32 %v3167, 16
      %v3218 = vrot.slane %v3216, 4
      %v3219 = vshll.u32 %v3167, 16
      %v3221 = vrot.slane %v3219, 5
      %v3222 = vor.u32 %v3218, %v3221
      %v3223 = vrot.slane %v3222, 4
      %v3225 = vshll.u32 %v3168, 16
      %v3227 = vrot.slane %v3225, 5
      %v3228 = vsel %vm975, %v3223, %v3227
      %v3229 = vshrl.u32 %v3168, 16
      %v3231 = vrot.slane %v3229, 4
      %v3232 = vor.u32 %v3231, %v3227
      %v3233 = vrot.slane %v3232, 4
      %v3235 = vshll.u32 %v3199, 16
      %v3237 = vrot.slane %v3235, 5
      %v3238 = vsel %vm975, %v3233, %v3237
      %v3240 = vshrl.u32 %v3169, 16
      %v3242 = vrot.slane %v3240, 4
      %v3243 = vshll.u32 %v3169, 16
      %v3245 = vrot.slane %v3243, 5
      %v3246 = vor.u32 %v3242, %v3245
      %v3247 = vrot.slane %v3246, 4
      %v3249 = vshll.u32 %v3170, 16
      %v3251 = vrot.slane %v3249, 5
      %v3252 = vsel %vm975, %v3247, %v3251
      %v3253 = vshrl.u32 %v3170, 16
      %v3255 = vrot.slane %v3253, 4
      %v3256 = vor.u32 %v3255, %v3251
      %v3257 = vrot.slane %v3256, 4
      %v3259 = vshll.u32 %v3200, 16
      %v3261 = vrot.slane %v3259, 5
      %v3262 = vsel %vm975, %v3257, %v3261
      %v3264 = vshrl.u32 %v3171, 16
      %v3266 = vrot.slane %v3264, 4
      %v3267 = vshll.u32 %v3171, 16
      %v3269 = vrot.slane %v3267, 5
      %v3270 = vor.u32 %v3266, %v3269
      %v3271 = vrot.slane %v3270, 4
      %v3273 = vshll.u32 %v3172, 16
      %v3275 = vrot.slane %v3273, 5
      %v3276 = vsel %vm975, %v3271, %v3275
      %v3277 = vshrl.u32 %v3172, 16
      %v3279 = vrot.slane %v3277, 4
      %v3280 = vor.u32 %v3279, %v3275
      %v3281 = vrot.slane %v3280, 4
      %v3283 = vshll.u32 %v3201, 16
      %v3285 = vrot.slane %v3283, 5
      %v3286 = vsel %vm975, %v3281, %v3285
      %v3288 = vshrl.u32 %v3173, 16
      %v3290 = vrot.slane %v3288, 4
      %v3291 = vshll.u32 %v3173, 16
      %v3293 = vrot.slane %v3291, 5
      %v3294 = vor.u32 %v3290, %v3293
      %v3295 = vrot.slane %v3294, 4
      %v3297 = vshll.u32 %v3174, 16
      %v3299 = vrot.slane %v3297, 5
      %v3300 = vsel %vm975, %v3295, %v3299
      %v3301 = vshrl.u32 %v3174, 16
      %v3303 = vrot.slane %v3301, 4
      %v3304 = vor.u32 %v3303, %v3299
      %v3305 = vrot.slane %v3304, 4
      %v3307 = vshll.u32 %v3202, 16
      %v3309 = vrot.slane %v3307, 5
      %v3310 = vsel %vm975, %v3305, %v3309
      %v3312 = vshrl.u32 %v3175, 16
      %v3314 = vrot.slane %v3312, 4
      %v3315 = vshll.u32 %v3175, 16
      %v3317 = vrot.slane %v3315, 5
      %v3318 = vor.u32 %v3314, %v3317
      %v3319 = vrot.slane %v3318, 4
      %v3321 = vshll.u32 %v3176, 16
      %v3323 = vrot.slane %v3321, 5
      %v3324 = vsel %vm975, %v3319, %v3323
      %v3325 = vshrl.u32 %v3176, 16
      %v3327 = vrot.slane %v3325, 4
      %v3328 = vor.u32 %v3327, %v3323
      %v3329 = vrot.slane %v3328, 4
      %v3331 = vshll.u32 %v3203, 16
      %v3333 = vrot.slane %v3331, 5
      %v3334 = vsel %vm975, %v3329, %v3333
      %v3336 = vshrl.u32 %v3177, 16
      %v3338 = vrot.slane %v3336, 4
      %v3339 = vshll.u32 %v3177, 16
      %v3341 = vrot.slane %v3339, 5
      %v3342 = vor.u32 %v3338, %v3341
      %v3343 = vrot.slane %v3342, 4
      %v3345 = vshll.u32 %v3178, 16
      %v3347 = vrot.slane %v3345, 5
      %v3348 = vsel %vm975, %v3343, %v3347
      %v3349 = vshrl.u32 %v3178, 16
      %v3351 = vrot.slane %v3349, 4
      %v3352 = vor.u32 %v3351, %v3347
      %v3353 = vrot.slane %v3352, 4
      %v3355 = vshll.u32 %v3204, 16
      %v3357 = vrot.slane %v3355, 5
      %v3358 = vsel %vm975, %v3353, %v3357
      %v3360 = vshrl.u32 %v3179, 16
      %v3362 = vrot.slane %v3360, 4
      %v3363 = vshll.u32 %v3179, 16
      %v3365 = vrot.slane %v3363, 5
      %v3366 = vor.u32 %v3362, %v3365
      %v3367 = vrot.slane %v3366, 4
      %v3369 = vshll.u32 %v3180, 16
      %v3371 = vrot.slane %v3369, 5
      %v3372 = vsel %vm975, %v3367, %v3371
      %v3373 = vshrl.u32 %v3180, 16
      %v3375 = vrot.slane %v3373, 4
      %v3376 = vor.u32 %v3375, %v3371
      %v3377 = vrot.slane %v3376, 4
      %v3379 = vshll.u32 %v3205, 16
      %v3381 = vrot.slane %v3379, 5
      %v3382 = vsel %vm975, %v3377, %v3381
      %v3384 = vshrl.u32 %v3181, 16
      %v3386 = vrot.slane %v3384, 4
      %v3387 = vshll.u32 %v3181, 16
      %v3389 = vrot.slane %v3387, 5
      %v3390 = vor.u32 %v3386, %v3389
      %v3391 = vrot.slane %v3390, 4
      %v3393 = vshll.u32 %v3182, 16
      %v3395 = vrot.slane %v3393, 5
      %v3396 = vsel %vm975, %v3391, %v3395
      %v3397 = vshrl.u32 %v3182, 16
      %v3399 = vrot.slane %v3397, 4
      %v3400 = vor.u32 %v3399, %v3395
      %v3401 = vrot.slane %v3400, 4
      %v3403 = vshll.u32 %v3206, 16
      %v3405 = vrot.slane %v3403, 5
      %v3406 = vsel %vm975, %v3401, %v3405
      %v3408 = vshrl.u32 %v3183, 16
      %v3410 = vrot.slane %v3408, 4
      %v3411 = vshll.u32 %v3183, 16
      %v3413 = vrot.slane %v3411, 5
      %v3414 = vor.u32 %v3410, %v3413
      %v3415 = vrot.slane %v3414, 4
      %v3417 = vshll.u32 %v3184, 16
      %v3419 = vrot.slane %v3417, 5
      %v3420 = vsel %vm975, %v3415, %v3419
      %v3421 = vshrl.u32 %v3184, 16
      %v3423 = vrot.slane %v3421, 4
      %v3424 = vor.u32 %v3423, %v3419
      %v3425 = vrot.slane %v3424, 4
      %v3427 = vshll.u32 %v3207, 16
      %v3429 = vrot.slane %v3427, 5
      %v3430 = vsel %vm975, %v3425, %v3429
      %v3432 = vshrl.u32 %v3185, 16
      %v3434 = vrot.slane %v3432, 4
      %v3435 = vshll.u32 %v3185, 16
      %v3437 = vrot.slane %v3435, 5
      %v3438 = vor.u32 %v3434, %v3437
      %v3439 = vrot.slane %v3438, 4
      %v3441 = vshll.u32 %v3186, 16
      %v3443 = vrot.slane %v3441, 5
      %v3444 = vsel %vm975, %v3439, %v3443
      %v3445 = vshrl.u32 %v3186, 16
      %v3447 = vrot.slane %v3445, 4
      %v3448 = vor.u32 %v3447, %v3443
      %v3449 = vrot.slane %v3448, 4
      %v3451 = vshll.u32 %v3208, 16
      %v3453 = vrot.slane %v3451, 5
      %v3454 = vsel %vm975, %v3449, %v3453
      %v3456 = vshrl.u32 %v3187, 16
      %v3458 = vrot.slane %v3456, 4
      %v3459 = vshll.u32 %v3187, 16
      %v3461 = vrot.slane %v3459, 5
      %v3462 = vor.u32 %v3458, %v3461
      %v3463 = vrot.slane %v3462, 4
      %v3465 = vshll.u32 %v3188, 16
      %v3467 = vrot.slane %v3465, 5
      %v3468 = vsel %vm975, %v3463, %v3467
      %v3469 = vshrl.u32 %v3188, 16
      %v3471 = vrot.slane %v3469, 4
      %v3472 = vor.u32 %v3471, %v3467
      %v3473 = vrot.slane %v3472, 4
      %v3475 = vshll.u32 %v3209, 16
      %v3477 = vrot.slane %v3475, 5
      %v3478 = vsel %vm975, %v3473, %v3477
      %v3480 = vshrl.u32 %v3189, 16
      %v3482 = vrot.slane %v3480, 4
      %v3483 = vshll.u32 %v3189, 16
      %v3485 = vrot.slane %v3483, 5
      %v3486 = vor.u32 %v3482, %v3485
      %v3487 = vrot.slane %v3486, 4
      %v3489 = vshll.u32 %v3190, 16
      %v3491 = vrot.slane %v3489, 5
      %v3492 = vsel %vm975, %v3487, %v3491
      %v3493 = vshrl.u32 %v3190, 16
      %v3495 = vrot.slane %v3493, 4
      %v3496 = vor.u32 %v3495, %v3491
      %v3497 = vrot.slane %v3496, 4
      %v3499 = vshll.u32 %v3210, 16
      %v3501 = vrot.slane %v3499, 5
      %v3502 = vsel %vm975, %v3497, %v3501
      %v3504 = vshrl.u32 %v3191, 16
      %v3506 = vrot.slane %v3504, 4
      %v3507 = vshll.u32 %v3191, 16
      %v3509 = vrot.slane %v3507, 5
      %v3510 = vor.u32 %v3506, %v3509
      %v3511 = vrot.slane %v3510, 4
      %v3513 = vshll.u32 %v3192, 16
      %v3515 = vrot.slane %v3513, 5
      %v3516 = vsel %vm975, %v3511, %v3515
      %v3517 = vshrl.u32 %v3192, 16
      %v3519 = vrot.slane %v3517, 4
      %v3520 = vor.u32 %v3519, %v3515
      %v3521 = vrot.slane %v3520, 4
      %v3523 = vshll.u32 %v3211, 16
      %v3525 = vrot.slane %v3523, 5
      %v3526 = vsel %vm975, %v3521, %v3525
      %v3528 = vshrl.u32 %v3193, 16
      %v3530 = vrot.slane %v3528, 4
      %v3531 = vshll.u32 %v3193, 16
      %v3533 = vrot.slane %v3531, 5
      %v3534 = vor.u32 %v3530, %v3533
      %v3535 = vrot.slane %v3534, 4
      %v3537 = vshll.u32 %v3194, 16
      %v3539 = vrot.slane %v3537, 5
      %v3540 = vsel %vm975, %v3535, %v3539
      %v3541 = vshrl.u32 %v3194, 16
      %v3543 = vrot.slane %v3541, 4
      %v3544 = vor.u32 %v3543, %v3539
      %v3545 = vrot.slane %v3544, 4
      %v3547 = vshll.u32 %v3212, 16
      %v3549 = vrot.slane %v3547, 5
      %v3550 = vsel %vm975, %v3545, %v3549
      %v3552 = vshrl.u32 %v3195, 16
      %v3554 = vrot.slane %v3552, 4
      %v3555 = vshll.u32 %v3195, 16
      %v3557 = vrot.slane %v3555, 5
      %v3558 = vor.u32 %v3554, %v3557
      %v3559 = vrot.slane %v3558, 4
      %v3561 = vshll.u32 %v3196, 16
      %v3563 = vrot.slane %v3561, 5
      %v3564 = vsel %vm975, %v3559, %v3563
      %v3565 = vshrl.u32 %v3196, 16
      %v3567 = vrot.slane %v3565, 4
      %v3568 = vor.u32 %v3567, %v3563
      %v3569 = vrot.slane %v3568, 4
      %v3571 = vshll.u32 %v3213, 16
      %v3573 = vrot.slane %v3571, 5
      %v3574 = vsel %vm975, %v3569, %v3573
      %v3576 = vshrl.u32 %v3197, 16
      %v3578 = vrot.slane %v3576, 4
      %v3579 = vshll.u32 %v3197, 16
      %v3581 = vrot.slane %v3579, 5
      %v3582 = vor.u32 %v3578, %v3581
      %v3583 = vrot.slane %v3582, 4
      %v3585 = vshll.u32 %v3198, 16
      %v3587 = vrot.slane %v3585, 5
      %v3588 = vsel %vm975, %v3583, %v3587
      %v3589 = vshrl.u32 %v3198, 16
      %v3591 = vrot.slane %v3589, 4
      %v3592 = vor.u32 %v3591, %v3587
      %v3593 = vrot.slane %v3592, 4
      %v3595 = vshll.u32 %v3214, 16
      %v3597 = vrot.slane %v3595, 5
      %v3598 = vsel %vm975, %v3593, %v3597
      %v3599 = vld [vmem:[%s3166] sm:$0xe]
      %v3600 = vld [vmem:[%s3166 + $0xc] sm:$0xe]
      %v3601 = vld [vmem:[%s3166 + $0x18] sm:$0xe]
      %v3602 = vld [vmem:[%s3166 + $0x24] sm:$0xe]
      %v3603 = vld [vmem:[%s3166 + $0x30] sm:$0xe]
      %v3604 = vld [vmem:[%s3166 + $0x3c] sm:$0xe]
      %v3605 = vld [vmem:[%s3166 + $0x48] sm:$0xe]
      %v3606 = vld [vmem:[%s3166 + $0x54] sm:$0xe]
      %v3607 = vld [vmem:[%s3166 + $0x60] sm:$0xe]
      %v3608 = vld [vmem:[%s3166 + $0x6c] sm:$0xe]
      %v3609 = vld [vmem:[%s3166 + $0x78] sm:$0xe]
      %v3610 = vld [vmem:[%s3166 + $0x84] sm:$0xe]
      %v3611 = vld [vmem:[%s3166 + $0x90] sm:$0xe]
      %v3612 = vld [vmem:[%s3166 + $0x9c] sm:$0xe]
      %v3613 = vld [vmem:[%s3166 + $0xa8] sm:$0xe]
      %v3614 = vld [vmem:[%s3166 + $0xb4] sm:$0xe]
      %v3663 = vrot.slane %v3599, 5
      %v3664 = vrot.slane %v3663, 4
      %v3665 = vrot.slane %v3168, 5
      %v3666 = vsel %vm1426, %v3664, %v3665
      %v3667 = vrot.slane %v3665, 4
      %v3668 = vrot.slane %v3199, 5
      %v3669 = vsel %vm1426, %v3667, %v3668
      %v3670 = vrot.slane %v3600, 5
      %v3671 = vrot.slane %v3670, 4
      %v3672 = vrot.slane %v3170, 5
      %v3673 = vsel %vm1426, %v3671, %v3672
      %v3674 = vrot.slane %v3672, 4
      %v3675 = vrot.slane %v3200, 5
      %v3676 = vsel %vm1426, %v3674, %v3675
      %v3677 = vrot.slane %v3601, 5
      %v3678 = vrot.slane %v3677, 4
      %v3679 = vrot.slane %v3172, 5
      %v3680 = vsel %vm1426, %v3678, %v3679
      %v3681 = vrot.slane %v3679, 4
      %v3682 = vrot.slane %v3201, 5
      %v3683 = vsel %vm1426, %v3681, %v3682
      %v3684 = vrot.slane %v3602, 5
      %v3685 = vrot.slane %v3684, 4
      %v3686 = vrot.slane %v3174, 5
      %v3687 = vsel %vm1426, %v3685, %v3686
      %v3688 = vrot.slane %v3686, 4
      %v3689 = vrot.slane %v3202, 5
      %v3690 = vsel %vm1426, %v3688, %v3689
      %v3691 = vrot.slane %v3603, 5
      %v3692 = vrot.slane %v3691, 4
      %v3693 = vrot.slane %v3176, 5
      %v3694 = vsel %vm1426, %v3692, %v3693
      %v3695 = vrot.slane %v3693, 4
      %v3696 = vrot.slane %v3203, 5
      %v3697 = vsel %vm1426, %v3695, %v3696
      %v3698 = vrot.slane %v3604, 5
      %v3699 = vrot.slane %v3698, 4
      %v3700 = vrot.slane %v3178, 5
      %v3701 = vsel %vm1426, %v3699, %v3700
      %v3702 = vrot.slane %v3700, 4
      %v3703 = vrot.slane %v3204, 5
      %v3704 = vsel %vm1426, %v3702, %v3703
      %v3705 = vrot.slane %v3605, 5
      %v3706 = vrot.slane %v3705, 4
      %v3707 = vrot.slane %v3180, 5
      %v3708 = vsel %vm1426, %v3706, %v3707
      %v3709 = vrot.slane %v3707, 4
      %v3710 = vrot.slane %v3205, 5
      %v3711 = vsel %vm1426, %v3709, %v3710
      %v3712 = vrot.slane %v3606, 5
      %v3713 = vrot.slane %v3712, 4
      %v3714 = vrot.slane %v3182, 5
      %v3715 = vsel %vm1426, %v3713, %v3714
      %v3716 = vrot.slane %v3714, 4
      %v3717 = vrot.slane %v3206, 5
      %v3718 = vsel %vm1426, %v3716, %v3717
      %v3719 = vrot.slane %v3607, 5
      %v3720 = vrot.slane %v3719, 4
      %v3721 = vrot.slane %v3184, 5
      %v3722 = vsel %vm1426, %v3720, %v3721
      %v3723 = vrot.slane %v3721, 4
      %v3724 = vrot.slane %v3207, 5
      %v3725 = vsel %vm1426, %v3723, %v3724
      %v3726 = vrot.slane %v3608, 5
      %v3727 = vrot.slane %v3726, 4
      %v3728 = vrot.slane %v3186, 5
      %v3729 = vsel %vm1426, %v3727, %v3728
      %v3730 = vrot.slane %v3728, 4
      %v3731 = vrot.slane %v3208, 5
      %v3732 = vsel %vm1426, %v3730, %v3731
      %v3733 = vrot.slane %v3609, 5
      %v3734 = vrot.slane %v3733, 4
      %v3735 = vrot.slane %v3188, 5
      %v3736 = vsel %vm1426, %v3734, %v3735
      %v3737 = vrot.slane %v3735, 4
      %v3738 = vrot.slane %v3209, 5
      %v3739 = vsel %vm1426, %v3737, %v3738
      %v3740 = vrot.slane %v3610, 5
      %v3741 = vrot.slane %v3740, 4
      %v3742 = vrot.slane %v3190, 5
      %v3743 = vsel %vm1426, %v3741, %v3742
      %v3744 = vrot.slane %v3742, 4
      %v3745 = vrot.slane %v3210, 5
      %v3746 = vsel %vm1426, %v3744, %v3745
      %v3747 = vrot.slane %v3611, 5
      %v3748 = vrot.slane %v3747, 4
      %v3749 = vrot.slane %v3192, 5
      %v3750 = vsel %vm1426, %v3748, %v3749
      %v3751 = vrot.slane %v3749, 4
      %v3752 = vrot.slane %v3211, 5
      %v3753 = vsel %vm1426, %v3751, %v3752
      %v3754 = vrot.slane %v3612, 5
      %v3755 = vrot.slane %v3754, 4
      %v3756 = vrot.slane %v3194, 5
      %v3757 = vsel %vm1426, %v3755, %v3756
      %v3758 = vrot.slane %v3756, 4
      %v3759 = vrot.slane %v3212, 5
      %v3760 = vsel %vm1426, %v3758, %v3759
      %v3761 = vrot.slane %v3613, 5
      %v3762 = vrot.slane %v3761, 4
      %v3763 = vrot.slane %v3196, 5
      %v3764 = vsel %vm1426, %v3762, %v3763
      %v3765 = vrot.slane %v3763, 4
      %v3766 = vrot.slane %v3213, 5
      %v3767 = vsel %vm1426, %v3765, %v3766
      %v3768 = vrot.slane %v3614, 5
      %v3769 = vrot.slane %v3768, 4
      %v3770 = vrot.slane %v3198, 5
      %v3771 = vsel %vm1426, %v3769, %v3770
      %v3772 = vrot.slane %v3770, 4
      %v3773 = vrot.slane %v3214, 5
      %v3774 = vsel %vm1426, %v3772, %v3773
      %v3791 = vunpack.c.l.b16 %v3167
      %v3792 = vunpack.c.l.b16 %v3168
      %v3793 = vunpack.c.l.b16 %v3169
      %v3794 = vunpack.c.l.b16 %v3170
      %v3795 = vunpack.c.l.b16 %v3171
      %v3796 = vunpack.c.l.b16 %v3172
      %v3797 = vunpack.c.l.b16 %v3173
      %v3798 = vunpack.c.l.b16 %v3174
      %v3799 = vunpack.c.l.b16 %v3175
      %v3800 = vunpack.c.l.b16 %v3176
      %v3801 = vunpack.c.l.b16 %v3177
      %v3802 = vunpack.c.l.b16 %v3178
      %v3803 = vunpack.c.l.b16 %v3179
      %v3804 = vunpack.c.l.b16 %v3180
      %v3805 = vunpack.c.l.b16 %v3181
      %v3806 = vunpack.c.l.b16 %v3182
      %v3807 = vunpack.c.l.b16 %v3183
      %v3808 = vunpack.c.l.b16 %v3184
      %v3809 = vunpack.c.l.b16 %v3185
      %v3810 = vunpack.c.l.b16 %v3186
      %v3811 = vunpack.c.l.b16 %v3187
      %v3812 = vunpack.c.l.b16 %v3188
      %v3813 = vunpack.c.l.b16 %v3189
      %v3814 = vunpack.c.l.b16 %v3190
      %v3815 = vunpack.c.l.b16 %v3191
      %v3816 = vunpack.c.l.b16 %v3192
      %v3817 = vunpack.c.l.b16 %v3193
      %v3818 = vunpack.c.l.b16 %v3194
      %v3819 = vunpack.c.l.b16 %v3195
      %v3820 = vunpack.c.l.b16 %v3196
      %v3821 = vunpack.c.l.b16 %v3197
      %v3822 = vunpack.c.l.b16 %v3198
      %v3823 = vpack.c.b16 %v3792, %v3791
      %v3824 = vpack.c.b16 %v3794, %v3793
      %v3825 = vpack.c.b16 %v3796, %v3795
      %v3826 = vpack.c.b16 %v3798, %v3797
      %v3827 = vpack.c.b16 %v3800, %v3799
      %v3828 = vpack.c.b16 %v3802, %v3801
      %v3829 = vpack.c.b16 %v3804, %v3803
      %v3830 = vpack.c.b16 %v3806, %v3805
      %v3831 = vpack.c.b16 %v3808, %v3807
      %v3832 = vpack.c.b16 %v3810, %v3809
      %v3833 = vpack.c.b16 %v3812, %v3811
      %v3834 = vpack.c.b16 %v3814, %v3813
      %v3835 = vpack.c.b16 %v3816, %v3815
      %v3836 = vpack.c.b16 %v3818, %v3817
      %v3837 = vpack.c.b16 %v3820, %v3819
      %v3838 = vpack.c.b16 %v3822, %v3821
      %v3839 = vunpack.c.l.b16 %v3228
      %v3840 = vunpack.c.l.b16 %v3238
      %v3841 = vunpack.c.l.b16 %v3252
      %v3842 = vunpack.c.l.b16 %v3262
      %v3843 = vunpack.c.l.b16 %v3276
      %v3844 = vunpack.c.l.b16 %v3286
      %v3845 = vunpack.c.l.b16 %v3300
      %v3846 = vunpack.c.l.b16 %v3310
      %v3847 = vunpack.c.l.b16 %v3324
      %v3848 = vunpack.c.l.b16 %v3334
      %v3849 = vunpack.c.l.b16 %v3348
      %v3850 = vunpack.c.l.b16 %v3358
      %v3851 = vunpack.c.l.b16 %v3372
      %v3852 = vunpack.c.l.b16 %v3382
      %v3853 = vunpack.c.l.b16 %v3396
      %v3854 = vunpack.c.l.b16 %v3406
      %v3855 = vunpack.c.l.b16 %v3420
      %v3856 = vunpack.c.l.b16 %v3430
      %v3857 = vunpack.c.l.b16 %v3444
      %v3858 = vunpack.c.l.b16 %v3454
      %v3859 = vunpack.c.l.b16 %v3468
      %v3860 = vunpack.c.l.b16 %v3478
      %v3861 = vunpack.c.l.b16 %v3492
      %v3862 = vunpack.c.l.b16 %v3502
      %v3863 = vunpack.c.l.b16 %v3516
      %v3864 = vunpack.c.l.b16 %v3526
      %v3865 = vunpack.c.l.b16 %v3540
      %v3866 = vunpack.c.l.b16 %v3550
      %v3867 = vunpack.c.l.b16 %v3564
      %v3868 = vunpack.c.l.b16 %v3574
      %v3869 = vunpack.c.l.b16 %v3588
      %v3870 = vunpack.c.l.b16 %v3598
      %v3871 = vpack.c.b16 %v3840, %v3839
      %v3872 = vpack.c.b16 %v3842, %v3841
      %v3873 = vpack.c.b16 %v3844, %v3843
      %v3874 = vpack.c.b16 %v3846, %v3845
      %v3875 = vpack.c.b16 %v3848, %v3847
      %v3876 = vpack.c.b16 %v3850, %v3849
      %v3877 = vpack.c.b16 %v3852, %v3851
      %v3878 = vpack.c.b16 %v3854, %v3853
      %v3879 = vpack.c.b16 %v3856, %v3855
      %v3880 = vpack.c.b16 %v3858, %v3857
      %v3881 = vpack.c.b16 %v3860, %v3859
      %v3882 = vpack.c.b16 %v3862, %v3861
      %v3883 = vpack.c.b16 %v3864, %v3863
      %v3884 = vpack.c.b16 %v3866, %v3865
      %v3885 = vpack.c.b16 %v3868, %v3867
      %v3886 = vpack.c.b16 %v3870, %v3869
      %3887 = vrot.lane.b32.xlu0 %v3871, 4
      %v3888 = vpop.permute.xlu0 %3887
      %3889 = vrot.lane.b32.xlu0 %v3872, 4
      %v3890 = vpop.permute.xlu0 %3889
      %3891 = vrot.lane.b32.xlu0 %v3873, 4
      %v3892 = vpop.permute.xlu0 %3891
      %3893 = vrot.lane.b32.xlu0 %v3874, 4
      %v3894 = vpop.permute.xlu0 %3893
      %3895 = vrot.lane.b32.xlu0 %v3875, 4
      %v3896 = vpop.permute.xlu0 %3895
      %3897 = vrot.lane.b32.xlu0 %v3876, 4
      %v3898 = vpop.permute.xlu0 %3897
      %3899 = vrot.lane.b32.xlu0 %v3877, 4
      %v3900 = vpop.permute.xlu0 %3899
      %3901 = vrot.lane.b32.xlu0 %v3878, 4
      %v3902 = vpop.permute.xlu0 %3901
      %3903 = vrot.lane.b32.xlu0 %v3879, 4
      %v3904 = vpop.permute.xlu0 %3903
      %3905 = vrot.lane.b32.xlu0 %v3880, 4
      %v3906 = vpop.permute.xlu0 %3905
      %3907 = vrot.lane.b32.xlu0 %v3881, 4
      %v3908 = vpop.permute.xlu0 %3907
      %3909 = vrot.lane.b32.xlu0 %v3882, 4
      %v3910 = vpop.permute.xlu0 %3909
      %3911 = vrot.lane.b32.xlu0 %v3883, 4
      %v3912 = vpop.permute.xlu0 %3911
      %3913 = vrot.lane.b32.xlu0 %v3884, 4
      %v3914 = vpop.permute.xlu0 %3913
      %3915 = vrot.lane.b32.xlu0 %v3885, 4
      %v3916 = vpop.permute.xlu0 %3915
      %3917 = vrot.lane.b32.xlu0 %v3886, 4
      %v3918 = vpop.permute.xlu0 %3917
      %v3919 = vunpack.c.l.b16 %v3666
      %v3920 = vunpack.c.l.b16 %v3669
      %v3921 = vunpack.c.l.b16 %v3673
      %v3922 = vunpack.c.l.b16 %v3676
      %v3923 = vunpack.c.l.b16 %v3680
      %v3924 = vunpack.c.l.b16 %v3683
      %v3925 = vunpack.c.l.b16 %v3687
      %v3926 = vunpack.c.l.b16 %v3690
      %v3927 = vunpack.c.l.b16 %v3694
      %v3928 = vunpack.c.l.b16 %v3697
      %v3929 = vunpack.c.l.b16 %v3701
      %v3930 = vunpack.c.l.b16 %v3704
      %v3931 = vunpack.c.l.b16 %v3708
      %v3932 = vunpack.c.l.b16 %v3711
      %v3933 = vunpack.c.l.b16 %v3715
      %v3934 = vunpack.c.l.b16 %v3718
      %v3935 = vunpack.c.l.b16 %v3722
      %v3936 = vunpack.c.l.b16 %v3725
      %v3937 = vunpack.c.l.b16 %v3729
      %v3938 = vunpack.c.l.b16 %v3732
      %v3939 = vunpack.c.l.b16 %v3736
      %v3940 = vunpack.c.l.b16 %v3739
      %v3941 = vunpack.c.l.b16 %v3743
      %v3942 = vunpack.c.l.b16 %v3746
      %v3943 = vunpack.c.l.b16 %v3750
      %v3944 = vunpack.c.l.b16 %v3753
      %v3945 = vunpack.c.l.b16 %v3757
      %v3946 = vunpack.c.l.b16 %v3760
      %v3947 = vunpack.c.l.b16 %v3764
      %v3948 = vunpack.c.l.b16 %v3767
      %v3949 = vunpack.c.l.b16 %v3771
      %v3950 = vunpack.c.l.b16 %v3774
      %v3951 = vpack.c.b16 %v3920, %v3919
      %v3952 = vpack.c.b16 %v3922, %v3921
      %v3953 = vpack.c.b16 %v3924, %v3923
      %v3954 = vpack.c.b16 %v3926, %v3925
      %v3955 = vpack.c.b16 %v3928, %v3927
      %v3956 = vpack.c.b16 %v3930, %v3929
      %v3957 = vpack.c.b16 %v3932, %v3931
      %v3958 = vpack.c.b16 %v3934, %v3933
      %v3959 = vpack.c.b16 %v3936, %v3935
      %v3960 = vpack.c.b16 %v3938, %v3937
      %v3961 = vpack.c.b16 %v3940, %v3939
      %v3962 = vpack.c.b16 %v3942, %v3941
      %v3963 = vpack.c.b16 %v3944, %v3943
      %v3964 = vpack.c.b16 %v3946, %v3945
      %v3965 = vpack.c.b16 %v3948, %v3947
      %v3966 = vpack.c.b16 %v3950, %v3949
      %3967 = vrot.lane.b32.xlu0 %v3951, 8
      %v3968 = vpop.permute.xlu0 %3967
      %3969 = vrot.lane.b32.xlu0 %v3952, 8
      %v3970 = vpop.permute.xlu0 %3969
      %3971 = vrot.lane.b32.xlu0 %v3953, 8
      %v3972 = vpop.permute.xlu0 %3971
      %3973 = vrot.lane.b32.xlu0 %v3954, 8
      %v3974 = vpop.permute.xlu0 %3973
      %3975 = vrot.lane.b32.xlu0 %v3955, 8
      %v3976 = vpop.permute.xlu0 %3975
      %3977 = vrot.lane.b32.xlu0 %v3956, 8
      %v3978 = vpop.permute.xlu0 %3977
      %3979 = vrot.lane.b32.xlu0 %v3957, 8
      %v3980 = vpop.permute.xlu0 %3979
      %3981 = vrot.lane.b32.xlu0 %v3958, 8
      %v3982 = vpop.permute.xlu0 %3981
      %3983 = vrot.lane.b32.xlu0 %v3959, 8
      %v3984 = vpop.permute.xlu0 %3983
      %3985 = vrot.lane.b32.xlu0 %v3960, 8
      %v3986 = vpop.permute.xlu0 %3985
      %3987 = vrot.lane.b32.xlu0 %v3961, 8
      %v3988 = vpop.permute.xlu0 %3987
      %3989 = vrot.lane.b32.xlu0 %v3962, 8
      %v3990 = vpop.permute.xlu0 %3989
      %3991 = vrot.lane.b32.xlu0 %v3963, 8
      %v3992 = vpop.permute.xlu0 %3991
      %3993 = vrot.lane.b32.xlu0 %v3964, 8
      %v3994 = vpop.permute.xlu0 %3993
      %3995 = vrot.lane.b32.xlu0 %v3965, 8
      %v3996 = vpop.permute.xlu0 %3995
      %3997 = vrot.lane.b32.xlu0 %v3966, 8
      %v3998 = vpop.permute.xlu0 %3997
      %v4001 = vsel %vm1763, %v3823, %v3888
      %v4004 = vsel %vm1763, %v3824, %v3890
      %v4007 = vsel %vm1763, %v3825, %v3892
      %v4010 = vsel %vm1763, %v3826, %v3894
      %v4013 = vsel %vm1763, %v3827, %v3896
      %v4016 = vsel %vm1763, %v3828, %v3898
      %v4019 = vsel %vm1763, %v3829, %v3900
      %v4022 = vsel %vm1763, %v3830, %v3902
      %v4025 = vsel %vm1763, %v3831, %v3904
      %v4028 = vsel %vm1763, %v3832, %v3906
      %v4031 = vsel %vm1763, %v3833, %v3908
      %v4034 = vsel %vm1763, %v3834, %v3910
      %v4037 = vsel %vm1763, %v3835, %v3912
      %v4040 = vsel %vm1763, %v3836, %v3914
      %v4043 = vsel %vm1763, %v3837, %v3916
      %v4046 = vsel %vm1763, %v3838, %v3918
      %v4048 = vsel %vm1812, %v4001, %v3968
      %v4050 = vsel %vm1812, %v4004, %v3970
      %v4052 = vsel %vm1812, %v4007, %v3972
      %v4054 = vsel %vm1812, %v4010, %v3974
      %v4056 = vsel %vm1812, %v4013, %v3976
      %v4058 = vsel %vm1812, %v4016, %v3978
      %v4060 = vsel %vm1812, %v4019, %v3980
      %v4062 = vsel %vm1812, %v4022, %v3982
      %v4064 = vsel %vm1812, %v4025, %v3984
      %v4066 = vsel %vm1812, %v4028, %v3986
      %v4068 = vsel %vm1812, %v4031, %v3988
      %v4070 = vsel %vm1812, %v4034, %v3990
      %v4072 = vsel %vm1812, %v4037, %v3992
      %v4074 = vsel %vm1812, %v4040, %v3994
      %v4076 = vsel %vm1812, %v4043, %v3996
      %v4078 = vsel %vm1812, %v4046, %v3998
      %s4079 = scalar_lea.vmem %s1, 16
      %v4080 = vld [vmem:[%s4079] sm:$0xf]
      %v4081 = vld [vmem:[%s4079 + $0x4] sm:$0x3]
      %v4084 = vunpack.c.l.b16 %v4080
      %v4085 = vunpack.c.l.b16 %v4081
      %v4086 = vpack.c.b16 %v4085, %v4084
      %v4087 = vsel %vm2767, %v4048, 0
      %v4089 = vsel %vm2767, %v4050, 0
      %v4091 = vsel %vm2767, %v4052, 0
      %v4093 = vsel %vm2767, %v4054, 0
      %v4095 = vsel %vm2767, %v4056, 0
      %v4097 = vsel %vm2767, %v4058, 0
      %v4099 = vsel %vm2767, %v4060, 0
      %v4101 = vsel %vm2767, %v4062, 0
      %v4103 = vsel %vm2767, %v4064, 0
      %v4105 = vsel %vm2767, %v4066, 0
      %v4107 = vsel %vm2767, %v4068, 0
      %v4109 = vsel %vm2767, %v4070, 0
      %v4111 = vsel %vm2767, %v4072, 0
      %v4113 = vsel %vm2767, %v4074, 0
      %v4115 = vsel %vm2767, %v4076, 0
      %v4117 = vsel %vm2767, %v4078, 0
      %v4120 = vsel %vm2800, %v4086, 0
      %4122 = vmatprep.subr.bf16.mxu0 0
      %4123 = vmatpush1.bf16.msra.mxu0 0
      %4124 = vmatprep.subr.bf16.mxu0 0
      %4125 = vmatpush1.bf16.msra.mxu0 0
      %4126 = vmatprep.subr.bf16.mxu0 0
      %4127 = vmatpush1.bf16.msra.mxu0 0
      %4128 = vmatprep.subr.bf16.mxu0 0
      %4129 = vmatpush1.bf16.msra.mxu0 0
      %4130 = vmatprep.subr.bf16.mxu0 0
      %4131 = vmatpush1.bf16.msra.mxu0 0
      %4132 = vmatprep.subr.bf16.mxu0 0
      %4133 = vmatpush1.bf16.msra.mxu0 0
      %4134 = vmatprep.subr.bf16.mxu0 0
      %4135 = vmatpush1.bf16.msra.mxu0 0
      %4136 = vmatprep.subr.bf16.mxu0 0
      %4137 = vmatpush1.bf16.msra.mxu0 %v4120
      %4138 = vmatprep.subr.bf16.mxu0 0
      %4139 = vmatpush2.bf16.msra.mxu0 0
      %4140 = vmatprep.subr.bf16.mxu0 0
      %4141 = vmatpush2.bf16.msra.mxu0 0
      %4142 = vmatprep.subr.bf16.mxu0 0
      %4143 = vmatpush2.bf16.msra.mxu0 0
      %4144 = vmatprep.subr.bf16.mxu0 0
      %4145 = vmatpush2.bf16.msra.mxu0 0
      %4146 = vmatprep.subr.bf16.mxu0 0
      %4147 = vmatpush2.bf16.msra.mxu0 0
      %4148 = vmatprep.subr.bf16.mxu0 0
      %4149 = vmatpush2.bf16.msra.mxu0 0
      %4150 = vmatprep.subr.bf16.mxu0 0
      %4151 = vmatpush2.bf16.msra.mxu0 0
      %4152 = vmatprep.subr.bf16.mxu0 0
      %4153 = vmatpush2.bf16.msra.mxu0 0
      %4154 = vmatprep.mubr.bf16.mxu0 0
      %4155 = vmatmul.mubr.bf16.gmra.mxu0 %v4087
      %v4156 = vpop.f32.mrf.mxu0
      %v4157 = vadd.f32 0.0, %v4156
      %v4158 = vpop.f32.mrf.mxu0
      %v4159 = vpop.f32.mrf.mxu0
      %v4160 = vadd.f32 0.0, %v4159
      %v4161 = vpop.f32.mrf.mxu0
      %4162 = vmatprep.mubr.bf16.mxu0 0
      %4163 = vmatmul.mubr.bf16.gmra.mxu0 %v4089
      %v4164 = vpop.f32.mrf.mxu0
      %v4165 = vadd.f32 0.0, %v4164
      %v4166 = vpop.f32.mrf.mxu0
      %v4167 = vpop.f32.mrf.mxu0
      %v4168 = vadd.f32 0.0, %v4167
      %v4169 = vpop.f32.mrf.mxu0
      %4170 = vmatprep.mubr.bf16.mxu0 0
      %4171 = vmatmul.mubr.bf16.gmra.mxu0 %v4091
      %v4172 = vpop.f32.mrf.mxu0
      %v4173 = vadd.f32 0.0, %v4172
      %v4174 = vpop.f32.mrf.mxu0
      %v4175 = vpop.f32.mrf.mxu0
      %v4176 = vadd.f32 0.0, %v4175
      %v4177 = vpop.f32.mrf.mxu0
      %4178 = vmatprep.mubr.bf16.mxu0 0
      %4179 = vmatmul.mubr.bf16.gmra.mxu0 %v4093
      %v4180 = vpop.f32.mrf.mxu0
      %v4181 = vadd.f32 0.0, %v4180
      %v4182 = vpop.f32.mrf.mxu0
      %v4183 = vpop.f32.mrf.mxu0
      %v4184 = vadd.f32 0.0, %v4183
      %v4185 = vpop.f32.mrf.mxu0
      %4186 = vmatprep.mubr.bf16.mxu0 0
      %4187 = vmatmul.mubr.bf16.gmra.mxu0 %v4095
      %v4188 = vpop.f32.mrf.mxu0
      %v4189 = vadd.f32 0.0, %v4188
      %v4190 = vpop.f32.mrf.mxu0
      %v4191 = vpop.f32.mrf.mxu0
      %v4192 = vadd.f32 0.0, %v4191
      %v4193 = vpop.f32.mrf.mxu0
      %4194 = vmatprep.mubr.bf16.mxu0 0
      %4195 = vmatmul.mubr.bf16.gmra.mxu0 %v4097
      %v4196 = vpop.f32.mrf.mxu0
      %v4197 = vadd.f32 0.0, %v4196
      %v4198 = vpop.f32.mrf.mxu0
      %v4199 = vpop.f32.mrf.mxu0
      %v4200 = vadd.f32 0.0, %v4199
      %v4201 = vpop.f32.mrf.mxu0
      %4202 = vmatprep.mubr.bf16.mxu0 0
      %4203 = vmatmul.mubr.bf16.gmra.mxu0 %v4099
      %v4204 = vpop.f32.mrf.mxu0
      %v4205 = vadd.f32 0.0, %v4204
      %v4206 = vpop.f32.mrf.mxu0
      %v4207 = vpop.f32.mrf.mxu0
      %v4208 = vadd.f32 0.0, %v4207
      %v4209 = vpop.f32.mrf.mxu0
      %4210 = vmatprep.mubr.bf16.mxu0 0
      %4211 = vmatmul.mubr.bf16.gmra.mxu0 %v4101
      %v4212 = vpop.f32.mrf.mxu0
      %v4213 = vadd.f32 0.0, %v4212
      %v4214 = vpop.f32.mrf.mxu0
      %v4215 = vpop.f32.mrf.mxu0
      %v4216 = vadd.f32 0.0, %v4215
      %v4217 = vpop.f32.mrf.mxu0
      %4218 = vmatprep.mubr.bf16.mxu0 0
      %4219 = vmatmul.mubr.bf16.gmra.mxu0 %v4103
      %v4220 = vpop.f32.mrf.mxu0
      %v4221 = vadd.f32 0.0, %v4220
      %v4222 = vpop.f32.mrf.mxu0
      %v4223 = vpop.f32.mrf.mxu0
      %v4224 = vadd.f32 0.0, %v4223
      %v4225 = vpop.f32.mrf.mxu0
      %4226 = vmatprep.mubr.bf16.mxu0 0
      %4227 = vmatmul.mubr.bf16.gmra.mxu0 %v4105
      %v4228 = vpop.f32.mrf.mxu0
      %v4229 = vadd.f32 0.0, %v4228
      %v4230 = vpop.f32.mrf.mxu0
      %v4231 = vpop.f32.mrf.mxu0
      %v4232 = vadd.f32 0.0, %v4231
      %v4233 = vpop.f32.mrf.mxu0
      %4234 = vmatprep.mubr.bf16.mxu0 0
      %4235 = vmatmul.mubr.bf16.gmra.mxu0 %v4107
      %v4236 = vpop.f32.mrf.mxu0
      %v4237 = vadd.f32 0.0, %v4236
      %v4238 = vpop.f32.mrf.mxu0
      %v4239 = vpop.f32.mrf.mxu0
      %v4240 = vadd.f32 0.0, %v4239
      %v4241 = vpop.f32.mrf.mxu0
      %4242 = vmatprep.mubr.bf16.mxu0 0
      %4243 = vmatmul.mubr.bf16.gmra.mxu0 %v4109
      %v4244 = vpop.f32.mrf.mxu0
      %v4245 = vadd.f32 0.0, %v4244
      %v4246 = vpop.f32.mrf.mxu0
      %v4247 = vpop.f32.mrf.mxu0
      %v4248 = vadd.f32 0.0, %v4247
      %v4249 = vpop.f32.mrf.mxu0
      %4250 = vmatprep.mubr.bf16.mxu0 0
      %4251 = vmatmul.mubr.bf16.gmra.mxu0 %v4111
      %v4252 = vpop.f32.mrf.mxu0
      %v4253 = vadd.f32 0.0, %v4252
      %v4254 = vpop.f32.mrf.mxu0
      %v4255 = vpop.f32.mrf.mxu0
      %v4256 = vadd.f32 0.0, %v4255
      %v4257 = vpop.f32.mrf.mxu0
      %4258 = vmatprep.mubr.bf16.mxu0 0
      %4259 = vmatmul.mubr.bf16.gmra.mxu0 %v4113
      %v4260 = vpop.f32.mrf.mxu0
      %v4261 = vadd.f32 0.0, %v4260
      %v4262 = vpop.f32.mrf.mxu0
      %v4263 = vpop.f32.mrf.mxu0
      %v4264 = vadd.f32 0.0, %v4263
      %v4265 = vpop.f32.mrf.mxu0
      %4266 = vmatprep.mubr.bf16.mxu0 0
      %4267 = vmatmul.mubr.bf16.gmra.mxu0 %v4115
      %v4268 = vpop.f32.mrf.mxu0
      %v4269 = vadd.f32 0.0, %v4268
      %v4270 = vpop.f32.mrf.mxu0
      %v4271 = vpop.f32.mrf.mxu0
      %v4272 = vadd.f32 0.0, %v4271
      %v4273 = vpop.f32.mrf.mxu0
      %4274 = vmatprep.mubr.bf16.mxu0 0
      %4275 = vmatmul.mubr.bf16.gmra.mxu0 %v4117
      %v4276 = vpop.f32.mrf.mxu0
      %v4277 = vadd.f32 0.0, %v4276
      %v4278 = vpop.f32.mrf.mxu0
      %v4279 = vpop.f32.mrf.mxu0
      %v4280 = vadd.f32 0.0, %v4279
      %v4281 = vpop.f32.mrf.mxu0
      %4282 = vdwg.mxu0
      %v4283 = vadd.f32 %v3040, %v4157
      %v4284 = vadd.f32 %v3043, %v4160
      %v4285 = vadd.f32 %v3048, %v4165
      %v4286 = vadd.f32 %v3051, %v4168
      %v4287 = vadd.f32 %v3056, %v4173
      %v4288 = vadd.f32 %v3059, %v4176
      %v4289 = vadd.f32 %v3064, %v4181
      %v4290 = vadd.f32 %v3067, %v4184
      %v4291 = vadd.f32 %v3072, %v4189
      %v4292 = vadd.f32 %v3075, %v4192
      %v4293 = vadd.f32 %v3080, %v4197
      %v4294 = vadd.f32 %v3083, %v4200
      %v4295 = vadd.f32 %v3088, %v4205
      %v4296 = vadd.f32 %v3091, %v4208
      %v4297 = vadd.f32 %v3096, %v4213
      %v4298 = vadd.f32 %v3099, %v4216
      %v4299 = vadd.f32 %v3104, %v4221
      %v4300 = vadd.f32 %v3107, %v4224
      %v4301 = vadd.f32 %v3112, %v4229
      %v4302 = vadd.f32 %v3115, %v4232
      %v4303 = vadd.f32 %v3120, %v4237
      %v4304 = vadd.f32 %v3123, %v4240
      %v4305 = vadd.f32 %v3128, %v4245
      %v4306 = vadd.f32 %v3131, %v4248
      %v4307 = vadd.f32 %v3136, %v4253
      %v4308 = vadd.f32 %v3139, %v4256
      %v4309 = vadd.f32 %v3144, %v4261
      %v4310 = vadd.f32 %v3147, %v4264
      %v4311 = vadd.f32 %v3152, %v4269
      %v4312 = vadd.f32 %v3155, %v4272
      %v4313 = vadd.f32 %v3160, %v4277
      %v4314 = vadd.f32 %v3163, %v4280
      %v4315 = vsel %vm1763, %v4283, 0.0
      %v4316 = vsel %vm1763, %v4284, 0.0
      %v4317 = vadd.f32 %v4315, %v4316
      %v4318 = vsel %vm1763, %v4285, 0.0
      %v4319 = vadd.f32 %v4317, %v4318
      %v4320 = vsel %vm1763, %v4286, 0.0
      %v4321 = vadd.f32 %v4319, %v4320
      %v4322 = vsel %vm1763, %v4287, 0.0
      %v4323 = vadd.f32 %v4321, %v4322
      %v4324 = vsel %vm1763, %v4288, 0.0
      %v4325 = vadd.f32 %v4323, %v4324
      %v4326 = vsel %vm1763, %v4289, 0.0
      %v4327 = vadd.f32 %v4325, %v4326
      %v4328 = vsel %vm1763, %v4290, 0.0
      %v4329 = vadd.f32 %v4327, %v4328
      %v4330 = vsel %vm1763, %v4291, 0.0
      %v4331 = vadd.f32 %v4329, %v4330
      %v4332 = vsel %vm1763, %v4292, 0.0
      %v4333 = vadd.f32 %v4331, %v4332
      %v4334 = vsel %vm1763, %v4293, 0.0
      %v4335 = vadd.f32 %v4333, %v4334
      %v4336 = vsel %vm1763, %v4294, 0.0
      %v4337 = vadd.f32 %v4335, %v4336
      %v4338 = vsel %vm1763, %v4295, 0.0
      %v4339 = vadd.f32 %v4337, %v4338
      %v4340 = vsel %vm1763, %v4296, 0.0
      %v4341 = vadd.f32 %v4339, %v4340
      %v4342 = vsel %vm1763, %v4297, 0.0
      %v4343 = vadd.f32 %v4341, %v4342
      %v4344 = vsel %vm1763, %v4298, 0.0
      %v4345 = vadd.f32 %v4343, %v4344
      %v4346 = vsel %vm1763, %v4299, 0.0
      %v4347 = vadd.f32 %v4345, %v4346
      %v4348 = vsel %vm1763, %v4300, 0.0
      %v4349 = vadd.f32 %v4347, %v4348
      %v4350 = vsel %vm1763, %v4301, 0.0
      %v4351 = vadd.f32 %v4349, %v4350
      %v4352 = vsel %vm1763, %v4302, 0.0
      %v4353 = vadd.f32 %v4351, %v4352
      %v4354 = vsel %vm1763, %v4303, 0.0
      %v4355 = vadd.f32 %v4353, %v4354
      %v4356 = vsel %vm1763, %v4304, 0.0
      %v4357 = vadd.f32 %v4355, %v4356
      %v4358 = vsel %vm1763, %v4305, 0.0
      %v4359 = vadd.f32 %v4357, %v4358
      %v4360 = vsel %vm1763, %v4306, 0.0
      %v4361 = vadd.f32 %v4359, %v4360
      %v4362 = vsel %vm1763, %v4307, 0.0
      %v4363 = vadd.f32 %v4361, %v4362
      %v4364 = vsel %vm1763, %v4308, 0.0
      %v4365 = vadd.f32 %v4363, %v4364
      %v4366 = vsel %vm1763, %v4309, 0.0
      %v4367 = vadd.f32 %v4365, %v4366
      %v4368 = vsel %vm1763, %v4310, 0.0
      %v4369 = vadd.f32 %v4367, %v4368
      %v4370 = vsel %vm1763, %v4311, 0.0
      %v4371 = vadd.f32 %v4369, %v4370
      %v4372 = vsel %vm1763, %v4312, 0.0
      %v4373 = vadd.f32 %v4371, %v4372
      %v4374 = vsel %vm1763, %v4313, 0.0
      %v4375 = vadd.f32 %v4373, %v4374
      %v4376 = vsel %vm1763, %v4314, 0.0
      %v4377 = vadd.f32 %v4375, %v4376
      %v4378 = vrot.slane %v4377, 4
      %v4379 = vadd.f32 %v4377, %v4378
      %v4380 = vrot.slane %v4379, 2
      %v4381 = vadd.f32 %v4379, %v4380
      %v4382 = vrot.slane %v4381, 1
      %v4383 = vadd.f32 %v4381, %v4382
      %v4384 = vmul.f32 %v4383, 0.00390625
      %v4385 = vsub.f32 %v4283, %v4384
      %v4386 = vsub.f32 %v4284, %v4384
      %v4387 = vsub.f32 %v4285, %v4384
      %v4388 = vsub.f32 %v4286, %v4384
      %v4389 = vsub.f32 %v4287, %v4384
      %v4390 = vsub.f32 %v4288, %v4384
      %v4391 = vsub.f32 %v4289, %v4384
      %v4392 = vsub.f32 %v4290, %v4384
      %v4393 = vsub.f32 %v4291, %v4384
      %v4394 = vsub.f32 %v4292, %v4384
      %v4395 = vsub.f32 %v4293, %v4384
      %v4396 = vsub.f32 %v4294, %v4384
      %v4397 = vsub.f32 %v4295, %v4384
      %v4398 = vsub.f32 %v4296, %v4384
      %v4399 = vsub.f32 %v4297, %v4384
      %v4400 = vsub.f32 %v4298, %v4384
      %v4401 = vsub.f32 %v4299, %v4384
      %v4402 = vsub.f32 %v4300, %v4384
      %v4403 = vsub.f32 %v4301, %v4384
      %v4404 = vsub.f32 %v4302, %v4384
      %v4405 = vsub.f32 %v4303, %v4384
      %v4406 = vsub.f32 %v4304, %v4384
      %v4407 = vsub.f32 %v4305, %v4384
      %v4408 = vsub.f32 %v4306, %v4384
      %v4409 = vsub.f32 %v4307, %v4384
      %v4410 = vsub.f32 %v4308, %v4384
      %v4411 = vsub.f32 %v4309, %v4384
      %v4412 = vsub.f32 %v4310, %v4384
      %v4413 = vsub.f32 %v4311, %v4384
      %v4414 = vsub.f32 %v4312, %v4384
      %v4415 = vsub.f32 %v4313, %v4384
      %v4416 = vsub.f32 %v4314, %v4384
      %v4417 = vmul.f32 %v4385, %v4385
      %v4418 = vmul.f32 %v4386, %v4386
      %v4419 = vmul.f32 %v4387, %v4387
      %v4420 = vmul.f32 %v4388, %v4388
      %v4421 = vmul.f32 %v4389, %v4389
      %v4422 = vmul.f32 %v4390, %v4390
      %v4423 = vmul.f32 %v4391, %v4391
      %v4424 = vmul.f32 %v4392, %v4392
      %v4425 = vmul.f32 %v4393, %v4393
      %v4426 = vmul.f32 %v4394, %v4394
      %v4427 = vmul.f32 %v4395, %v4395
      %v4428 = vmul.f32 %v4396, %v4396
      %v4429 = vmul.f32 %v4397, %v4397
      %v4430 = vmul.f32 %v4398, %v4398
      %v4431 = vmul.f32 %v4399, %v4399
      %v4432 = vmul.f32 %v4400, %v4400
      %v4433 = vmul.f32 %v4401, %v4401
      %v4434 = vmul.f32 %v4402, %v4402
      %v4435 = vmul.f32 %v4403, %v4403
      %v4436 = vmul.f32 %v4404, %v4404
      %v4437 = vmul.f32 %v4405, %v4405
      %v4438 = vmul.f32 %v4406, %v4406
      %v4439 = vmul.f32 %v4407, %v4407
      %v4440 = vmul.f32 %v4408, %v4408
      %v4441 = vmul.f32 %v4409, %v4409
      %v4442 = vmul.f32 %v4410, %v4410
      %v4443 = vmul.f32 %v4411, %v4411
      %v4444 = vmul.f32 %v4412, %v4412
      %v4445 = vmul.f32 %v4413, %v4413
      %v4446 = vmul.f32 %v4414, %v4414
      %v4447 = vmul.f32 %v4415, %v4415
      %v4448 = vmul.f32 %v4416, %v4416
      %v4449 = vsel %vm1763, %v4417, 0.0
      %v4450 = vsel %vm1763, %v4418, 0.0
      %v4451 = vadd.f32 %v4449, %v4450
      %v4452 = vsel %vm1763, %v4419, 0.0
      %v4453 = vadd.f32 %v4451, %v4452
      %v4454 = vsel %vm1763, %v4420, 0.0
      %v4455 = vadd.f32 %v4453, %v4454
      %v4456 = vsel %vm1763, %v4421, 0.0
      %v4457 = vadd.f32 %v4455, %v4456
      %v4458 = vsel %vm1763, %v4422, 0.0
      %v4459 = vadd.f32 %v4457, %v4458
      %v4460 = vsel %vm1763, %v4423, 0.0
      %v4461 = vadd.f32 %v4459, %v4460
      %v4462 = vsel %vm1763, %v4424, 0.0
      %v4463 = vadd.f32 %v4461, %v4462
      %v4464 = vsel %vm1763, %v4425, 0.0
      %v4465 = vadd.f32 %v4463, %v4464
      %v4466 = vsel %vm1763, %v4426, 0.0
      %v4467 = vadd.f32 %v4465, %v4466
      %v4468 = vsel %vm1763, %v4427, 0.0
      %v4469 = vadd.f32 %v4467, %v4468
      %v4470 = vsel %vm1763, %v4428, 0.0
      %v4471 = vadd.f32 %v4469, %v4470
      %v4472 = vsel %vm1763, %v4429, 0.0
      %v4473 = vadd.f32 %v4471, %v4472
      %v4474 = vsel %vm1763, %v4430, 0.0
      %v4475 = vadd.f32 %v4473, %v4474
      %v4476 = vsel %vm1763, %v4431, 0.0
      %v4477 = vadd.f32 %v4475, %v4476
      %v4478 = vsel %vm1763, %v4432, 0.0
      %v4479 = vadd.f32 %v4477, %v4478
      %v4480 = vsel %vm1763, %v4433, 0.0
      %v4481 = vadd.f32 %v4479, %v4480
      %v4482 = vsel %vm1763, %v4434, 0.0
      %v4483 = vadd.f32 %v4481, %v4482
      %v4484 = vsel %vm1763, %v4435, 0.0
      %v4485 = vadd.f32 %v4483, %v4484
      %v4486 = vsel %vm1763, %v4436, 0.0
      %v4487 = vadd.f32 %v4485, %v4486
      %v4488 = vsel %vm1763, %v4437, 0.0
      %v4489 = vadd.f32 %v4487, %v4488
      %v4490 = vsel %vm1763, %v4438, 0.0
      %v4491 = vadd.f32 %v4489, %v4490
      %v4492 = vsel %vm1763, %v4439, 0.0
      %v4493 = vadd.f32 %v4491, %v4492
      %v4494 = vsel %vm1763, %v4440, 0.0
      %v4495 = vadd.f32 %v4493, %v4494
      %v4496 = vsel %vm1763, %v4441, 0.0
      %v4497 = vadd.f32 %v4495, %v4496
      %v4498 = vsel %vm1763, %v4442, 0.0
      %v4499 = vadd.f32 %v4497, %v4498
      %v4500 = vsel %vm1763, %v4443, 0.0
      %v4501 = vadd.f32 %v4499, %v4500
      %v4502 = vsel %vm1763, %v4444, 0.0
      %v4503 = vadd.f32 %v4501, %v4502
      %v4504 = vsel %vm1763, %v4445, 0.0
      %v4505 = vadd.f32 %v4503, %v4504
      %v4506 = vsel %vm1763, %v4446, 0.0
      %v4507 = vadd.f32 %v4505, %v4506
      %v4508 = vsel %vm1763, %v4447, 0.0
      %v4509 = vadd.f32 %v4507, %v4508
      %v4510 = vsel %vm1763, %v4448, 0.0
      %v4511 = vadd.f32 %v4509, %v4510
      %v4512 = vrot.slane %v4511, 4
      %v4513 = vadd.f32 %v4511, %v4512
      %v4514 = vrot.slane %v4513, 2
      %v4515 = vadd.f32 %v4513, %v4514
      %v4516 = vrot.slane %v4515, 1
      %v4517 = vadd.f32 %v4515, %v4516
      %v4518 = vmul.f32 %v4517, 0.00390625
      %v4519 = vadd.f32 %v4518, 1e-05
      %v4520 = vrsqrt.pop %v4519
      %v4521 = vmul.f32 %v4385, %v4520
      %v4522 = vmul.f32 %v4386, %v4520
      %v4523 = vmul.f32 %v4387, %v4520
      %v4524 = vmul.f32 %v4388, %v4520
      %v4525 = vmul.f32 %v4389, %v4520
      %v4526 = vmul.f32 %v4390, %v4520
      %v4527 = vmul.f32 %v4391, %v4520
      %v4528 = vmul.f32 %v4392, %v4520
      %v4529 = vmul.f32 %v4393, %v4520
      %v4530 = vmul.f32 %v4394, %v4520
      %v4531 = vmul.f32 %v4395, %v4520
      %v4532 = vmul.f32 %v4396, %v4520
      %v4533 = vmul.f32 %v4397, %v4520
      %v4534 = vmul.f32 %v4398, %v4520
      %v4535 = vmul.f32 %v4399, %v4520
      %v4536 = vmul.f32 %v4400, %v4520
      %v4537 = vmul.f32 %v4401, %v4520
      %v4538 = vmul.f32 %v4402, %v4520
      %v4539 = vmul.f32 %v4403, %v4520
      %v4540 = vmul.f32 %v4404, %v4520
      %v4541 = vmul.f32 %v4405, %v4520
      %v4542 = vmul.f32 %v4406, %v4520
      %v4543 = vmul.f32 %v4407, %v4520
      %v4544 = vmul.f32 %v4408, %v4520
      %v4545 = vmul.f32 %v4409, %v4520
      %v4546 = vmul.f32 %v4410, %v4520
      %v4547 = vmul.f32 %v4411, %v4520
      %v4548 = vmul.f32 %v4412, %v4520
      %v4549 = vmul.f32 %v4413, %v4520
      %v4550 = vmul.f32 %v4414, %v4520
      %v4551 = vmul.f32 %v4415, %v4520
      %v4552 = vmul.f32 %v4416, %v4520
      %v4553 = vmax.f32 %v4521, 0.0
      %v4554 = vmax.f32 %v4522, 0.0
      %v4555 = vmax.f32 %v4523, 0.0
      %v4556 = vmax.f32 %v4524, 0.0
      %v4557 = vmax.f32 %v4525, 0.0
      %v4558 = vmax.f32 %v4526, 0.0
      %v4559 = vmax.f32 %v4527, 0.0
      %v4560 = vmax.f32 %v4528, 0.0
      %v4561 = vmax.f32 %v4529, 0.0
      %v4562 = vmax.f32 %v4530, 0.0
      %v4563 = vmax.f32 %v4531, 0.0
      %v4564 = vmax.f32 %v4532, 0.0
      %v4565 = vmax.f32 %v4533, 0.0
      %v4566 = vmax.f32 %v4534, 0.0
      %v4567 = vmax.f32 %v4535, 0.0
      %v4568 = vmax.f32 %v4536, 0.0
      %v4569 = vmax.f32 %v4537, 0.0
      %v4570 = vmax.f32 %v4538, 0.0
      %v4571 = vmax.f32 %v4539, 0.0
      %v4572 = vmax.f32 %v4540, 0.0
      %v4573 = vmax.f32 %v4541, 0.0
      %v4574 = vmax.f32 %v4542, 0.0
      %v4575 = vmax.f32 %v4543, 0.0
      %v4576 = vmax.f32 %v4544, 0.0
      %v4577 = vmax.f32 %v4545, 0.0
      %v4578 = vmax.f32 %v4546, 0.0
      %v4579 = vmax.f32 %v4547, 0.0
      %v4580 = vmax.f32 %v4548, 0.0
      %v4581 = vmax.f32 %v4549, 0.0
      %v4582 = vmax.f32 %v4550, 0.0
      %v4583 = vmax.f32 %v4551, 0.0
      %v4584 = vmax.f32 %v4552, 0.0
      %v4585 = vpack.c.bf16 %v4554, %v4553
      %v4586 = vpack.c.bf16 %v4556, %v4555
      %v4587 = vpack.c.bf16 %v4558, %v4557
      %v4588 = vpack.c.bf16 %v4560, %v4559
      %v4589 = vpack.c.bf16 %v4562, %v4561
      %v4590 = vpack.c.bf16 %v4564, %v4563
      %v4591 = vpack.c.bf16 %v4566, %v4565
      %v4592 = vpack.c.bf16 %v4568, %v4567
      %v4593 = vpack.c.bf16 %v4570, %v4569
      %v4594 = vpack.c.bf16 %v4572, %v4571
      %v4595 = vpack.c.bf16 %v4574, %v4573
      %v4596 = vpack.c.bf16 %v4576, %v4575
      %v4597 = vpack.c.bf16 %v4578, %v4577
      %v4598 = vpack.c.bf16 %v4580, %v4579
      %v4599 = vpack.c.bf16 %v4582, %v4581
      %v4600 = vpack.c.bf16 %v4584, %v4583
      %v4617 = vunpack.c.l.b16 %v4585
      %v4618 = vunpack.c.h.b16 %v4585
      %v4619 = vunpack.c.l.b16 %v4586
      %v4620 = vunpack.c.h.b16 %v4586
      %v4621 = vunpack.c.l.b16 %v4587
      %v4622 = vunpack.c.h.b16 %v4587
      %v4623 = vunpack.c.l.b16 %v4588
      %v4624 = vunpack.c.h.b16 %v4588
      %v4625 = vunpack.c.l.b16 %v4589
      %v4626 = vunpack.c.h.b16 %v4589
      %v4627 = vunpack.c.l.b16 %v4590
      %v4628 = vunpack.c.h.b16 %v4590
      %v4629 = vunpack.c.l.b16 %v4591
      %v4630 = vunpack.c.h.b16 %v4591
      %v4631 = vunpack.c.l.b16 %v4592
      %v4632 = vunpack.c.h.b16 %v4592
      %v4633 = vunpack.c.l.b16 %v4593
      %v4634 = vunpack.c.h.b16 %v4593
      %v4635 = vunpack.c.l.b16 %v4594
      %v4636 = vunpack.c.h.b16 %v4594
      %v4637 = vunpack.c.l.b16 %v4595
      %v4638 = vunpack.c.h.b16 %v4595
      %v4639 = vunpack.c.l.b16 %v4596
      %v4640 = vunpack.c.h.b16 %v4596
      %v4641 = vunpack.c.l.b16 %v4597
      %v4642 = vunpack.c.h.b16 %v4597
      %v4643 = vunpack.c.l.b16 %v4598
      %v4644 = vunpack.c.h.b16 %v4598
      %v4645 = vunpack.c.l.b16 %v4599
      %v4646 = vunpack.c.h.b16 %v4599
      %v4647 = vunpack.c.l.b16 %v4600
      %v4648 = vunpack.c.h.b16 %v4600
      %v4649 = vpack.c.b16 %v4617, %v4617
      %v4650 = vpack.c.b16 %v4618, %v4618
      %v4651 = vpack.c.b16 %v4619, %v4619
      %v4652 = vpack.c.b16 %v4620, %v4620
      %v4653 = vpack.c.b16 %v4621, %v4621
      %v4654 = vpack.c.b16 %v4622, %v4622
      %v4655 = vpack.c.b16 %v4623, %v4623
      %v4656 = vpack.c.b16 %v4624, %v4624
      %v4657 = vpack.c.b16 %v4625, %v4625
      %v4658 = vpack.c.b16 %v4626, %v4626
      %v4659 = vpack.c.b16 %v4627, %v4627
      %v4660 = vpack.c.b16 %v4628, %v4628
      %v4661 = vpack.c.b16 %v4629, %v4629
      %v4662 = vpack.c.b16 %v4630, %v4630
      %v4663 = vpack.c.b16 %v4631, %v4631
      %v4664 = vpack.c.b16 %v4632, %v4632
      %v4665 = vpack.c.b16 %v4633, %v4633
      %v4666 = vpack.c.b16 %v4634, %v4634
      %v4667 = vpack.c.b16 %v4635, %v4635
      %v4668 = vpack.c.b16 %v4636, %v4636
      %v4669 = vpack.c.b16 %v4637, %v4637
      %v4670 = vpack.c.b16 %v4638, %v4638
      %v4671 = vpack.c.b16 %v4639, %v4639
      %v4672 = vpack.c.b16 %v4640, %v4640
      %v4673 = vpack.c.b16 %v4641, %v4641
      %v4674 = vpack.c.b16 %v4642, %v4642
      %v4675 = vpack.c.b16 %v4643, %v4643
      %v4676 = vpack.c.b16 %v4644, %v4644
      %v4677 = vpack.c.b16 %v4645, %v4645
      %v4678 = vpack.c.b16 %v4646, %v4646
      %v4679 = vpack.c.b16 %v4647, %v4647
      %v4680 = vpack.c.b16 %v4648, %v4648
      %v4682 = vshrl.u32 %v4649, 16
      %v4684 = vrot.slane %v4682, 7
      %v4685 = vshll.u32 %v4649, 16
      %v4687 = vor.u32 %v4684, %v4685
      %v4688 = vrot.slane %v4684, 4
      %v4690 = vshrl.u32 %v4650, 16
      %v4692 = vrot.slane %v4690, 7
      %v4693 = vshll.u32 %v4650, 16
      %v4695 = vor.u32 %v4692, %v4693
      %v4696 = vsel %vm206, %v4688, %v4695
      %v4697 = vrot.slane %v4692, 4
      %v4699 = vshrl.u32 %v4651, 16
      %v4701 = vrot.slane %v4699, 7
      %v4702 = vshll.u32 %v4651, 16
      %v4704 = vor.u32 %v4701, %v4702
      %v4705 = vrot.slane %v4701, 4
      %v4707 = vshrl.u32 %v4652, 16
      %v4709 = vrot.slane %v4707, 7
      %v4710 = vshll.u32 %v4652, 16
      %v4712 = vor.u32 %v4709, %v4710
      %v4713 = vsel %vm206, %v4705, %v4712
      %v4714 = vrot.slane %v4709, 4
      %v4716 = vshrl.u32 %v4653, 16
      %v4718 = vrot.slane %v4716, 7
      %v4719 = vshll.u32 %v4653, 16
      %v4721 = vor.u32 %v4718, %v4719
      %v4722 = vrot.slane %v4718, 4
      %v4724 = vshrl.u32 %v4654, 16
      %v4726 = vrot.slane %v4724, 7
      %v4727 = vshll.u32 %v4654, 16
      %v4729 = vor.u32 %v4726, %v4727
      %v4730 = vsel %vm206, %v4722, %v4729
      %v4731 = vrot.slane %v4726, 4
      %v4733 = vshrl.u32 %v4655, 16
      %v4735 = vrot.slane %v4733, 7
      %v4736 = vshll.u32 %v4655, 16
      %v4738 = vor.u32 %v4735, %v4736
      %v4739 = vrot.slane %v4735, 4
      %v4741 = vshrl.u32 %v4656, 16
      %v4743 = vrot.slane %v4741, 7
      %v4744 = vshll.u32 %v4656, 16
      %v4746 = vor.u32 %v4743, %v4744
      %v4747 = vsel %vm206, %v4739, %v4746
      %v4748 = vrot.slane %v4743, 4
      %v4750 = vshrl.u32 %v4657, 16
      %v4752 = vrot.slane %v4750, 7
      %v4753 = vshll.u32 %v4657, 16
      %v4755 = vor.u32 %v4752, %v4753
      %v4756 = vrot.slane %v4752, 4
      %v4758 = vshrl.u32 %v4658, 16
      %v4760 = vrot.slane %v4758, 7
      %v4761 = vshll.u32 %v4658, 16
      %v4763 = vor.u32 %v4760, %v4761
      %v4764 = vsel %vm206, %v4756, %v4763
      %v4765 = vrot.slane %v4760, 4
      %v4767 = vshrl.u32 %v4659, 16
      %v4769 = vrot.slane %v4767, 7
      %v4770 = vshll.u32 %v4659, 16
      %v4772 = vor.u32 %v4769, %v4770
      %v4773 = vrot.slane %v4769, 4
      %v4775 = vshrl.u32 %v4660, 16
      %v4777 = vrot.slane %v4775, 7
      %v4778 = vshll.u32 %v4660, 16
      %v4780 = vor.u32 %v4777, %v4778
      %v4781 = vsel %vm206, %v4773, %v4780
      %v4782 = vrot.slane %v4777, 4
      %v4784 = vshrl.u32 %v4661, 16
      %v4786 = vrot.slane %v4784, 7
      %v4787 = vshll.u32 %v4661, 16
      %v4789 = vor.u32 %v4786, %v4787
      %v4790 = vrot.slane %v4786, 4
      %v4792 = vshrl.u32 %v4662, 16
      %v4794 = vrot.slane %v4792, 7
      %v4795 = vshll.u32 %v4662, 16
      %v4797 = vor.u32 %v4794, %v4795
      %v4798 = vsel %vm206, %v4790, %v4797
      %v4799 = vrot.slane %v4794, 4
      %v4801 = vshrl.u32 %v4663, 16
      %v4803 = vrot.slane %v4801, 7
      %v4804 = vshll.u32 %v4663, 16
      %v4806 = vor.u32 %v4803, %v4804
      %v4807 = vrot.slane %v4803, 4
      %v4809 = vshrl.u32 %v4664, 16
      %v4811 = vrot.slane %v4809, 7
      %v4812 = vshll.u32 %v4664, 16
      %v4814 = vor.u32 %v4811, %v4812
      %v4815 = vsel %vm206, %v4807, %v4814
      %v4816 = vrot.slane %v4811, 4
      %v4818 = vshrl.u32 %v4665, 16
      %v4820 = vrot.slane %v4818, 7
      %v4821 = vshll.u32 %v4665, 16
      %v4823 = vor.u32 %v4820, %v4821
      %v4824 = vrot.slane %v4820, 4
      %v4826 = vshrl.u32 %v4666, 16
      %v4828 = vrot.slane %v4826, 7
      %v4829 = vshll.u32 %v4666, 16
      %v4831 = vor.u32 %v4828, %v4829
      %v4832 = vsel %vm206, %v4824, %v4831
      %v4833 = vrot.slane %v4828, 4
      %v4835 = vshrl.u32 %v4667, 16
      %v4837 = vrot.slane %v4835, 7
      %v4838 = vshll.u32 %v4667, 16
      %v4840 = vor.u32 %v4837, %v4838
      %v4841 = vrot.slane %v4837, 4
      %v4843 = vshrl.u32 %v4668, 16
      %v4845 = vrot.slane %v4843, 7
      %v4846 = vshll.u32 %v4668, 16
      %v4848 = vor.u32 %v4845, %v4846
      %v4849 = vsel %vm206, %v4841, %v4848
      %v4850 = vrot.slane %v4845, 4
      %v4852 = vshrl.u32 %v4669, 16
      %v4854 = vrot.slane %v4852, 7
      %v4855 = vshll.u32 %v4669, 16
      %v4857 = vor.u32 %v4854, %v4855
      %v4858 = vrot.slane %v4854, 4
      %v4860 = vshrl.u32 %v4670, 16
      %v4862 = vrot.slane %v4860, 7
      %v4863 = vshll.u32 %v4670, 16
      %v4865 = vor.u32 %v4862, %v4863
      %v4866 = vsel %vm206, %v4858, %v4865
      %v4867 = vrot.slane %v4862, 4
      %v4869 = vshrl.u32 %v4671, 16
      %v4871 = vrot.slane %v4869, 7
      %v4872 = vshll.u32 %v4671, 16
      %v4874 = vor.u32 %v4871, %v4872
      %v4875 = vrot.slane %v4871, 4
      %v4877 = vshrl.u32 %v4672, 16
      %v4879 = vrot.slane %v4877, 7
      %v4880 = vshll.u32 %v4672, 16
      %v4882 = vor.u32 %v4879, %v4880
      %v4883 = vsel %vm206, %v4875, %v4882
      %v4884 = vrot.slane %v4879, 4
      %v4886 = vshrl.u32 %v4673, 16
      %v4888 = vrot.slane %v4886, 7
      %v4889 = vshll.u32 %v4673, 16
      %v4891 = vor.u32 %v4888, %v4889
      %v4892 = vrot.slane %v4888, 4
      %v4894 = vshrl.u32 %v4674, 16
      %v4896 = vrot.slane %v4894, 7
      %v4897 = vshll.u32 %v4674, 16
      %v4899 = vor.u32 %v4896, %v4897
      %v4900 = vsel %vm206, %v4892, %v4899
      %v4901 = vrot.slane %v4896, 4
      %v4903 = vshrl.u32 %v4675, 16
      %v4905 = vrot.slane %v4903, 7
      %v4906 = vshll.u32 %v4675, 16
      %v4908 = vor.u32 %v4905, %v4906
      %v4909 = vrot.slane %v4905, 4
      %v4911 = vshrl.u32 %v4676, 16
      %v4913 = vrot.slane %v4911, 7
      %v4914 = vshll.u32 %v4676, 16
      %v4916 = vor.u32 %v4913, %v4914
      %v4917 = vsel %vm206, %v4909, %v4916
      %v4918 = vrot.slane %v4913, 4
      %v4920 = vshrl.u32 %v4677, 16
      %v4922 = vrot.slane %v4920, 7
      %v4923 = vshll.u32 %v4677, 16
      %v4925 = vor.u32 %v4922, %v4923
      %v4926 = vrot.slane %v4922, 4
      %v4928 = vshrl.u32 %v4678, 16
      %v4930 = vrot.slane %v4928, 7
      %v4931 = vshll.u32 %v4678, 16
      %v4933 = vor.u32 %v4930, %v4931
      %v4934 = vsel %vm206, %v4926, %v4933
      %v4935 = vrot.slane %v4930, 4
      %v4937 = vshrl.u32 %v4679, 16
      %v4939 = vrot.slane %v4937, 7
      %v4940 = vshll.u32 %v4679, 16
      %v4942 = vor.u32 %v4939, %v4940
      %v4943 = vrot.slane %v4939, 4
      %v4945 = vshrl.u32 %v4680, 16
      %v4947 = vrot.slane %v4945, 7
      %v4948 = vshll.u32 %v4680, 16
      %v4950 = vor.u32 %v4947, %v4948
      %v4951 = vsel %vm206, %v4943, %v4950
      %v4952 = vrot.slane %v4947, 4
      %v5001 = vsel %vm530, %v4687, %v1847
      %5002 = vst [vmem:[%s527] sm:$0xf] %v5001
      %5003 = vst.msk [vmem:[%s527 + $0x4] sm:$0xf] %vm534, %v4696
      %v5004 = vld [vmem:[%s527 + $0x8] sm:$0x1]
      %v5005 = vsel %vm537, %v4697, %v5004
      %5006 = vst [vmem:[%s527 + $0x8] sm:$0x1] %v5005
      %v5007 = vld [vmem:[%s527 + $0xc] sm:$0xf]
      %v5008 = vsel %vm530, %v4704, %v5007
      %5009 = vst [vmem:[%s527 + $0xc] sm:$0xf] %v5008
      %5010 = vst.msk [vmem:[%s527 + $0x10] sm:$0xf] %vm534, %v4713
      %v5011 = vld [vmem:[%s527 + $0x14] sm:$0x1]
      %v5012 = vsel %vm537, %v4714, %v5011
      %5013 = vst [vmem:[%s527 + $0x14] sm:$0x1] %v5012
      %v5014 = vld [vmem:[%s527 + $0x18] sm:$0xf]
      %v5015 = vsel %vm530, %v4721, %v5014
      %5016 = vst [vmem:[%s527 + $0x18] sm:$0xf] %v5015
      %5017 = vst.msk [vmem:[%s527 + $0x1c] sm:$0xf] %vm534, %v4730
      %v5018 = vld [vmem:[%s527 + $0x20] sm:$0x1]
      %v5019 = vsel %vm537, %v4731, %v5018
      %5020 = vst [vmem:[%s527 + $0x20] sm:$0x1] %v5019
      %v5021 = vld [vmem:[%s527 + $0x24] sm:$0xf]
      %v5022 = vsel %vm530, %v4738, %v5021
      %5023 = vst [vmem:[%s527 + $0x24] sm:$0xf] %v5022
      %5024 = vst.msk [vmem:[%s527 + $0x28] sm:$0xf] %vm534, %v4747
      %v5025 = vld [vmem:[%s527 + $0x2c] sm:$0x1]
      %v5026 = vsel %vm537, %v4748, %v5025
      %5027 = vst [vmem:[%s527 + $0x2c] sm:$0x1] %v5026
      %v5028 = vld [vmem:[%s527 + $0x30] sm:$0xf]
      %v5029 = vsel %vm530, %v4755, %v5028
      %5030 = vst [vmem:[%s527 + $0x30] sm:$0xf] %v5029
      %5031 = vst.msk [vmem:[%s527 + $0x34] sm:$0xf] %vm534, %v4764
      %v5032 = vld [vmem:[%s527 + $0x38] sm:$0x1]
      %v5033 = vsel %vm537, %v4765, %v5032
      %5034 = vst [vmem:[%s527 + $0x38] sm:$0x1] %v5033
      %v5035 = vld [vmem:[%s527 + $0x3c] sm:$0xf]
      %v5036 = vsel %vm530, %v4772, %v5035
      %5037 = vst [vmem:[%s527 + $0x3c] sm:$0xf] %v5036
      %5038 = vst.msk [vmem:[%s527 + $0x40] sm:$0xf] %vm534, %v4781
      %v5039 = vld [vmem:[%s527 + $0x44] sm:$0x1]
      %v5040 = vsel %vm537, %v4782, %v5039
      %5041 = vst [vmem:[%s527 + $0x44] sm:$0x1] %v5040
      %v5042 = vld [vmem:[%s527 + $0x48] sm:$0xf]
      %v5043 = vsel %vm530, %v4789, %v5042
      %5044 = vst [vmem:[%s527 + $0x48] sm:$0xf] %v5043
      %5045 = vst.msk [vmem:[%s527 + $0x4c] sm:$0xf] %vm534, %v4798
      %v5046 = vld [vmem:[%s527 + $0x50] sm:$0x1]
      %v5047 = vsel %vm537, %v4799, %v5046
      %5048 = vst [vmem:[%s527 + $0x50] sm:$0x1] %v5047
      %v5049 = vld [vmem:[%s527 + $0x54] sm:$0xf]
      %v5050 = vsel %vm530, %v4806, %v5049
      %5051 = vst [vmem:[%s527 + $0x54] sm:$0xf] %v5050
      %5052 = vst.msk [vmem:[%s527 + $0x58] sm:$0xf] %vm534, %v4815
      %v5053 = vld [vmem:[%s527 + $0x5c] sm:$0x1]
      %v5054 = vsel %vm537, %v4816, %v5053
      %5055 = vst [vmem:[%s527 + $0x5c] sm:$0x1] %v5054
      %v5056 = vld [vmem:[%s527 + $0x60] sm:$0xf]
      %v5057 = vsel %vm530, %v4823, %v5056
      %5058 = vst [vmem:[%s527 + $0x60] sm:$0xf] %v5057
      %5059 = vst.msk [vmem:[%s527 + $0x64] sm:$0xf] %vm534, %v4832
      %v5060 = vld [vmem:[%s527 + $0x68] sm:$0x1]
      %v5061 = vsel %vm537, %v4833, %v5060
      %5062 = vst [vmem:[%s527 + $0x68] sm:$0x1] %v5061
      %v5063 = vld [vmem:[%s527 + $0x6c] sm:$0xf]
      %v5064 = vsel %vm530, %v4840, %v5063
      %5065 = vst [vmem:[%s527 + $0x6c] sm:$0xf] %v5064
      %5066 = vst.msk [vmem:[%s527 + $0x70] sm:$0xf] %vm534, %v4849
      %v5067 = vld [vmem:[%s527 + $0x74] sm:$0x1]
      %v5068 = vsel %vm537, %v4850, %v5067
      %5069 = vst [vmem:[%s527 + $0x74] sm:$0x1] %v5068
      %v5070 = vld [vmem:[%s527 + $0x78] sm:$0xf]
      %v5071 = vsel %vm530, %v4857, %v5070
      %5072 = vst [vmem:[%s527 + $0x78] sm:$0xf] %v5071
      %5073 = vst.msk [vmem:[%s527 + $0x7c] sm:$0xf] %vm534, %v4866
      %v5074 = vld [vmem:[%s527 + $0x80] sm:$0x1]
      %v5075 = vsel %vm537, %v4867, %v5074
      %5076 = vst [vmem:[%s527 + $0x80] sm:$0x1] %v5075
      %v5077 = vld [vmem:[%s527 + $0x84] sm:$0xf]
      %v5078 = vsel %vm530, %v4874, %v5077
      %5079 = vst [vmem:[%s527 + $0x84] sm:$0xf] %v5078
      %5080 = vst.msk [vmem:[%s527 + $0x88] sm:$0xf] %vm534, %v4883
      %v5081 = vld [vmem:[%s527 + $0x8c] sm:$0x1]
      %v5082 = vsel %vm537, %v4884, %v5081
      %5083 = vst [vmem:[%s527 + $0x8c] sm:$0x1] %v5082
      %v5084 = vld [vmem:[%s527 + $0x90] sm:$0xf]
      %v5085 = vsel %vm530, %v4891, %v5084
      %5086 = vst [vmem:[%s527 + $0x90] sm:$0xf] %v5085
      %5087 = vst.msk [vmem:[%s527 + $0x94] sm:$0xf] %vm534, %v4900
      %v5088 = vld [vmem:[%s527 + $0x98] sm:$0x1]
      %v5089 = vsel %vm537, %v4901, %v5088
      %5090 = vst [vmem:[%s527 + $0x98] sm:$0x1] %v5089
      %v5091 = vld [vmem:[%s527 + $0x9c] sm:$0xf]
      %v5092 = vsel %vm530, %v4908, %v5091
      %5093 = vst [vmem:[%s527 + $0x9c] sm:$0xf] %v5092
      %5094 = vst.msk [vmem:[%s527 + $0xa0] sm:$0xf] %vm534, %v4917
      %v5095 = vld [vmem:[%s527 + $0xa4] sm:$0x1]
      %v5096 = vsel %vm537, %v4918, %v5095
      %5097 = vst [vmem:[%s527 + $0xa4] sm:$0x1] %v5096
      %v5098 = vld [vmem:[%s527 + $0xa8] sm:$0xf]
      %v5099 = vsel %vm530, %v4925, %v5098
      %5100 = vst [vmem:[%s527 + $0xa8] sm:$0xf] %v5099
      %5101 = vst.msk [vmem:[%s527 + $0xac] sm:$0xf] %vm534, %v4934
      %v5102 = vld [vmem:[%s527 + $0xb0] sm:$0x1]
      %v5103 = vsel %vm537, %v4935, %v5102
      %5104 = vst [vmem:[%s527 + $0xb0] sm:$0x1] %v5103
      %v5105 = vld [vmem:[%s527 + $0xb4] sm:$0xf]
      %v5106 = vsel %vm530, %v4942, %v5105
      %5107 = vst [vmem:[%s527 + $0xb4] sm:$0xf] %v5106
      %5108 = vst.msk [vmem:[%s527 + $0xb8] sm:$0xf] %vm534, %v4951
      %v5109 = vld [vmem:[%s527 + $0xbc] sm:$0x1]
      %v5110 = vsel %vm537, %v4952, %v5109
      %5111 = vst [vmem:[%s527 + $0xbc] sm:$0x1] %v5110
      %v5112 = vrot.slane %v4682, 4
      %v5113 = vrot.slane %v5112, 4
      %v5114 = vrot.slane %v4699, 4
      %v5115 = vrot.slane %v5114, 4
      %v5116 = vrot.slane %v4716, 4
      %v5117 = vrot.slane %v5116, 4
      %v5118 = vrot.slane %v4733, 4
      %v5119 = vrot.slane %v5118, 4
      %v5120 = vrot.slane %v4750, 4
      %v5121 = vrot.slane %v5120, 4
      %v5122 = vrot.slane %v4767, 4
      %v5123 = vrot.slane %v5122, 4
      %v5124 = vrot.slane %v4784, 4
      %v5125 = vrot.slane %v5124, 4
      %v5126 = vrot.slane %v4801, 4
      %v5127 = vrot.slane %v5126, 4
      %v5128 = vrot.slane %v4818, 4
      %v5129 = vrot.slane %v5128, 4
      %v5130 = vrot.slane %v4835, 4
      %v5131 = vrot.slane %v5130, 4
      %v5132 = vrot.slane %v4852, 4
      %v5133 = vrot.slane %v5132, 4
      %v5134 = vrot.slane %v4869, 4
      %v5135 = vrot.slane %v5134, 4
      %v5136 = vrot.slane %v4886, 4
      %v5137 = vrot.slane %v5136, 4
      %v5138 = vrot.slane %v4903, 4
      %v5139 = vrot.slane %v5138, 4
      %v5140 = vrot.slane %v4920, 4
      %v5141 = vrot.slane %v5140, 4
      %v5142 = vrot.slane %v4937, 4
      %v5143 = vrot.slane %v5142, 4
      %v5160 = vld [vmem:[%s527] sm:$0x1]
      %v5161 = vsel %vm537, %v5113, %v5160
      %5162 = vst [vmem:[%s527] sm:$0x1] %v5161
      %v5163 = vld [vmem:[%s527 + $0xc] sm:$0x1]
      %v5164 = vsel %vm537, %v5115, %v5163
      %5165 = vst [vmem:[%s527 + $0xc] sm:$0x1] %v5164
      %v5166 = vld [vmem:[%s527 + $0x18] sm:$0x1]
      %v5167 = vsel %vm537, %v5117, %v5166
      %5168 = vst [vmem:[%s527 + $0x18] sm:$0x1] %v5167
      %v5169 = vld [vmem:[%s527 + $0x24] sm:$0x1]
      %v5170 = vsel %vm537, %v5119, %v5169
      %5171 = vst [vmem:[%s527 + $0x24] sm:$0x1] %v5170
      %v5172 = vld [vmem:[%s527 + $0x30] sm:$0x1]
      %v5173 = vsel %vm537, %v5121, %v5172
      %5174 = vst [vmem:[%s527 + $0x30] sm:$0x1] %v5173
      %v5175 = vld [vmem:[%s527 + $0x3c] sm:$0x1]
      %v5176 = vsel %vm537, %v5123, %v5175
      %5177 = vst [vmem:[%s527 + $0x3c] sm:$0x1] %v5176
      %v5178 = vld [vmem:[%s527 + $0x48] sm:$0x1]
      %v5179 = vsel %vm537, %v5125, %v5178
      %5180 = vst [vmem:[%s527 + $0x48] sm:$0x1] %v5179
      %v5181 = vld [vmem:[%s527 + $0x54] sm:$0x1]
      %v5182 = vsel %vm537, %v5127, %v5181
      %5183 = vst [vmem:[%s527 + $0x54] sm:$0x1] %v5182
      %v5184 = vld [vmem:[%s527 + $0x60] sm:$0x1]
      %v5185 = vsel %vm537, %v5129, %v5184
      %5186 = vst [vmem:[%s527 + $0x60] sm:$0x1] %v5185
      %v5187 = vld [vmem:[%s527 + $0x6c] sm:$0x1]
      %v5188 = vsel %vm537, %v5131, %v5187
      %5189 = vst [vmem:[%s527 + $0x6c] sm:$0x1] %v5188
      %v5190 = vld [vmem:[%s527 + $0x78] sm:$0x1]
      %v5191 = vsel %vm537, %v5133, %v5190
      %5192 = vst [vmem:[%s527 + $0x78] sm:$0x1] %v5191
      %v5193 = vld [vmem:[%s527 + $0x84] sm:$0x1]
      %v5194 = vsel %vm537, %v5135, %v5193
      %5195 = vst [vmem:[%s527 + $0x84] sm:$0x1] %v5194
      %v5196 = vld [vmem:[%s527 + $0x90] sm:$0x1]
      %v5197 = vsel %vm537, %v5137, %v5196
      %5198 = vst [vmem:[%s527 + $0x90] sm:$0x1] %v5197
      %v5199 = vld [vmem:[%s527 + $0x9c] sm:$0x1]
      %v5200 = vsel %vm537, %v5139, %v5199
      %5201 = vst [vmem:[%s527 + $0x9c] sm:$0x1] %v5200
      %v5202 = vld [vmem:[%s527 + $0xa8] sm:$0x1]
      %v5203 = vsel %vm537, %v5141, %v5202
      %5204 = vst [vmem:[%s527 + $0xa8] sm:$0x1] %v5203
      %v5205 = vld [vmem:[%s527 + $0xb4] sm:$0x1]
      %v5206 = vsel %vm537, %v5143, %v5205
      %5207 = vst [vmem:[%s527 + $0xb4] sm:$0x1] %v5206
      %v5208 = vrot.slane %v4693, 7
      %v5209 = vrot.slane %v5208, 4
      %v5210 = vrot.slane %v4710, 7
      %v5211 = vrot.slane %v5210, 4
      %v5212 = vrot.slane %v4727, 7
      %v5213 = vrot.slane %v5212, 4
      %v5214 = vrot.slane %v4744, 7
      %v5215 = vrot.slane %v5214, 4
      %v5216 = vrot.slane %v4761, 7
      %v5217 = vrot.slane %v5216, 4
      %v5218 = vrot.slane %v4778, 7
      %v5219 = vrot.slane %v5218, 4
      %v5220 = vrot.slane %v4795, 7
      %v5221 = vrot.slane %v5220, 4
      %v5222 = vrot.slane %v4812, 7
      %v5223 = vrot.slane %v5222, 4
      %v5224 = vrot.slane %v4829, 7
      %v5225 = vrot.slane %v5224, 4
      %v5226 = vrot.slane %v4846, 7
      %v5227 = vrot.slane %v5226, 4
      %v5228 = vrot.slane %v4863, 7
      %v5229 = vrot.slane %v5228, 4
      %v5230 = vrot.slane %v4880, 7
      %v5231 = vrot.slane %v5230, 4
      %v5232 = vrot.slane %v4897, 7
      %v5233 = vrot.slane %v5232, 4
      %v5234 = vrot.slane %v4914, 7
      %v5235 = vrot.slane %v5234, 4
      %v5236 = vrot.slane %v4931, 7
      %v5237 = vrot.slane %v5236, 4
      %v5238 = vrot.slane %v4948, 7
      %v5239 = vrot.slane %v5238, 4
      %v5256 = vld [vmem:[%s527 + $0x8] sm:$0x1]
      %v5257 = vsel %vm790, %v5209, %v5256
      %5258 = vst [vmem:[%s527 + $0x8] sm:$0x1] %v5257
      %v5259 = vld [vmem:[%s527 + $0x14] sm:$0x1]
      %v5260 = vsel %vm790, %v5211, %v5259
      %5261 = vst [vmem:[%s527 + $0x14] sm:$0x1] %v5260
      %v5262 = vld [vmem:[%s527 + $0x20] sm:$0x1]
      %v5263 = vsel %vm790, %v5213, %v5262
      %5264 = vst [vmem:[%s527 + $0x20] sm:$0x1] %v5263
      %v5265 = vld [vmem:[%s527 + $0x2c] sm:$0x1]
      %v5266 = vsel %vm790, %v5215, %v5265
      %5267 = vst [vmem:[%s527 + $0x2c] sm:$0x1] %v5266
      %v5268 = vld [vmem:[%s527 + $0x38] sm:$0x1]
      %v5269 = vsel %vm790, %v5217, %v5268
      %5270 = vst [vmem:[%s527 + $0x38] sm:$0x1] %v5269
      %v5271 = vld [vmem:[%s527 + $0x44] sm:$0x1]
      %v5272 = vsel %vm790, %v5219, %v5271
      %5273 = vst [vmem:[%s527 + $0x44] sm:$0x1] %v5272
      %v5274 = vld [vmem:[%s527 + $0x50] sm:$0x1]
      %v5275 = vsel %vm790, %v5221, %v5274
      %5276 = vst [vmem:[%s527 + $0x50] sm:$0x1] %v5275
      %v5277 = vld [vmem:[%s527 + $0x5c] sm:$0x1]
      %v5278 = vsel %vm790, %v5223, %v5277
      %5279 = vst [vmem:[%s527 + $0x5c] sm:$0x1] %v5278
      %v5280 = vld [vmem:[%s527 + $0x68] sm:$0x1]
      %v5281 = vsel %vm790, %v5225, %v5280
      %5282 = vst [vmem:[%s527 + $0x68] sm:$0x1] %v5281
      %v5283 = vld [vmem:[%s527 + $0x74] sm:$0x1]
      %v5284 = vsel %vm790, %v5227, %v5283
      %5285 = vst [vmem:[%s527 + $0x74] sm:$0x1] %v5284
      %v5286 = vld [vmem:[%s527 + $0x80] sm:$0x1]
      %v5287 = vsel %vm790, %v5229, %v5286
      %5288 = vst [vmem:[%s527 + $0x80] sm:$0x1] %v5287
      %v5289 = vld [vmem:[%s527 + $0x8c] sm:$0x1]
      %v5290 = vsel %vm790, %v5231, %v5289
      %5291 = vst [vmem:[%s527 + $0x8c] sm:$0x1] %v5290
      %v5292 = vld [vmem:[%s527 + $0x98] sm:$0x1]
      %v5293 = vsel %vm790, %v5233, %v5292
      %5294 = vst [vmem:[%s527 + $0x98] sm:$0x1] %v5293
      %v5295 = vld [vmem:[%s527 + $0xa4] sm:$0x1]
      %v5296 = vsel %vm790, %v5235, %v5295
      %5297 = vst [vmem:[%s527 + $0xa4] sm:$0x1] %v5296
      %v5298 = vld [vmem:[%s527 + $0xb0] sm:$0x1]
      %v5299 = vsel %vm790, %v5237, %v5298
      %5300 = vst [vmem:[%s527 + $0xb0] sm:$0x1] %v5299
      %v5301 = vld [vmem:[%s527 + $0xbc] sm:$0x1]
      %v5302 = vsel %vm790, %v5239, %v5301
      %5303 = vst [vmem:[%s527 + $0xbc] sm:$0x1] %v5302
      %v5305 = vshrl.u32 %v4586, 16
      %v5308 = vrot.slane %v5305, 7
      %v5309 = vshll.u32 %v4586, 16
      %v5311 = vor.u32 %v5308, %v5309
      %v5314 = vrot.slane %v5309, 7
      %v5316 = vsel %vm865, %v5305, %v5311
      %v5317 = vsel %vm865, %v5308, %v5314
      %v5320 = vunpack.c.l.b16 %v5316
      %v5321 = vunpack.c.h.b16 %v5316
      %v5322 = vunpack.c.l.b16 %v5317
      %v5323 = vpack.c.b16 %v5320, %v5320
      %v5324 = vpack.c.b16 %v5321, %v5321
      %v5325 = vpack.c.b16 %v5322, %v5322
      %5329 = vst.msk [vmem:[#allocation2] sm:$0xf] %vm534, %v5323
      %5330 = vst.msk [vmem:[#allocation2 + $0x4] sm:$0xf] %vm534, %v5324
      %5331 = vst.msk [vmem:[#allocation2 + $0x8] sm:$0x1] %vm881, %v5325
      %v5333 = vshrl.u32 %v4599, 16
      %v5336 = vrot.slane %v5333, 7
      %v5337 = vshll.u32 %v4599, 16
      %v5339 = vor.u32 %v5336, %v5337
      %v5342 = vrot.slane %v5337, 7
      %v5344 = vsel %vm865, %v5333, %v5339
      %v5345 = vsel %vm865, %v5336, %v5342
      %v5348 = vunpack.c.l.b16 %v5344
      %v5349 = vunpack.c.h.b16 %v5344
      %v5350 = vunpack.c.l.b16 %v5345
      %v5351 = vpack.c.b16 %v5348, %v5348
      %v5352 = vpack.c.b16 %v5349, %v5349
      %v5353 = vpack.c.b16 %v5350, %v5350
      %5357 = vst.msk [vmem:[%s921] sm:$0xf] %vm534, %v5351
      %5358 = vst.msk [vmem:[%s921 + $0x4] sm:$0xf] %vm534, %v5352
      %5359 = vst.msk [vmem:[%s921 + $0x8] sm:$0x1] %vm881, %v5353
      %v5360 = vld [vmem:[#allocation2] sm:$0xf]
      %v5361 = vld [vmem:[#allocation2 + $0x4] sm:$0xf]
      %v5362 = vld [vmem:[#allocation2 + $0xc] sm:$0xf]
      %v5363 = vld [vmem:[#allocation2 + $0x10] sm:$0xf]
      %v5364 = vld [vmem:[#allocation2 + $0x18] sm:$0xf]
      %v5365 = vld [vmem:[#allocation2 + $0x1c] sm:$0xf]
      %v5366 = vld [vmem:[#allocation2 + $0x24] sm:$0xf]
      %v5367 = vld [vmem:[#allocation2 + $0x28] sm:$0xf]
      %v5368 = vld [vmem:[#allocation2 + $0x30] sm:$0xf]
      %v5369 = vld [vmem:[#allocation2 + $0x34] sm:$0xf]
      %v5370 = vld [vmem:[#allocation2 + $0x3c] sm:$0xf]
      %v5371 = vld [vmem:[#allocation2 + $0x40] sm:$0xf]
      %v5372 = vld [vmem:[#allocation2 + $0x48] sm:$0xf]
      %v5373 = vld [vmem:[#allocation2 + $0x4c] sm:$0xf]
      %v5374 = vld [vmem:[#allocation2 + $0x54] sm:$0xf]
      %v5375 = vld [vmem:[#allocation2 + $0x58] sm:$0xf]
      %v5376 = vld [vmem:[#allocation2 + $0x60] sm:$0xf]
      %v5377 = vld [vmem:[#allocation2 + $0x64] sm:$0xf]
      %v5378 = vld [vmem:[#allocation2 + $0x6c] sm:$0xf]
      %v5379 = vld [vmem:[#allocation2 + $0x70] sm:$0xf]
      %v5380 = vld [vmem:[#allocation2 + $0x78] sm:$0xf]
      %v5381 = vld [vmem:[#allocation2 + $0x7c] sm:$0xf]
      %v5382 = vld [vmem:[#allocation2 + $0x84] sm:$0xf]
      %v5383 = vld [vmem:[#allocation2 + $0x88] sm:$0xf]
      %v5384 = vld [vmem:[#allocation2 + $0x90] sm:$0xf]
      %v5385 = vld [vmem:[#allocation2 + $0x94] sm:$0xf]
      %v5386 = vld [vmem:[#allocation2 + $0x9c] sm:$0xf]
      %v5387 = vld [vmem:[#allocation2 + $0xa0] sm:$0xf]
      %v5388 = vld [vmem:[#allocation2 + $0xa8] sm:$0xf]
      %v5389 = vld [vmem:[#allocation2 + $0xac] sm:$0xf]
      %v5390 = vld [vmem:[#allocation2 + $0xb4] sm:$0xf]
      %v5391 = vld [vmem:[#allocation2 + $0xb8] sm:$0xf]
      %v5392 = vld [vmem:[#allocation2 + $0x8] sm:$0x1]
      %v5393 = vld [vmem:[#allocation2 + $0x14] sm:$0x1]
      %v5394 = vld [vmem:[#allocation2 + $0x20] sm:$0x1]
      %v5395 = vld [vmem:[#allocation2 + $0x2c] sm:$0x1]
      %v5396 = vld [vmem:[#allocation2 + $0x38] sm:$0x1]
      %v5397 = vld [vmem:[#allocation2 + $0x44] sm:$0x1]
      %v5398 = vld [vmem:[#allocation2 + $0x50] sm:$0x1]
      %v5399 = vld [vmem:[#allocation2 + $0x5c] sm:$0x1]
      %v5400 = vld [vmem:[#allocation2 + $0x68] sm:$0x1]
      %v5401 = vld [vmem:[#allocation2 + $0x74] sm:$0x1]
      %v5402 = vld [vmem:[#allocation2 + $0x80] sm:$0x1]
      %v5403 = vld [vmem:[#allocation2 + $0x8c] sm:$0x1]
      %v5404 = vld [vmem:[#allocation2 + $0x98] sm:$0x1]
      %v5405 = vld [vmem:[#allocation2 + $0xa4] sm:$0x1]
      %v5406 = vld [vmem:[#allocation2 + $0xb0] sm:$0x1]
      %v5407 = vld [vmem:[#allocation2 + $0xbc] sm:$0x1]
      %v5409 = vshrl.u32 %v5360, 16
      %v5411 = vrot.slane %v5409, 4
      %v5412 = vshll.u32 %v5360, 16
      %v5414 = vrot.slane %v5412, 5
      %v5415 = vor.u32 %v5411, %v5414
      %v5416 = vrot.slane %v5415, 4
      %v5418 = vshll.u32 %v5361, 16
      %v5420 = vrot.slane %v5418, 5
      %v5421 = vsel %vm975, %v5416, %v5420
      %v5422 = vshrl.u32 %v5361, 16
      %v5424 = vrot.slane %v5422, 4
      %v5425 = vor.u32 %v5424, %v5420
      %v5426 = vrot.slane %v5425, 4
      %v5428 = vshll.u32 %v5392, 16
      %v5430 = vrot.slane %v5428, 5
      %v5431 = vsel %vm975, %v5426, %v5430
      %v5433 = vshrl.u32 %v5362, 16
      %v5435 = vrot.slane %v5433, 4
      %v5436 = vshll.u32 %v5362, 16
      %v5438 = vrot.slane %v5436, 5
      %v5439 = vor.u32 %v5435, %v5438
      %v5440 = vrot.slane %v5439, 4
      %v5442 = vshll.u32 %v5363, 16
      %v5444 = vrot.slane %v5442, 5
      %v5445 = vsel %vm975, %v5440, %v5444
      %v5446 = vshrl.u32 %v5363, 16
      %v5448 = vrot.slane %v5446, 4
      %v5449 = vor.u32 %v5448, %v5444
      %v5450 = vrot.slane %v5449, 4
      %v5452 = vshll.u32 %v5393, 16
      %v5454 = vrot.slane %v5452, 5
      %v5455 = vsel %vm975, %v5450, %v5454
      %v5457 = vshrl.u32 %v5364, 16
      %v5459 = vrot.slane %v5457, 4
      %v5460 = vshll.u32 %v5364, 16
      %v5462 = vrot.slane %v5460, 5
      %v5463 = vor.u32 %v5459, %v5462
      %v5464 = vrot.slane %v5463, 4
      %v5466 = vshll.u32 %v5365, 16
      %v5468 = vrot.slane %v5466, 5
      %v5469 = vsel %vm975, %v5464, %v5468
      %v5470 = vshrl.u32 %v5365, 16
      %v5472 = vrot.slane %v5470, 4
      %v5473 = vor.u32 %v5472, %v5468
      %v5474 = vrot.slane %v5473, 4
      %v5476 = vshll.u32 %v5394, 16
      %v5478 = vrot.slane %v5476, 5
      %v5479 = vsel %vm975, %v5474, %v5478
      %v5481 = vshrl.u32 %v5366, 16
      %v5483 = vrot.slane %v5481, 4
      %v5484 = vshll.u32 %v5366, 16
      %v5486 = vrot.slane %v5484, 5
      %v5487 = vor.u32 %v5483, %v5486
      %v5488 = vrot.slane %v5487, 4
      %v5490 = vshll.u32 %v5367, 16
      %v5492 = vrot.slane %v5490, 5
      %v5493 = vsel %vm975, %v5488, %v5492
      %v5494 = vshrl.u32 %v5367, 16
      %v5496 = vrot.slane %v5494, 4
      %v5497 = vor.u32 %v5496, %v5492
      %v5498 = vrot.slane %v5497, 4
      %v5500 = vshll.u32 %v5395, 16
      %v5502 = vrot.slane %v5500, 5
      %v5503 = vsel %vm975, %v5498, %v5502
      %v5505 = vshrl.u32 %v5368, 16
      %v5507 = vrot.slane %v5505, 4
      %v5508 = vshll.u32 %v5368, 16
      %v5510 = vrot.slane %v5508, 5
      %v5511 = vor.u32 %v5507, %v5510
      %v5512 = vrot.slane %v5511, 4
      %v5514 = vshll.u32 %v5369, 16
      %v5516 = vrot.slane %v5514, 5
      %v5517 = vsel %vm975, %v5512, %v5516
      %v5518 = vshrl.u32 %v5369, 16
      %v5520 = vrot.slane %v5518, 4
      %v5521 = vor.u32 %v5520, %v5516
      %v5522 = vrot.slane %v5521, 4
      %v5524 = vshll.u32 %v5396, 16
      %v5526 = vrot.slane %v5524, 5
      %v5527 = vsel %vm975, %v5522, %v5526
      %v5529 = vshrl.u32 %v5370, 16
      %v5531 = vrot.slane %v5529, 4
      %v5532 = vshll.u32 %v5370, 16
      %v5534 = vrot.slane %v5532, 5
      %v5535 = vor.u32 %v5531, %v5534
      %v5536 = vrot.slane %v5535, 4
      %v5538 = vshll.u32 %v5371, 16
      %v5540 = vrot.slane %v5538, 5
      %v5541 = vsel %vm975, %v5536, %v5540
      %v5542 = vshrl.u32 %v5371, 16
      %v5544 = vrot.slane %v5542, 4
      %v5545 = vor.u32 %v5544, %v5540
      %v5546 = vrot.slane %v5545, 4
      %v5548 = vshll.u32 %v5397, 16
      %v5550 = vrot.slane %v5548, 5
      %v5551 = vsel %vm975, %v5546, %v5550
      %v5553 = vshrl.u32 %v5372, 16
      %v5555 = vrot.slane %v5553, 4
      %v5556 = vshll.u32 %v5372, 16
      %v5558 = vrot.slane %v5556, 5
      %v5559 = vor.u32 %v5555, %v5558
      %v5560 = vrot.slane %v5559, 4
      %v5562 = vshll.u32 %v5373, 16
      %v5564 = vrot.slane %v5562, 5
      %v5565 = vsel %vm975, %v5560, %v5564
      %v5566 = vshrl.u32 %v5373, 16
      %v5568 = vrot.slane %v5566, 4
      %v5569 = vor.u32 %v5568, %v5564
      %v5570 = vrot.slane %v5569, 4
      %v5572 = vshll.u32 %v5398, 16
      %v5574 = vrot.slane %v5572, 5
      %v5575 = vsel %vm975, %v5570, %v5574
      %v5577 = vshrl.u32 %v5374, 16
      %v5579 = vrot.slane %v5577, 4
      %v5580 = vshll.u32 %v5374, 16
      %v5582 = vrot.slane %v5580, 5
      %v5583 = vor.u32 %v5579, %v5582
      %v5584 = vrot.slane %v5583, 4
      %v5586 = vshll.u32 %v5375, 16
      %v5588 = vrot.slane %v5586, 5
      %v5589 = vsel %vm975, %v5584, %v5588
      %v5590 = vshrl.u32 %v5375, 16
      %v5592 = vrot.slane %v5590, 4
      %v5593 = vor.u32 %v5592, %v5588
      %v5594 = vrot.slane %v5593, 4
      %v5596 = vshll.u32 %v5399, 16
      %v5598 = vrot.slane %v5596, 5
      %v5599 = vsel %vm975, %v5594, %v5598
      %v5601 = vshrl.u32 %v5376, 16
      %v5603 = vrot.slane %v5601, 4
      %v5604 = vshll.u32 %v5376, 16
      %v5606 = vrot.slane %v5604, 5
      %v5607 = vor.u32 %v5603, %v5606
      %v5608 = vrot.slane %v5607, 4
      %v5610 = vshll.u32 %v5377, 16
      %v5612 = vrot.slane %v5610, 5
      %v5613 = vsel %vm975, %v5608, %v5612
      %v5614 = vshrl.u32 %v5377, 16
      %v5616 = vrot.slane %v5614, 4
      %v5617 = vor.u32 %v5616, %v5612
      %v5618 = vrot.slane %v5617, 4
      %v5620 = vshll.u32 %v5400, 16
      %v5622 = vrot.slane %v5620, 5
      %v5623 = vsel %vm975, %v5618, %v5622
      %v5625 = vshrl.u32 %v5378, 16
      %v5627 = vrot.slane %v5625, 4
      %v5628 = vshll.u32 %v5378, 16
      %v5630 = vrot.slane %v5628, 5
      %v5631 = vor.u32 %v5627, %v5630
      %v5632 = vrot.slane %v5631, 4
      %v5634 = vshll.u32 %v5379, 16
      %v5636 = vrot.slane %v5634, 5
      %v5637 = vsel %vm975, %v5632, %v5636
      %v5638 = vshrl.u32 %v5379, 16
      %v5640 = vrot.slane %v5638, 4
      %v5641 = vor.u32 %v5640, %v5636
      %v5642 = vrot.slane %v5641, 4
      %v5644 = vshll.u32 %v5401, 16
      %v5646 = vrot.slane %v5644, 5
      %v5647 = vsel %vm975, %v5642, %v5646
      %v5649 = vshrl.u32 %v5380, 16
      %v5651 = vrot.slane %v5649, 4
      %v5652 = vshll.u32 %v5380, 16
      %v5654 = vrot.slane %v5652, 5
      %v5655 = vor.u32 %v5651, %v5654
      %v5656 = vrot.slane %v5655, 4
      %v5658 = vshll.u32 %v5381, 16
      %v5660 = vrot.slane %v5658, 5
      %v5661 = vsel %vm975, %v5656, %v5660
      %v5662 = vshrl.u32 %v5381, 16
      %v5664 = vrot.slane %v5662, 4
      %v5665 = vor.u32 %v5664, %v5660
      %v5666 = vrot.slane %v5665, 4
      %v5668 = vshll.u32 %v5402, 16
      %v5670 = vrot.slane %v5668, 5
      %v5671 = vsel %vm975, %v5666, %v5670
      %v5673 = vshrl.u32 %v5382, 16
      %v5675 = vrot.slane %v5673, 4
      %v5676 = vshll.u32 %v5382, 16
      %v5678 = vrot.slane %v5676, 5
      %v5679 = vor.u32 %v5675, %v5678
      %v5680 = vrot.slane %v5679, 4
      %v5682 = vshll.u32 %v5383, 16
      %v5684 = vrot.slane %v5682, 5
      %v5685 = vsel %vm975, %v5680, %v5684
      %v5686 = vshrl.u32 %v5383, 16
      %v5688 = vrot.slane %v5686, 4
      %v5689 = vor.u32 %v5688, %v5684
      %v5690 = vrot.slane %v5689, 4
      %v5692 = vshll.u32 %v5403, 16
      %v5694 = vrot.slane %v5692, 5
      %v5695 = vsel %vm975, %v5690, %v5694
      %v5697 = vshrl.u32 %v5384, 16
      %v5699 = vrot.slane %v5697, 4
      %v5700 = vshll.u32 %v5384, 16
      %v5702 = vrot.slane %v5700, 5
      %v5703 = vor.u32 %v5699, %v5702
      %v5704 = vrot.slane %v5703, 4
      %v5706 = vshll.u32 %v5385, 16
      %v5708 = vrot.slane %v5706, 5
      %v5709 = vsel %vm975, %v5704, %v5708
      %v5710 = vshrl.u32 %v5385, 16
      %v5712 = vrot.slane %v5710, 4
      %v5713 = vor.u32 %v5712, %v5708
      %v5714 = vrot.slane %v5713, 4
      %v5716 = vshll.u32 %v5404, 16
      %v5718 = vrot.slane %v5716, 5
      %v5719 = vsel %vm975, %v5714, %v5718
      %v5721 = vshrl.u32 %v5386, 16
      %v5723 = vrot.slane %v5721, 4
      %v5724 = vshll.u32 %v5386, 16
      %v5726 = vrot.slane %v5724, 5
      %v5727 = vor.u32 %v5723, %v5726
      %v5728 = vrot.slane %v5727, 4
      %v5730 = vshll.u32 %v5387, 16
      %v5732 = vrot.slane %v5730, 5
      %v5733 = vsel %vm975, %v5728, %v5732
      %v5734 = vshrl.u32 %v5387, 16
      %v5736 = vrot.slane %v5734, 4
      %v5737 = vor.u32 %v5736, %v5732
      %v5738 = vrot.slane %v5737, 4
      %v5740 = vshll.u32 %v5405, 16
      %v5742 = vrot.slane %v5740, 5
      %v5743 = vsel %vm975, %v5738, %v5742
      %v5745 = vshrl.u32 %v5388, 16
      %v5747 = vrot.slane %v5745, 4
      %v5748 = vshll.u32 %v5388, 16
      %v5750 = vrot.slane %v5748, 5
      %v5751 = vor.u32 %v5747, %v5750
      %v5752 = vrot.slane %v5751, 4
      %v5754 = vshll.u32 %v5389, 16
      %v5756 = vrot.slane %v5754, 5
      %v5757 = vsel %vm975, %v5752, %v5756
      %v5758 = vshrl.u32 %v5389, 16
      %v5760 = vrot.slane %v5758, 4
      %v5761 = vor.u32 %v5760, %v5756
      %v5762 = vrot.slane %v5761, 4
      %v5764 = vshll.u32 %v5406, 16
      %v5766 = vrot.slane %v5764, 5
      %v5767 = vsel %vm975, %v5762, %v5766
      %v5769 = vshrl.u32 %v5390, 16
      %v5771 = vrot.slane %v5769, 4
      %v5772 = vshll.u32 %v5390, 16
      %v5774 = vrot.slane %v5772, 5
      %v5775 = vor.u32 %v5771, %v5774
      %v5776 = vrot.slane %v5775, 4
      %v5778 = vshll.u32 %v5391, 16
      %v5780 = vrot.slane %v5778, 5
      %v5781 = vsel %vm975, %v5776, %v5780
      %v5782 = vshrl.u32 %v5391, 16
      %v5784 = vrot.slane %v5782, 4
      %v5785 = vor.u32 %v5784, %v5780
      %v5786 = vrot.slane %v5785, 4
      %v5788 = vshll.u32 %v5407, 16
      %v5790 = vrot.slane %v5788, 5
      %v5791 = vsel %vm975, %v5786, %v5790
      %v5792 = vld [vmem:[#allocation2] sm:$0xe]
      %v5793 = vld [vmem:[#allocation2 + $0xc] sm:$0xe]
      %v5794 = vld [vmem:[#allocation2 + $0x18] sm:$0xe]
      %v5795 = vld [vmem:[#allocation2 + $0x24] sm:$0xe]
      %v5796 = vld [vmem:[#allocation2 + $0x30] sm:$0xe]
      %v5797 = vld [vmem:[#allocation2 + $0x3c] sm:$0xe]
      %v5798 = vld [vmem:[#allocation2 + $0x48] sm:$0xe]
      %v5799 = vld [vmem:[#allocation2 + $0x54] sm:$0xe]
      %v5800 = vld [vmem:[#allocation2 + $0x60] sm:$0xe]
      %v5801 = vld [vmem:[#allocation2 + $0x6c] sm:$0xe]
      %v5802 = vld [vmem:[#allocation2 + $0x78] sm:$0xe]
      %v5803 = vld [vmem:[#allocation2 + $0x84] sm:$0xe]
      %v5804 = vld [vmem:[#allocation2 + $0x90] sm:$0xe]
      %v5805 = vld [vmem:[#allocation2 + $0x9c] sm:$0xe]
      %v5806 = vld [vmem:[#allocation2 + $0xa8] sm:$0xe]
      %v5807 = vld [vmem:[#allocation2 + $0xb4] sm:$0xe]
      %v5856 = vrot.slane %v5792, 5
      %v5857 = vrot.slane %v5856, 4
      %v5858 = vrot.slane %v5361, 5
      %v5859 = vsel %vm1426, %v5857, %v5858
      %v5860 = vrot.slane %v5858, 4
      %v5861 = vrot.slane %v5392, 5
      %v5862 = vsel %vm1426, %v5860, %v5861
      %v5863 = vrot.slane %v5793, 5
      %v5864 = vrot.slane %v5863, 4
      %v5865 = vrot.slane %v5363, 5
      %v5866 = vsel %vm1426, %v5864, %v5865
      %v5867 = vrot.slane %v5865, 4
      %v5868 = vrot.slane %v5393, 5
      %v5869 = vsel %vm1426, %v5867, %v5868
      %v5870 = vrot.slane %v5794, 5
      %v5871 = vrot.slane %v5870, 4
      %v5872 = vrot.slane %v5365, 5
      %v5873 = vsel %vm1426, %v5871, %v5872
      %v5874 = vrot.slane %v5872, 4
      %v5875 = vrot.slane %v5394, 5
      %v5876 = vsel %vm1426, %v5874, %v5875
      %v5877 = vrot.slane %v5795, 5
      %v5878 = vrot.slane %v5877, 4
      %v5879 = vrot.slane %v5367, 5
      %v5880 = vsel %vm1426, %v5878, %v5879
      %v5881 = vrot.slane %v5879, 4
      %v5882 = vrot.slane %v5395, 5
      %v5883 = vsel %vm1426, %v5881, %v5882
      %v5884 = vrot.slane %v5796, 5
      %v5885 = vrot.slane %v5884, 4
      %v5886 = vrot.slane %v5369, 5
      %v5887 = vsel %vm1426, %v5885, %v5886
      %v5888 = vrot.slane %v5886, 4
      %v5889 = vrot.slane %v5396, 5
      %v5890 = vsel %vm1426, %v5888, %v5889
      %v5891 = vrot.slane %v5797, 5
      %v5892 = vrot.slane %v5891, 4
      %v5893 = vrot.slane %v5371, 5
      %v5894 = vsel %vm1426, %v5892, %v5893
      %v5895 = vrot.slane %v5893, 4
      %v5896 = vrot.slane %v5397, 5
      %v5897 = vsel %vm1426, %v5895, %v5896
      %v5898 = vrot.slane %v5798, 5
      %v5899 = vrot.slane %v5898, 4
      %v5900 = vrot.slane %v5373, 5
      %v5901 = vsel %vm1426, %v5899, %v5900
      %v5902 = vrot.slane %v5900, 4
      %v5903 = vrot.slane %v5398, 5
      %v5904 = vsel %vm1426, %v5902, %v5903
      %v5905 = vrot.slane %v5799, 5
      %v5906 = vrot.slane %v5905, 4
      %v5907 = vrot.slane %v5375, 5
      %v5908 = vsel %vm1426, %v5906, %v5907
      %v5909 = vrot.slane %v5907, 4
      %v5910 = vrot.slane %v5399, 5
      %v5911 = vsel %vm1426, %v5909, %v5910
      %v5912 = vrot.slane %v5800, 5
      %v5913 = vrot.slane %v5912, 4
      %v5914 = vrot.slane %v5377, 5
      %v5915 = vsel %vm1426, %v5913, %v5914
      %v5916 = vrot.slane %v5914, 4
      %v5917 = vrot.slane %v5400, 5
      %v5918 = vsel %vm1426, %v5916, %v5917
      %v5919 = vrot.slane %v5801, 5
      %v5920 = vrot.slane %v5919, 4
      %v5921 = vrot.slane %v5379, 5
      %v5922 = vsel %vm1426, %v5920, %v5921
      %v5923 = vrot.slane %v5921, 4
      %v5924 = vrot.slane %v5401, 5
      %v5925 = vsel %vm1426, %v5923, %v5924
      %v5926 = vrot.slane %v5802, 5
      %v5927 = vrot.slane %v5926, 4
      %v5928 = vrot.slane %v5381, 5
      %v5929 = vsel %vm1426, %v5927, %v5928
      %v5930 = vrot.slane %v5928, 4
      %v5931 = vrot.slane %v5402, 5
      %v5932 = vsel %vm1426, %v5930, %v5931
      %v5933 = vrot.slane %v5803, 5
      %v5934 = vrot.slane %v5933, 4
      %v5935 = vrot.slane %v5383, 5
      %v5936 = vsel %vm1426, %v5934, %v5935
      %v5937 = vrot.slane %v5935, 4
      %v5938 = vrot.slane %v5403, 5
      %v5939 = vsel %vm1426, %v5937, %v5938
      %v5940 = vrot.slane %v5804, 5
      %v5941 = vrot.slane %v5940, 4
      %v5942 = vrot.slane %v5385, 5
      %v5943 = vsel %vm1426, %v5941, %v5942
      %v5944 = vrot.slane %v5942, 4
      %v5945 = vrot.slane %v5404, 5
      %v5946 = vsel %vm1426, %v5944, %v5945
      %v5947 = vrot.slane %v5805, 5
      %v5948 = vrot.slane %v5947, 4
      %v5949 = vrot.slane %v5387, 5
      %v5950 = vsel %vm1426, %v5948, %v5949
      %v5951 = vrot.slane %v5949, 4
      %v5952 = vrot.slane %v5405, 5
      %v5953 = vsel %vm1426, %v5951, %v5952
      %v5954 = vrot.slane %v5806, 5
      %v5955 = vrot.slane %v5954, 4
      %v5956 = vrot.slane %v5389, 5
      %v5957 = vsel %vm1426, %v5955, %v5956
      %v5958 = vrot.slane %v5956, 4
      %v5959 = vrot.slane %v5406, 5
      %v5960 = vsel %vm1426, %v5958, %v5959
      %v5961 = vrot.slane %v5807, 5
      %v5962 = vrot.slane %v5961, 4
      %v5963 = vrot.slane %v5391, 5
      %v5964 = vsel %vm1426, %v5962, %v5963
      %v5965 = vrot.slane %v5963, 4
      %v5966 = vrot.slane %v5407, 5
      %v5967 = vsel %vm1426, %v5965, %v5966
      %v5984 = vunpack.c.l.b16 %v5360
      %v5985 = vunpack.c.l.b16 %v5361
      %v5986 = vunpack.c.l.b16 %v5362
      %v5987 = vunpack.c.l.b16 %v5363
      %v5988 = vunpack.c.l.b16 %v5364
      %v5989 = vunpack.c.l.b16 %v5365
      %v5990 = vunpack.c.l.b16 %v5366
      %v5991 = vunpack.c.l.b16 %v5367
      %v5992 = vunpack.c.l.b16 %v5368
      %v5993 = vunpack.c.l.b16 %v5369
      %v5994 = vunpack.c.l.b16 %v5370
      %v5995 = vunpack.c.l.b16 %v5371
      %v5996 = vunpack.c.l.b16 %v5372
      %v5997 = vunpack.c.l.b16 %v5373
      %v5998 = vunpack.c.l.b16 %v5374
      %v5999 = vunpack.c.l.b16 %v5375
      %v6000 = vunpack.c.l.b16 %v5376
      %v6001 = vunpack.c.l.b16 %v5377
      %v6002 = vunpack.c.l.b16 %v5378
      %v6003 = vunpack.c.l.b16 %v5379
      %v6004 = vunpack.c.l.b16 %v5380
      %v6005 = vunpack.c.l.b16 %v5381
      %v6006 = vunpack.c.l.b16 %v5382
      %v6007 = vunpack.c.l.b16 %v5383
      %v6008 = vunpack.c.l.b16 %v5384
      %v6009 = vunpack.c.l.b16 %v5385
      %v6010 = vunpack.c.l.b16 %v5386
      %v6011 = vunpack.c.l.b16 %v5387
      %v6012 = vunpack.c.l.b16 %v5388
      %v6013 = vunpack.c.l.b16 %v5389
      %v6014 = vunpack.c.l.b16 %v5390
      %v6015 = vunpack.c.l.b16 %v5391
      %v6016 = vpack.c.b16 %v5985, %v5984
      %v6017 = vpack.c.b16 %v5987, %v5986
      %v6018 = vpack.c.b16 %v5989, %v5988
      %v6019 = vpack.c.b16 %v5991, %v5990
      %v6020 = vpack.c.b16 %v5993, %v5992
      %v6021 = vpack.c.b16 %v5995, %v5994
      %v6022 = vpack.c.b16 %v5997, %v5996
      %v6023 = vpack.c.b16 %v5999, %v5998
      %v6024 = vpack.c.b16 %v6001, %v6000
      %v6025 = vpack.c.b16 %v6003, %v6002
      %v6026 = vpack.c.b16 %v6005, %v6004
      %v6027 = vpack.c.b16 %v6007, %v6006
      %v6028 = vpack.c.b16 %v6009, %v6008
      %v6029 = vpack.c.b16 %v6011, %v6010
      %v6030 = vpack.c.b16 %v6013, %v6012
      %v6031 = vpack.c.b16 %v6015, %v6014
      %v6032 = vunpack.c.l.b16 %v5421
      %v6033 = vunpack.c.l.b16 %v5431
      %v6034 = vunpack.c.l.b16 %v5445
      %v6035 = vunpack.c.l.b16 %v5455
      %v6036 = vunpack.c.l.b16 %v5469
      %v6037 = vunpack.c.l.b16 %v5479
      %v6038 = vunpack.c.l.b16 %v5493
      %v6039 = vunpack.c.l.b16 %v5503
      %v6040 = vunpack.c.l.b16 %v5517
      %v6041 = vunpack.c.l.b16 %v5527
      %v6042 = vunpack.c.l.b16 %v5541
      %v6043 = vunpack.c.l.b16 %v5551
      %v6044 = vunpack.c.l.b16 %v5565
      %v6045 = vunpack.c.l.b16 %v5575
      %v6046 = vunpack.c.l.b16 %v5589
      %v6047 = vunpack.c.l.b16 %v5599
      %v6048 = vunpack.c.l.b16 %v5613
      %v6049 = vunpack.c.l.b16 %v5623
      %v6050 = vunpack.c.l.b16 %v5637
      %v6051 = vunpack.c.l.b16 %v5647
      %v6052 = vunpack.c.l.b16 %v5661
      %v6053 = vunpack.c.l.b16 %v5671
      %v6054 = vunpack.c.l.b16 %v5685
      %v6055 = vunpack.c.l.b16 %v5695
      %v6056 = vunpack.c.l.b16 %v5709
      %v6057 = vunpack.c.l.b16 %v5719
      %v6058 = vunpack.c.l.b16 %v5733
      %v6059 = vunpack.c.l.b16 %v5743
      %v6060 = vunpack.c.l.b16 %v5757
      %v6061 = vunpack.c.l.b16 %v5767
      %v6062 = vunpack.c.l.b16 %v5781
      %v6063 = vunpack.c.l.b16 %v5791
      %v6064 = vpack.c.b16 %v6033, %v6032
      %v6065 = vpack.c.b16 %v6035, %v6034
      %v6066 = vpack.c.b16 %v6037, %v6036
      %v6067 = vpack.c.b16 %v6039, %v6038
      %v6068 = vpack.c.b16 %v6041, %v6040
      %v6069 = vpack.c.b16 %v6043, %v6042
      %v6070 = vpack.c.b16 %v6045, %v6044
      %v6071 = vpack.c.b16 %v6047, %v6046
      %v6072 = vpack.c.b16 %v6049, %v6048
      %v6073 = vpack.c.b16 %v6051, %v6050
      %v6074 = vpack.c.b16 %v6053, %v6052
      %v6075 = vpack.c.b16 %v6055, %v6054
      %v6076 = vpack.c.b16 %v6057, %v6056
      %v6077 = vpack.c.b16 %v6059, %v6058
      %v6078 = vpack.c.b16 %v6061, %v6060
      %v6079 = vpack.c.b16 %v6063, %v6062
      %6080 = vrot.lane.b32.xlu0 %v6064, 4
      %v6081 = vpop.permute.xlu0 %6080
      %6082 = vrot.lane.b32.xlu0 %v6065, 4
      %v6083 = vpop.permute.xlu0 %6082
      %6084 = vrot.lane.b32.xlu0 %v6066, 4
      %v6085 = vpop.permute.xlu0 %6084
      %6086 = vrot.lane.b32.xlu0 %v6067, 4
      %v6087 = vpop.permute.xlu0 %6086
      %6088 = vrot.lane.b32.xlu0 %v6068, 4
      %v6089 = vpop.permute.xlu0 %6088
      %6090 = vrot.lane.b32.xlu0 %v6069, 4
      %v6091 = vpop.permute.xlu0 %6090
      %6092 = vrot.lane.b32.xlu0 %v6070, 4
      %v6093 = vpop.permute.xlu0 %6092
      %6094 = vrot.lane.b32.xlu0 %v6071, 4
      %v6095 = vpop.permute.xlu0 %6094
      %6096 = vrot.lane.b32.xlu0 %v6072, 4
      %v6097 = vpop.permute.xlu0 %6096
      %6098 = vrot.lane.b32.xlu0 %v6073, 4
      %v6099 = vpop.permute.xlu0 %6098
      %6100 = vrot.lane.b32.xlu0 %v6074, 4
      %v6101 = vpop.permute.xlu0 %6100
      %6102 = vrot.lane.b32.xlu0 %v6075, 4
      %v6103 = vpop.permute.xlu0 %6102
      %6104 = vrot.lane.b32.xlu0 %v6076, 4
      %v6105 = vpop.permute.xlu0 %6104
      %6106 = vrot.lane.b32.xlu0 %v6077, 4
      %v6107 = vpop.permute.xlu0 %6106
      %6108 = vrot.lane.b32.xlu0 %v6078, 4
      %v6109 = vpop.permute.xlu0 %6108
      %6110 = vrot.lane.b32.xlu0 %v6079, 4
      %v6111 = vpop.permute.xlu0 %6110
      %v6112 = vunpack.c.l.b16 %v5859
      %v6113 = vunpack.c.l.b16 %v5862
      %v6114 = vunpack.c.l.b16 %v5866
      %v6115 = vunpack.c.l.b16 %v5869
      %v6116 = vunpack.c.l.b16 %v5873
      %v6117 = vunpack.c.l.b16 %v5876
      %v6118 = vunpack.c.l.b16 %v5880
      %v6119 = vunpack.c.l.b16 %v5883
      %v6120 = vunpack.c.l.b16 %v5887
      %v6121 = vunpack.c.l.b16 %v5890
      %v6122 = vunpack.c.l.b16 %v5894
      %v6123 = vunpack.c.l.b16 %v5897
      %v6124 = vunpack.c.l.b16 %v5901
      %v6125 = vunpack.c.l.b16 %v5904
      %v6126 = vunpack.c.l.b16 %v5908
      %v6127 = vunpack.c.l.b16 %v5911
      %v6128 = vunpack.c.l.b16 %v5915
      %v6129 = vunpack.c.l.b16 %v5918
      %v6130 = vunpack.c.l.b16 %v5922
      %v6131 = vunpack.c.l.b16 %v5925
      %v6132 = vunpack.c.l.b16 %v5929
      %v6133 = vunpack.c.l.b16 %v5932
      %v6134 = vunpack.c.l.b16 %v5936
      %v6135 = vunpack.c.l.b16 %v5939
      %v6136 = vunpack.c.l.b16 %v5943
      %v6137 = vunpack.c.l.b16 %v5946
      %v6138 = vunpack.c.l.b16 %v5950
      %v6139 = vunpack.c.l.b16 %v5953
      %v6140 = vunpack.c.l.b16 %v5957
      %v6141 = vunpack.c.l.b16 %v5960
      %v6142 = vunpack.c.l.b16 %v5964
      %v6143 = vunpack.c.l.b16 %v5967
      %v6144 = vpack.c.b16 %v6113, %v6112
      %v6145 = vpack.c.b16 %v6115, %v6114
      %v6146 = vpack.c.b16 %v6117, %v6116
      %v6147 = vpack.c.b16 %v6119, %v6118
      %v6148 = vpack.c.b16 %v6121, %v6120
      %v6149 = vpack.c.b16 %v6123, %v6122
      %v6150 = vpack.c.b16 %v6125, %v6124
      %v6151 = vpack.c.b16 %v6127, %v6126
      %v6152 = vpack.c.b16 %v6129, %v6128
      %v6153 = vpack.c.b16 %v6131, %v6130
      %v6154 = vpack.c.b16 %v6133, %v6132
      %v6155 = vpack.c.b16 %v6135, %v6134
      %v6156 = vpack.c.b16 %v6137, %v6136
      %v6157 = vpack.c.b16 %v6139, %v6138
      %v6158 = vpack.c.b16 %v6141, %v6140
      %v6159 = vpack.c.b16 %v6143, %v6142
      %6160 = vrot.lane.b32.xlu0 %v6144, 8
      %v6161 = vpop.permute.xlu0 %6160
      %6162 = vrot.lane.b32.xlu0 %v6145, 8
      %v6163 = vpop.permute.xlu0 %6162
      %6164 = vrot.lane.b32.xlu0 %v6146, 8
      %v6165 = vpop.permute.xlu0 %6164
      %6166 = vrot.lane.b32.xlu0 %v6147, 8
      %v6167 = vpop.permute.xlu0 %6166
      %6168 = vrot.lane.b32.xlu0 %v6148, 8
      %v6169 = vpop.permute.xlu0 %6168
      %6170 = vrot.lane.b32.xlu0 %v6149, 8
      %v6171 = vpop.permute.xlu0 %6170
      %6172 = vrot.lane.b32.xlu0 %v6150, 8
      %v6173 = vpop.permute.xlu0 %6172
      %6174 = vrot.lane.b32.xlu0 %v6151, 8
      %v6175 = vpop.permute.xlu0 %6174
      %6176 = vrot.lane.b32.xlu0 %v6152, 8
      %v6177 = vpop.permute.xlu0 %6176
      %6178 = vrot.lane.b32.xlu0 %v6153, 8
      %v6179 = vpop.permute.xlu0 %6178
      %6180 = vrot.lane.b32.xlu0 %v6154, 8
      %v6181 = vpop.permute.xlu0 %6180
      %6182 = vrot.lane.b32.xlu0 %v6155, 8
      %v6183 = vpop.permute.xlu0 %6182
      %6184 = vrot.lane.b32.xlu0 %v6156, 8
      %v6185 = vpop.permute.xlu0 %6184
      %6186 = vrot.lane.b32.xlu0 %v6157, 8
      %v6187 = vpop.permute.xlu0 %6186
      %6188 = vrot.lane.b32.xlu0 %v6158, 8
      %v6189 = vpop.permute.xlu0 %6188
      %6190 = vrot.lane.b32.xlu0 %v6159, 8
      %v6191 = vpop.permute.xlu0 %6190
      %v6194 = vsel %vm1763, %v6016, %v6081
      %v6197 = vsel %vm1763, %v6017, %v6083
      %v6200 = vsel %vm1763, %v6018, %v6085
      %v6203 = vsel %vm1763, %v6019, %v6087
      %v6206 = vsel %vm1763, %v6020, %v6089
      %v6209 = vsel %vm1763, %v6021, %v6091
      %v6212 = vsel %vm1763, %v6022, %v6093
      %v6215 = vsel %vm1763, %v6023, %v6095
      %v6218 = vsel %vm1763, %v6024, %v6097
      %v6221 = vsel %vm1763, %v6025, %v6099
      %v6224 = vsel %vm1763, %v6026, %v6101
      %v6227 = vsel %vm1763, %v6027, %v6103
      %v6230 = vsel %vm1763, %v6028, %v6105
      %v6233 = vsel %vm1763, %v6029, %v6107
      %v6236 = vsel %vm1763, %v6030, %v6109
      %v6239 = vsel %vm1763, %v6031, %v6111
      %v6241 = vsel %vm1812, %v6194, %v6161
      %v6243 = vsel %vm1812, %v6197, %v6163
      %v6245 = vsel %vm1812, %v6200, %v6165
      %v6247 = vsel %vm1812, %v6203, %v6167
      %v6249 = vsel %vm1812, %v6206, %v6169
      %v6251 = vsel %vm1812, %v6209, %v6171
      %v6253 = vsel %vm1812, %v6212, %v6173
      %v6255 = vsel %vm1812, %v6215, %v6175
      %v6257 = vsel %vm1812, %v6218, %v6177
      %v6259 = vsel %vm1812, %v6221, %v6179
      %v6261 = vsel %vm1812, %v6224, %v6181
      %v6263 = vsel %vm1812, %v6227, %v6183
      %v6265 = vsel %vm1812, %v6230, %v6185
      %v6267 = vsel %vm1812, %v6233, %v6187
      %v6269 = vsel %vm1812, %v6236, %v6189
      %v6271 = vsel %vm1812, %v6239, %v6191
      %v6272 = vld [vmem:[%s2] sm:$0xf]
      %v6273 = vld [vmem:[%s2 + $0x4] sm:$0x3]
      %v6274 = vld [vmem:[%s527] sm:$0xf]
      %v6275 = vld [vmem:[%s527 + $0x4] sm:$0xf]
      %v6276 = vld [vmem:[%s527 + $0xc] sm:$0xf]
      %v6277 = vld [vmem:[%s527 + $0x10] sm:$0xf]
      %v6278 = vld [vmem:[%s527 + $0x18] sm:$0xf]
      %v6279 = vld [vmem:[%s527 + $0x1c] sm:$0xf]
      %v6280 = vld [vmem:[%s527 + $0x24] sm:$0xf]
      %v6281 = vld [vmem:[%s527 + $0x28] sm:$0xf]
      %v6282 = vld [vmem:[%s527 + $0x30] sm:$0xf]
      %v6283 = vld [vmem:[%s527 + $0x34] sm:$0xf]
      %v6284 = vld [vmem:[%s527 + $0x3c] sm:$0xf]
      %v6285 = vld [vmem:[%s527 + $0x40] sm:$0xf]
      %v6286 = vld [vmem:[%s527 + $0x48] sm:$0xf]
      %v6287 = vld [vmem:[%s527 + $0x4c] sm:$0xf]
      %v6288 = vld [vmem:[%s527 + $0x54] sm:$0xf]
      %v6289 = vld [vmem:[%s527 + $0x58] sm:$0xf]
      %v6290 = vld [vmem:[%s527 + $0x60] sm:$0xf]
      %v6291 = vld [vmem:[%s527 + $0x64] sm:$0xf]
      %v6292 = vld [vmem:[%s527 + $0x6c] sm:$0xf]
      %v6293 = vld [vmem:[%s527 + $0x70] sm:$0xf]
      %v6294 = vld [vmem:[%s527 + $0x78] sm:$0xf]
      %v6295 = vld [vmem:[%s527 + $0x7c] sm:$0xf]
      %v6296 = vld [vmem:[%s527 + $0x84] sm:$0xf]
      %v6297 = vld [vmem:[%s527 + $0x88] sm:$0xf]
      %v6298 = vld [vmem:[%s527 + $0x90] sm:$0xf]
      %v6299 = vld [vmem:[%s527 + $0x94] sm:$0xf]
      %v6300 = vld [vmem:[%s527 + $0x9c] sm:$0xf]
      %v6301 = vld [vmem:[%s527 + $0xa0] sm:$0xf]
      %v6302 = vld [vmem:[%s527 + $0xa8] sm:$0xf]
      %v6303 = vld [vmem:[%s527 + $0xac] sm:$0xf]
      %v6304 = vld [vmem:[%s527 + $0xb4] sm:$0xf]
      %v6305 = vld [vmem:[%s527 + $0xb8] sm:$0xf]
      %v6306 = vld [vmem:[%s527 + $0x8] sm:$0x1]
      %v6307 = vld [vmem:[%s527 + $0x14] sm:$0x1]
      %v6308 = vld [vmem:[%s527 + $0x20] sm:$0x1]
      %v6309 = vld [vmem:[%s527 + $0x2c] sm:$0x1]
      %v6310 = vld [vmem:[%s527 + $0x38] sm:$0x1]
      %v6311 = vld [vmem:[%s527 + $0x44] sm:$0x1]
      %v6312 = vld [vmem:[%s527 + $0x50] sm:$0x1]
      %v6313 = vld [vmem:[%s527 + $0x5c] sm:$0x1]
      %v6314 = vld [vmem:[%s527 + $0x68] sm:$0x1]
      %v6315 = vld [vmem:[%s527 + $0x74] sm:$0x1]
      %v6316 = vld [vmem:[%s527 + $0x80] sm:$0x1]
      %v6317 = vld [vmem:[%s527 + $0x8c] sm:$0x1]
      %v6318 = vld [vmem:[%s527 + $0x98] sm:$0x1]
      %v6319 = vld [vmem:[%s527 + $0xa4] sm:$0x1]
      %v6320 = vld [vmem:[%s527 + $0xb0] sm:$0x1]
      %v6321 = vld [vmem:[%s527 + $0xbc] sm:$0x1]
      %v6323 = vshrl.u32 %v6274, 16
      %v6325 = vrot.slane %v6323, 4
      %v6326 = vshll.u32 %v6274, 16
      %v6328 = vrot.slane %v6326, 5
      %v6329 = vor.u32 %v6325, %v6328
      %v6330 = vrot.slane %v6329, 4
      %v6332 = vshll.u32 %v6275, 16
      %v6334 = vrot.slane %v6332, 5
      %v6335 = vsel %vm975, %v6330, %v6334
      %v6336 = vshrl.u32 %v6275, 16
      %v6338 = vrot.slane %v6336, 4
      %v6339 = vor.u32 %v6338, %v6334
      %v6340 = vrot.slane %v6339, 4
      %v6342 = vshll.u32 %v6306, 16
      %v6344 = vrot.slane %v6342, 5
      %v6345 = vsel %vm975, %v6340, %v6344
      %v6347 = vshrl.u32 %v6276, 16
      %v6349 = vrot.slane %v6347, 4
      %v6350 = vshll.u32 %v6276, 16
      %v6352 = vrot.slane %v6350, 5
      %v6353 = vor.u32 %v6349, %v6352
      %v6354 = vrot.slane %v6353, 4
      %v6356 = vshll.u32 %v6277, 16
      %v6358 = vrot.slane %v6356, 5
      %v6359 = vsel %vm975, %v6354, %v6358
      %v6360 = vshrl.u32 %v6277, 16
      %v6362 = vrot.slane %v6360, 4
      %v6363 = vor.u32 %v6362, %v6358
      %v6364 = vrot.slane %v6363, 4
      %v6366 = vshll.u32 %v6307, 16
      %v6368 = vrot.slane %v6366, 5
      %v6369 = vsel %vm975, %v6364, %v6368
      %v6371 = vshrl.u32 %v6278, 16
      %v6373 = vrot.slane %v6371, 4
      %v6374 = vshll.u32 %v6278, 16
      %v6376 = vrot.slane %v6374, 5
      %v6377 = vor.u32 %v6373, %v6376
      %v6378 = vrot.slane %v6377, 4
      %v6380 = vshll.u32 %v6279, 16
      %v6382 = vrot.slane %v6380, 5
      %v6383 = vsel %vm975, %v6378, %v6382
      %v6384 = vshrl.u32 %v6279, 16
      %v6386 = vrot.slane %v6384, 4
      %v6387 = vor.u32 %v6386, %v6382
      %v6388 = vrot.slane %v6387, 4
      %v6390 = vshll.u32 %v6308, 16
      %v6392 = vrot.slane %v6390, 5
      %v6393 = vsel %vm975, %v6388, %v6392
      %v6395 = vshrl.u32 %v6280, 16
      %v6397 = vrot.slane %v6395, 4
      %v6398 = vshll.u32 %v6280, 16
      %v6400 = vrot.slane %v6398, 5
      %v6401 = vor.u32 %v6397, %v6400
      %v6402 = vrot.slane %v6401, 4
      %v6404 = vshll.u32 %v6281, 16
      %v6406 = vrot.slane %v6404, 5
      %v6407 = vsel %vm975, %v6402, %v6406
      %v6408 = vshrl.u32 %v6281, 16
      %v6410 = vrot.slane %v6408, 4
      %v6411 = vor.u32 %v6410, %v6406
      %v6412 = vrot.slane %v6411, 4
      %v6414 = vshll.u32 %v6309, 16
      %v6416 = vrot.slane %v6414, 5
      %v6417 = vsel %vm975, %v6412, %v6416
      %v6419 = vshrl.u32 %v6282, 16
      %v6421 = vrot.slane %v6419, 4
      %v6422 = vshll.u32 %v6282, 16
      %v6424 = vrot.slane %v6422, 5
      %v6425 = vor.u32 %v6421, %v6424
      %v6426 = vrot.slane %v6425, 4
      %v6428 = vshll.u32 %v6283, 16
      %v6430 = vrot.slane %v6428, 5
      %v6431 = vsel %vm975, %v6426, %v6430
      %v6432 = vshrl.u32 %v6283, 16
      %v6434 = vrot.slane %v6432, 4
      %v6435 = vor.u32 %v6434, %v6430
      %v6436 = vrot.slane %v6435, 4
      %v6438 = vshll.u32 %v6310, 16
      %v6440 = vrot.slane %v6438, 5
      %v6441 = vsel %vm975, %v6436, %v6440
      %v6443 = vshrl.u32 %v6284, 16
      %v6445 = vrot.slane %v6443, 4
      %v6446 = vshll.u32 %v6284, 16
      %v6448 = vrot.slane %v6446, 5
      %v6449 = vor.u32 %v6445, %v6448
      %v6450 = vrot.slane %v6449, 4
      %v6452 = vshll.u32 %v6285, 16
      %v6454 = vrot.slane %v6452, 5
      %v6455 = vsel %vm975, %v6450, %v6454
      %v6456 = vshrl.u32 %v6285, 16
      %v6458 = vrot.slane %v6456, 4
      %v6459 = vor.u32 %v6458, %v6454
      %v6460 = vrot.slane %v6459, 4
      %v6462 = vshll.u32 %v6311, 16
      %v6464 = vrot.slane %v6462, 5
      %v6465 = vsel %vm975, %v6460, %v6464
      %v6467 = vshrl.u32 %v6286, 16
      %v6469 = vrot.slane %v6467, 4
      %v6470 = vshll.u32 %v6286, 16
      %v6472 = vrot.slane %v6470, 5
      %v6473 = vor.u32 %v6469, %v6472
      %v6474 = vrot.slane %v6473, 4
      %v6476 = vshll.u32 %v6287, 16
      %v6478 = vrot.slane %v6476, 5
      %v6479 = vsel %vm975, %v6474, %v6478
      %v6480 = vshrl.u32 %v6287, 16
      %v6482 = vrot.slane %v6480, 4
      %v6483 = vor.u32 %v6482, %v6478
      %v6484 = vrot.slane %v6483, 4
      %v6486 = vshll.u32 %v6312, 16
      %v6488 = vrot.slane %v6486, 5
      %v6489 = vsel %vm975, %v6484, %v6488
      %v6491 = vshrl.u32 %v6288, 16
      %v6493 = vrot.slane %v6491, 4
      %v6494 = vshll.u32 %v6288, 16
      %v6496 = vrot.slane %v6494, 5
      %v6497 = vor.u32 %v6493, %v6496
      %v6498 = vrot.slane %v6497, 4
      %v6500 = vshll.u32 %v6289, 16
      %v6502 = vrot.slane %v6500, 5
      %v6503 = vsel %vm975, %v6498, %v6502
      %v6504 = vshrl.u32 %v6289, 16
      %v6506 = vrot.slane %v6504, 4
      %v6507 = vor.u32 %v6506, %v6502
      %v6508 = vrot.slane %v6507, 4
      %v6510 = vshll.u32 %v6313, 16
      %v6512 = vrot.slane %v6510, 5
      %v6513 = vsel %vm975, %v6508, %v6512
      %v6515 = vshrl.u32 %v6290, 16
      %v6517 = vrot.slane %v6515, 4
      %v6518 = vshll.u32 %v6290, 16
      %v6520 = vrot.slane %v6518, 5
      %v6521 = vor.u32 %v6517, %v6520
      %v6522 = vrot.slane %v6521, 4
      %v6524 = vshll.u32 %v6291, 16
      %v6526 = vrot.slane %v6524, 5
      %v6527 = vsel %vm975, %v6522, %v6526
      %v6528 = vshrl.u32 %v6291, 16
      %v6530 = vrot.slane %v6528, 4
      %v6531 = vor.u32 %v6530, %v6526
      %v6532 = vrot.slane %v6531, 4
      %v6534 = vshll.u32 %v6314, 16
      %v6536 = vrot.slane %v6534, 5
      %v6537 = vsel %vm975, %v6532, %v6536
      %v6539 = vshrl.u32 %v6292, 16
      %v6541 = vrot.slane %v6539, 4
      %v6542 = vshll.u32 %v6292, 16
      %v6544 = vrot.slane %v6542, 5
      %v6545 = vor.u32 %v6541, %v6544
      %v6546 = vrot.slane %v6545, 4
      %v6548 = vshll.u32 %v6293, 16
      %v6550 = vrot.slane %v6548, 5
      %v6551 = vsel %vm975, %v6546, %v6550
      %v6552 = vshrl.u32 %v6293, 16
      %v6554 = vrot.slane %v6552, 4
      %v6555 = vor.u32 %v6554, %v6550
      %v6556 = vrot.slane %v6555, 4
      %v6558 = vshll.u32 %v6315, 16
      %v6560 = vrot.slane %v6558, 5
      %v6561 = vsel %vm975, %v6556, %v6560
      %v6563 = vshrl.u32 %v6294, 16
      %v6565 = vrot.slane %v6563, 4
      %v6566 = vshll.u32 %v6294, 16
      %v6568 = vrot.slane %v6566, 5
      %v6569 = vor.u32 %v6565, %v6568
      %v6570 = vrot.slane %v6569, 4
      %v6572 = vshll.u32 %v6295, 16
      %v6574 = vrot.slane %v6572, 5
      %v6575 = vsel %vm975, %v6570, %v6574
      %v6576 = vshrl.u32 %v6295, 16
      %v6578 = vrot.slane %v6576, 4
      %v6579 = vor.u32 %v6578, %v6574
      %v6580 = vrot.slane %v6579, 4
      %v6582 = vshll.u32 %v6316, 16
      %v6584 = vrot.slane %v6582, 5
      %v6585 = vsel %vm975, %v6580, %v6584
      %v6587 = vshrl.u32 %v6296, 16
      %v6589 = vrot.slane %v6587, 4
      %v6590 = vshll.u32 %v6296, 16
      %v6592 = vrot.slane %v6590, 5
      %v6593 = vor.u32 %v6589, %v6592
      %v6594 = vrot.slane %v6593, 4
      %v6596 = vshll.u32 %v6297, 16
      %v6598 = vrot.slane %v6596, 5
      %v6599 = vsel %vm975, %v6594, %v6598
      %v6600 = vshrl.u32 %v6297, 16
      %v6602 = vrot.slane %v6600, 4
      %v6603 = vor.u32 %v6602, %v6598
      %v6604 = vrot.slane %v6603, 4
      %v6606 = vshll.u32 %v6317, 16
      %v6608 = vrot.slane %v6606, 5
      %v6609 = vsel %vm975, %v6604, %v6608
      %v6611 = vshrl.u32 %v6298, 16
      %v6613 = vrot.slane %v6611, 4
      %v6614 = vshll.u32 %v6298, 16
      %v6616 = vrot.slane %v6614, 5
      %v6617 = vor.u32 %v6613, %v6616
      %v6618 = vrot.slane %v6617, 4
      %v6620 = vshll.u32 %v6299, 16
      %v6622 = vrot.slane %v6620, 5
      %v6623 = vsel %vm975, %v6618, %v6622
      %v6624 = vshrl.u32 %v6299, 16
      %v6626 = vrot.slane %v6624, 4
      %v6627 = vor.u32 %v6626, %v6622
      %v6628 = vrot.slane %v6627, 4
      %v6630 = vshll.u32 %v6318, 16
      %v6632 = vrot.slane %v6630, 5
      %v6633 = vsel %vm975, %v6628, %v6632
      %v6635 = vshrl.u32 %v6300, 16
      %v6637 = vrot.slane %v6635, 4
      %v6638 = vshll.u32 %v6300, 16
      %v6640 = vrot.slane %v6638, 5
      %v6641 = vor.u32 %v6637, %v6640
      %v6642 = vrot.slane %v6641, 4
      %v6644 = vshll.u32 %v6301, 16
      %v6646 = vrot.slane %v6644, 5
      %v6647 = vsel %vm975, %v6642, %v6646
      %v6648 = vshrl.u32 %v6301, 16
      %v6650 = vrot.slane %v6648, 4
      %v6651 = vor.u32 %v6650, %v6646
      %v6652 = vrot.slane %v6651, 4
      %v6654 = vshll.u32 %v6319, 16
      %v6656 = vrot.slane %v6654, 5
      %v6657 = vsel %vm975, %v6652, %v6656
      %v6659 = vshrl.u32 %v6302, 16
      %v6661 = vrot.slane %v6659, 4
      %v6662 = vshll.u32 %v6302, 16
      %v6664 = vrot.slane %v6662, 5
      %v6665 = vor.u32 %v6661, %v6664
      %v6666 = vrot.slane %v6665, 4
      %v6668 = vshll.u32 %v6303, 16
      %v6670 = vrot.slane %v6668, 5
      %v6671 = vsel %vm975, %v6666, %v6670
      %v6672 = vshrl.u32 %v6303, 16
      %v6674 = vrot.slane %v6672, 4
      %v6675 = vor.u32 %v6674, %v6670
      %v6676 = vrot.slane %v6675, 4
      %v6678 = vshll.u32 %v6320, 16
      %v6680 = vrot.slane %v6678, 5
      %v6681 = vsel %vm975, %v6676, %v6680
      %v6683 = vshrl.u32 %v6304, 16
      %v6685 = vrot.slane %v6683, 4
      %v6686 = vshll.u32 %v6304, 16
      %v6688 = vrot.slane %v6686, 5
      %v6689 = vor.u32 %v6685, %v6688
      %v6690 = vrot.slane %v6689, 4
      %v6692 = vshll.u32 %v6305, 16
      %v6694 = vrot.slane %v6692, 5
      %v6695 = vsel %vm975, %v6690, %v6694
      %v6696 = vshrl.u32 %v6305, 16
      %v6698 = vrot.slane %v6696, 4
      %v6699 = vor.u32 %v6698, %v6694
      %v6700 = vrot.slane %v6699, 4
      %v6702 = vshll.u32 %v6321, 16
      %v6704 = vrot.slane %v6702, 5
      %v6705 = vsel %vm975, %v6700, %v6704
      %v6706 = vld [vmem:[%s527] sm:$0xe]
      %v6707 = vld [vmem:[%s527 + $0xc] sm:$0xe]
      %v6708 = vld [vmem:[%s527 + $0x18] sm:$0xe]
      %v6709 = vld [vmem:[%s527 + $0x24] sm:$0xe]
      %v6710 = vld [vmem:[%s527 + $0x30] sm:$0xe]
      %v6711 = vld [vmem:[%s527 + $0x3c] sm:$0xe]
      %v6712 = vld [vmem:[%s527 + $0x48] sm:$0xe]
      %v6713 = vld [vmem:[%s527 + $0x54] sm:$0xe]
      %v6714 = vld [vmem:[%s527 + $0x60] sm:$0xe]
      %v6715 = vld [vmem:[%s527 + $0x6c] sm:$0xe]
      %v6716 = vld [vmem:[%s527 + $0x78] sm:$0xe]
      %v6717 = vld [vmem:[%s527 + $0x84] sm:$0xe]
      %v6718 = vld [vmem:[%s527 + $0x90] sm:$0xe]
      %v6719 = vld [vmem:[%s527 + $0x9c] sm:$0xe]
      %v6720 = vld [vmem:[%s527 + $0xa8] sm:$0xe]
      %v6721 = vld [vmem:[%s527 + $0xb4] sm:$0xe]
      %v6770 = vrot.slane %v6706, 5
      %v6771 = vrot.slane %v6770, 4
      %v6772 = vrot.slane %v6275, 5
      %v6773 = vsel %vm1426, %v6771, %v6772
      %v6774 = vrot.slane %v6772, 4
      %v6775 = vrot.slane %v6306, 5
      %v6776 = vsel %vm1426, %v6774, %v6775
      %v6777 = vrot.slane %v6707, 5
      %v6778 = vrot.slane %v6777, 4
      %v6779 = vrot.slane %v6277, 5
      %v6780 = vsel %vm1426, %v6778, %v6779
      %v6781 = vrot.slane %v6779, 4
      %v6782 = vrot.slane %v6307, 5
      %v6783 = vsel %vm1426, %v6781, %v6782
      %v6784 = vrot.slane %v6708, 5
      %v6785 = vrot.slane %v6784, 4
      %v6786 = vrot.slane %v6279, 5
      %v6787 = vsel %vm1426, %v6785, %v6786
      %v6788 = vrot.slane %v6786, 4
      %v6789 = vrot.slane %v6308, 5
      %v6790 = vsel %vm1426, %v6788, %v6789
      %v6791 = vrot.slane %v6709, 5
      %v6792 = vrot.slane %v6791, 4
      %v6793 = vrot.slane %v6281, 5
      %v6794 = vsel %vm1426, %v6792, %v6793
      %v6795 = vrot.slane %v6793, 4
      %v6796 = vrot.slane %v6309, 5
      %v6797 = vsel %vm1426, %v6795, %v6796
      %v6798 = vrot.slane %v6710, 5
      %v6799 = vrot.slane %v6798, 4
      %v6800 = vrot.slane %v6283, 5
      %v6801 = vsel %vm1426, %v6799, %v6800
      %v6802 = vrot.slane %v6800, 4
      %v6803 = vrot.slane %v6310, 5
      %v6804 = vsel %vm1426, %v6802, %v6803
      %v6805 = vrot.slane %v6711, 5
      %v6806 = vrot.slane %v6805, 4
      %v6807 = vrot.slane %v6285, 5
      %v6808 = vsel %vm1426, %v6806, %v6807
      %v6809 = vrot.slane %v6807, 4
      %v6810 = vrot.slane %v6311, 5
      %v6811 = vsel %vm1426, %v6809, %v6810
      %v6812 = vrot.slane %v6712, 5
      %v6813 = vrot.slane %v6812, 4
      %v6814 = vrot.slane %v6287, 5
      %v6815 = vsel %vm1426, %v6813, %v6814
      %v6816 = vrot.slane %v6814, 4
      %v6817 = vrot.slane %v6312, 5
      %v6818 = vsel %vm1426, %v6816, %v6817
      %v6819 = vrot.slane %v6713, 5
      %v6820 = vrot.slane %v6819, 4
      %v6821 = vrot.slane %v6289, 5
      %v6822 = vsel %vm1426, %v6820, %v6821
      %v6823 = vrot.slane %v6821, 4
      %v6824 = vrot.slane %v6313, 5
      %v6825 = vsel %vm1426, %v6823, %v6824
      %v6826 = vrot.slane %v6714, 5
      %v6827 = vrot.slane %v6826, 4
      %v6828 = vrot.slane %v6291, 5
      %v6829 = vsel %vm1426, %v6827, %v6828
      %v6830 = vrot.slane %v6828, 4
      %v6831 = vrot.slane %v6314, 5
      %v6832 = vsel %vm1426, %v6830, %v6831
      %v6833 = vrot.slane %v6715, 5
      %v6834 = vrot.slane %v6833, 4
      %v6835 = vrot.slane %v6293, 5
      %v6836 = vsel %vm1426, %v6834, %v6835
      %v6837 = vrot.slane %v6835, 4
      %v6838 = vrot.slane %v6315, 5
      %v6839 = vsel %vm1426, %v6837, %v6838
      %v6840 = vrot.slane %v6716, 5
      %v6841 = vrot.slane %v6840, 4
      %v6842 = vrot.slane %v6295, 5
      %v6843 = vsel %vm1426, %v6841, %v6842
      %v6844 = vrot.slane %v6842, 4
      %v6845 = vrot.slane %v6316, 5
      %v6846 = vsel %vm1426, %v6844, %v6845
      %v6847 = vrot.slane %v6717, 5
      %v6848 = vrot.slane %v6847, 4
      %v6849 = vrot.slane %v6297, 5
      %v6850 = vsel %vm1426, %v6848, %v6849
      %v6851 = vrot.slane %v6849, 4
      %v6852 = vrot.slane %v6317, 5
      %v6853 = vsel %vm1426, %v6851, %v6852
      %v6854 = vrot.slane %v6718, 5
      %v6855 = vrot.slane %v6854, 4
      %v6856 = vrot.slane %v6299, 5
      %v6857 = vsel %vm1426, %v6855, %v6856
      %v6858 = vrot.slane %v6856, 4
      %v6859 = vrot.slane %v6318, 5
      %v6860 = vsel %vm1426, %v6858, %v6859
      %v6861 = vrot.slane %v6719, 5
      %v6862 = vrot.slane %v6861, 4
      %v6863 = vrot.slane %v6301, 5
      %v6864 = vsel %vm1426, %v6862, %v6863
      %v6865 = vrot.slane %v6863, 4
      %v6866 = vrot.slane %v6319, 5
      %v6867 = vsel %vm1426, %v6865, %v6866
      %v6868 = vrot.slane %v6720, 5
      %v6869 = vrot.slane %v6868, 4
      %v6870 = vrot.slane %v6303, 5
      %v6871 = vsel %vm1426, %v6869, %v6870
      %v6872 = vrot.slane %v6870, 4
      %v6873 = vrot.slane %v6320, 5
      %v6874 = vsel %vm1426, %v6872, %v6873
      %v6875 = vrot.slane %v6721, 5
      %v6876 = vrot.slane %v6875, 4
      %v6877 = vrot.slane %v6305, 5
      %v6878 = vsel %vm1426, %v6876, %v6877
      %v6879 = vrot.slane %v6877, 4
      %v6880 = vrot.slane %v6321, 5
      %v6881 = vsel %vm1426, %v6879, %v6880
      %v6898 = vunpack.c.l.b16 %v6274
      %v6899 = vunpack.c.l.b16 %v6275
      %v6900 = vunpack.c.l.b16 %v6276
      %v6901 = vunpack.c.l.b16 %v6277
      %v6902 = vunpack.c.l.b16 %v6278
      %v6903 = vunpack.c.l.b16 %v6279
      %v6904 = vunpack.c.l.b16 %v6280
      %v6905 = vunpack.c.l.b16 %v6281
      %v6906 = vunpack.c.l.b16 %v6282
      %v6907 = vunpack.c.l.b16 %v6283
      %v6908 = vunpack.c.l.b16 %v6284
      %v6909 = vunpack.c.l.b16 %v6285
      %v6910 = vunpack.c.l.b16 %v6286
      %v6911 = vunpack.c.l.b16 %v6287
      %v6912 = vunpack.c.l.b16 %v6288
      %v6913 = vunpack.c.l.b16 %v6289
      %v6914 = vunpack.c.l.b16 %v6290
      %v6915 = vunpack.c.l.b16 %v6291
      %v6916 = vunpack.c.l.b16 %v6292
      %v6917 = vunpack.c.l.b16 %v6293
      %v6918 = vunpack.c.l.b16 %v6294
      %v6919 = vunpack.c.l.b16 %v6295
      %v6920 = vunpack.c.l.b16 %v6296
      %v6921 = vunpack.c.l.b16 %v6297
      %v6922 = vunpack.c.l.b16 %v6298
      %v6923 = vunpack.c.l.b16 %v6299
      %v6924 = vunpack.c.l.b16 %v6300
      %v6925 = vunpack.c.l.b16 %v6301
      %v6926 = vunpack.c.l.b16 %v6302
      %v6927 = vunpack.c.l.b16 %v6303
      %v6928 = vunpack.c.l.b16 %v6304
      %v6929 = vunpack.c.l.b16 %v6305
      %v6930 = vpack.c.b16 %v6899, %v6898
      %v6931 = vpack.c.b16 %v6901, %v6900
      %v6932 = vpack.c.b16 %v6903, %v6902
      %v6933 = vpack.c.b16 %v6905, %v6904
      %v6934 = vpack.c.b16 %v6907, %v6906
      %v6935 = vpack.c.b16 %v6909, %v6908
      %v6936 = vpack.c.b16 %v6911, %v6910
      %v6937 = vpack.c.b16 %v6913, %v6912
      %v6938 = vpack.c.b16 %v6915, %v6914
      %v6939 = vpack.c.b16 %v6917, %v6916
      %v6940 = vpack.c.b16 %v6919, %v6918
      %v6941 = vpack.c.b16 %v6921, %v6920
      %v6942 = vpack.c.b16 %v6923, %v6922
      %v6943 = vpack.c.b16 %v6925, %v6924
      %v6944 = vpack.c.b16 %v6927, %v6926
      %v6945 = vpack.c.b16 %v6929, %v6928
      %v6946 = vunpack.c.l.b16 %v6335
      %v6947 = vunpack.c.l.b16 %v6345
      %v6948 = vunpack.c.l.b16 %v6359
      %v6949 = vunpack.c.l.b16 %v6369
      %v6950 = vunpack.c.l.b16 %v6383
      %v6951 = vunpack.c.l.b16 %v6393
      %v6952 = vunpack.c.l.b16 %v6407
      %v6953 = vunpack.c.l.b16 %v6417
      %v6954 = vunpack.c.l.b16 %v6431
      %v6955 = vunpack.c.l.b16 %v6441
      %v6956 = vunpack.c.l.b16 %v6455
      %v6957 = vunpack.c.l.b16 %v6465
      %v6958 = vunpack.c.l.b16 %v6479
      %v6959 = vunpack.c.l.b16 %v6489
      %v6960 = vunpack.c.l.b16 %v6503
      %v6961 = vunpack.c.l.b16 %v6513
      %v6962 = vunpack.c.l.b16 %v6527
      %v6963 = vunpack.c.l.b16 %v6537
      %v6964 = vunpack.c.l.b16 %v6551
      %v6965 = vunpack.c.l.b16 %v6561
      %v6966 = vunpack.c.l.b16 %v6575
      %v6967 = vunpack.c.l.b16 %v6585
      %v6968 = vunpack.c.l.b16 %v6599
      %v6969 = vunpack.c.l.b16 %v6609
      %v6970 = vunpack.c.l.b16 %v6623
      %v6971 = vunpack.c.l.b16 %v6633
      %v6972 = vunpack.c.l.b16 %v6647
      %v6973 = vunpack.c.l.b16 %v6657
      %v6974 = vunpack.c.l.b16 %v6671
      %v6975 = vunpack.c.l.b16 %v6681
      %v6976 = vunpack.c.l.b16 %v6695
      %v6977 = vunpack.c.l.b16 %v6705
      %v6978 = vpack.c.b16 %v6947, %v6946
      %v6979 = vpack.c.b16 %v6949, %v6948
      %v6980 = vpack.c.b16 %v6951, %v6950
      %v6981 = vpack.c.b16 %v6953, %v6952
      %v6982 = vpack.c.b16 %v6955, %v6954
      %v6983 = vpack.c.b16 %v6957, %v6956
      %v6984 = vpack.c.b16 %v6959, %v6958
      %v6985 = vpack.c.b16 %v6961, %v6960
      %v6986 = vpack.c.b16 %v6963, %v6962
      %v6987 = vpack.c.b16 %v6965, %v6964
      %v6988 = vpack.c.b16 %v6967, %v6966
      %v6989 = vpack.c.b16 %v6969, %v6968
      %v6990 = vpack.c.b16 %v6971, %v6970
      %v6991 = vpack.c.b16 %v6973, %v6972
      %v6992 = vpack.c.b16 %v6975, %v6974
      %v6993 = vpack.c.b16 %v6977, %v6976
      %6994 = vrot.lane.b32.xlu0 %v6978, 4
      %v6995 = vpop.permute.xlu0 %6994
      %6996 = vrot.lane.b32.xlu0 %v6979, 4
      %v6997 = vpop.permute.xlu0 %6996
      %6998 = vrot.lane.b32.xlu0 %v6980, 4
      %v6999 = vpop.permute.xlu0 %6998
      %7000 = vrot.lane.b32.xlu0 %v6981, 4
      %v7001 = vpop.permute.xlu0 %7000
      %7002 = vrot.lane.b32.xlu0 %v6982, 4
      %v7003 = vpop.permute.xlu0 %7002
      %7004 = vrot.lane.b32.xlu0 %v6983, 4
      %v7005 = vpop.permute.xlu0 %7004
      %7006 = vrot.lane.b32.xlu0 %v6984, 4
      %v7007 = vpop.permute.xlu0 %7006
      %7008 = vrot.lane.b32.xlu0 %v6985, 4
      %v7009 = vpop.permute.xlu0 %7008
      %7010 = vrot.lane.b32.xlu0 %v6986, 4
      %v7011 = vpop.permute.xlu0 %7010
      %7012 = vrot.lane.b32.xlu0 %v6987, 4
      %v7013 = vpop.permute.xlu0 %7012
      %7014 = vrot.lane.b32.xlu0 %v6988, 4
      %v7015 = vpop.permute.xlu0 %7014
      %7016 = vrot.lane.b32.xlu0 %v6989, 4
      %v7017 = vpop.permute.xlu0 %7016
      %7018 = vrot.lane.b32.xlu0 %v6990, 4
      %v7019 = vpop.permute.xlu0 %7018
      %7020 = vrot.lane.b32.xlu0 %v6991, 4
      %v7021 = vpop.permute.xlu0 %7020
      %7022 = vrot.lane.b32.xlu0 %v6992, 4
      %v7023 = vpop.permute.xlu0 %7022
      %7024 = vrot.lane.b32.xlu0 %v6993, 4
      %v7025 = vpop.permute.xlu0 %7024
      %v7026 = vunpack.c.l.b16 %v6773
      %v7027 = vunpack.c.l.b16 %v6776
      %v7028 = vunpack.c.l.b16 %v6780
      %v7029 = vunpack.c.l.b16 %v6783
      %v7030 = vunpack.c.l.b16 %v6787
      %v7031 = vunpack.c.l.b16 %v6790
      %v7032 = vunpack.c.l.b16 %v6794
      %v7033 = vunpack.c.l.b16 %v6797
      %v7034 = vunpack.c.l.b16 %v6801
      %v7035 = vunpack.c.l.b16 %v6804
      %v7036 = vunpack.c.l.b16 %v6808
      %v7037 = vunpack.c.l.b16 %v6811
      %v7038 = vunpack.c.l.b16 %v6815
      %v7039 = vunpack.c.l.b16 %v6818
      %v7040 = vunpack.c.l.b16 %v6822
      %v7041 = vunpack.c.l.b16 %v6825
      %v7042 = vunpack.c.l.b16 %v6829
      %v7043 = vunpack.c.l.b16 %v6832
      %v7044 = vunpack.c.l.b16 %v6836
      %v7045 = vunpack.c.l.b16 %v6839
      %v7046 = vunpack.c.l.b16 %v6843
      %v7047 = vunpack.c.l.b16 %v6846
      %v7048 = vunpack.c.l.b16 %v6850
      %v7049 = vunpack.c.l.b16 %v6853
      %v7050 = vunpack.c.l.b16 %v6857
      %v7051 = vunpack.c.l.b16 %v6860
      %v7052 = vunpack.c.l.b16 %v6864
      %v7053 = vunpack.c.l.b16 %v6867
      %v7054 = vunpack.c.l.b16 %v6871
      %v7055 = vunpack.c.l.b16 %v6874
      %v7056 = vunpack.c.l.b16 %v6878
      %v7057 = vunpack.c.l.b16 %v6881
      %v7058 = vpack.c.b16 %v7027, %v7026
      %v7059 = vpack.c.b16 %v7029, %v7028
      %v7060 = vpack.c.b16 %v7031, %v7030
      %v7061 = vpack.c.b16 %v7033, %v7032
      %v7062 = vpack.c.b16 %v7035, %v7034
      %v7063 = vpack.c.b16 %v7037, %v7036
      %v7064 = vpack.c.b16 %v7039, %v7038
      %v7065 = vpack.c.b16 %v7041, %v7040
      %v7066 = vpack.c.b16 %v7043, %v7042
      %v7067 = vpack.c.b16 %v7045, %v7044
      %v7068 = vpack.c.b16 %v7047, %v7046
      %v7069 = vpack.c.b16 %v7049, %v7048
      %v7070 = vpack.c.b16 %v7051, %v7050
      %v7071 = vpack.c.b16 %v7053, %v7052
      %v7072 = vpack.c.b16 %v7055, %v7054
      %v7073 = vpack.c.b16 %v7057, %v7056
      %7074 = vrot.lane.b32.xlu0 %v7058, 8
      %v7075 = vpop.permute.xlu0 %7074
      %7076 = vrot.lane.b32.xlu0 %v7059, 8
      %v7077 = vpop.permute.xlu0 %7076
      %7078 = vrot.lane.b32.xlu0 %v7060, 8
      %v7079 = vpop.permute.xlu0 %7078
      %7080 = vrot.lane.b32.xlu0 %v7061, 8
      %v7081 = vpop.permute.xlu0 %7080
      %7082 = vrot.lane.b32.xlu0 %v7062, 8
      %v7083 = vpop.permute.xlu0 %7082
      %7084 = vrot.lane.b32.xlu0 %v7063, 8
      %v7085 = vpop.permute.xlu0 %7084
      %7086 = vrot.lane.b32.xlu0 %v7064, 8
      %v7087 = vpop.permute.xlu0 %7086
      %7088 = vrot.lane.b32.xlu0 %v7065, 8
      %v7089 = vpop.permute.xlu0 %7088
      %7090 = vrot.lane.b32.xlu0 %v7066, 8
      %v7091 = vpop.permute.xlu0 %7090
      %7092 = vrot.lane.b32.xlu0 %v7067, 8
      %v7093 = vpop.permute.xlu0 %7092
      %7094 = vrot.lane.b32.xlu0 %v7068, 8
      %v7095 = vpop.permute.xlu0 %7094
      %7096 = vrot.lane.b32.xlu0 %v7069, 8
      %v7097 = vpop.permute.xlu0 %7096
      %7098 = vrot.lane.b32.xlu0 %v7070, 8
      %v7099 = vpop.permute.xlu0 %7098
      %7100 = vrot.lane.b32.xlu0 %v7071, 8
      %v7101 = vpop.permute.xlu0 %7100
      %7102 = vrot.lane.b32.xlu0 %v7072, 8
      %v7103 = vpop.permute.xlu0 %7102
      %7104 = vrot.lane.b32.xlu0 %v7073, 8
      %v7105 = vpop.permute.xlu0 %7104
      %v7108 = vsel %vm1763, %v6930, %v6995
      %v7111 = vsel %vm1763, %v6931, %v6997
      %v7114 = vsel %vm1763, %v6932, %v6999
      %v7117 = vsel %vm1763, %v6933, %v7001
      %v7120 = vsel %vm1763, %v6934, %v7003
      %v7123 = vsel %vm1763, %v6935, %v7005
      %v7126 = vsel %vm1763, %v6936, %v7007
      %v7129 = vsel %vm1763, %v6937, %v7009
      %v7132 = vsel %vm1763, %v6938, %v7011
      %v7135 = vsel %vm1763, %v6939, %v7013
      %v7138 = vsel %vm1763, %v6940, %v7015
      %v7141 = vsel %vm1763, %v6941, %v7017
      %v7144 = vsel %vm1763, %v6942, %v7019
      %v7147 = vsel %vm1763, %v6943, %v7021
      %v7150 = vsel %vm1763, %v6944, %v7023
      %v7153 = vsel %vm1763, %v6945, %v7025
      %v7155 = vsel %vm1812, %v7108, %v7075
      %v7157 = vsel %vm1812, %v7111, %v7077
      %v7159 = vsel %vm1812, %v7114, %v7079
      %v7161 = vsel %vm1812, %v7117, %v7081
      %v7163 = vsel %vm1812, %v7120, %v7083
      %v7165 = vsel %vm1812, %v7123, %v7085
      %v7167 = vsel %vm1812, %v7126, %v7087
      %v7169 = vsel %vm1812, %v7129, %v7089
      %v7171 = vsel %vm1812, %v7132, %v7091
      %v7173 = vsel %vm1812, %v7135, %v7093
      %v7175 = vsel %vm1812, %v7138, %v7095
      %v7177 = vsel %vm1812, %v7141, %v7097
      %v7179 = vsel %vm1812, %v7144, %v7099
      %v7181 = vsel %vm1812, %v7147, %v7101
      %v7183 = vsel %vm1812, %v7150, %v7103
      %v7185 = vsel %vm1812, %v7153, %v7105
      %s7186 = scalar_lea.vmem %s2, 8
      %v7187 = vld [vmem:[%s7186] sm:$0xf]
      %v7188 = vld [vmem:[%s7186 + $0x4] sm:$0x3]
      %v7191 = vunpack.c.l.b16 %v7187
      %v7192 = vunpack.c.l.b16 %v7188
      %v7193 = vpack.c.b16 %v7192, %v7191
      %v7194 = vsel %vm2767, %v7155, 0
      %v7196 = vsel %vm2767, %v7157, 0
      %v7198 = vsel %vm2767, %v7159, 0
      %v7200 = vsel %vm2767, %v7161, 0
      %v7202 = vsel %vm2767, %v7163, 0
      %v7204 = vsel %vm2767, %v7165, 0
      %v7206 = vsel %vm2767, %v7167, 0
      %v7208 = vsel %vm2767, %v7169, 0
      %v7210 = vsel %vm2767, %v7171, 0
      %v7212 = vsel %vm2767, %v7173, 0
      %v7214 = vsel %vm2767, %v7175, 0
      %v7216 = vsel %vm2767, %v7177, 0
      %v7218 = vsel %vm2767, %v7179, 0
      %v7220 = vsel %vm2767, %v7181, 0
      %v7222 = vsel %vm2767, %v7183, 0
      %v7224 = vsel %vm2767, %v7185, 0
      %v7227 = vsel %vm2800, %v7193, 0
      %7229 = vmatprep.subr.bf16.mxu0 0
      %7230 = vmatpush1.bf16.msra.mxu0 0
      %7231 = vmatprep.subr.bf16.mxu0 0
      %7232 = vmatpush1.bf16.msra.mxu0 0
      %7233 = vmatprep.subr.bf16.mxu0 0
      %7234 = vmatpush1.bf16.msra.mxu0 0
      %7235 = vmatprep.subr.bf16.mxu0 0
      %7236 = vmatpush1.bf16.msra.mxu0 0
      %7237 = vmatprep.subr.bf16.mxu0 0
      %7238 = vmatpush1.bf16.msra.mxu0 0
      %7239 = vmatprep.subr.bf16.mxu0 0
      %7240 = vmatpush1.bf16.msra.mxu0 0
      %7241 = vmatprep.subr.bf16.mxu0 0
      %7242 = vmatpush1.bf16.msra.mxu0 0
      %7243 = vmatprep.subr.bf16.mxu0 0
      %7244 = vmatpush1.bf16.msra.mxu0 %v7227
      %7245 = vmatprep.subr.bf16.mxu0 0
      %7246 = vmatpush2.bf16.msra.mxu0 0
      %7247 = vmatprep.subr.bf16.mxu0 0
      %7248 = vmatpush2.bf16.msra.mxu0 0
      %7249 = vmatprep.subr.bf16.mxu0 0
      %7250 = vmatpush2.bf16.msra.mxu0 0
      %7251 = vmatprep.subr.bf16.mxu0 0
      %7252 = vmatpush2.bf16.msra.mxu0 0
      %7253 = vmatprep.subr.bf16.mxu0 0
      %7254 = vmatpush2.bf16.msra.mxu0 0
      %7255 = vmatprep.subr.bf16.mxu0 0
      %7256 = vmatpush2.bf16.msra.mxu0 0
      %7257 = vmatprep.subr.bf16.mxu0 0
      %7258 = vmatpush2.bf16.msra.mxu0 0
      %7259 = vmatprep.subr.bf16.mxu0 0
      %7260 = vmatpush2.bf16.msra.mxu0 0
      %7261 = vmatprep.mubr.bf16.mxu0 0
      %7262 = vmatmul.mubr.bf16.gmra.mxu0 %v7194
      %v7263 = vpop.f32.mrf.mxu0
      %v7264 = vadd.f32 0.0, %v7263
      %v7265 = vpop.f32.mrf.mxu0
      %v7266 = vpop.f32.mrf.mxu0
      %v7267 = vadd.f32 0.0, %v7266
      %v7268 = vpop.f32.mrf.mxu0
      %7269 = vmatprep.mubr.bf16.mxu0 0
      %7270 = vmatmul.mubr.bf16.gmra.mxu0 %v7196
      %v7271 = vpop.f32.mrf.mxu0
      %v7272 = vadd.f32 0.0, %v7271
      %v7273 = vpop.f32.mrf.mxu0
      %v7274 = vpop.f32.mrf.mxu0
      %v7275 = vadd.f32 0.0, %v7274
      %v7276 = vpop.f32.mrf.mxu0
      %7277 = vmatprep.mubr.bf16.mxu0 0
      %7278 = vmatmul.mubr.bf16.gmra.mxu0 %v7198
      %v7279 = vpop.f32.mrf.mxu0
      %v7280 = vadd.f32 0.0, %v7279
      %v7281 = vpop.f32.mrf.mxu0
      %v7282 = vpop.f32.mrf.mxu0
      %v7283 = vadd.f32 0.0, %v7282
      %v7284 = vpop.f32.mrf.mxu0
      %7285 = vmatprep.mubr.bf16.mxu0 0
      %7286 = vmatmul.mubr.bf16.gmra.mxu0 %v7200
      %v7287 = vpop.f32.mrf.mxu0
      %v7288 = vadd.f32 0.0, %v7287
      %v7289 = vpop.f32.mrf.mxu0
      %v7290 = vpop.f32.mrf.mxu0
      %v7291 = vadd.f32 0.0, %v7290
      %v7292 = vpop.f32.mrf.mxu0
      %7293 = vmatprep.mubr.bf16.mxu0 0
      %7294 = vmatmul.mubr.bf16.gmra.mxu0 %v7202
      %v7295 = vpop.f32.mrf.mxu0
      %v7296 = vadd.f32 0.0, %v7295
      %v7297 = vpop.f32.mrf.mxu0
      %v7298 = vpop.f32.mrf.mxu0
      %v7299 = vadd.f32 0.0, %v7298
      %v7300 = vpop.f32.mrf.mxu0
      %7301 = vmatprep.mubr.bf16.mxu0 0
      %7302 = vmatmul.mubr.bf16.gmra.mxu0 %v7204
      %v7303 = vpop.f32.mrf.mxu0
      %v7304 = vadd.f32 0.0, %v7303
      %v7305 = vpop.f32.mrf.mxu0
      %v7306 = vpop.f32.mrf.mxu0
      %v7307 = vadd.f32 0.0, %v7306
      %v7308 = vpop.f32.mrf.mxu0
      %7309 = vmatprep.mubr.bf16.mxu0 0
      %7310 = vmatmul.mubr.bf16.gmra.mxu0 %v7206
      %v7311 = vpop.f32.mrf.mxu0
      %v7312 = vadd.f32 0.0, %v7311
      %v7313 = vpop.f32.mrf.mxu0
      %v7314 = vpop.f32.mrf.mxu0
      %v7315 = vadd.f32 0.0, %v7314
      %v7316 = vpop.f32.mrf.mxu0
      %7317 = vmatprep.mubr.bf16.mxu0 0
      %7318 = vmatmul.mubr.bf16.gmra.mxu0 %v7208
      %v7319 = vpop.f32.mrf.mxu0
      %v7320 = vadd.f32 0.0, %v7319
      %v7321 = vpop.f32.mrf.mxu0
      %v7322 = vpop.f32.mrf.mxu0
      %v7323 = vadd.f32 0.0, %v7322
      %v7324 = vpop.f32.mrf.mxu0
      %7325 = vmatprep.mubr.bf16.mxu0 0
      %7326 = vmatmul.mubr.bf16.gmra.mxu0 %v7210
      %v7327 = vpop.f32.mrf.mxu0
      %v7328 = vadd.f32 0.0, %v7327
      %v7329 = vpop.f32.mrf.mxu0
      %v7330 = vpop.f32.mrf.mxu0
      %v7331 = vadd.f32 0.0, %v7330
      %v7332 = vpop.f32.mrf.mxu0
      %7333 = vmatprep.mubr.bf16.mxu0 0
      %7334 = vmatmul.mubr.bf16.gmra.mxu0 %v7212
      %v7335 = vpop.f32.mrf.mxu0
      %v7336 = vadd.f32 0.0, %v7335
      %v7337 = vpop.f32.mrf.mxu0
      %v7338 = vpop.f32.mrf.mxu0
      %v7339 = vadd.f32 0.0, %v7338
      %v7340 = vpop.f32.mrf.mxu0
      %7341 = vmatprep.mubr.bf16.mxu0 0
      %7342 = vmatmul.mubr.bf16.gmra.mxu0 %v7214
      %v7343 = vpop.f32.mrf.mxu0
      %v7344 = vadd.f32 0.0, %v7343
      %v7345 = vpop.f32.mrf.mxu0
      %v7346 = vpop.f32.mrf.mxu0
      %v7347 = vadd.f32 0.0, %v7346
      %v7348 = vpop.f32.mrf.mxu0
      %7349 = vmatprep.mubr.bf16.mxu0 0
      %7350 = vmatmul.mubr.bf16.gmra.mxu0 %v7216
      %v7351 = vpop.f32.mrf.mxu0
      %v7352 = vadd.f32 0.0, %v7351
      %v7353 = vpop.f32.mrf.mxu0
      %v7354 = vpop.f32.mrf.mxu0
      %v7355 = vadd.f32 0.0, %v7354
      %v7356 = vpop.f32.mrf.mxu0
      %7357 = vmatprep.mubr.bf16.mxu0 0
      %7358 = vmatmul.mubr.bf16.gmra.mxu0 %v7218
      %v7359 = vpop.f32.mrf.mxu0
      %v7360 = vadd.f32 0.0, %v7359
      %v7361 = vpop.f32.mrf.mxu0
      %v7362 = vpop.f32.mrf.mxu0
      %v7363 = vadd.f32 0.0, %v7362
      %v7364 = vpop.f32.mrf.mxu0
      %7365 = vmatprep.mubr.bf16.mxu0 0
      %7366 = vmatmul.mubr.bf16.gmra.mxu0 %v7220
      %v7367 = vpop.f32.mrf.mxu0
      %v7368 = vadd.f32 0.0, %v7367
      %v7369 = vpop.f32.mrf.mxu0
      %v7370 = vpop.f32.mrf.mxu0
      %v7371 = vadd.f32 0.0, %v7370
      %v7372 = vpop.f32.mrf.mxu0
      %7373 = vmatprep.mubr.bf16.mxu0 0
      %7374 = vmatmul.mubr.bf16.gmra.mxu0 %v7222
      %v7375 = vpop.f32.mrf.mxu0
      %v7376 = vadd.f32 0.0, %v7375
      %v7377 = vpop.f32.mrf.mxu0
      %v7378 = vpop.f32.mrf.mxu0
      %v7379 = vadd.f32 0.0, %v7378
      %v7380 = vpop.f32.mrf.mxu0
      %7381 = vmatprep.mubr.bf16.mxu0 0
      %7382 = vmatmul.mubr.bf16.gmra.mxu0 %v7224
      %v7383 = vpop.f32.mrf.mxu0
      %v7384 = vadd.f32 0.0, %v7383
      %v7385 = vpop.f32.mrf.mxu0
      %v7386 = vpop.f32.mrf.mxu0
      %v7387 = vadd.f32 0.0, %v7386
      %v7388 = vpop.f32.mrf.mxu0
      %7389 = vdwg.mxu0
      %v7392 = vunpack.c.l.b16 %v6272
      %v7393 = vunpack.c.l.b16 %v6273
      %v7394 = vpack.c.b16 %v7393, %v7392
      %v7395 = vsel %vm2767, %v6241, 0
      %v7397 = vsel %vm2767, %v6243, 0
      %v7399 = vsel %vm2767, %v6245, 0
      %v7401 = vsel %vm2767, %v6247, 0
      %v7403 = vsel %vm2767, %v6249, 0
      %v7405 = vsel %vm2767, %v6251, 0
      %v7407 = vsel %vm2767, %v6253, 0
      %v7409 = vsel %vm2767, %v6255, 0
      %v7411 = vsel %vm2767, %v6257, 0
      %v7413 = vsel %vm2767, %v6259, 0
      %v7415 = vsel %vm2767, %v6261, 0
      %v7417 = vsel %vm2767, %v6263, 0
      %v7419 = vsel %vm2767, %v6265, 0
      %v7421 = vsel %vm2767, %v6267, 0
      %v7423 = vsel %vm2767, %v6269, 0
      %v7425 = vsel %vm2767, %v6271, 0
      %v7428 = vsel %vm2800, %v7394, 0
      %7430 = vmatprep.subr.bf16.mxu0 0
      %7431 = vmatpush1.bf16.msra.mxu0 0
      %7432 = vmatprep.subr.bf16.mxu0 0
      %7433 = vmatpush1.bf16.msra.mxu0 0
      %7434 = vmatprep.subr.bf16.mxu0 0
      %7435 = vmatpush1.bf16.msra.mxu0 0
      %7436 = vmatprep.subr.bf16.mxu0 0
      %7437 = vmatpush1.bf16.msra.mxu0 0
      %7438 = vmatprep.subr.bf16.mxu0 0
      %7439 = vmatpush1.bf16.msra.mxu0 0
      %7440 = vmatprep.subr.bf16.mxu0 0
      %7441 = vmatpush1.bf16.msra.mxu0 0
      %7442 = vmatprep.subr.bf16.mxu0 0
      %7443 = vmatpush1.bf16.msra.mxu0 0
      %7444 = vmatprep.subr.bf16.mxu0 0
      %7445 = vmatpush1.bf16.msra.mxu0 %v7428
      %7446 = vmatprep.subr.bf16.mxu0 0
      %7447 = vmatpush2.bf16.msra.mxu0 0
      %7448 = vmatprep.subr.bf16.mxu0 0
      %7449 = vmatpush2.bf16.msra.mxu0 0
      %7450 = vmatprep.subr.bf16.mxu0 0
      %7451 = vmatpush2.bf16.msra.mxu0 0
      %7452 = vmatprep.subr.bf16.mxu0 0
      %7453 = vmatpush2.bf16.msra.mxu0 0
      %7454 = vmatprep.subr.bf16.mxu0 0
      %7455 = vmatpush2.bf16.msra.mxu0 0
      %7456 = vmatprep.subr.bf16.mxu0 0
      %7457 = vmatpush2.bf16.msra.mxu0 0
      %7458 = vmatprep.subr.bf16.mxu0 0
      %7459 = vmatpush2.bf16.msra.mxu0 0
      %7460 = vmatprep.subr.bf16.mxu0 0
      %7461 = vmatpush2.bf16.msra.mxu0 0
      %7462 = vmatprep.mubr.bf16.mxu0 0
      %7463 = vmatmul.mubr.bf16.gmra.mxu0 %v7395
      %v7464 = vpop.f32.mrf.mxu0
      %v7465 = vadd.f32 %v7264, %v7464
      %v7466 = vpop.f32.mrf.mxu0
      %v7467 = vpop.f32.mrf.mxu0
      %v7468 = vadd.f32 %v7267, %v7467
      %v7469 = vpop.f32.mrf.mxu0
      %7470 = vmatprep.mubr.bf16.mxu0 0
      %7471 = vmatmul.mubr.bf16.gmra.mxu0 %v7397
      %v7472 = vpop.f32.mrf.mxu0
      %v7473 = vadd.f32 %v7272, %v7472
      %v7474 = vpop.f32.mrf.mxu0
      %v7475 = vpop.f32.mrf.mxu0
      %v7476 = vadd.f32 %v7275, %v7475
      %v7477 = vpop.f32.mrf.mxu0
      %7478 = vmatprep.mubr.bf16.mxu0 0
      %7479 = vmatmul.mubr.bf16.gmra.mxu0 %v7399
      %v7480 = vpop.f32.mrf.mxu0
      %v7481 = vadd.f32 %v7280, %v7480
      %v7482 = vpop.f32.mrf.mxu0
      %v7483 = vpop.f32.mrf.mxu0
      %v7484 = vadd.f32 %v7283, %v7483
      %v7485 = vpop.f32.mrf.mxu0
      %7486 = vmatprep.mubr.bf16.mxu0 0
      %7487 = vmatmul.mubr.bf16.gmra.mxu0 %v7401
      %v7488 = vpop.f32.mrf.mxu0
      %v7489 = vadd.f32 %v7288, %v7488
      %v7490 = vpop.f32.mrf.mxu0
      %v7491 = vpop.f32.mrf.mxu0
      %v7492 = vadd.f32 %v7291, %v7491
      %v7493 = vpop.f32.mrf.mxu0
      %7494 = vmatprep.mubr.bf16.mxu0 0
      %7495 = vmatmul.mubr.bf16.gmra.mxu0 %v7403
      %v7496 = vpop.f32.mrf.mxu0
      %v7497 = vadd.f32 %v7296, %v7496
      %v7498 = vpop.f32.mrf.mxu0
      %v7499 = vpop.f32.mrf.mxu0
      %v7500 = vadd.f32 %v7299, %v7499
      %v7501 = vpop.f32.mrf.mxu0
      %7502 = vmatprep.mubr.bf16.mxu0 0
      %7503 = vmatmul.mubr.bf16.gmra.mxu0 %v7405
      %v7504 = vpop.f32.mrf.mxu0
      %v7505 = vadd.f32 %v7304, %v7504
      %v7506 = vpop.f32.mrf.mxu0
      %v7507 = vpop.f32.mrf.mxu0
      %v7508 = vadd.f32 %v7307, %v7507
      %v7509 = vpop.f32.mrf.mxu0
      %7510 = vmatprep.mubr.bf16.mxu0 0
      %7511 = vmatmul.mubr.bf16.gmra.mxu0 %v7407
      %v7512 = vpop.f32.mrf.mxu0
      %v7513 = vadd.f32 %v7312, %v7512
      %v7514 = vpop.f32.mrf.mxu0
      %v7515 = vpop.f32.mrf.mxu0
      %v7516 = vadd.f32 %v7315, %v7515
      %v7517 = vpop.f32.mrf.mxu0
      %7518 = vmatprep.mubr.bf16.mxu0 0
      %7519 = vmatmul.mubr.bf16.gmra.mxu0 %v7409
      %v7520 = vpop.f32.mrf.mxu0
      %v7521 = vadd.f32 %v7320, %v7520
      %v7522 = vpop.f32.mrf.mxu0
      %v7523 = vpop.f32.mrf.mxu0
      %v7524 = vadd.f32 %v7323, %v7523
      %v7525 = vpop.f32.mrf.mxu0
      %7526 = vmatprep.mubr.bf16.mxu0 0
      %7527 = vmatmul.mubr.bf16.gmra.mxu0 %v7411
      %v7528 = vpop.f32.mrf.mxu0
      %v7529 = vadd.f32 %v7328, %v7528
      %v7530 = vpop.f32.mrf.mxu0
      %v7531 = vpop.f32.mrf.mxu0
      %v7532 = vadd.f32 %v7331, %v7531
      %v7533 = vpop.f32.mrf.mxu0
      %7534 = vmatprep.mubr.bf16.mxu0 0
      %7535 = vmatmul.mubr.bf16.gmra.mxu0 %v7413
      %v7536 = vpop.f32.mrf.mxu0
      %v7537 = vadd.f32 %v7336, %v7536
      %v7538 = vpop.f32.mrf.mxu0
      %v7539 = vpop.f32.mrf.mxu0
      %v7540 = vadd.f32 %v7339, %v7539
      %v7541 = vpop.f32.mrf.mxu0
      %7542 = vmatprep.mubr.bf16.mxu0 0
      %7543 = vmatmul.mubr.bf16.gmra.mxu0 %v7415
      %v7544 = vpop.f32.mrf.mxu0
      %v7545 = vadd.f32 %v7344, %v7544
      %v7546 = vpop.f32.mrf.mxu0
      %v7547 = vpop.f32.mrf.mxu0
      %v7548 = vadd.f32 %v7347, %v7547
      %v7549 = vpop.f32.mrf.mxu0
      %7550 = vmatprep.mubr.bf16.mxu0 0
      %7551 = vmatmul.mubr.bf16.gmra.mxu0 %v7417
      %v7552 = vpop.f32.mrf.mxu0
      %v7553 = vadd.f32 %v7352, %v7552
      %v7554 = vpop.f32.mrf.mxu0
      %v7555 = vpop.f32.mrf.mxu0
      %v7556 = vadd.f32 %v7355, %v7555
      %v7557 = vpop.f32.mrf.mxu0
      %7558 = vmatprep.mubr.bf16.mxu0 0
      %7559 = vmatmul.mubr.bf16.gmra.mxu0 %v7419
      %v7560 = vpop.f32.mrf.mxu0
      %v7561 = vadd.f32 %v7360, %v7560
      %v7562 = vpop.f32.mrf.mxu0
      %v7563 = vpop.f32.mrf.mxu0
      %v7564 = vadd.f32 %v7363, %v7563
      %v7565 = vpop.f32.mrf.mxu0
      %7566 = vmatprep.mubr.bf16.mxu0 0
      %7567 = vmatmul.mubr.bf16.gmra.mxu0 %v7421
      %v7568 = vpop.f32.mrf.mxu0
      %v7569 = vadd.f32 %v7368, %v7568
      %v7570 = vpop.f32.mrf.mxu0
      %v7571 = vpop.f32.mrf.mxu0
      %v7572 = vadd.f32 %v7371, %v7571
      %v7573 = vpop.f32.mrf.mxu0
      %7574 = vmatprep.mubr.bf16.mxu0 0
      %7575 = vmatmul.mubr.bf16.gmra.mxu0 %v7423
      %v7576 = vpop.f32.mrf.mxu0
      %v7577 = vadd.f32 %v7376, %v7576
      %v7578 = vpop.f32.mrf.mxu0
      %v7579 = vpop.f32.mrf.mxu0
      %v7580 = vadd.f32 %v7379, %v7579
      %v7581 = vpop.f32.mrf.mxu0
      %7582 = vmatprep.mubr.bf16.mxu0 0
      %7583 = vmatmul.mubr.bf16.gmra.mxu0 %v7425
      %v7584 = vpop.f32.mrf.mxu0
      %v7585 = vadd.f32 %v7384, %v7584
      %v7586 = vpop.f32.mrf.mxu0
      %v7587 = vpop.f32.mrf.mxu0
      %v7588 = vadd.f32 %v7387, %v7587
      %v7589 = vpop.f32.mrf.mxu0
      %7590 = vdwg.mxu0
      %v7591 = vld [vmem:[%s3166] sm:$0xf]
      %v7592 = vld [vmem:[%s3166 + $0x4] sm:$0xf]
      %v7593 = vld [vmem:[%s3166 + $0xc] sm:$0xf]
      %v7594 = vld [vmem:[%s3166 + $0x10] sm:$0xf]
      %v7595 = vld [vmem:[%s3166 + $0x18] sm:$0xf]
      %v7596 = vld [vmem:[%s3166 + $0x1c] sm:$0xf]
      %v7597 = vld [vmem:[%s3166 + $0x24] sm:$0xf]
      %v7598 = vld [vmem:[%s3166 + $0x28] sm:$0xf]
      %v7599 = vld [vmem:[%s3166 + $0x30] sm:$0xf]
      %v7600 = vld [vmem:[%s3166 + $0x34] sm:$0xf]
      %v7601 = vld [vmem:[%s3166 + $0x3c] sm:$0xf]
      %v7602 = vld [vmem:[%s3166 + $0x40] sm:$0xf]
      %v7603 = vld [vmem:[%s3166 + $0x48] sm:$0xf]
      %v7604 = vld [vmem:[%s3166 + $0x4c] sm:$0xf]
      %v7605 = vld [vmem:[%s3166 + $0x54] sm:$0xf]
      %v7606 = vld [vmem:[%s3166 + $0x58] sm:$0xf]
      %v7607 = vld [vmem:[%s3166 + $0x60] sm:$0xf]
      %v7608 = vld [vmem:[%s3166 + $0x64] sm:$0xf]
      %v7609 = vld [vmem:[%s3166 + $0x6c] sm:$0xf]
      %v7610 = vld [vmem:[%s3166 + $0x70] sm:$0xf]
      %v7611 = vld [vmem:[%s3166 + $0x78] sm:$0xf]
      %v7612 = vld [vmem:[%s3166 + $0x7c] sm:$0xf]
      %v7613 = vld [vmem:[%s3166 + $0x84] sm:$0xf]
      %v7614 = vld [vmem:[%s3166 + $0x88] sm:$0xf]
      %v7615 = vld [vmem:[%s3166 + $0x90] sm:$0xf]
      %v7616 = vld [vmem:[%s3166 + $0x94] sm:$0xf]
      %v7617 = vld [vmem:[%s3166 + $0x9c] sm:$0xf]
      %v7618 = vld [vmem:[%s3166 + $0xa0] sm:$0xf]
      %v7619 = vld [vmem:[%s3166 + $0xa8] sm:$0xf]
      %v7620 = vld [vmem:[%s3166 + $0xac] sm:$0xf]
      %v7621 = vld [vmem:[%s3166 + $0xb4] sm:$0xf]
      %v7622 = vld [vmem:[%s3166 + $0xb8] sm:$0xf]
      %v7623 = vld [vmem:[%s3166 + $0x8] sm:$0x1]
      %v7624 = vld [vmem:[%s3166 + $0x14] sm:$0x1]
      %v7625 = vld [vmem:[%s3166 + $0x20] sm:$0x1]
      %v7626 = vld [vmem:[%s3166 + $0x2c] sm:$0x1]
      %v7627 = vld [vmem:[%s3166 + $0x38] sm:$0x1]
      %v7628 = vld [vmem:[%s3166 + $0x44] sm:$0x1]
      %v7629 = vld [vmem:[%s3166 + $0x50] sm:$0x1]
      %v7630 = vld [vmem:[%s3166 + $0x5c] sm:$0x1]
      %v7631 = vld [vmem:[%s3166 + $0x68] sm:$0x1]
      %v7632 = vld [vmem:[%s3166 + $0x74] sm:$0x1]
      %v7633 = vld [vmem:[%s3166 + $0x80] sm:$0x1]
      %v7634 = vld [vmem:[%s3166 + $0x8c] sm:$0x1]
      %v7635 = vld [vmem:[%s3166 + $0x98] sm:$0x1]
      %v7636 = vld [vmem:[%s3166 + $0xa4] sm:$0x1]
      %v7637 = vld [vmem:[%s3166 + $0xb0] sm:$0x1]
      %v7638 = vld [vmem:[%s3166 + $0xbc] sm:$0x1]
      %v7640 = vshrl.u32 %v7591, 16
      %v7642 = vrot.slane %v7640, 4
      %v7643 = vshll.u32 %v7591, 16
      %v7645 = vrot.slane %v7643, 5
      %v7646 = vor.u32 %v7642, %v7645
      %v7647 = vrot.slane %v7646, 4
      %v7649 = vshll.u32 %v7592, 16
      %v7651 = vrot.slane %v7649, 5
      %v7652 = vsel %vm975, %v7647, %v7651
      %v7653 = vshrl.u32 %v7592, 16
      %v7655 = vrot.slane %v7653, 4
      %v7656 = vor.u32 %v7655, %v7651
      %v7657 = vrot.slane %v7656, 4
      %v7659 = vshll.u32 %v7623, 16
      %v7661 = vrot.slane %v7659, 5
      %v7662 = vsel %vm975, %v7657, %v7661
      %v7664 = vshrl.u32 %v7593, 16
      %v7666 = vrot.slane %v7664, 4
      %v7667 = vshll.u32 %v7593, 16
      %v7669 = vrot.slane %v7667, 5
      %v7670 = vor.u32 %v7666, %v7669
      %v7671 = vrot.slane %v7670, 4
      %v7673 = vshll.u32 %v7594, 16
      %v7675 = vrot.slane %v7673, 5
      %v7676 = vsel %vm975, %v7671, %v7675
      %v7677 = vshrl.u32 %v7594, 16
      %v7679 = vrot.slane %v7677, 4
      %v7680 = vor.u32 %v7679, %v7675
      %v7681 = vrot.slane %v7680, 4
      %v7683 = vshll.u32 %v7624, 16
      %v7685 = vrot.slane %v7683, 5
      %v7686 = vsel %vm975, %v7681, %v7685
      %v7688 = vshrl.u32 %v7595, 16
      %v7690 = vrot.slane %v7688, 4
      %v7691 = vshll.u32 %v7595, 16
      %v7693 = vrot.slane %v7691, 5
      %v7694 = vor.u32 %v7690, %v7693
      %v7695 = vrot.slane %v7694, 4
      %v7697 = vshll.u32 %v7596, 16
      %v7699 = vrot.slane %v7697, 5
      %v7700 = vsel %vm975, %v7695, %v7699
      %v7701 = vshrl.u32 %v7596, 16
      %v7703 = vrot.slane %v7701, 4
      %v7704 = vor.u32 %v7703, %v7699
      %v7705 = vrot.slane %v7704, 4
      %v7707 = vshll.u32 %v7625, 16
      %v7709 = vrot.slane %v7707, 5
      %v7710 = vsel %vm975, %v7705, %v7709
      %v7712 = vshrl.u32 %v7597, 16
      %v7714 = vrot.slane %v7712, 4
      %v7715 = vshll.u32 %v7597, 16
      %v7717 = vrot.slane %v7715, 5
      %v7718 = vor.u32 %v7714, %v7717
      %v7719 = vrot.slane %v7718, 4
      %v7721 = vshll.u32 %v7598, 16
      %v7723 = vrot.slane %v7721, 5
      %v7724 = vsel %vm975, %v7719, %v7723
      %v7725 = vshrl.u32 %v7598, 16
      %v7727 = vrot.slane %v7725, 4
      %v7728 = vor.u32 %v7727, %v7723
      %v7729 = vrot.slane %v7728, 4
      %v7731 = vshll.u32 %v7626, 16
      %v7733 = vrot.slane %v7731, 5
      %v7734 = vsel %vm975, %v7729, %v7733
      %v7736 = vshrl.u32 %v7599, 16
      %v7738 = vrot.slane %v7736, 4
      %v7739 = vshll.u32 %v7599, 16
      %v7741 = vrot.slane %v7739, 5
      %v7742 = vor.u32 %v7738, %v7741
      %v7743 = vrot.slane %v7742, 4
      %v7745 = vshll.u32 %v7600, 16
      %v7747 = vrot.slane %v7745, 5
      %v7748 = vsel %vm975, %v7743, %v7747
      %v7749 = vshrl.u32 %v7600, 16
      %v7751 = vrot.slane %v7749, 4
      %v7752 = vor.u32 %v7751, %v7747
      %v7753 = vrot.slane %v7752, 4
      %v7755 = vshll.u32 %v7627, 16
      %v7757 = vrot.slane %v7755, 5
      %v7758 = vsel %vm975, %v7753, %v7757
      %v7760 = vshrl.u32 %v7601, 16
      %v7762 = vrot.slane %v7760, 4
      %v7763 = vshll.u32 %v7601, 16
      %v7765 = vrot.slane %v7763, 5
      %v7766 = vor.u32 %v7762, %v7765
      %v7767 = vrot.slane %v7766, 4
      %v7769 = vshll.u32 %v7602, 16
      %v7771 = vrot.slane %v7769, 5
      %v7772 = vsel %vm975, %v7767, %v7771
      %v7773 = vshrl.u32 %v7602, 16
      %v7775 = vrot.slane %v7773, 4
      %v7776 = vor.u32 %v7775, %v7771
      %v7777 = vrot.slane %v7776, 4
      %v7779 = vshll.u32 %v7628, 16
      %v7781 = vrot.slane %v7779, 5
      %v7782 = vsel %vm975, %v7777, %v7781
      %v7784 = vshrl.u32 %v7603, 16
      %v7786 = vrot.slane %v7784, 4
      %v7787 = vshll.u32 %v7603, 16
      %v7789 = vrot.slane %v7787, 5
      %v7790 = vor.u32 %v7786, %v7789
      %v7791 = vrot.slane %v7790, 4
      %v7793 = vshll.u32 %v7604, 16
      %v7795 = vrot.slane %v7793, 5
      %v7796 = vsel %vm975, %v7791, %v7795
      %v7797 = vshrl.u32 %v7604, 16
      %v7799 = vrot.slane %v7797, 4
      %v7800 = vor.u32 %v7799, %v7795
      %v7801 = vrot.slane %v7800, 4
      %v7803 = vshll.u32 %v7629, 16
      %v7805 = vrot.slane %v7803, 5
      %v7806 = vsel %vm975, %v7801, %v7805
      %v7808 = vshrl.u32 %v7605, 16
      %v7810 = vrot.slane %v7808, 4
      %v7811 = vshll.u32 %v7605, 16
      %v7813 = vrot.slane %v7811, 5
      %v7814 = vor.u32 %v7810, %v7813
      %v7815 = vrot.slane %v7814, 4
      %v7817 = vshll.u32 %v7606, 16
      %v7819 = vrot.slane %v7817, 5
      %v7820 = vsel %vm975, %v7815, %v7819
      %v7821 = vshrl.u32 %v7606, 16
      %v7823 = vrot.slane %v7821, 4
      %v7824 = vor.u32 %v7823, %v7819
      %v7825 = vrot.slane %v7824, 4
      %v7827 = vshll.u32 %v7630, 16
      %v7829 = vrot.slane %v7827, 5
      %v7830 = vsel %vm975, %v7825, %v7829
      %v7832 = vshrl.u32 %v7607, 16
      %v7834 = vrot.slane %v7832, 4
      %v7835 = vshll.u32 %v7607, 16
      %v7837 = vrot.slane %v7835, 5
      %v7838 = vor.u32 %v7834, %v7837
      %v7839 = vrot.slane %v7838, 4
      %v7841 = vshll.u32 %v7608, 16
      %v7843 = vrot.slane %v7841, 5
      %v7844 = vsel %vm975, %v7839, %v7843
      %v7845 = vshrl.u32 %v7608, 16
      %v7847 = vrot.slane %v7845, 4
      %v7848 = vor.u32 %v7847, %v7843
      %v7849 = vrot.slane %v7848, 4
      %v7851 = vshll.u32 %v7631, 16
      %v7853 = vrot.slane %v7851, 5
      %v7854 = vsel %vm975, %v7849, %v7853
      %v7856 = vshrl.u32 %v7609, 16
      %v7858 = vrot.slane %v7856, 4
      %v7859 = vshll.u32 %v7609, 16
      %v7861 = vrot.slane %v7859, 5
      %v7862 = vor.u32 %v7858, %v7861
      %v7863 = vrot.slane %v7862, 4
      %v7865 = vshll.u32 %v7610, 16
      %v7867 = vrot.slane %v7865, 5
      %v7868 = vsel %vm975, %v7863, %v7867
      %v7869 = vshrl.u32 %v7610, 16
      %v7871 = vrot.slane %v7869, 4
      %v7872 = vor.u32 %v7871, %v7867
      %v7873 = vrot.slane %v7872, 4
      %v7875 = vshll.u32 %v7632, 16
      %v7877 = vrot.slane %v7875, 5
      %v7878 = vsel %vm975, %v7873, %v7877
      %v7880 = vshrl.u32 %v7611, 16
      %v7882 = vrot.slane %v7880, 4
      %v7883 = vshll.u32 %v7611, 16
      %v7885 = vrot.slane %v7883, 5
      %v7886 = vor.u32 %v7882, %v7885
      %v7887 = vrot.slane %v7886, 4
      %v7889 = vshll.u32 %v7612, 16
      %v7891 = vrot.slane %v7889, 5
      %v7892 = vsel %vm975, %v7887, %v7891
      %v7893 = vshrl.u32 %v7612, 16
      %v7895 = vrot.slane %v7893, 4
      %v7896 = vor.u32 %v7895, %v7891
      %v7897 = vrot.slane %v7896, 4
      %v7899 = vshll.u32 %v7633, 16
      %v7901 = vrot.slane %v7899, 5
      %v7902 = vsel %vm975, %v7897, %v7901
      %v7904 = vshrl.u32 %v7613, 16
      %v7906 = vrot.slane %v7904, 4
      %v7907 = vshll.u32 %v7613, 16
      %v7909 = vrot.slane %v7907, 5
      %v7910 = vor.u32 %v7906, %v7909
      %v7911 = vrot.slane %v7910, 4
      %v7913 = vshll.u32 %v7614, 16
      %v7915 = vrot.slane %v7913, 5
      %v7916 = vsel %vm975, %v7911, %v7915
      %v7917 = vshrl.u32 %v7614, 16
      %v7919 = vrot.slane %v7917, 4
      %v7920 = vor.u32 %v7919, %v7915
      %v7921 = vrot.slane %v7920, 4
      %v7923 = vshll.u32 %v7634, 16
      %v7925 = vrot.slane %v7923, 5
      %v7926 = vsel %vm975, %v7921, %v7925
      %v7928 = vshrl.u32 %v7615, 16
      %v7930 = vrot.slane %v7928, 4
      %v7931 = vshll.u32 %v7615, 16
      %v7933 = vrot.slane %v7931, 5
      %v7934 = vor.u32 %v7930, %v7933
      %v7935 = vrot.slane %v7934, 4
      %v7937 = vshll.u32 %v7616, 16
      %v7939 = vrot.slane %v7937, 5
      %v7940 = vsel %vm975, %v7935, %v7939
      %v7941 = vshrl.u32 %v7616, 16
      %v7943 = vrot.slane %v7941, 4
      %v7944 = vor.u32 %v7943, %v7939
      %v7945 = vrot.slane %v7944, 4
      %v7947 = vshll.u32 %v7635, 16
      %v7949 = vrot.slane %v7947, 5
      %v7950 = vsel %vm975, %v7945, %v7949
      %v7952 = vshrl.u32 %v7617, 16
      %v7954 = vrot.slane %v7952, 4
      %v7955 = vshll.u32 %v7617, 16
      %v7957 = vrot.slane %v7955, 5
      %v7958 = vor.u32 %v7954, %v7957
      %v7959 = vrot.slane %v7958, 4
      %v7961 = vshll.u32 %v7618, 16
      %v7963 = vrot.slane %v7961, 5
      %v7964 = vsel %vm975, %v7959, %v7963
      %v7965 = vshrl.u32 %v7618, 16
      %v7967 = vrot.slane %v7965, 4
      %v7968 = vor.u32 %v7967, %v7963
      %v7969 = vrot.slane %v7968, 4
      %v7971 = vshll.u32 %v7636, 16
      %v7973 = vrot.slane %v7971, 5
      %v7974 = vsel %vm975, %v7969, %v7973
      %v7976 = vshrl.u32 %v7619, 16
      %v7978 = vrot.slane %v7976, 4
      %v7979 = vshll.u32 %v7619, 16
      %v7981 = vrot.slane %v7979, 5
      %v7982 = vor.u32 %v7978, %v7981
      %v7983 = vrot.slane %v7982, 4
      %v7985 = vshll.u32 %v7620, 16
      %v7987 = vrot.slane %v7985, 5
      %v7988 = vsel %vm975, %v7983, %v7987
      %v7989 = vshrl.u32 %v7620, 16
      %v7991 = vrot.slane %v7989, 4
      %v7992 = vor.u32 %v7991, %v7987
      %v7993 = vrot.slane %v7992, 4
      %v7995 = vshll.u32 %v7637, 16
      %v7997 = vrot.slane %v7995, 5
      %v7998 = vsel %vm975, %v7993, %v7997
      %v8000 = vshrl.u32 %v7621, 16
      %v8002 = vrot.slane %v8000, 4
      %v8003 = vshll.u32 %v7621, 16
      %v8005 = vrot.slane %v8003, 5
      %v8006 = vor.u32 %v8002, %v8005
      %v8007 = vrot.slane %v8006, 4
      %v8009 = vshll.u32 %v7622, 16
      %v8011 = vrot.slane %v8009, 5
      %v8012 = vsel %vm975, %v8007, %v8011
      %v8013 = vshrl.u32 %v7622, 16
      %v8015 = vrot.slane %v8013, 4
      %v8016 = vor.u32 %v8015, %v8011
      %v8017 = vrot.slane %v8016, 4
      %v8019 = vshll.u32 %v7638, 16
      %v8021 = vrot.slane %v8019, 5
      %v8022 = vsel %vm975, %v8017, %v8021
      %v8023 = vld [vmem:[%s3166] sm:$0xe]
      %v8024 = vld [vmem:[%s3166 + $0xc] sm:$0xe]
      %v8025 = vld [vmem:[%s3166 + $0x18] sm:$0xe]
      %v8026 = vld [vmem:[%s3166 + $0x24] sm:$0xe]
      %v8027 = vld [vmem:[%s3166 + $0x30] sm:$0xe]
      %v8028 = vld [vmem:[%s3166 + $0x3c] sm:$0xe]
      %v8029 = vld [vmem:[%s3166 + $0x48] sm:$0xe]
      %v8030 = vld [vmem:[%s3166 + $0x54] sm:$0xe]
      %v8031 = vld [vmem:[%s3166 + $0x60] sm:$0xe]
      %v8032 = vld [vmem:[%s3166 + $0x6c] sm:$0xe]
      %v8033 = vld [vmem:[%s3166 + $0x78] sm:$0xe]
      %v8034 = vld [vmem:[%s3166 + $0x84] sm:$0xe]
      %v8035 = vld [vmem:[%s3166 + $0x90] sm:$0xe]
      %v8036 = vld [vmem:[%s3166 + $0x9c] sm:$0xe]
      %v8037 = vld [vmem:[%s3166 + $0xa8] sm:$0xe]
      %v8038 = vld [vmem:[%s3166 + $0xb4] sm:$0xe]
      %v8087 = vrot.slane %v8023, 5
      %v8088 = vrot.slane %v8087, 4
      %v8089 = vrot.slane %v7592, 5
      %v8090 = vsel %vm1426, %v8088, %v8089
      %v8091 = vrot.slane %v8089, 4
      %v8092 = vrot.slane %v7623, 5
      %v8093 = vsel %vm1426, %v8091, %v8092
      %v8094 = vrot.slane %v8024, 5
      %v8095 = vrot.slane %v8094, 4
      %v8096 = vrot.slane %v7594, 5
      %v8097 = vsel %vm1426, %v8095, %v8096
      %v8098 = vrot.slane %v8096, 4
      %v8099 = vrot.slane %v7624, 5
      %v8100 = vsel %vm1426, %v8098, %v8099
      %v8101 = vrot.slane %v8025, 5
      %v8102 = vrot.slane %v8101, 4
      %v8103 = vrot.slane %v7596, 5
      %v8104 = vsel %vm1426, %v8102, %v8103
      %v8105 = vrot.slane %v8103, 4
      %v8106 = vrot.slane %v7625, 5
      %v8107 = vsel %vm1426, %v8105, %v8106
      %v8108 = vrot.slane %v8026, 5
      %v8109 = vrot.slane %v8108, 4
      %v8110 = vrot.slane %v7598, 5
      %v8111 = vsel %vm1426, %v8109, %v8110
      %v8112 = vrot.slane %v8110, 4
      %v8113 = vrot.slane %v7626, 5
      %v8114 = vsel %vm1426, %v8112, %v8113
      %v8115 = vrot.slane %v8027, 5
      %v8116 = vrot.slane %v8115, 4
      %v8117 = vrot.slane %v7600, 5
      %v8118 = vsel %vm1426, %v8116, %v8117
      %v8119 = vrot.slane %v8117, 4
      %v8120 = vrot.slane %v7627, 5
      %v8121 = vsel %vm1426, %v8119, %v8120
      %v8122 = vrot.slane %v8028, 5
      %v8123 = vrot.slane %v8122, 4
      %v8124 = vrot.slane %v7602, 5
      %v8125 = vsel %vm1426, %v8123, %v8124
      %v8126 = vrot.slane %v8124, 4
      %v8127 = vrot.slane %v7628, 5
      %v8128 = vsel %vm1426, %v8126, %v8127
      %v8129 = vrot.slane %v8029, 5
      %v8130 = vrot.slane %v8129, 4
      %v8131 = vrot.slane %v7604, 5
      %v8132 = vsel %vm1426, %v8130, %v8131
      %v8133 = vrot.slane %v8131, 4
      %v8134 = vrot.slane %v7629, 5
      %v8135 = vsel %vm1426, %v8133, %v8134
      %v8136 = vrot.slane %v8030, 5
      %v8137 = vrot.slane %v8136, 4
      %v8138 = vrot.slane %v7606, 5
      %v8139 = vsel %vm1426, %v8137, %v8138
      %v8140 = vrot.slane %v8138, 4
      %v8141 = vrot.slane %v7630, 5
      %v8142 = vsel %vm1426, %v8140, %v8141
      %v8143 = vrot.slane %v8031, 5
      %v8144 = vrot.slane %v8143, 4
      %v8145 = vrot.slane %v7608, 5
      %v8146 = vsel %vm1426, %v8144, %v8145
      %v8147 = vrot.slane %v8145, 4
      %v8148 = vrot.slane %v7631, 5
      %v8149 = vsel %vm1426, %v8147, %v8148
      %v8150 = vrot.slane %v8032, 5
      %v8151 = vrot.slane %v8150, 4
      %v8152 = vrot.slane %v7610, 5
      %v8153 = vsel %vm1426, %v8151, %v8152
      %v8154 = vrot.slane %v8152, 4
      %v8155 = vrot.slane %v7632, 5
      %v8156 = vsel %vm1426, %v8154, %v8155
      %v8157 = vrot.slane %v8033, 5
      %v8158 = vrot.slane %v8157, 4
      %v8159 = vrot.slane %v7612, 5
      %v8160 = vsel %vm1426, %v8158, %v8159
      %v8161 = vrot.slane %v8159, 4
      %v8162 = vrot.slane %v7633, 5
      %v8163 = vsel %vm1426, %v8161, %v8162
      %v8164 = vrot.slane %v8034, 5
      %v8165 = vrot.slane %v8164, 4
      %v8166 = vrot.slane %v7614, 5
      %v8167 = vsel %vm1426, %v8165, %v8166
      %v8168 = vrot.slane %v8166, 4
      %v8169 = vrot.slane %v7634, 5
      %v8170 = vsel %vm1426, %v8168, %v8169
      %v8171 = vrot.slane %v8035, 5
      %v8172 = vrot.slane %v8171, 4
      %v8173 = vrot.slane %v7616, 5
      %v8174 = vsel %vm1426, %v8172, %v8173
      %v8175 = vrot.slane %v8173, 4
      %v8176 = vrot.slane %v7635, 5
      %v8177 = vsel %vm1426, %v8175, %v8176
      %v8178 = vrot.slane %v8036, 5
      %v8179 = vrot.slane %v8178, 4
      %v8180 = vrot.slane %v7618, 5
      %v8181 = vsel %vm1426, %v8179, %v8180
      %v8182 = vrot.slane %v8180, 4
      %v8183 = vrot.slane %v7636, 5
      %v8184 = vsel %vm1426, %v8182, %v8183
      %v8185 = vrot.slane %v8037, 5
      %v8186 = vrot.slane %v8185, 4
      %v8187 = vrot.slane %v7620, 5
      %v8188 = vsel %vm1426, %v8186, %v8187
      %v8189 = vrot.slane %v8187, 4
      %v8190 = vrot.slane %v7637, 5
      %v8191 = vsel %vm1426, %v8189, %v8190
      %v8192 = vrot.slane %v8038, 5
      %v8193 = vrot.slane %v8192, 4
      %v8194 = vrot.slane %v7622, 5
      %v8195 = vsel %vm1426, %v8193, %v8194
      %v8196 = vrot.slane %v8194, 4
      %v8197 = vrot.slane %v7638, 5
      %v8198 = vsel %vm1426, %v8196, %v8197
      %v8215 = vunpack.c.l.b16 %v7591
      %v8216 = vunpack.c.l.b16 %v7592
      %v8217 = vunpack.c.l.b16 %v7593
      %v8218 = vunpack.c.l.b16 %v7594
      %v8219 = vunpack.c.l.b16 %v7595
      %v8220 = vunpack.c.l.b16 %v7596
      %v8221 = vunpack.c.l.b16 %v7597
      %v8222 = vunpack.c.l.b16 %v7598
      %v8223 = vunpack.c.l.b16 %v7599
      %v8224 = vunpack.c.l.b16 %v7600
      %v8225 = vunpack.c.l.b16 %v7601
      %v8226 = vunpack.c.l.b16 %v7602
      %v8227 = vunpack.c.l.b16 %v7603
      %v8228 = vunpack.c.l.b16 %v7604
      %v8229 = vunpack.c.l.b16 %v7605
      %v8230 = vunpack.c.l.b16 %v7606
      %v8231 = vunpack.c.l.b16 %v7607
      %v8232 = vunpack.c.l.b16 %v7608
      %v8233 = vunpack.c.l.b16 %v7609
      %v8234 = vunpack.c.l.b16 %v7610
      %v8235 = vunpack.c.l.b16 %v7611
      %v8236 = vunpack.c.l.b16 %v7612
      %v8237 = vunpack.c.l.b16 %v7613
      %v8238 = vunpack.c.l.b16 %v7614
      %v8239 = vunpack.c.l.b16 %v7615
      %v8240 = vunpack.c.l.b16 %v7616
      %v8241 = vunpack.c.l.b16 %v7617
      %v8242 = vunpack.c.l.b16 %v7618
      %v8243 = vunpack.c.l.b16 %v7619
      %v8244 = vunpack.c.l.b16 %v7620
      %v8245 = vunpack.c.l.b16 %v7621
      %v8246 = vunpack.c.l.b16 %v7622
      %v8247 = vpack.c.b16 %v8216, %v8215
      %v8248 = vpack.c.b16 %v8218, %v8217
      %v8249 = vpack.c.b16 %v8220, %v8219
      %v8250 = vpack.c.b16 %v8222, %v8221
      %v8251 = vpack.c.b16 %v8224, %v8223
      %v8252 = vpack.c.b16 %v8226, %v8225
      %v8253 = vpack.c.b16 %v8228, %v8227
      %v8254 = vpack.c.b16 %v8230, %v8229
      %v8255 = vpack.c.b16 %v8232, %v8231
      %v8256 = vpack.c.b16 %v8234, %v8233
      %v8257 = vpack.c.b16 %v8236, %v8235
      %v8258 = vpack.c.b16 %v8238, %v8237
      %v8259 = vpack.c.b16 %v8240, %v8239
      %v8260 = vpack.c.b16 %v8242, %v8241
      %v8261 = vpack.c.b16 %v8244, %v8243
      %v8262 = vpack.c.b16 %v8246, %v8245
      %v8263 = vunpack.c.l.b16 %v7652
      %v8264 = vunpack.c.l.b16 %v7662
      %v8265 = vunpack.c.l.b16 %v7676
      %v8266 = vunpack.c.l.b16 %v7686
      %v8267 = vunpack.c.l.b16 %v7700
      %v8268 = vunpack.c.l.b16 %v7710
      %v8269 = vunpack.c.l.b16 %v7724
      %v8270 = vunpack.c.l.b16 %v7734
      %v8271 = vunpack.c.l.b16 %v7748
      %v8272 = vunpack.c.l.b16 %v7758
      %v8273 = vunpack.c.l.b16 %v7772
      %v8274 = vunpack.c.l.b16 %v7782
      %v8275 = vunpack.c.l.b16 %v7796
      %v8276 = vunpack.c.l.b16 %v7806
      %v8277 = vunpack.c.l.b16 %v7820
      %v8278 = vunpack.c.l.b16 %v7830
      %v8279 = vunpack.c.l.b16 %v7844
      %v8280 = vunpack.c.l.b16 %v7854
      %v8281 = vunpack.c.l.b16 %v7868
      %v8282 = vunpack.c.l.b16 %v7878
      %v8283 = vunpack.c.l.b16 %v7892
      %v8284 = vunpack.c.l.b16 %v7902
      %v8285 = vunpack.c.l.b16 %v7916
      %v8286 = vunpack.c.l.b16 %v7926
      %v8287 = vunpack.c.l.b16 %v7940
      %v8288 = vunpack.c.l.b16 %v7950
      %v8289 = vunpack.c.l.b16 %v7964
      %v8290 = vunpack.c.l.b16 %v7974
      %v8291 = vunpack.c.l.b16 %v7988
      %v8292 = vunpack.c.l.b16 %v7998
      %v8293 = vunpack.c.l.b16 %v8012
      %v8294 = vunpack.c.l.b16 %v8022
      %v8295 = vpack.c.b16 %v8264, %v8263
      %v8296 = vpack.c.b16 %v8266, %v8265
      %v8297 = vpack.c.b16 %v8268, %v8267
      %v8298 = vpack.c.b16 %v8270, %v8269
      %v8299 = vpack.c.b16 %v8272, %v8271
      %v8300 = vpack.c.b16 %v8274, %v8273
      %v8301 = vpack.c.b16 %v8276, %v8275
      %v8302 = vpack.c.b16 %v8278, %v8277
      %v8303 = vpack.c.b16 %v8280, %v8279
      %v8304 = vpack.c.b16 %v8282, %v8281
      %v8305 = vpack.c.b16 %v8284, %v8283
      %v8306 = vpack.c.b16 %v8286, %v8285
      %v8307 = vpack.c.b16 %v8288, %v8287
      %v8308 = vpack.c.b16 %v8290, %v8289
      %v8309 = vpack.c.b16 %v8292, %v8291
      %v8310 = vpack.c.b16 %v8294, %v8293
      %8311 = vrot.lane.b32.xlu0 %v8295, 4
      %v8312 = vpop.permute.xlu0 %8311
      %8313 = vrot.lane.b32.xlu0 %v8296, 4
      %v8314 = vpop.permute.xlu0 %8313
      %8315 = vrot.lane.b32.xlu0 %v8297, 4
      %v8316 = vpop.permute.xlu0 %8315
      %8317 = vrot.lane.b32.xlu0 %v8298, 4
      %v8318 = vpop.permute.xlu0 %8317
      %8319 = vrot.lane.b32.xlu0 %v8299, 4
      %v8320 = vpop.permute.xlu0 %8319
      %8321 = vrot.lane.b32.xlu0 %v8300, 4
      %v8322 = vpop.permute.xlu0 %8321
      %8323 = vrot.lane.b32.xlu0 %v8301, 4
      %v8324 = vpop.permute.xlu0 %8323
      %8325 = vrot.lane.b32.xlu0 %v8302, 4
      %v8326 = vpop.permute.xlu0 %8325
      %8327 = vrot.lane.b32.xlu0 %v8303, 4
      %v8328 = vpop.permute.xlu0 %8327
      %8329 = vrot.lane.b32.xlu0 %v8304, 4
      %v8330 = vpop.permute.xlu0 %8329
      %8331 = vrot.lane.b32.xlu0 %v8305, 4
      %v8332 = vpop.permute.xlu0 %8331
      %8333 = vrot.lane.b32.xlu0 %v8306, 4
      %v8334 = vpop.permute.xlu0 %8333
      %8335 = vrot.lane.b32.xlu0 %v8307, 4
      %v8336 = vpop.permute.xlu0 %8335
      %8337 = vrot.lane.b32.xlu0 %v8308, 4
      %v8338 = vpop.permute.xlu0 %8337
      %8339 = vrot.lane.b32.xlu0 %v8309, 4
      %v8340 = vpop.permute.xlu0 %8339
      %8341 = vrot.lane.b32.xlu0 %v8310, 4
      %v8342 = vpop.permute.xlu0 %8341
      %v8343 = vunpack.c.l.b16 %v8090
      %v8344 = vunpack.c.l.b16 %v8093
      %v8345 = vunpack.c.l.b16 %v8097
      %v8346 = vunpack.c.l.b16 %v8100
      %v8347 = vunpack.c.l.b16 %v8104
      %v8348 = vunpack.c.l.b16 %v8107
      %v8349 = vunpack.c.l.b16 %v8111
      %v8350 = vunpack.c.l.b16 %v8114
      %v8351 = vunpack.c.l.b16 %v8118
      %v8352 = vunpack.c.l.b16 %v8121
      %v8353 = vunpack.c.l.b16 %v8125
      %v8354 = vunpack.c.l.b16 %v8128
      %v8355 = vunpack.c.l.b16 %v8132
      %v8356 = vunpack.c.l.b16 %v8135
      %v8357 = vunpack.c.l.b16 %v8139
      %v8358 = vunpack.c.l.b16 %v8142
      %v8359 = vunpack.c.l.b16 %v8146
      %v8360 = vunpack.c.l.b16 %v8149
      %v8361 = vunpack.c.l.b16 %v8153
      %v8362 = vunpack.c.l.b16 %v8156
      %v8363 = vunpack.c.l.b16 %v8160
      %v8364 = vunpack.c.l.b16 %v8163
      %v8365 = vunpack.c.l.b16 %v8167
      %v8366 = vunpack.c.l.b16 %v8170
      %v8367 = vunpack.c.l.b16 %v8174
      %v8368 = vunpack.c.l.b16 %v8177
      %v8369 = vunpack.c.l.b16 %v8181
      %v8370 = vunpack.c.l.b16 %v8184
      %v8371 = vunpack.c.l.b16 %v8188
      %v8372 = vunpack.c.l.b16 %v8191
      %v8373 = vunpack.c.l.b16 %v8195
      %v8374 = vunpack.c.l.b16 %v8198
      %v8375 = vpack.c.b16 %v8344, %v8343
      %v8376 = vpack.c.b16 %v8346, %v8345
      %v8377 = vpack.c.b16 %v8348, %v8347
      %v8378 = vpack.c.b16 %v8350, %v8349
      %v8379 = vpack.c.b16 %v8352, %v8351
      %v8380 = vpack.c.b16 %v8354, %v8353
      %v8381 = vpack.c.b16 %v8356, %v8355
      %v8382 = vpack.c.b16 %v8358, %v8357
      %v8383 = vpack.c.b16 %v8360, %v8359
      %v8384 = vpack.c.b16 %v8362, %v8361
      %v8385 = vpack.c.b16 %v8364, %v8363
      %v8386 = vpack.c.b16 %v8366, %v8365
      %v8387 = vpack.c.b16 %v8368, %v8367
      %v8388 = vpack.c.b16 %v8370, %v8369
      %v8389 = vpack.c.b16 %v8372, %v8371
      %v8390 = vpack.c.b16 %v8374, %v8373
      %8391 = vrot.lane.b32.xlu0 %v8375, 8
      %v8392 = vpop.permute.xlu0 %8391
      %8393 = vrot.lane.b32.xlu0 %v8376, 8
      %v8394 = vpop.permute.xlu0 %8393
      %8395 = vrot.lane.b32.xlu0 %v8377, 8
      %v8396 = vpop.permute.xlu0 %8395
      %8397 = vrot.lane.b32.xlu0 %v8378, 8
      %v8398 = vpop.permute.xlu0 %8397
      %8399 = vrot.lane.b32.xlu0 %v8379, 8
      %v8400 = vpop.permute.xlu0 %8399
      %8401 = vrot.lane.b32.xlu0 %v8380, 8
      %v8402 = vpop.permute.xlu0 %8401
      %8403 = vrot.lane.b32.xlu0 %v8381, 8
      %v8404 = vpop.permute.xlu0 %8403
      %8405 = vrot.lane.b32.xlu0 %v8382, 8
      %v8406 = vpop.permute.xlu0 %8405
      %8407 = vrot.lane.b32.xlu0 %v8383, 8
      %v8408 = vpop.permute.xlu0 %8407
      %8409 = vrot.lane.b32.xlu0 %v8384, 8
      %v8410 = vpop.permute.xlu0 %8409
      %8411 = vrot.lane.b32.xlu0 %v8385, 8
      %v8412 = vpop.permute.xlu0 %8411
      %8413 = vrot.lane.b32.xlu0 %v8386, 8
      %v8414 = vpop.permute.xlu0 %8413
      %8415 = vrot.lane.b32.xlu0 %v8387, 8
      %v8416 = vpop.permute.xlu0 %8415
      %8417 = vrot.lane.b32.xlu0 %v8388, 8
      %v8418 = vpop.permute.xlu0 %8417
      %8419 = vrot.lane.b32.xlu0 %v8389, 8
      %v8420 = vpop.permute.xlu0 %8419
      %8421 = vrot.lane.b32.xlu0 %v8390, 8
      %v8422 = vpop.permute.xlu0 %8421
      %v8425 = vsel %vm1763, %v8247, %v8312
      %v8428 = vsel %vm1763, %v8248, %v8314
      %v8431 = vsel %vm1763, %v8249, %v8316
      %v8434 = vsel %vm1763, %v8250, %v8318
      %v8437 = vsel %vm1763, %v8251, %v8320
      %v8440 = vsel %vm1763, %v8252, %v8322
      %v8443 = vsel %vm1763, %v8253, %v8324
      %v8446 = vsel %vm1763, %v8254, %v8326
      %v8449 = vsel %vm1763, %v8255, %v8328
      %v8452 = vsel %vm1763, %v8256, %v8330
      %v8455 = vsel %vm1763, %v8257, %v8332
      %v8458 = vsel %vm1763, %v8258, %v8334
      %v8461 = vsel %vm1763, %v8259, %v8336
      %v8464 = vsel %vm1763, %v8260, %v8338
      %v8467 = vsel %vm1763, %v8261, %v8340
      %v8470 = vsel %vm1763, %v8262, %v8342
      %v8472 = vsel %vm1812, %v8425, %v8392
      %v8474 = vsel %vm1812, %v8428, %v8394
      %v8476 = vsel %vm1812, %v8431, %v8396
      %v8478 = vsel %vm1812, %v8434, %v8398
      %v8480 = vsel %vm1812, %v8437, %v8400
      %v8482 = vsel %vm1812, %v8440, %v8402
      %v8484 = vsel %vm1812, %v8443, %v8404
      %v8486 = vsel %vm1812, %v8446, %v8406
      %v8488 = vsel %vm1812, %v8449, %v8408
      %v8490 = vsel %vm1812, %v8452, %v8410
      %v8492 = vsel %vm1812, %v8455, %v8412
      %v8494 = vsel %vm1812, %v8458, %v8414
      %v8496 = vsel %vm1812, %v8461, %v8416
      %v8498 = vsel %vm1812, %v8464, %v8418
      %v8500 = vsel %vm1812, %v8467, %v8420
      %v8502 = vsel %vm1812, %v8470, %v8422
      %s8503 = scalar_lea.vmem %s2, 16
      %v8504 = vld [vmem:[%s8503] sm:$0xf]
      %v8505 = vld [vmem:[%s8503 + $0x4] sm:$0x3]
      %v8508 = vunpack.c.l.b16 %v8504
      %v8509 = vunpack.c.l.b16 %v8505
      %v8510 = vpack.c.b16 %v8509, %v8508
      %v8511 = vsel %vm2767, %v8472, 0
      %v8513 = vsel %vm2767, %v8474, 0
      %v8515 = vsel %vm2767, %v8476, 0
      %v8517 = vsel %vm2767, %v8478, 0
      %v8519 = vsel %vm2767, %v8480, 0
      %v8521 = vsel %vm2767, %v8482, 0
      %v8523 = vsel %vm2767, %v8484, 0
      %v8525 = vsel %vm2767, %v8486, 0
      %v8527 = vsel %vm2767, %v8488, 0
      %v8529 = vsel %vm2767, %v8490, 0
      %v8531 = vsel %vm2767, %v8492, 0
      %v8533 = vsel %vm2767, %v8494, 0
      %v8535 = vsel %vm2767, %v8496, 0
      %v8537 = vsel %vm2767, %v8498, 0
      %v8539 = vsel %vm2767, %v8500, 0
      %v8541 = vsel %vm2767, %v8502, 0
      %v8544 = vsel %vm2800, %v8510, 0
      %8546 = vmatprep.subr.bf16.mxu0 0
      %8547 = vmatpush1.bf16.msra.mxu0 0
      %8548 = vmatprep.subr.bf16.mxu0 0
      %8549 = vmatpush1.bf16.msra.mxu0 0
      %8550 = vmatprep.subr.bf16.mxu0 0
      %8551 = vmatpush1.bf16.msra.mxu0 0
      %8552 = vmatprep.subr.bf16.mxu0 0
      %8553 = vmatpush1.bf16.msra.mxu0 0
      %8554 = vmatprep.subr.bf16.mxu0 0
      %8555 = vmatpush1.bf16.msra.mxu0 0
      %8556 = vmatprep.subr.bf16.mxu0 0
      %8557 = vmatpush1.bf16.msra.mxu0 0
      %8558 = vmatprep.subr.bf16.mxu0 0
      %8559 = vmatpush1.bf16.msra.mxu0 0
      %8560 = vmatprep.subr.bf16.mxu0 0
      %8561 = vmatpush1.bf16.msra.mxu0 %v8544
      %8562 = vmatprep.subr.bf16.mxu0 0
      %8563 = vmatpush2.bf16.msra.mxu0 0
      %8564 = vmatprep.subr.bf16.mxu0 0
      %8565 = vmatpush2.bf16.msra.mxu0 0
      %8566 = vmatprep.subr.bf16.mxu0 0
      %8567 = vmatpush2.bf16.msra.mxu0 0
      %8568 = vmatprep.subr.bf16.mxu0 0
      %8569 = vmatpush2.bf16.msra.mxu0 0
      %8570 = vmatprep.subr.bf16.mxu0 0
      %8571 = vmatpush2.bf16.msra.mxu0 0
      %8572 = vmatprep.subr.bf16.mxu0 0
      %8573 = vmatpush2.bf16.msra.mxu0 0
      %8574 = vmatprep.subr.bf16.mxu0 0
      %8575 = vmatpush2.bf16.msra.mxu0 0
      %8576 = vmatprep.subr.bf16.mxu0 0
      %8577 = vmatpush2.bf16.msra.mxu0 0
      %8578 = vmatprep.mubr.bf16.mxu0 0
      %8579 = vmatmul.mubr.bf16.gmra.mxu0 %v8511
      %v8580 = vpop.f32.mrf.mxu0
      %v8581 = vadd.f32 0.0, %v8580
      %v8582 = vpop.f32.mrf.mxu0
      %v8583 = vpop.f32.mrf.mxu0
      %v8584 = vadd.f32 0.0, %v8583
      %v8585 = vpop.f32.mrf.mxu0
      %8586 = vmatprep.mubr.bf16.mxu0 0
      %8587 = vmatmul.mubr.bf16.gmra.mxu0 %v8513
      %v8588 = vpop.f32.mrf.mxu0
      %v8589 = vadd.f32 0.0, %v8588
      %v8590 = vpop.f32.mrf.mxu0
      %v8591 = vpop.f32.mrf.mxu0
      %v8592 = vadd.f32 0.0, %v8591
      %v8593 = vpop.f32.mrf.mxu0
      %8594 = vmatprep.mubr.bf16.mxu0 0
      %8595 = vmatmul.mubr.bf16.gmra.mxu0 %v8515
      %v8596 = vpop.f32.mrf.mxu0
      %v8597 = vadd.f32 0.0, %v8596
      %v8598 = vpop.f32.mrf.mxu0
      %v8599 = vpop.f32.mrf.mxu0
      %v8600 = vadd.f32 0.0, %v8599
      %v8601 = vpop.f32.mrf.mxu0
      %8602 = vmatprep.mubr.bf16.mxu0 0
      %8603 = vmatmul.mubr.bf16.gmra.mxu0 %v8517
      %v8604 = vpop.f32.mrf.mxu0
      %v8605 = vadd.f32 0.0, %v8604
      %v8606 = vpop.f32.mrf.mxu0
      %v8607 = vpop.f32.mrf.mxu0
      %v8608 = vadd.f32 0.0, %v8607
      %v8609 = vpop.f32.mrf.mxu0
      %8610 = vmatprep.mubr.bf16.mxu0 0
      %8611 = vmatmul.mubr.bf16.gmra.mxu0 %v8519
      %v8612 = vpop.f32.mrf.mxu0
      %v8613 = vadd.f32 0.0, %v8612
      %v8614 = vpop.f32.mrf.mxu0
      %v8615 = vpop.f32.mrf.mxu0
      %v8616 = vadd.f32 0.0, %v8615
      %v8617 = vpop.f32.mrf.mxu0
      %8618 = vmatprep.mubr.bf16.mxu0 0
      %8619 = vmatmul.mubr.bf16.gmra.mxu0 %v8521
      %v8620 = vpop.f32.mrf.mxu0
      %v8621 = vadd.f32 0.0, %v8620
      %v8622 = vpop.f32.mrf.mxu0
      %v8623 = vpop.f32.mrf.mxu0
      %v8624 = vadd.f32 0.0, %v8623
      %v8625 = vpop.f32.mrf.mxu0
      %8626 = vmatprep.mubr.bf16.mxu0 0
      %8627 = vmatmul.mubr.bf16.gmra.mxu0 %v8523
      %v8628 = vpop.f32.mrf.mxu0
      %v8629 = vadd.f32 0.0, %v8628
      %v8630 = vpop.f32.mrf.mxu0
      %v8631 = vpop.f32.mrf.mxu0
      %v8632 = vadd.f32 0.0, %v8631
      %v8633 = vpop.f32.mrf.mxu0
      %8634 = vmatprep.mubr.bf16.mxu0 0
      %8635 = vmatmul.mubr.bf16.gmra.mxu0 %v8525
      %v8636 = vpop.f32.mrf.mxu0
      %v8637 = vadd.f32 0.0, %v8636
      %v8638 = vpop.f32.mrf.mxu0
      %v8639 = vpop.f32.mrf.mxu0
      %v8640 = vadd.f32 0.0, %v8639
      %v8641 = vpop.f32.mrf.mxu0
      %8642 = vmatprep.mubr.bf16.mxu0 0
      %8643 = vmatmul.mubr.bf16.gmra.mxu0 %v8527
      %v8644 = vpop.f32.mrf.mxu0
      %v8645 = vadd.f32 0.0, %v8644
      %v8646 = vpop.f32.mrf.mxu0
      %v8647 = vpop.f32.mrf.mxu0
      %v8648 = vadd.f32 0.0, %v8647
      %v8649 = vpop.f32.mrf.mxu0
      %8650 = vmatprep.mubr.bf16.mxu0 0
      %8651 = vmatmul.mubr.bf16.gmra.mxu0 %v8529
      %v8652 = vpop.f32.mrf.mxu0
      %v8653 = vadd.f32 0.0, %v8652
      %v8654 = vpop.f32.mrf.mxu0
      %v8655 = vpop.f32.mrf.mxu0
      %v8656 = vadd.f32 0.0, %v8655
      %v8657 = vpop.f32.mrf.mxu0
      %8658 = vmatprep.mubr.bf16.mxu0 0
      %8659 = vmatmul.mubr.bf16.gmra.mxu0 %v8531
      %v8660 = vpop.f32.mrf.mxu0
      %v8661 = vadd.f32 0.0, %v8660
      %v8662 = vpop.f32.mrf.mxu0
      %v8663 = vpop.f32.mrf.mxu0
      %v8664 = vadd.f32 0.0, %v8663
      %v8665 = vpop.f32.mrf.mxu0
      %8666 = vmatprep.mubr.bf16.mxu0 0
      %8667 = vmatmul.mubr.bf16.gmra.mxu0 %v8533
      %v8668 = vpop.f32.mrf.mxu0
      %v8669 = vadd.f32 0.0, %v8668
      %v8670 = vpop.f32.mrf.mxu0
      %v8671 = vpop.f32.mrf.mxu0
      %v8672 = vadd.f32 0.0, %v8671
      %v8673 = vpop.f32.mrf.mxu0
      %8674 = vmatprep.mubr.bf16.mxu0 0
      %8675 = vmatmul.mubr.bf16.gmra.mxu0 %v8535
      %v8676 = vpop.f32.mrf.mxu0
      %v8677 = vadd.f32 0.0, %v8676
      %v8678 = vpop.f32.mrf.mxu0
      %v8679 = vpop.f32.mrf.mxu0
      %v8680 = vadd.f32 0.0, %v8679
      %v8681 = vpop.f32.mrf.mxu0
      %8682 = vmatprep.mubr.bf16.mxu0 0
      %8683 = vmatmul.mubr.bf16.gmra.mxu0 %v8537
      %v8684 = vpop.f32.mrf.mxu0
      %v8685 = vadd.f32 0.0, %v8684
      %v8686 = vpop.f32.mrf.mxu0
      %v8687 = vpop.f32.mrf.mxu0
      %v8688 = vadd.f32 0.0, %v8687
      %v8689 = vpop.f32.mrf.mxu0
      %8690 = vmatprep.mubr.bf16.mxu0 0
      %8691 = vmatmul.mubr.bf16.gmra.mxu0 %v8539
      %v8692 = vpop.f32.mrf.mxu0
      %v8693 = vadd.f32 0.0, %v8692
      %v8694 = vpop.f32.mrf.mxu0
      %v8695 = vpop.f32.mrf.mxu0
      %v8696 = vadd.f32 0.0, %v8695
      %v8697 = vpop.f32.mrf.mxu0
      %8698 = vmatprep.mubr.bf16.mxu0 0
      %8699 = vmatmul.mubr.bf16.gmra.mxu0 %v8541
      %v8700 = vpop.f32.mrf.mxu0
      %v8701 = vadd.f32 0.0, %v8700
      %v8702 = vpop.f32.mrf.mxu0
      %v8703 = vpop.f32.mrf.mxu0
      %v8704 = vadd.f32 0.0, %v8703
      %v8705 = vpop.f32.mrf.mxu0
      %8706 = vdwg.mxu0
      %v8707 = vadd.f32 %v7465, %v8581
      %v8708 = vadd.f32 %v7468, %v8584
      %v8709 = vadd.f32 %v7473, %v8589
      %v8710 = vadd.f32 %v7476, %v8592
      %v8711 = vadd.f32 %v7481, %v8597
      %v8712 = vadd.f32 %v7484, %v8600
      %v8713 = vadd.f32 %v7489, %v8605
      %v8714 = vadd.f32 %v7492, %v8608
      %v8715 = vadd.f32 %v7497, %v8613
      %v8716 = vadd.f32 %v7500, %v8616
      %v8717 = vadd.f32 %v7505, %v8621
      %v8718 = vadd.f32 %v7508, %v8624
      %v8719 = vadd.f32 %v7513, %v8629
      %v8720 = vadd.f32 %v7516, %v8632
      %v8721 = vadd.f32 %v7521, %v8637
      %v8722 = vadd.f32 %v7524, %v8640
      %v8723 = vadd.f32 %v7529, %v8645
      %v8724 = vadd.f32 %v7532, %v8648
      %v8725 = vadd.f32 %v7537, %v8653
      %v8726 = vadd.f32 %v7540, %v8656
      %v8727 = vadd.f32 %v7545, %v8661
      %v8728 = vadd.f32 %v7548, %v8664
      %v8729 = vadd.f32 %v7553, %v8669
      %v8730 = vadd.f32 %v7556, %v8672
      %v8731 = vadd.f32 %v7561, %v8677
      %v8732 = vadd.f32 %v7564, %v8680
      %v8733 = vadd.f32 %v7569, %v8685
      %v8734 = vadd.f32 %v7572, %v8688
      %v8735 = vadd.f32 %v7577, %v8693
      %v8736 = vadd.f32 %v7580, %v8696
      %v8737 = vadd.f32 %v7585, %v8701
      %v8738 = vadd.f32 %v7588, %v8704
      %v8739 = vsel %vm1763, %v8707, 0.0
      %v8740 = vsel %vm1763, %v8708, 0.0
      %v8741 = vadd.f32 %v8739, %v8740
      %v8742 = vsel %vm1763, %v8709, 0.0
      %v8743 = vadd.f32 %v8741, %v8742
      %v8744 = vsel %vm1763, %v8710, 0.0
      %v8745 = vadd.f32 %v8743, %v8744
      %v8746 = vsel %vm1763, %v8711, 0.0
      %v8747 = vadd.f32 %v8745, %v8746
      %v8748 = vsel %vm1763, %v8712, 0.0
      %v8749 = vadd.f32 %v8747, %v8748
      %v8750 = vsel %vm1763, %v8713, 0.0
      %v8751 = vadd.f32 %v8749, %v8750
      %v8752 = vsel %vm1763, %v8714, 0.0
      %v8753 = vadd.f32 %v8751, %v8752
      %v8754 = vsel %vm1763, %v8715, 0.0
      %v8755 = vadd.f32 %v8753, %v8754
      %v8756 = vsel %vm1763, %v8716, 0.0
      %v8757 = vadd.f32 %v8755, %v8756
      %v8758 = vsel %vm1763, %v8717, 0.0
      %v8759 = vadd.f32 %v8757, %v8758
      %v8760 = vsel %vm1763, %v8718, 0.0
      %v8761 = vadd.f32 %v8759, %v8760
      %v8762 = vsel %vm1763, %v8719, 0.0
      %v8763 = vadd.f32 %v8761, %v8762
      %v8764 = vsel %vm1763, %v8720, 0.0
      %v8765 = vadd.f32 %v8763, %v8764
      %v8766 = vsel %vm1763, %v8721, 0.0
      %v8767 = vadd.f32 %v8765, %v8766
      %v8768 = vsel %vm1763, %v8722, 0.0
      %v8769 = vadd.f32 %v8767, %v8768
      %v8770 = vsel %vm1763, %v8723, 0.0
      %v8771 = vadd.f32 %v8769, %v8770
      %v8772 = vsel %vm1763, %v8724, 0.0
      %v8773 = vadd.f32 %v8771, %v8772
      %v8774 = vsel %vm1763, %v8725, 0.0
      %v8775 = vadd.f32 %v8773, %v8774
      %v8776 = vsel %vm1763, %v8726, 0.0
      %v8777 = vadd.f32 %v8775, %v8776
      %v8778 = vsel %vm1763, %v8727, 0.0
      %v8779 = vadd.f32 %v8777, %v8778
      %v8780 = vsel %vm1763, %v8728, 0.0
      %v8781 = vadd.f32 %v8779, %v8780
      %v8782 = vsel %vm1763, %v8729, 0.0
      %v8783 = vadd.f32 %v8781, %v8782
      %v8784 = vsel %vm1763, %v8730, 0.0
      %v8785 = vadd.f32 %v8783, %v8784
      %v8786 = vsel %vm1763, %v8731, 0.0
      %v8787 = vadd.f32 %v8785, %v8786
      %v8788 = vsel %vm1763, %v8732, 0.0
      %v8789 = vadd.f32 %v8787, %v8788
      %v8790 = vsel %vm1763, %v8733, 0.0
      %v8791 = vadd.f32 %v8789, %v8790
      %v8792 = vsel %vm1763, %v8734, 0.0
      %v8793 = vadd.f32 %v8791, %v8792
      %v8794 = vsel %vm1763, %v8735, 0.0
      %v8795 = vadd.f32 %v8793, %v8794
      %v8796 = vsel %vm1763, %v8736, 0.0
      %v8797 = vadd.f32 %v8795, %v8796
      %v8798 = vsel %vm1763, %v8737, 0.0
      %v8799 = vadd.f32 %v8797, %v8798
      %v8800 = vsel %vm1763, %v8738, 0.0
      %v8801 = vadd.f32 %v8799, %v8800
      %v8802 = vrot.slane %v8801, 4
      %v8803 = vadd.f32 %v8801, %v8802
      %v8804 = vrot.slane %v8803, 2
      %v8805 = vadd.f32 %v8803, %v8804
      %v8806 = vrot.slane %v8805, 1
      %v8807 = vadd.f32 %v8805, %v8806
      %v8808 = vmul.f32 %v8807, 0.00390625
      %v8809 = vsub.f32 %v8707, %v8808
      %v8810 = vsub.f32 %v8708, %v8808
      %v8811 = vsub.f32 %v8709, %v8808
      %v8812 = vsub.f32 %v8710, %v8808
      %v8813 = vsub.f32 %v8711, %v8808
      %v8814 = vsub.f32 %v8712, %v8808
      %v8815 = vsub.f32 %v8713, %v8808
      %v8816 = vsub.f32 %v8714, %v8808
      %v8817 = vsub.f32 %v8715, %v8808
      %v8818 = vsub.f32 %v8716, %v8808
      %v8819 = vsub.f32 %v8717, %v8808
      %v8820 = vsub.f32 %v8718, %v8808
      %v8821 = vsub.f32 %v8719, %v8808
      %v8822 = vsub.f32 %v8720, %v8808
      %v8823 = vsub.f32 %v8721, %v8808
      %v8824 = vsub.f32 %v8722, %v8808
      %v8825 = vsub.f32 %v8723, %v8808
      %v8826 = vsub.f32 %v8724, %v8808
      %v8827 = vsub.f32 %v8725, %v8808
      %v8828 = vsub.f32 %v8726, %v8808
      %v8829 = vsub.f32 %v8727, %v8808
      %v8830 = vsub.f32 %v8728, %v8808
      %v8831 = vsub.f32 %v8729, %v8808
      %v8832 = vsub.f32 %v8730, %v8808
      %v8833 = vsub.f32 %v8731, %v8808
      %v8834 = vsub.f32 %v8732, %v8808
      %v8835 = vsub.f32 %v8733, %v8808
      %v8836 = vsub.f32 %v8734, %v8808
      %v8837 = vsub.f32 %v8735, %v8808
      %v8838 = vsub.f32 %v8736, %v8808
      %v8839 = vsub.f32 %v8737, %v8808
      %v8840 = vsub.f32 %v8738, %v8808
      %v8841 = vmul.f32 %v8809, %v8809
      %v8842 = vmul.f32 %v8810, %v8810
      %v8843 = vmul.f32 %v8811, %v8811
      %v8844 = vmul.f32 %v8812, %v8812
      %v8845 = vmul.f32 %v8813, %v8813
      %v8846 = vmul.f32 %v8814, %v8814
      %v8847 = vmul.f32 %v8815, %v8815
      %v8848 = vmul.f32 %v8816, %v8816
      %v8849 = vmul.f32 %v8817, %v8817
      %v8850 = vmul.f32 %v8818, %v8818
      %v8851 = vmul.f32 %v8819, %v8819
      %v8852 = vmul.f32 %v8820, %v8820
      %v8853 = vmul.f32 %v8821, %v8821
      %v8854 = vmul.f32 %v8822, %v8822
      %v8855 = vmul.f32 %v8823, %v8823
      %v8856 = vmul.f32 %v8824, %v8824
      %v8857 = vmul.f32 %v8825, %v8825
      %v8858 = vmul.f32 %v8826, %v8826
      %v8859 = vmul.f32 %v8827, %v8827
      %v8860 = vmul.f32 %v8828, %v8828
      %v8861 = vmul.f32 %v8829, %v8829
      %v8862 = vmul.f32 %v8830, %v8830
      %v8863 = vmul.f32 %v8831, %v8831
      %v8864 = vmul.f32 %v8832, %v8832
      %v8865 = vmul.f32 %v8833, %v8833
      %v8866 = vmul.f32 %v8834, %v8834
      %v8867 = vmul.f32 %v8835, %v8835
      %v8868 = vmul.f32 %v8836, %v8836
      %v8869 = vmul.f32 %v8837, %v8837
      %v8870 = vmul.f32 %v8838, %v8838
      %v8871 = vmul.f32 %v8839, %v8839
      %v8872 = vmul.f32 %v8840, %v8840
      %v8873 = vsel %vm1763, %v8841, 0.0
      %v8874 = vsel %vm1763, %v8842, 0.0
      %v8875 = vadd.f32 %v8873, %v8874
      %v8876 = vsel %vm1763, %v8843, 0.0
      %v8877 = vadd.f32 %v8875, %v8876
      %v8878 = vsel %vm1763, %v8844, 0.0
      %v8879 = vadd.f32 %v8877, %v8878
      %v8880 = vsel %vm1763, %v8845, 0.0
      %v8881 = vadd.f32 %v8879, %v8880
      %v8882 = vsel %vm1763, %v8846, 0.0
      %v8883 = vadd.f32 %v8881, %v8882
      %v8884 = vsel %vm1763, %v8847, 0.0
      %v8885 = vadd.f32 %v8883, %v8884
      %v8886 = vsel %vm1763, %v8848, 0.0
      %v8887 = vadd.f32 %v8885, %v8886
      %v8888 = vsel %vm1763, %v8849, 0.0
      %v8889 = vadd.f32 %v8887, %v8888
      %v8890 = vsel %vm1763, %v8850, 0.0
      %v8891 = vadd.f32 %v8889, %v8890
      %v8892 = vsel %vm1763, %v8851, 0.0
      %v8893 = vadd.f32 %v8891, %v8892
      %v8894 = vsel %vm1763, %v8852, 0.0
      %v8895 = vadd.f32 %v8893, %v8894
      %v8896 = vsel %vm1763, %v8853, 0.0
      %v8897 = vadd.f32 %v8895, %v8896
      %v8898 = vsel %vm1763, %v8854, 0.0
      %v8899 = vadd.f32 %v8897, %v8898
      %v8900 = vsel %vm1763, %v8855, 0.0
      %v8901 = vadd.f32 %v8899, %v8900
      %v8902 = vsel %vm1763, %v8856, 0.0
      %v8903 = vadd.f32 %v8901, %v8902
      %v8904 = vsel %vm1763, %v8857, 0.0
      %v8905 = vadd.f32 %v8903, %v8904
      %v8906 = vsel %vm1763, %v8858, 0.0
      %v8907 = vadd.f32 %v8905, %v8906
      %v8908 = vsel %vm1763, %v8859, 0.0
      %v8909 = vadd.f32 %v8907, %v8908
      %v8910 = vsel %vm1763, %v8860, 0.0
      %v8911 = vadd.f32 %v8909, %v8910
      %v8912 = vsel %vm1763, %v8861, 0.0
      %v8913 = vadd.f32 %v8911, %v8912
      %v8914 = vsel %vm1763, %v8862, 0.0
      %v8915 = vadd.f32 %v8913, %v8914
      %v8916 = vsel %vm1763, %v8863, 0.0
      %v8917 = vadd.f32 %v8915, %v8916
      %v8918 = vsel %vm1763, %v8864, 0.0
      %v8919 = vadd.f32 %v8917, %v8918
      %v8920 = vsel %vm1763, %v8865, 0.0
      %v8921 = vadd.f32 %v8919, %v8920
      %v8922 = vsel %vm1763, %v8866, 0.0
      %v8923 = vadd.f32 %v8921, %v8922
      %v8924 = vsel %vm1763, %v8867, 0.0
      %v8925 = vadd.f32 %v8923, %v8924
      %v8926 = vsel %vm1763, %v8868, 0.0
      %v8927 = vadd.f32 %v8925, %v8926
      %v8928 = vsel %vm1763, %v8869, 0.0
      %v8929 = vadd.f32 %v8927, %v8928
      %v8930 = vsel %vm1763, %v8870, 0.0
      %v8931 = vadd.f32 %v8929, %v8930
      %v8932 = vsel %vm1763, %v8871, 0.0
      %v8933 = vadd.f32 %v8931, %v8932
      %v8934 = vsel %vm1763, %v8872, 0.0
      %v8935 = vadd.f32 %v8933, %v8934
      %v8936 = vrot.slane %v8935, 4
      %v8937 = vadd.f32 %v8935, %v8936
      %v8938 = vrot.slane %v8937, 2
      %v8939 = vadd.f32 %v8937, %v8938
      %v8940 = vrot.slane %v8939, 1
      %v8941 = vadd.f32 %v8939, %v8940
      %v8942 = vmul.f32 %v8941, 0.00390625
      %v8943 = vadd.f32 %v8942, 1e-05
      %v8944 = vrsqrt.pop %v8943
      %v8945 = vmul.f32 %v8809, %v8944
      %v8946 = vmul.f32 %v8810, %v8944
      %v8947 = vmul.f32 %v8811, %v8944
      %v8948 = vmul.f32 %v8812, %v8944
      %v8949 = vmul.f32 %v8813, %v8944
      %v8950 = vmul.f32 %v8814, %v8944
      %v8951 = vmul.f32 %v8815, %v8944
      %v8952 = vmul.f32 %v8816, %v8944
      %v8953 = vmul.f32 %v8817, %v8944
      %v8954 = vmul.f32 %v8818, %v8944
      %v8955 = vmul.f32 %v8819, %v8944
      %v8956 = vmul.f32 %v8820, %v8944
      %v8957 = vmul.f32 %v8821, %v8944
      %v8958 = vmul.f32 %v8822, %v8944
      %v8959 = vmul.f32 %v8823, %v8944
      %v8960 = vmul.f32 %v8824, %v8944
      %v8961 = vmul.f32 %v8825, %v8944
      %v8962 = vmul.f32 %v8826, %v8944
      %v8963 = vmul.f32 %v8827, %v8944
      %v8964 = vmul.f32 %v8828, %v8944
      %v8965 = vmul.f32 %v8829, %v8944
      %v8966 = vmul.f32 %v8830, %v8944
      %v8967 = vmul.f32 %v8831, %v8944
      %v8968 = vmul.f32 %v8832, %v8944
      %v8969 = vmul.f32 %v8833, %v8944
      %v8970 = vmul.f32 %v8834, %v8944
      %v8971 = vmul.f32 %v8835, %v8944
      %v8972 = vmul.f32 %v8836, %v8944
      %v8973 = vmul.f32 %v8837, %v8944
      %v8974 = vmul.f32 %v8838, %v8944
      %v8975 = vmul.f32 %v8839, %v8944
      %v8976 = vmul.f32 %v8840, %v8944
      %v8977 = vunpack.c.l.bf16 %v172
      %v8978 = vunpack.c.l.bf16 %v173
      %v8979 = vunpack.c.l.bf16 %v174
      %v8980 = vunpack.c.l.bf16 %v175
      %v8981 = vunpack.c.l.bf16 %v176
      %v8982 = vunpack.c.l.bf16 %v177
      %v8983 = vunpack.c.l.bf16 %v178
      %v8984 = vunpack.c.l.bf16 %v179
      %v8985 = vunpack.c.l.bf16 %v180
      %v8986 = vunpack.c.l.bf16 %v181
      %v8987 = vunpack.c.l.bf16 %v182
      %v8988 = vunpack.c.l.bf16 %v183
      %v8989 = vunpack.c.l.bf16 %v184
      %v8990 = vunpack.c.l.bf16 %v185
      %v8991 = vunpack.c.l.bf16 %v186
      %v8992 = vunpack.c.l.bf16 %v187
      %v8993 = vunpack.c.l.bf16 %v188
      %v8994 = vunpack.c.l.bf16 %v189
      %v8995 = vunpack.c.l.bf16 %v190
      %v8996 = vunpack.c.l.bf16 %v191
      %v8997 = vunpack.c.l.bf16 %v192
      %v8998 = vunpack.c.l.bf16 %v193
      %v8999 = vunpack.c.l.bf16 %v194
      %v9000 = vunpack.c.l.bf16 %v195
      %v9001 = vunpack.c.l.bf16 %v196
      %v9002 = vunpack.c.l.bf16 %v197
      %v9003 = vunpack.c.l.bf16 %v198
      %v9004 = vunpack.c.l.bf16 %v199
      %v9005 = vunpack.c.l.bf16 %v200
      %v9006 = vunpack.c.l.bf16 %v201
      %v9007 = vunpack.c.l.bf16 %v202
      %v9008 = vunpack.c.l.bf16 %v203
      %v9009 = vadd.f32 %v8977, %v8945
      %v9010 = vadd.f32 %v8978, %v8946
      %v9011 = vadd.f32 %v8979, %v8947
      %v9012 = vadd.f32 %v8980, %v8948
      %v9013 = vadd.f32 %v8981, %v8949
      %v9014 = vadd.f32 %v8982, %v8950
      %v9015 = vadd.f32 %v8983, %v8951
      %v9016 = vadd.f32 %v8984, %v8952
      %v9017 = vadd.f32 %v8985, %v8953
      %v9018 = vadd.f32 %v8986, %v8954
      %v9019 = vadd.f32 %v8987, %v8955
      %v9020 = vadd.f32 %v8988, %v8956
      %v9021 = vadd.f32 %v8989, %v8957
      %v9022 = vadd.f32 %v8990, %v8958
      %v9023 = vadd.f32 %v8991, %v8959
      %v9024 = vadd.f32 %v8992, %v8960
      %v9025 = vadd.f32 %v8993, %v8961
      %v9026 = vadd.f32 %v8994, %v8962
      %v9027 = vadd.f32 %v8995, %v8963
      %v9028 = vadd.f32 %v8996, %v8964
      %v9029 = vadd.f32 %v8997, %v8965
      %v9030 = vadd.f32 %v8998, %v8966
      %v9031 = vadd.f32 %v8999, %v8967
      %v9032 = vadd.f32 %v9000, %v8968
      %v9033 = vadd.f32 %v9001, %v8969
      %v9034 = vadd.f32 %v9002, %v8970
      %v9035 = vadd.f32 %v9003, %v8971
      %v9036 = vadd.f32 %v9004, %v8972
      %v9037 = vadd.f32 %v9005, %v8973
      %v9038 = vadd.f32 %v9006, %v8974
      %v9039 = vadd.f32 %v9007, %v8975
      %v9040 = vadd.f32 %v9008, %v8976
      %9041 = vst.msk [vmem:[%s170] sm:$0xff] %vm1763, %v9009
      %9042 = vst.msk [vmem:[%s170 + $0x8] sm:$0xff] %vm1763, %v9010
      %9043 = vst.msk [vmem:[%s170 + $0x10] sm:$0xff] %vm1763, %v9011
      %9044 = vst.msk [vmem:[%s170 + $0x18] sm:$0xff] %vm1763, %v9012
      %9045 = vst.msk [vmem:[%s170 + $0x20] sm:$0xff] %vm1763, %v9013
      %9046 = vst.msk [vmem:[%s170 + $0x28] sm:$0xff] %vm1763, %v9014
      %9047 = vst.msk [vmem:[%s170 + $0x30] sm:$0xff] %vm1763, %v9015
      %9048 = vst.msk [vmem:[%s170 + $0x38] sm:$0xff] %vm1763, %v9016
      %9049 = vst.msk [vmem:[%s170 + $0x40] sm:$0xff] %vm1763, %v9017
      %9050 = vst.msk [vmem:[%s170 + $0x48] sm:$0xff] %vm1763, %v9018
      %9051 = vst.msk [vmem:[%s170 + $0x50] sm:$0xff] %vm1763, %v9019
      %9052 = vst.msk [vmem:[%s170 + $0x58] sm:$0xff] %vm1763, %v9020
      %9053 = vst.msk [vmem:[%s170 + $0x60] sm:$0xff] %vm1763, %v9021
      %9054 = vst.msk [vmem:[%s170 + $0x68] sm:$0xff] %vm1763, %v9022
      %9055 = vst.msk [vmem:[%s170 + $0x70] sm:$0xff] %vm1763, %v9023
      %9056 = vst.msk [vmem:[%s170 + $0x78] sm:$0xff] %vm1763, %v9024
      %9057 = vst.msk [vmem:[%s170 + $0x80] sm:$0xff] %vm1763, %v9025
      %9058 = vst.msk [vmem:[%s170 + $0x88] sm:$0xff] %vm1763, %v9026
      %9059 = vst.msk [vmem:[%s170 + $0x90] sm:$0xff] %vm1763, %v9027
      %9060 = vst.msk [vmem:[%s170 + $0x98] sm:$0xff] %vm1763, %v9028
      %9061 = vst.msk [vmem:[%s170 + $0xa0] sm:$0xff] %vm1763, %v9029
      %9062 = vst.msk [vmem:[%s170 + $0xa8] sm:$0xff] %vm1763, %v9030
      %9063 = vst.msk [vmem:[%s170 + $0xb0] sm:$0xff] %vm1763, %v9031
      %9064 = vst.msk [vmem:[%s170 + $0xb8] sm:$0xff] %vm1763, %v9032
      %9065 = vst.msk [vmem:[%s170 + $0xc0] sm:$0xff] %vm1763, %v9033
      %9066 = vst.msk [vmem:[%s170 + $0xc8] sm:$0xff] %vm1763, %v9034
      %9067 = vst.msk [vmem:[%s170 + $0xd0] sm:$0xff] %vm1763, %v9035
      %9068 = vst.msk [vmem:[%s170 + $0xd8] sm:$0xff] %vm1763, %v9036
      %9069 = vst.msk [vmem:[%s170 + $0xe0] sm:$0xff] %vm1763, %v9037
      %9070 = vst.msk [vmem:[%s170 + $0xe8] sm:$0xff] %vm1763, %v9038
      %9071 = vst.msk [vmem:[%s170 + $0xf0] sm:$0xff] %vm1763, %v9039
      %9072 = vst.msk [vmem:[%s170 + $0xf8] sm:$0xff] %vm1763, %v9040
      %p9073 = scmp.lt.s32.totalorder %s14, 1
      %s9074 = scalar_select %p9073, %s14, 1
      %s9075 = smul.addr %s9074, 32
      %s9076 = smul.addr %s9075, 8
      %s9077 = scalar_lea.vmem %s3, %s9076
      // Predicated region
      $region33: #{resblock_pallas.1} parent=31 // pred_check
        %p9078 = pneg %p100
      $region34: #{resblock_pallas.1} parent=31 // pred_check_branch
        %9080 = sbr.rel (%p9078) target = $region36
      $region35: #{resblock_pallas.1} parent=31 // pred_region
        _
      $region36: #{resblock_pallas.1} parent=31 // pred_fallthru
        _
    $region32: #{resblock_pallas.1} parent=5 // pred_fallthru
      _
    %p9081 = scmp.le.s32.totalorder 2, %s9
    // Predicated region
    $region37: #{resblock_pallas.1} parent=5 // pred_check
      %p9082 = pneg %p9081
    $region38: #{resblock_pallas.1} parent=5 // pred_check_branch
      %9084 = sbr.rel (%p9082) target = $region40
    $region39: #{resblock_pallas.1} parent=5 // pred_region
      %s9085 = ssub.s32 %s9, 2
      // Predicated region
      $region41: #{resblock_pallas.1} parent=39 // pred_check
        %p9086 = pneg %p106
      $region42: #{resblock_pallas.1} parent=39 // pred_check_branch
        %9088 = sbr.rel (%p9086) target = $region44
      $region43: #{resblock_pallas.1} parent=39 // pred_region
        %p9089 = scmp.lt.s32.totalorder %s15, 1
        %s9090 = scalar_select %p9089, %s15, 1
        %s9091 = smul.addr %s9090, 32
        %s9092 = smul.addr %s9091, 8
        %s9093 = scalar_lea.vmem %s3, %s9092
      $region44: #{resblock_pallas.1} parent=39 // pred_fallthru
        _
    $region40: #{resblock_pallas.1} parent=5 // pred_fallthru
      _
  $region6: #{resblock_pallas.1} parent=0 // loop_footer
    %s13 = sadd.s32 1, %s9
  $region7: #{resblock_pallas.1} parent=0 // loop_footer_branch
    %8 = sbr.rel target = $region3
  $region8: #{resblock_pallas.1} parent=0 // loop_exit
    _

</llo_original>
